<compile_context>
chip_gen: v7x
topology: tpu7x:2x2x1
jax: 0.10.0
libtpu: 0.0.40
codegen_flags: <defaults>
</compile_context>

<pallas_src>
import functools

import jax
import jax.numpy as jnp
from jax.experimental import pallas as pl
from jax.experimental.pallas import tpu as pltpu

# ----------------------------- model config (small) -----------------------------
D_MODEL = 32
NHEAD = 4
NUM_ENC_LAYERS = 2
NUM_DEC_LAYERS = 2
DIM_FF = 64
SRC_LEN = 8
TGT_LEN = 8
BATCH = 2
LN_EPS = 1e-5
NEG_INF = -1e30

ENC_FIELDS = ("qkv_w", "qkv_b", "out_w", "out_b",
              "lin1_w", "lin1_b", "lin2_w", "lin2_b",
              "ln1_g", "ln1_b", "ln2_g", "ln2_b")
DEC_FIELDS = ("sa_qkv_w", "sa_qkv_b", "sa_out_w", "sa_out_b",
              "ca_qkv_w", "ca_qkv_b", "ca_out_w", "ca_out_b",
              "lin1_w", "lin1_b", "lin2_w", "lin2_b",
              "ln1_g", "ln1_b", "ln2_g", "ln2_b", "ln3_g", "ln3_b")


# ================================ fused kernel ===================================

def _make_transformer_kernel(E, H, n_enc, n_dec):
    """Builds the single fused whole-model kernel (all shapes static)."""

    def _linear(x, w, b):
        return jnp.dot(x, w, preferred_element_type=jnp.float32) + b

    def _layer_norm(x, g, b):
        mean = jnp.mean(x, axis=-1, keepdims=True)
        c = x - mean
        var = jnp.mean(c * c, axis=-1, keepdims=True)
        return c * jax.lax.rsqrt(var + LN_EPS) * g + b

    def _mha(x_q, x_kv, w_qkv, b_qkv, w_out, b_out, bias, hmask_ref):
        # w_qkv: (E, 3E), pre-transposed; 1/sqrt(head_dim) folded into the Q block.
        if x_q is x_kv:                                   # self-attention: fused QKV matmul
            qkv = _linear(x_q, w_qkv, b_qkv)              # (Mq, 3E)
            q, k, v = qkv[:, :E], qkv[:, E:2 * E], qkv[:, 2 * E:]
        else:                                             # cross-attention
            q = _linear(x_q, w_qkv[:, :E], b_qkv[:, :E])
            kv = _linear(x_kv, w_qkv[:, E:], b_qkv[:, E:])
            k, v = kv[:, :E], kv[:, E:]

        out = jnp.zeros(x_q.shape, jnp.float32)
        for h in range(H):                                # unrolled; everything stays in vregs
            hm = hmask_ref[h]                             # (1, E) column mask for head h
            # Scores for head h over all batch rows in one MXU op; contracting the
            # last dims of q and k avoids an explicit transpose of k.
            s = jax.lax.dot_general(q * hm, k, (((1,), (1,)), ((), ())),
                                    preferred_element_type=jnp.float32)
            s = s + bias                                  # block-diag bias keeps batches separate
            s = s - jnp.max(s, axis=-1, keepdims=True)
            p = jnp.exp(s)
            p = p * pl.reciprocal(jnp.sum(p, axis=-1, keepdims=True), approx=True)
            out = out + jnp.dot(p, v * hm, preferred_element_type=jnp.float32)
        return _linear(out, w_out, b_out)

    n_e, n_d = len(ENC_FIELDS), len(DEC_FIELDS)

    def kernel(*refs):
        src_ref, tgt_ref, b_enc_ref, b_dself_ref, b_dcross_ref, hmask_ref = refs[:6]
        rest = refs[6:]
        enc = dict(zip(ENC_FIELDS, rest[:n_e]))
        dec = dict(zip(DEC_FIELDS, rest[n_e:n_e + n_d]))
        enc_ng, enc_nb, dec_ng, dec_nb = rest[n_e + n_d:n_e + n_d + 4]
        out_ref = rest[n_e + n_d + 4]

        bias_enc = b_enc_ref[...]
        bias_dself = b_dself_ref[...]
        bias_dcross = b_dcross_ref[...]

        # ------------------------------- encoder -------------------------------
        x = src_ref[...]                                  # (S*B, E), time-major rows
        for l in range(n_enc):
            a = _mha(x, x, enc["qkv_w"][l], enc["qkv_b"][l],
                     enc["out_w"][l], enc["out_b"][l], bias_enc, hmask_ref)
            x = _layer_norm(x + a, enc["ln1_g"][l], enc["ln1_b"][l])
            h1 = jnp.maximum(_linear(x, enc["lin1_w"][l], enc["lin1_b"][l]), 0.0)
            f = _linear(h1, enc["lin2_w"][l], enc["lin2_b"][l])
            x = _layer_norm(x + f, enc["ln2_g"][l], enc["ln2_b"][l])
        memory = _layer_norm(x, enc_ng[...], enc_nb[...])

        # ------------------------------- decoder -------------------------------
        y = tgt_ref[...]                                  # (T*B, E)
        for l in range(n_dec):
            a = _mha(y, y, dec["sa_qkv_w"][l], dec["sa_qkv_b"][l],
                     dec["sa_out_w"][l], dec["sa_out_b"][l], bias_dself, hmask_ref)
            y = _layer_norm(y + a, dec["ln1_g"][l], dec["ln1_b"][l])
            a = _mha(y, memory, dec["ca_qkv_w"][l], dec["ca_qkv_b"][l],
                     dec["ca_out_w"][l], dec["ca_out_b"][l], bias_dcross, hmask_ref)
            y = _layer_norm(y + a, dec["ln2_g"][l], dec["ln2_b"][l])
            h1 = jnp.maximum(_linear(y, dec["lin1_w"][l], dec["lin1_b"][l]), 0.0)
            f = _linear(h1, dec["lin2_w"][l], dec["lin2_b"][l])
            y = _layer_norm(y + f, dec["ln3_g"][l], dec["ln3_b"][l])
        y = _layer_norm(y, dec_ng[...], dec_nb[...])

        out_ref[...] = y.astype(out_ref.dtype)

    return kernel


# ================================= wrapper =======================================

def _block_diag_bias(B, Lq, Lkv):
    """(Lq*B, Lkv*B) additive score bias: 0 within the same batch, -1e30 across.

    Rows/cols are time-major flattened (row i -> batch i % B), matching the
    (seq, batch, E) -> (seq*batch, E) reshape of the activations.
    """
    qb = jnp.arange(Lq * B, dtype=jnp.int32) % B
    kb = jnp.arange(Lkv * B, dtype=jnp.int32) % B
    same = qb[:, None] == kb[None, :]
    return jnp.where(same, 0.0, NEG_INF).astype(jnp.float32)


def _head_masks(nhead, E):
    """(H, 1, E) column masks selecting each head's slice of the embedding."""
    head_of_col = jnp.arange(E, dtype=jnp.int32) // (E // nhead)
    m = head_of_col[None, :] == jnp.arange(nhead, dtype=jnp.int32)[:, None]
    return m.astype(jnp.float32).reshape(nhead, 1, E)


def transformer_forward(src, tgt, flat_params, nhead):
    if src.shape[1] != tgt.shape[1]:
        raise RuntimeError("the batch number of src and tgt must be equal")
    if src.shape[2] != D_MODEL or tgt.shape[2] != D_MODEL:
        raise RuntimeError("the feature number of src and tgt must be equal to d_model")

    S, B, E = src.shape
    T = tgt.shape[0]
    n_enc = flat_params[0].shape[0]
    n_dec = flat_params[len(ENC_FIELDS)].shape[0]

    # (seq, B, E) -> (seq*B, E): contiguous reshape, no relayout / transpose.
    src2d = src.reshape(S * B, E)
    tgt2d = tgt.reshape(T * B, E)

    bias_enc = _block_diag_bias(B, S, S)       # constant-folded by XLA
    bias_dself = _block_diag_bias(B, T, T)
    bias_dcross = _block_diag_bias(B, T, S)
    hmask = _head_masks(nhead, E)

    kernel = _make_transformer_kernel(E, nhead, n_enc, n_dec)
    out2d = pl.pallas_call(
        kernel,
        out_shape=jax.ShapeDtypeStruct((T * B, E), jnp.float32),
        compiler_params=pltpu.CompilerParams(vmem_limit_bytes=32 * 1024 * 1024),
    )(src2d, tgt2d, bias_enc, bias_dself, bias_dcross, hmask, *flat_params)
    return out2d.reshape(T, B, E)


# ============================== parameter handling ===============================

def init_mha_params(key, E):
    k1, k2 = jax.random.split(key)
    limit = (6.0 / (3 * E + E)) ** 0.5                # xavier_uniform on (3E, E)
    in_w = jax.random.uniform(k1, (3 * E, E), jnp.float32, -limit, limit)
    in_b = jnp.zeros((3 * E,), jnp.float32)
    lim2 = (1.0 / E) ** 0.5
    out_w = jax.random.uniform(k2, (E, E), jnp.float32, -lim2, lim2)
    out_b = jnp.zeros((E,), jnp.float32)
    return dict(in_w=in_w, in_b=in_b, out_w=out_w, out_b=out_b)


def init_linear_params(key, out_f, in_f):
    k1, k2 = jax.random.split(key)
    lim = (1.0 / in_f) ** 0.5
    w = jax.random.uniform(k1, (out_f, in_f), jnp.float32, -lim, lim)
    b = jax.random.uniform(k2, (out_f,), jnp.float32, -lim, lim)
    return (w, b)


def init_ln_params(E):
    return (jnp.ones((E,), jnp.float32), jnp.zeros((E,), jnp.float32))


def init_encoder_layer(key, E, F):
    ks = jax.random.split(key, 3)
    return dict(
        self_attn=init_mha_params(ks[0], E),
        linear1=init_linear_params(ks[1], F, E),
        linear2=init_linear_params(ks[2], E, F),
        norm1=init_ln_params(E),
        norm2=init_ln_params(E),
    )


def init_decoder_layer(key, E, F):
    ks = jax.random.split(key, 4)
    return dict(
        self_attn=init_mha_params(ks[0], E),
        cross_attn=init_mha_params(ks[1], E),
        linear1=init_linear_params(ks[2], F, E),
        linear2=init_linear_params(ks[3], E, F),
        norm1=init_ln_params(E),
        norm2=init_ln_params(E),
        norm3=init_ln_params(E),
    )


def init_transformer_params(key, E, F, n_enc, n_dec):
    keys = jax.random.split(key, n_enc + n_dec)
    enc = [init_encoder_layer(keys[i], E, F) for i in range(n_enc)]
    dec = [init_decoder_layer(keys[n_enc + i], E, F) for i in range(n_dec)]
    return dict(
        encoder_layers=enc,
        decoder_layers=dec,
        encoder_norm=init_ln_params(E),
        decoder_norm=init_ln_params(E),
    )


def pack_params(params, nhead):
    """Pre-transpose / stack weights once (outside jit) into the kernel layout."""
    E = D_MODEL
    scaling = float(E // nhead) ** -0.5

    def pack_mha(p):
        w_t = jnp.transpose(p["in_w"])                          # (E, 3E) = [Wq.T|Wk.T|Wv.T]
        w_t = jnp.concatenate([w_t[:, :E] * scaling, w_t[:, E:]], axis=1)
        b = p["in_b"].reshape(1, 3 * E)
        b = jnp.concatenate([b[:, :E] * scaling, b[:, E:]], axis=1)
        return w_t, b, jnp.transpose(p["out_w"]), p["out_b"].reshape(1, E)

    def pack_lin(wb):
        w, b = wb
        return jnp.transpose(w), b.reshape(1, -1)

    def pack_ln(gb):
        g, b = gb
        return g.reshape(1, -1), b.reshape(1, -1)

    enc_layers = []
    for lp in params["encoder_layers"]:
        qw, qb, ow, ob = pack_mha(lp["self_attn"])
        l1w, l1b = pack_lin(lp["linear1"])
        l2w, l2b = pack_lin(lp["linear2"])
        n1g, n1b = pack_ln(lp["norm1"])
        n2g, n2b = pack_ln(lp["norm2"])
        enc_layers.append((qw, qb, ow, ob, l1w, l1b, l2w, l2b, n1g, n1b, n2g, n2b))

    dec_layers = []
    for lp in params["decoder_layers"]:
        sqw, sqb, sow, sob = pack_mha(lp["self_attn"])
        cqw, cqb, cow, cob = pack_mha(lp["cross_attn"])
        l1w, l1b = pack_lin(lp["linear1"])
        l2w, l2b = pack_lin(lp["linear2"])
        n1g, n1b = pack_ln(lp["norm1"])
        n2g, n2b = pack_ln(lp["norm2"])
        n3g, n3b = pack_ln(lp["norm3"])
        dec_layers.append((sqw, sqb, sow, sob, cqw, cqb, cow, cob,
                           l1w, l1b, l2w, l2b, n1g, n1b, n2g, n2b, n3g, n3b))

    flat = []
    for i in range(len(ENC_FIELDS)):
        flat.append(jnp.stack([layer[i] for layer in enc_layers]))
    for i in range(len(DEC_FIELDS)):
        flat.append(jnp.stack([layer[i] for layer in dec_layers]))
    eg, eb = pack_ln(params["encoder_norm"])
    dg, db = pack_ln(params["decoder_norm"])
    flat += [eg, eb, dg, db]
    return tuple(flat)


# ===================================== main ======================================

if __name__ == "__main__":
    key = jax.random.PRNGKey(0)
    kp, ks, kt = jax.random.split(key, 3)

    params = init_transformer_params(kp, D_MODEL, DIM_FF,
                                     NUM_ENC_LAYERS, NUM_DEC_LAYERS)
    flat_params = pack_params(params, NHEAD)

    src = jax.random.normal(ks, (SRC_LEN, BATCH, D_MODEL), jnp.float32)
    tgt = jax.random.normal(kt, (TGT_LEN, BATCH, D_MODEL), jnp.float32)

    # TODO(synk): attn_mask / key_padding_mask paths are not implemented (forward
    # defaults to None masks in the reference); dropout is identity (eval mode).
    fwd = jax.jit(functools.partial(transformer_forward, nhead=NHEAD))
    out = fwd(src, tgt, flat_params)
    jax.block_until_ready(out)

    assert out.shape == (TGT_LEN, BATCH, D_MODEL)
    assert out.dtype == jnp.float32
    assert bool(jnp.all(jnp.isfinite(out)))
    print("KERNEL_OK")
</pallas_src>

<mosaic_0001>
module attributes {stable_mosaic.version = 11 : i64} {
  func.func @kernel(%arg0: memref<16x32xf32, #tpu.memory_space<vmem>>, %arg1: memref<16x32xf32, #tpu.memory_space<vmem>>, %arg2: memref<16x16xf32, #tpu.memory_space<vmem>>, %arg3: memref<16x16xf32, #tpu.memory_space<vmem>>, %arg4: memref<16x16xf32, #tpu.memory_space<vmem>>, %arg5: memref<4x1x32xf32, #tpu.memory_space<vmem>>, %arg6: memref<2x32x96xf32, #tpu.memory_space<vmem>>, %arg7: memref<2x1x96xf32, #tpu.memory_space<vmem>>, %arg8: memref<2x32x32xf32, #tpu.memory_space<vmem>>, %arg9: memref<2x1x32xf32, #tpu.memory_space<vmem>>, %arg10: memref<2x32x64xf32, #tpu.memory_space<vmem>>, %arg11: memref<2x1x64xf32, #tpu.memory_space<vmem>>, %arg12: memref<2x64x32xf32, #tpu.memory_space<vmem>>, %arg13: memref<2x1x32xf32, #tpu.memory_space<vmem>>, %arg14: memref<2x1x32xf32, #tpu.memory_space<vmem>>, %arg15: memref<2x1x32xf32, #tpu.memory_space<vmem>>, %arg16: memref<2x1x32xf32, #tpu.memory_space<vmem>>, %arg17: memref<2x1x32xf32, #tpu.memory_space<vmem>>, %arg18: memref<2x32x96xf32, #tpu.memory_space<vmem>>, %arg19: memref<2x1x96xf32, #tpu.memory_space<vmem>>, %arg20: memref<2x32x32xf32, #tpu.memory_space<vmem>>, %arg21: memref<2x1x32xf32, #tpu.memory_space<vmem>>, %arg22: memref<2x32x96xf32, #tpu.memory_space<vmem>>, %arg23: memref<2x1x96xf32, #tpu.memory_space<vmem>>, %arg24: memref<2x32x32xf32, #tpu.memory_space<vmem>>, %arg25: memref<2x1x32xf32, #tpu.memory_space<vmem>>, %arg26: memref<2x32x64xf32, #tpu.memory_space<vmem>>, %arg27: memref<2x1x64xf32, #tpu.memory_space<vmem>>, %arg28: memref<2x64x32xf32, #tpu.memory_space<vmem>>, %arg29: memref<2x1x32xf32, #tpu.memory_space<vmem>>, %arg30: memref<2x1x32xf32, #tpu.memory_space<vmem>>, %arg31: memref<2x1x32xf32, #tpu.memory_space<vmem>>, %arg32: memref<2x1x32xf32, #tpu.memory_space<vmem>>, %arg33: memref<2x1x32xf32, #tpu.memory_space<vmem>>, %arg34: memref<2x1x32xf32, #tpu.memory_space<vmem>>, %arg35: memref<2x1x32xf32, #tpu.memory_space<vmem>>, %arg36: memref<1x32xf32, #tpu.memory_space<vmem>>, %arg37: memref<1x32xf32, #tpu.memory_space<vmem>>, %arg38: memref<1x32xf32, #tpu.memory_space<vmem>>, %arg39: memref<1x32xf32, #tpu.memory_space<vmem>>, %arg40: memref<16x32xf32, #tpu.memory_space<vmem>>) attributes {dimension_semantics = [], scalar_prefetch = 0 : i64, scratch_operands = 0 : i64, tpu.core_type = #tpu.core_type<tc>} {
    %c0 = arith.constant 0 : index
    %c0_0 = arith.constant 0 : index
    %0 = vector.load %arg2[%c0, %c0_0] : memref<16x16xf32, #tpu.memory_space<vmem>>, vector<16x16xf32>
    %c0_1 = arith.constant 0 : index
    %c0_2 = arith.constant 0 : index
    %1 = vector.load %arg3[%c0_1, %c0_2] : memref<16x16xf32, #tpu.memory_space<vmem>>, vector<16x16xf32>
    %c0_3 = arith.constant 0 : index
    %c0_4 = arith.constant 0 : index
    %2 = vector.load %arg4[%c0_3, %c0_4] : memref<16x16xf32, #tpu.memory_space<vmem>>, vector<16x16xf32>
    %c0_5 = arith.constant 0 : index
    %c0_6 = arith.constant 0 : index
    %3 = vector.load %arg0[%c0_5, %c0_6] : memref<16x32xf32, #tpu.memory_space<vmem>>, vector<16x32xf32>
    %c0_7 = arith.constant 0 : index
    %c0_8 = arith.constant 0 : index
    %c0_9 = arith.constant 0 : index
    %4 = vector.load %arg6[%c0_7, %c0_8, %c0_9] : memref<2x32x96xf32, #tpu.memory_space<vmem>>, vector<1x32x96xf32>
    %5 = vector.shape_cast %4 : vector<1x32x96xf32> to vector<32x96xf32>
    %c0_10 = arith.constant 0 : index
    %c0_11 = arith.constant 0 : index
    %c0_12 = arith.constant 0 : index
    %6 = vector.load %arg7[%c0_10, %c0_11, %c0_12] : memref<2x1x96xf32, #tpu.memory_space<vmem>>, vector<1x1x96xf32>
    %7 = vector.shape_cast %6 : vector<1x1x96xf32> to vector<1x96xf32>
    %c0_13 = arith.constant 0 : index
    %c0_14 = arith.constant 0 : index
    %c0_15 = arith.constant 0 : index
    %8 = vector.load %arg8[%c0_13, %c0_14, %c0_15] : memref<2x32x32xf32, #tpu.memory_space<vmem>>, vector<1x32x32xf32>
    %9 = vector.shape_cast %8 : vector<1x32x32xf32> to vector<32x32xf32>
    %c0_16 = arith.constant 0 : index
    %c0_17 = arith.constant 0 : index
    %c0_18 = arith.constant 0 : index
    %10 = vector.load %arg9[%c0_16, %c0_17, %c0_18] : memref<2x1x32xf32, #tpu.memory_space<vmem>>, vector<1x1x32xf32>
    %11 = vector.shape_cast %10 : vector<1x1x32xf32> to vector<1x32xf32>
    %cst = arith.constant dense<0.000000e+00> : vector<16x96xf32>
    %12 = tpu.matmul %3, %5, %cst {dimension_numbers = #tpu.dot_dimension_numbers<[1], [0], [0], [1], [0, 0, 1, 1], [], []>} : vector<16x32xf32>, vector<32x96xf32>, vector<16x96xf32> -> vector<16x96xf32>
    %13 = vector.broadcast %7 : vector<1x96xf32> to vector<16x96xf32>
    %14 = arith.addf %12, %13 : vector<16x96xf32>
    %15 = vector.extract_strided_slice %14 {offsets = [0, 0], sizes = [16, 32], strides = [1, 1]} : vector<16x96xf32> to vector<16x32xf32>
    %16 = vector.extract_strided_slice %14 {offsets = [0, 32], sizes = [16, 32], strides = [1, 1]} : vector<16x96xf32> to vector<16x32xf32>
    %17 = vector.extract_strided_slice %14 {offsets = [0, 64], sizes = [16, 32], strides = [1, 1]} : vector<16x96xf32> to vector<16x32xf32>
    %cst_19 = arith.constant 0.000000e+00 : f32
    %18 = vector.broadcast %cst_19 : f32 to vector<16x32xf32>
    %c0_20 = arith.constant 0 : index
    %c0_21 = arith.constant 0 : index
    %c0_22 = arith.constant 0 : index
    %19 = vector.load %arg5[%c0_20, %c0_21, %c0_22] : memref<4x1x32xf32, #tpu.memory_space<vmem>>, vector<1x1x32xf32>
    %20 = vector.shape_cast %19 : vector<1x1x32xf32> to vector<1x32xf32>
    %21 = vector.broadcast %20 : vector<1x32xf32> to vector<16x32xf32>
    %22 = arith.mulf %15, %21 : vector<16x32xf32>
    %cst_23 = arith.constant dense<0.000000e+00> : vector<16x16xf32>
    %23 = tpu.matmul %22, %16, %cst_23 {dimension_numbers = #tpu.dot_dimension_numbers<[1], [1], [0], [0], [0, 0, 1, 0], [], []>} : vector<16x32xf32>, vector<16x32xf32>, vector<16x16xf32> -> vector<16x16xf32>
    %24 = arith.addf %23, %0 : vector<16x16xf32>
    %cst_24 = arith.constant dense<0xFF800000> : vector<16xf32>
    %25 = vector.multi_reduction <maximumf>, %24, %cst_24 [1] : vector<16x16xf32> to vector<16xf32>
    %26 = vector.shape_cast %25 : vector<16xf32> to vector<16x1xf32>
    %27 = vector.broadcast %26 : vector<16x1xf32> to vector<16x16xf32>
    %28 = arith.subf %24, %27 : vector<16x16xf32>
    %29 = math.exp %28 : vector<16x16xf32>
    %cst_25 = arith.constant dense<0.000000e+00> : vector<16xf32>
    %30 = vector.multi_reduction <add>, %29, %cst_25 [1] : vector<16x16xf32> to vector<16xf32>
    %31 = vector.shape_cast %30 : vector<16xf32> to vector<16x1xf32>
    %32 = tpu.reciprocal %31 {approx = true} : vector<16x1xf32> -> vector<16x1xf32>
    %33 = vector.broadcast %32 : vector<16x1xf32> to vector<16x16xf32>
    %34 = arith.mulf %29, %33 : vector<16x16xf32>
    %35 = vector.broadcast %20 : vector<1x32xf32> to vector<16x32xf32>
    %36 = arith.mulf %17, %35 : vector<16x32xf32>
    %cst_26 = arith.constant dense<0.000000e+00> : vector<16x32xf32>
    %37 = tpu.matmul %34, %36, %cst_26 {dimension_numbers = #tpu.dot_dimension_numbers<[1], [0], [0], [1], [0, 0, 1, 1], [], []>} : vector<16x16xf32>, vector<16x32xf32>, vector<16x32xf32> -> vector<16x32xf32>
    %38 = arith.addf %18, %37 : vector<16x32xf32>
    %c1 = arith.constant 1 : index
    %c0_27 = arith.constant 0 : index
    %c0_28 = arith.constant 0 : index
    %39 = vector.load %arg5[%c1, %c0_27, %c0_28] : memref<4x1x32xf32, #tpu.memory_space<vmem>>, vector<1x1x32xf32>
    %40 = vector.shape_cast %39 : vector<1x1x32xf32> to vector<1x32xf32>
    %41 = vector.broadcast %40 : vector<1x32xf32> to vector<16x32xf32>
    %42 = arith.mulf %15, %41 : vector<16x32xf32>
    %cst_29 = arith.constant dense<0.000000e+00> : vector<16x16xf32>
    %43 = tpu.matmul %42, %16, %cst_29 {dimension_numbers = #tpu.dot_dimension_numbers<[1], [1], [0], [0], [0, 0, 1, 0], [], []>} : vector<16x32xf32>, vector<16x32xf32>, vector<16x16xf32> -> vector<16x16xf32>
    %44 = arith.addf %43, %0 : vector<16x16xf32>
    %cst_30 = arith.constant dense<0xFF800000> : vector<16xf32>
    %45 = vector.multi_reduction <maximumf>, %44, %cst_30 [1] : vector<16x16xf32> to vector<16xf32>
    %46 = vector.shape_cast %45 : vector<16xf32> to vector<16x1xf32>
    %47 = vector.broadcast %46 : vector<16x1xf32> to vector<16x16xf32>
    %48 = arith.subf %44, %47 : vector<16x16xf32>
    %49 = math.exp %48 : vector<16x16xf32>
    %cst_31 = arith.constant dense<0.000000e+00> : vector<16xf32>
    %50 = vector.multi_reduction <add>, %49, %cst_31 [1] : vector<16x16xf32> to vector<16xf32>
    %51 = vector.shape_cast %50 : vector<16xf32> to vector<16x1xf32>
    %52 = tpu.reciprocal %51 {approx = true} : vector<16x1xf32> -> vector<16x1xf32>
    %53 = vector.broadcast %52 : vector<16x1xf32> to vector<16x16xf32>
    %54 = arith.mulf %49, %53 : vector<16x16xf32>
    %55 = vector.broadcast %40 : vector<1x32xf32> to vector<16x32xf32>
    %56 = arith.mulf %17, %55 : vector<16x32xf32>
    %cst_32 = arith.constant dense<0.000000e+00> : vector<16x32xf32>
    %57 = tpu.matmul %54, %56, %cst_32 {dimension_numbers = #tpu.dot_dimension_numbers<[1], [0], [0], [1], [0, 0, 1, 1], [], []>} : vector<16x16xf32>, vector<16x32xf32>, vector<16x32xf32> -> vector<16x32xf32>
    %58 = arith.addf %38, %57 : vector<16x32xf32>
    %c2 = arith.constant 2 : index
    %c0_33 = arith.constant 0 : index
    %c0_34 = arith.constant 0 : index
    %59 = vector.load %arg5[%c2, %c0_33, %c0_34] : memref<4x1x32xf32, #tpu.memory_space<vmem>>, vector<1x1x32xf32>
    %60 = vector.shape_cast %59 : vector<1x1x32xf32> to vector<1x32xf32>
    %61 = vector.broadcast %60 : vector<1x32xf32> to vector<16x32xf32>
    %62 = arith.mulf %15, %61 : vector<16x32xf32>
    %cst_35 = arith.constant dense<0.000000e+00> : vector<16x16xf32>
    %63 = tpu.matmul %62, %16, %cst_35 {dimension_numbers = #tpu.dot_dimension_numbers<[1], [1], [0], [0], [0, 0, 1, 0], [], []>} : vector<16x32xf32>, vector<16x32xf32>, vector<16x16xf32> -> vector<16x16xf32>
    %64 = arith.addf %63, %0 : vector<16x16xf32>
    %cst_36 = arith.constant dense<0xFF800000> : vector<16xf32>
    %65 = vector.multi_reduction <maximumf>, %64, %cst_36 [1] : vector<16x16xf32> to vector<16xf32>
    %66 = vector.shape_cast %65 : vector<16xf32> to vector<16x1xf32>
    %67 = vector.broadcast %66 : vector<16x1xf32> to vector<16x16xf32>
    %68 = arith.subf %64, %67 : vector<16x16xf32>
    %69 = math.exp %68 : vector<16x16xf32>
    %cst_37 = arith.constant dense<0.000000e+00> : vector<16xf32>
    %70 = vector.multi_reduction <add>, %69, %cst_37 [1] : vector<16x16xf32> to vector<16xf32>
    %71 = vector.shape_cast %70 : vector<16xf32> to vector<16x1xf32>
    %72 = tpu.reciprocal %71 {approx = true} : vector<16x1xf32> -> vector<16x1xf32>
    %73 = vector.broadcast %72 : vector<16x1xf32> to vector<16x16xf32>
    %74 = arith.mulf %69, %73 : vector<16x16xf32>
    %75 = vector.broadcast %60 : vector<1x32xf32> to vector<16x32xf32>
    %76 = arith.mulf %17, %75 : vector<16x32xf32>
    %cst_38 = arith.constant dense<0.000000e+00> : vector<16x32xf32>
    %77 = tpu.matmul %74, %76, %cst_38 {dimension_numbers = #tpu.dot_dimension_numbers<[1], [0], [0], [1], [0, 0, 1, 1], [], []>} : vector<16x16xf32>, vector<16x32xf32>, vector<16x32xf32> -> vector<16x32xf32>
    %78 = arith.addf %58, %77 : vector<16x32xf32>
    %c3 = arith.constant 3 : index
    %c0_39 = arith.constant 0 : index
    %c0_40 = arith.constant 0 : index
    %79 = vector.load %arg5[%c3, %c0_39, %c0_40] : memref<4x1x32xf32, #tpu.memory_space<vmem>>, vector<1x1x32xf32>
    %80 = vector.shape_cast %79 : vector<1x1x32xf32> to vector<1x32xf32>
    %81 = vector.broadcast %80 : vector<1x32xf32> to vector<16x32xf32>
    %82 = arith.mulf %15, %81 : vector<16x32xf32>
    %cst_41 = arith.constant dense<0.000000e+00> : vector<16x16xf32>
    %83 = tpu.matmul %82, %16, %cst_41 {dimension_numbers = #tpu.dot_dimension_numbers<[1], [1], [0], [0], [0, 0, 1, 0], [], []>} : vector<16x32xf32>, vector<16x32xf32>, vector<16x16xf32> -> vector<16x16xf32>
    %84 = arith.addf %83, %0 : vector<16x16xf32>
    %cst_42 = arith.constant dense<0xFF800000> : vector<16xf32>
    %85 = vector.multi_reduction <maximumf>, %84, %cst_42 [1] : vector<16x16xf32> to vector<16xf32>
    %86 = vector.shape_cast %85 : vector<16xf32> to vector<16x1xf32>
    %87 = vector.broadcast %86 : vector<16x1xf32> to vector<16x16xf32>
    %88 = arith.subf %84, %87 : vector<16x16xf32>
    %89 = math.exp %88 : vector<16x16xf32>
    %cst_43 = arith.constant dense<0.000000e+00> : vector<16xf32>
    %90 = vector.multi_reduction <add>, %89, %cst_43 [1] : vector<16x16xf32> to vector<16xf32>
    %91 = vector.shape_cast %90 : vector<16xf32> to vector<16x1xf32>
    %92 = tpu.reciprocal %91 {approx = true} : vector<16x1xf32> -> vector<16x1xf32>
    %93 = vector.broadcast %92 : vector<16x1xf32> to vector<16x16xf32>
    %94 = arith.mulf %89, %93 : vector<16x16xf32>
    %95 = vector.broadcast %80 : vector<1x32xf32> to vector<16x32xf32>
    %96 = arith.mulf %17, %95 : vector<16x32xf32>
    %cst_44 = arith.constant dense<0.000000e+00> : vector<16x32xf32>
    %97 = tpu.matmul %94, %96, %cst_44 {dimension_numbers = #tpu.dot_dimension_numbers<[1], [0], [0], [1], [0, 0, 1, 1], [], []>} : vector<16x16xf32>, vector<16x32xf32>, vector<16x32xf32> -> vector<16x32xf32>
    %98 = arith.addf %78, %97 : vector<16x32xf32>
    %cst_45 = arith.constant dense<0.000000e+00> : vector<16x32xf32>
    %99 = tpu.matmul %98, %9, %cst_45 {dimension_numbers = #tpu.dot_dimension_numbers<[1], [0], [0], [1], [0, 0, 1, 1], [], []>} : vector<16x32xf32>, vector<32x32xf32>, vector<16x32xf32> -> vector<16x32xf32>
    %100 = vector.broadcast %11 : vector<1x32xf32> to vector<16x32xf32>
    %101 = arith.addf %99, %100 : vector<16x32xf32>
    %102 = arith.addf %3, %101 : vector<16x32xf32>
    %c0_46 = arith.constant 0 : index
    %c0_47 = arith.constant 0 : index
    %c0_48 = arith.constant 0 : index
    %103 = vector.load %arg14[%c0_46, %c0_47, %c0_48] : memref<2x1x32xf32, #tpu.memory_space<vmem>>, vector<1x1x32xf32>
    %104 = vector.shape_cast %103 : vector<1x1x32xf32> to vector<1x32xf32>
    %c0_49 = arith.constant 0 : index
    %c0_50 = arith.constant 0 : index
    %c0_51 = arith.constant 0 : index
    %105 = vector.load %arg15[%c0_49, %c0_50, %c0_51] : memref<2x1x32xf32, #tpu.memory_space<vmem>>, vector<1x1x32xf32>
    %106 = vector.shape_cast %105 : vector<1x1x32xf32> to vector<1x32xf32>
    %cst_52 = arith.constant dense<0.000000e+00> : vector<16xf32>
    %107 = vector.multi_reduction <add>, %102, %cst_52 [1] : vector<16x32xf32> to vector<16xf32>
    %108 = vector.shape_cast %107 : vector<16xf32> to vector<16x1xf32>
    %cst_53 = arith.constant 3.200000e+01 : f32
    %109 = vector.broadcast %cst_53 : f32 to vector<16x1xf32>
    %110 = arith.divf %108, %109 : vector<16x1xf32>
    %111 = vector.broadcast %110 : vector<16x1xf32> to vector<16x32xf32>
    %112 = arith.subf %102, %111 : vector<16x32xf32>
    %113 = arith.mulf %112, %112 : vector<16x32xf32>
    %cst_54 = arith.constant dense<0.000000e+00> : vector<16xf32>
    %114 = vector.multi_reduction <add>, %113, %cst_54 [1] : vector<16x32xf32> to vector<16xf32>
    %115 = vector.shape_cast %114 : vector<16xf32> to vector<16x1xf32>
    %cst_55 = arith.constant 3.200000e+01 : f32
    %116 = vector.broadcast %cst_55 : f32 to vector<16x1xf32>
    %117 = arith.divf %115, %116 : vector<16x1xf32>
    %cst_56 = arith.constant 9.99999974E-6 : f32
    %118 = vector.broadcast %cst_56 : f32 to vector<16x1xf32>
    %119 = arith.addf %117, %118 : vector<16x1xf32>
    %120 = math.rsqrt %119 : vector<16x1xf32>
    %121 = vector.broadcast %120 : vector<16x1xf32> to vector<16x32xf32>
    %122 = arith.mulf %112, %121 : vector<16x32xf32>
    %123 = vector.broadcast %104 : vector<1x32xf32> to vector<16x32xf32>
    %124 = arith.mulf %122, %123 : vector<16x32xf32>
    %125 = vector.broadcast %106 : vector<1x32xf32> to vector<16x32xf32>
    %126 = arith.addf %124, %125 : vector<16x32xf32>
    %c0_57 = arith.constant 0 : index
    %c0_58 = arith.constant 0 : index
    %c0_59 = arith.constant 0 : index
    %127 = vector.load %arg10[%c0_57, %c0_58, %c0_59] : memref<2x32x64xf32, #tpu.memory_space<vmem>>, vector<1x32x64xf32>
    %128 = vector.shape_cast %127 : vector<1x32x64xf32> to vector<32x64xf32>
    %c0_60 = arith.constant 0 : index
    %c0_61 = arith.constant 0 : index
    %c0_62 = arith.constant 0 : index
    %129 = vector.load %arg11[%c0_60, %c0_61, %c0_62] : memref<2x1x64xf32, #tpu.memory_space<vmem>>, vector<1x1x64xf32>
    %130 = vector.shape_cast %129 : vector<1x1x64xf32> to vector<1x64xf32>
    %cst_63 = arith.constant dense<0.000000e+00> : vector<16x64xf32>
    %131 = tpu.matmul %126, %128, %cst_63 {dimension_numbers = #tpu.dot_dimension_numbers<[1], [0], [0], [1], [0, 0, 1, 1], [], []>} : vector<16x32xf32>, vector<32x64xf32>, vector<16x64xf32> -> vector<16x64xf32>
    %132 = vector.broadcast %130 : vector<1x64xf32> to vector<16x64xf32>
    %133 = arith.addf %131, %132 : vector<16x64xf32>
    %cst_64 = arith.constant 0.000000e+00 : f32
    %134 = vector.broadcast %cst_64 : f32 to vector<16x64xf32>
    %135 = arith.maximumf %133, %134 : vector<16x64xf32>
    %c0_65 = arith.constant 0 : index
    %c0_66 = arith.constant 0 : index
    %c0_67 = arith.constant 0 : index
    %136 = vector.load %arg12[%c0_65, %c0_66, %c0_67] : memref<2x64x32xf32, #tpu.memory_space<vmem>>, vector<1x64x32xf32>
    %137 = vector.shape_cast %136 : vector<1x64x32xf32> to vector<64x32xf32>
    %c0_68 = arith.constant 0 : index
    %c0_69 = arith.constant 0 : index
    %c0_70 = arith.constant 0 : index
    %138 = vector.load %arg13[%c0_68, %c0_69, %c0_70] : memref<2x1x32xf32, #tpu.memory_space<vmem>>, vector<1x1x32xf32>
    %139 = vector.shape_cast %138 : vector<1x1x32xf32> to vector<1x32xf32>
    %cst_71 = arith.constant dense<0.000000e+00> : vector<16x32xf32>
    %140 = tpu.matmul %135, %137, %cst_71 {dimension_numbers = #tpu.dot_dimension_numbers<[1], [0], [0], [1], [0, 0, 1, 1], [], []>} : vector<16x64xf32>, vector<64x32xf32>, vector<16x32xf32> -> vector<16x32xf32>
    %141 = vector.broadcast %139 : vector<1x32xf32> to vector<16x32xf32>
    %142 = arith.addf %140, %141 : vector<16x32xf32>
    %143 = arith.addf %126, %142 : vector<16x32xf32>
    %c0_72 = arith.constant 0 : index
    %c0_73 = arith.constant 0 : index
    %c0_74 = arith.constant 0 : index
    %144 = vector.load %arg16[%c0_72, %c0_73, %c0_74] : memref<2x1x32xf32, #tpu.memory_space<vmem>>, vector<1x1x32xf32>
    %145 = vector.shape_cast %144 : vector<1x1x32xf32> to vector<1x32xf32>
    %c0_75 = arith.constant 0 : index
    %c0_76 = arith.constant 0 : index
    %c0_77 = arith.constant 0 : index
    %146 = vector.load %arg17[%c0_75, %c0_76, %c0_77] : memref<2x1x32xf32, #tpu.memory_space<vmem>>, vector<1x1x32xf32>
    %147 = vector.shape_cast %146 : vector<1x1x32xf32> to vector<1x32xf32>
    %cst_78 = arith.constant dense<0.000000e+00> : vector<16xf32>
    %148 = vector.multi_reduction <add>, %143, %cst_78 [1] : vector<16x32xf32> to vector<16xf32>
    %149 = vector.shape_cast %148 : vector<16xf32> to vector<16x1xf32>
    %cst_79 = arith.constant 3.200000e+01 : f32
    %150 = vector.broadcast %cst_79 : f32 to vector<16x1xf32>
    %151 = arith.divf %149, %150 : vector<16x1xf32>
    %152 = vector.broadcast %151 : vector<16x1xf32> to vector<16x32xf32>
    %153 = arith.subf %143, %152 : vector<16x32xf32>
    %154 = arith.mulf %153, %153 : vector<16x32xf32>
    %cst_80 = arith.constant dense<0.000000e+00> : vector<16xf32>
    %155 = vector.multi_reduction <add>, %154, %cst_80 [1] : vector<16x32xf32> to vector<16xf32>
    %156 = vector.shape_cast %155 : vector<16xf32> to vector<16x1xf32>
    %cst_81 = arith.constant 3.200000e+01 : f32
    %157 = vector.broadcast %cst_81 : f32 to vector<16x1xf32>
    %158 = arith.divf %156, %157 : vector<16x1xf32>
    %cst_82 = arith.constant 9.99999974E-6 : f32
    %159 = vector.broadcast %cst_82 : f32 to vector<16x1xf32>
    %160 = arith.addf %158, %159 : vector<16x1xf32>
    %161 = math.rsqrt %160 : vector<16x1xf32>
    %162 = vector.broadcast %161 : vector<16x1xf32> to vector<16x32xf32>
    %163 = arith.mulf %153, %162 : vector<16x32xf32>
    %164 = vector.broadcast %145 : vector<1x32xf32> to vector<16x32xf32>
    %165 = arith.mulf %163, %164 : vector<16x32xf32>
    %166 = vector.broadcast %147 : vector<1x32xf32> to vector<16x32xf32>
    %167 = arith.addf %165, %166 : vector<16x32xf32>
    %c1_83 = arith.constant 1 : index
    %c0_84 = arith.constant 0 : index
    %c0_85 = arith.constant 0 : index
    %168 = vector.load %arg6[%c1_83, %c0_84, %c0_85] : memref<2x32x96xf32, #tpu.memory_space<vmem>>, vector<1x32x96xf32>
    %169 = vector.shape_cast %168 : vector<1x32x96xf32> to vector<32x96xf32>
    %c1_86 = arith.constant 1 : index
    %c0_87 = arith.constant 0 : index
    %c0_88 = arith.constant 0 : index
    %170 = vector.load %arg7[%c1_86, %c0_87, %c0_88] : memref<2x1x96xf32, #tpu.memory_space<vmem>>, vector<1x1x96xf32>
    %171 = vector.shape_cast %170 : vector<1x1x96xf32> to vector<1x96xf32>
    %c1_89 = arith.constant 1 : index
    %c0_90 = arith.constant 0 : index
    %c0_91 = arith.constant 0 : index
    %172 = vector.load %arg8[%c1_89, %c0_90, %c0_91] : memref<2x32x32xf32, #tpu.memory_space<vmem>>, vector<1x32x32xf32>
    %173 = vector.shape_cast %172 : vector<1x32x32xf32> to vector<32x32xf32>
    %c1_92 = arith.constant 1 : index
    %c0_93 = arith.constant 0 : index
    %c0_94 = arith.constant 0 : index
    %174 = vector.load %arg9[%c1_92, %c0_93, %c0_94] : memref<2x1x32xf32, #tpu.memory_space<vmem>>, vector<1x1x32xf32>
    %175 = vector.shape_cast %174 : vector<1x1x32xf32> to vector<1x32xf32>
    %cst_95 = arith.constant dense<0.000000e+00> : vector<16x96xf32>
    %176 = tpu.matmul %167, %169, %cst_95 {dimension_numbers = #tpu.dot_dimension_numbers<[1], [0], [0], [1], [0, 0, 1, 1], [], []>} : vector<16x32xf32>, vector<32x96xf32>, vector<16x96xf32> -> vector<16x96xf32>
    %177 = vector.broadcast %171 : vector<1x96xf32> to vector<16x96xf32>
    %178 = arith.addf %176, %177 : vector<16x96xf32>
    %179 = vector.extract_strided_slice %178 {offsets = [0, 0], sizes = [16, 32], strides = [1, 1]} : vector<16x96xf32> to vector<16x32xf32>
    %180 = vector.extract_strided_slice %178 {offsets = [0, 32], sizes = [16, 32], strides = [1, 1]} : vector<16x96xf32> to vector<16x32xf32>
    %181 = vector.extract_strided_slice %178 {offsets = [0, 64], sizes = [16, 32], strides = [1, 1]} : vector<16x96xf32> to vector<16x32xf32>
    %cst_96 = arith.constant 0.000000e+00 : f32
    %182 = vector.broadcast %cst_96 : f32 to vector<16x32xf32>
    %c0_97 = arith.constant 0 : index
    %c0_98 = arith.constant 0 : index
    %c0_99 = arith.constant 0 : index
    %183 = vector.load %arg5[%c0_97, %c0_98, %c0_99] : memref<4x1x32xf32, #tpu.memory_space<vmem>>, vector<1x1x32xf32>
    %184 = vector.shape_cast %183 : vector<1x1x32xf32> to vector<1x32xf32>
    %185 = vector.broadcast %184 : vector<1x32xf32> to vector<16x32xf32>
    %186 = arith.mulf %179, %185 : vector<16x32xf32>
    %cst_100 = arith.constant dense<0.000000e+00> : vector<16x16xf32>
    %187 = tpu.matmul %186, %180, %cst_100 {dimension_numbers = #tpu.dot_dimension_numbers<[1], [1], [0], [0], [0, 0, 1, 0], [], []>} : vector<16x32xf32>, vector<16x32xf32>, vector<16x16xf32> -> vector<16x16xf32>
    %188 = arith.addf %187, %0 : vector<16x16xf32>
    %cst_101 = arith.constant dense<0xFF800000> : vector<16xf32>
    %189 = vector.multi_reduction <maximumf>, %188, %cst_101 [1] : vector<16x16xf32> to vector<16xf32>
    %190 = vector.shape_cast %189 : vector<16xf32> to vector<16x1xf32>
    %191 = vector.broadcast %190 : vector<16x1xf32> to vector<16x16xf32>
    %192 = arith.subf %188, %191 : vector<16x16xf32>
    %193 = math.exp %192 : vector<16x16xf32>
    %cst_102 = arith.constant dense<0.000000e+00> : vector<16xf32>
    %194 = vector.multi_reduction <add>, %193, %cst_102 [1] : vector<16x16xf32> to vector<16xf32>
    %195 = vector.shape_cast %194 : vector<16xf32> to vector<16x1xf32>
    %196 = tpu.reciprocal %195 {approx = true} : vector<16x1xf32> -> vector<16x1xf32>
    %197 = vector.broadcast %196 : vector<16x1xf32> to vector<16x16xf32>
    %198 = arith.mulf %193, %197 : vector<16x16xf32>
    %199 = vector.broadcast %184 : vector<1x32xf32> to vector<16x32xf32>
    %200 = arith.mulf %181, %199 : vector<16x32xf32>
    %cst_103 = arith.constant dense<0.000000e+00> : vector<16x32xf32>
    %201 = tpu.matmul %198, %200, %cst_103 {dimension_numbers = #tpu.dot_dimension_numbers<[1], [0], [0], [1], [0, 0, 1, 1], [], []>} : vector<16x16xf32>, vector<16x32xf32>, vector<16x32xf32> -> vector<16x32xf32>
    %202 = arith.addf %182, %201 : vector<16x32xf32>
    %c1_104 = arith.constant 1 : index
    %c0_105 = arith.constant 0 : index
    %c0_106 = arith.constant 0 : index
    %203 = vector.load %arg5[%c1_104, %c0_105, %c0_106] : memref<4x1x32xf32, #tpu.memory_space<vmem>>, vector<1x1x32xf32>
    %204 = vector.shape_cast %203 : vector<1x1x32xf32> to vector<1x32xf32>
    %205 = vector.broadcast %204 : vector<1x32xf32> to vector<16x32xf32>
    %206 = arith.mulf %179, %205 : vector<16x32xf32>
    %cst_107 = arith.constant dense<0.000000e+00> : vector<16x16xf32>
    %207 = tpu.matmul %206, %180, %cst_107 {dimension_numbers = #tpu.dot_dimension_numbers<[1], [1], [0], [0], [0, 0, 1, 0], [], []>} : vector<16x32xf32>, vector<16x32xf32>, vector<16x16xf32> -> vector<16x16xf32>
    %208 = arith.addf %207, %0 : vector<16x16xf32>
    %cst_108 = arith.constant dense<0xFF800000> : vector<16xf32>
    %209 = vector.multi_reduction <maximumf>, %208, %cst_108 [1] : vector<16x16xf32> to vector<16xf32>
    %210 = vector.shape_cast %209 : vector<16xf32> to vector<16x1xf32>
    %211 = vector.broadcast %210 : vector<16x1xf32> to vector<16x16xf32>
    %212 = arith.subf %208, %211 : vector<16x16xf32>
    %213 = math.exp %212 : vector<16x16xf32>
    %cst_109 = arith.constant dense<0.000000e+00> : vector<16xf32>
    %214 = vector.multi_reduction <add>, %213, %cst_109 [1] : vector<16x16xf32> to vector<16xf32>
    %215 = vector.shape_cast %214 : vector<16xf32> to vector<16x1xf32>
    %216 = tpu.reciprocal %215 {approx = true} : vector<16x1xf32> -> vector<16x1xf32>
    %217 = vector.broadcast %216 : vector<16x1xf32> to vector<16x16xf32>
    %218 = arith.mulf %213, %217 : vector<16x16xf32>
    %219 = vector.broadcast %204 : vector<1x32xf32> to vector<16x32xf32>
    %220 = arith.mulf %181, %219 : vector<16x32xf32>
    %cst_110 = arith.constant dense<0.000000e+00> : vector<16x32xf32>
    %221 = tpu.matmul %218, %220, %cst_110 {dimension_numbers = #tpu.dot_dimension_numbers<[1], [0], [0], [1], [0, 0, 1, 1], [], []>} : vector<16x16xf32>, vector<16x32xf32>, vector<16x32xf32> -> vector<16x32xf32>
    %222 = arith.addf %202, %221 : vector<16x32xf32>
    %c2_111 = arith.constant 2 : index
    %c0_112 = arith.constant 0 : index
    %c0_113 = arith.constant 0 : index
    %223 = vector.load %arg5[%c2_111, %c0_112, %c0_113] : memref<4x1x32xf32, #tpu.memory_space<vmem>>, vector<1x1x32xf32>
    %224 = vector.shape_cast %223 : vector<1x1x32xf32> to vector<1x32xf32>
    %225 = vector.broadcast %224 : vector<1x32xf32> to vector<16x32xf32>
    %226 = arith.mulf %179, %225 : vector<16x32xf32>
    %cst_114 = arith.constant dense<0.000000e+00> : vector<16x16xf32>
    %227 = tpu.matmul %226, %180, %cst_114 {dimension_numbers = #tpu.dot_dimension_numbers<[1], [1], [0], [0], [0, 0, 1, 0], [], []>} : vector<16x32xf32>, vector<16x32xf32>, vector<16x16xf32> -> vector<16x16xf32>
    %228 = arith.addf %227, %0 : vector<16x16xf32>
    %cst_115 = arith.constant dense<0xFF800000> : vector<16xf32>
    %229 = vector.multi_reduction <maximumf>, %228, %cst_115 [1] : vector<16x16xf32> to vector<16xf32>
    %230 = vector.shape_cast %229 : vector<16xf32> to vector<16x1xf32>
    %231 = vector.broadcast %230 : vector<16x1xf32> to vector<16x16xf32>
    %232 = arith.subf %228, %231 : vector<16x16xf32>
    %233 = math.exp %232 : vector<16x16xf32>
    %cst_116 = arith.constant dense<0.000000e+00> : vector<16xf32>
    %234 = vector.multi_reduction <add>, %233, %cst_116 [1] : vector<16x16xf32> to vector<16xf32>
    %235 = vector.shape_cast %234 : vector<16xf32> to vector<16x1xf32>
    %236 = tpu.reciprocal %235 {approx = true} : vector<16x1xf32> -> vector<16x1xf32>
    %237 = vector.broadcast %236 : vector<16x1xf32> to vector<16x16xf32>
    %238 = arith.mulf %233, %237 : vector<16x16xf32>
    %239 = vector.broadcast %224 : vector<1x32xf32> to vector<16x32xf32>
    %240 = arith.mulf %181, %239 : vector<16x32xf32>
    %cst_117 = arith.constant dense<0.000000e+00> : vector<16x32xf32>
    %241 = tpu.matmul %238, %240, %cst_117 {dimension_numbers = #tpu.dot_dimension_numbers<[1], [0], [0], [1], [0, 0, 1, 1], [], []>} : vector<16x16xf32>, vector<16x32xf32>, vector<16x32xf32> -> vector<16x32xf32>
    %242 = arith.addf %222, %241 : vector<16x32xf32>
    %c3_118 = arith.constant 3 : index
    %c0_119 = arith.constant 0 : index
    %c0_120 = arith.constant 0 : index
    %243 = vector.load %arg5[%c3_118, %c0_119, %c0_120] : memref<4x1x32xf32, #tpu.memory_space<vmem>>, vector<1x1x32xf32>
    %244 = vector.shape_cast %243 : vector<1x1x32xf32> to vector<1x32xf32>
    %245 = vector.broadcast %244 : vector<1x32xf32> to vector<16x32xf32>
    %246 = arith.mulf %179, %245 : vector<16x32xf32>
    %cst_121 = arith.constant dense<0.000000e+00> : vector<16x16xf32>
    %247 = tpu.matmul %246, %180, %cst_121 {dimension_numbers = #tpu.dot_dimension_numbers<[1], [1], [0], [0], [0, 0, 1, 0], [], []>} : vector<16x32xf32>, vector<16x32xf32>, vector<16x16xf32> -> vector<16x16xf32>
    %248 = arith.addf %247, %0 : vector<16x16xf32>
    %cst_122 = arith.constant dense<0xFF800000> : vector<16xf32>
    %249 = vector.multi_reduction <maximumf>, %248, %cst_122 [1] : vector<16x16xf32> to vector<16xf32>
    %250 = vector.shape_cast %249 : vector<16xf32> to vector<16x1xf32>
    %251 = vector.broadcast %250 : vector<16x1xf32> to vector<16x16xf32>
    %252 = arith.subf %248, %251 : vector<16x16xf32>
    %253 = math.exp %252 : vector<16x16xf32>
    %cst_123 = arith.constant dense<0.000000e+00> : vector<16xf32>
    %254 = vector.multi_reduction <add>, %253, %cst_123 [1] : vector<16x16xf32> to vector<16xf32>
    %255 = vector.shape_cast %254 : vector<16xf32> to vector<16x1xf32>
    %256 = tpu.reciprocal %255 {approx = true} : vector<16x1xf32> -> vector<16x1xf32>
    %257 = vector.broadcast %256 : vector<16x1xf32> to vector<16x16xf32>
    %258 = arith.mulf %253, %257 : vector<16x16xf32>
    %259 = vector.broadcast %244 : vector<1x32xf32> to vector<16x32xf32>
    %260 = arith.mulf %181, %259 : vector<16x32xf32>
    %cst_124 = arith.constant dense<0.000000e+00> : vector<16x32xf32>
    %261 = tpu.matmul %258, %260, %cst_124 {dimension_numbers = #tpu.dot_dimension_numbers<[1], [0], [0], [1], [0, 0, 1, 1], [], []>} : vector<16x16xf32>, vector<16x32xf32>, vector<16x32xf32> -> vector<16x32xf32>
    %262 = arith.addf %242, %261 : vector<16x32xf32>
    %cst_125 = arith.constant dense<0.000000e+00> : vector<16x32xf32>
    %263 = tpu.matmul %262, %173, %cst_125 {dimension_numbers = #tpu.dot_dimension_numbers<[1], [0], [0], [1], [0, 0, 1, 1], [], []>} : vector<16x32xf32>, vector<32x32xf32>, vector<16x32xf32> -> vector<16x32xf32>
    %264 = vector.broadcast %175 : vector<1x32xf32> to vector<16x32xf32>
    %265 = arith.addf %263, %264 : vector<16x32xf32>
    %266 = arith.addf %167, %265 : vector<16x32xf32>
    %c1_126 = arith.constant 1 : index
    %c0_127 = arith.constant 0 : index
    %c0_128 = arith.constant 0 : index
    %267 = vector.load %arg14[%c1_126, %c0_127, %c0_128] : memref<2x1x32xf32, #tpu.memory_space<vmem>>, vector<1x1x32xf32>
    %268 = vector.shape_cast %267 : vector<1x1x32xf32> to vector<1x32xf32>
    %c1_129 = arith.constant 1 : index
    %c0_130 = arith.constant 0 : index
    %c0_131 = arith.constant 0 : index
    %269 = vector.load %arg15[%c1_129, %c0_130, %c0_131] : memref<2x1x32xf32, #tpu.memory_space<vmem>>, vector<1x1x32xf32>
    %270 = vector.shape_cast %269 : vector<1x1x32xf32> to vector<1x32xf32>
    %cst_132 = arith.constant dense<0.000000e+00> : vector<16xf32>
    %271 = vector.multi_reduction <add>, %266, %cst_132 [1] : vector<16x32xf32> to vector<16xf32>
    %272 = vector.shape_cast %271 : vector<16xf32> to vector<16x1xf32>
    %cst_133 = arith.constant 3.200000e+01 : f32
    %273 = vector.broadcast %cst_133 : f32 to vector<16x1xf32>
    %274 = arith.divf %272, %273 : vector<16x1xf32>
    %275 = vector.broadcast %274 : vector<16x1xf32> to vector<16x32xf32>
    %276 = arith.subf %266, %275 : vector<16x32xf32>
    %277 = arith.mulf %276, %276 : vector<16x32xf32>
    %cst_134 = arith.constant dense<0.000000e+00> : vector<16xf32>
    %278 = vector.multi_reduction <add>, %277, %cst_134 [1] : vector<16x32xf32> to vector<16xf32>
    %279 = vector.shape_cast %278 : vector<16xf32> to vector<16x1xf32>
    %cst_135 = arith.constant 3.200000e+01 : f32
    %280 = vector.broadcast %cst_135 : f32 to vector<16x1xf32>
    %281 = arith.divf %279, %280 : vector<16x1xf32>
    %cst_136 = arith.constant 9.99999974E-6 : f32
    %282 = vector.broadcast %cst_136 : f32 to vector<16x1xf32>
    %283 = arith.addf %281, %282 : vector<16x1xf32>
    %284 = math.rsqrt %283 : vector<16x1xf32>
    %285 = vector.broadcast %284 : vector<16x1xf32> to vector<16x32xf32>
    %286 = arith.mulf %276, %285 : vector<16x32xf32>
    %287 = vector.broadcast %268 : vector<1x32xf32> to vector<16x32xf32>
    %288 = arith.mulf %286, %287 : vector<16x32xf32>
    %289 = vector.broadcast %270 : vector<1x32xf32> to vector<16x32xf32>
    %290 = arith.addf %288, %289 : vector<16x32xf32>
    %c1_137 = arith.constant 1 : index
    %c0_138 = arith.constant 0 : index
    %c0_139 = arith.constant 0 : index
    %291 = vector.load %arg10[%c1_137, %c0_138, %c0_139] : memref<2x32x64xf32, #tpu.memory_space<vmem>>, vector<1x32x64xf32>
    %292 = vector.shape_cast %291 : vector<1x32x64xf32> to vector<32x64xf32>
    %c1_140 = arith.constant 1 : index
    %c0_141 = arith.constant 0 : index
    %c0_142 = arith.constant 0 : index
    %293 = vector.load %arg11[%c1_140, %c0_141, %c0_142] : memref<2x1x64xf32, #tpu.memory_space<vmem>>, vector<1x1x64xf32>
    %294 = vector.shape_cast %293 : vector<1x1x64xf32> to vector<1x64xf32>
    %cst_143 = arith.constant dense<0.000000e+00> : vector<16x64xf32>
    %295 = tpu.matmul %290, %292, %cst_143 {dimension_numbers = #tpu.dot_dimension_numbers<[1], [0], [0], [1], [0, 0, 1, 1], [], []>} : vector<16x32xf32>, vector<32x64xf32>, vector<16x64xf32> -> vector<16x64xf32>
    %296 = vector.broadcast %294 : vector<1x64xf32> to vector<16x64xf32>
    %297 = arith.addf %295, %296 : vector<16x64xf32>
    %cst_144 = arith.constant 0.000000e+00 : f32
    %298 = vector.broadcast %cst_144 : f32 to vector<16x64xf32>
    %299 = arith.maximumf %297, %298 : vector<16x64xf32>
    %c1_145 = arith.constant 1 : index
    %c0_146 = arith.constant 0 : index
    %c0_147 = arith.constant 0 : index
    %300 = vector.load %arg12[%c1_145, %c0_146, %c0_147] : memref<2x64x32xf32, #tpu.memory_space<vmem>>, vector<1x64x32xf32>
    %301 = vector.shape_cast %300 : vector<1x64x32xf32> to vector<64x32xf32>
    %c1_148 = arith.constant 1 : index
    %c0_149 = arith.constant 0 : index
    %c0_150 = arith.constant 0 : index
    %302 = vector.load %arg13[%c1_148, %c0_149, %c0_150] : memref<2x1x32xf32, #tpu.memory_space<vmem>>, vector<1x1x32xf32>
    %303 = vector.shape_cast %302 : vector<1x1x32xf32> to vector<1x32xf32>
    %cst_151 = arith.constant dense<0.000000e+00> : vector<16x32xf32>
    %304 = tpu.matmul %299, %301, %cst_151 {dimension_numbers = #tpu.dot_dimension_numbers<[1], [0], [0], [1], [0, 0, 1, 1], [], []>} : vector<16x64xf32>, vector<64x32xf32>, vector<16x32xf32> -> vector<16x32xf32>
    %305 = vector.broadcast %303 : vector<1x32xf32> to vector<16x32xf32>
    %306 = arith.addf %304, %305 : vector<16x32xf32>
    %307 = arith.addf %290, %306 : vector<16x32xf32>
    %c1_152 = arith.constant 1 : index
    %c0_153 = arith.constant 0 : index
    %c0_154 = arith.constant 0 : index
    %308 = vector.load %arg16[%c1_152, %c0_153, %c0_154] : memref<2x1x32xf32, #tpu.memory_space<vmem>>, vector<1x1x32xf32>
    %309 = vector.shape_cast %308 : vector<1x1x32xf32> to vector<1x32xf32>
    %c1_155 = arith.constant 1 : index
    %c0_156 = arith.constant 0 : index
    %c0_157 = arith.constant 0 : index
    %310 = vector.load %arg17[%c1_155, %c0_156, %c0_157] : memref<2x1x32xf32, #tpu.memory_space<vmem>>, vector<1x1x32xf32>
    %311 = vector.shape_cast %310 : vector<1x1x32xf32> to vector<1x32xf32>
    %cst_158 = arith.constant dense<0.000000e+00> : vector<16xf32>
    %312 = vector.multi_reduction <add>, %307, %cst_158 [1] : vector<16x32xf32> to vector<16xf32>
    %313 = vector.shape_cast %312 : vector<16xf32> to vector<16x1xf32>
    %cst_159 = arith.constant 3.200000e+01 : f32
    %314 = vector.broadcast %cst_159 : f32 to vector<16x1xf32>
    %315 = arith.divf %313, %314 : vector<16x1xf32>
    %316 = vector.broadcast %315 : vector<16x1xf32> to vector<16x32xf32>
    %317 = arith.subf %307, %316 : vector<16x32xf32>
    %318 = arith.mulf %317, %317 : vector<16x32xf32>
    %cst_160 = arith.constant dense<0.000000e+00> : vector<16xf32>
    %319 = vector.multi_reduction <add>, %318, %cst_160 [1] : vector<16x32xf32> to vector<16xf32>
    %320 = vector.shape_cast %319 : vector<16xf32> to vector<16x1xf32>
    %cst_161 = arith.constant 3.200000e+01 : f32
    %321 = vector.broadcast %cst_161 : f32 to vector<16x1xf32>
    %322 = arith.divf %320, %321 : vector<16x1xf32>
    %cst_162 = arith.constant 9.99999974E-6 : f32
    %323 = vector.broadcast %cst_162 : f32 to vector<16x1xf32>
    %324 = arith.addf %322, %323 : vector<16x1xf32>
    %325 = math.rsqrt %324 : vector<16x1xf32>
    %326 = vector.broadcast %325 : vector<16x1xf32> to vector<16x32xf32>
    %327 = arith.mulf %317, %326 : vector<16x32xf32>
    %328 = vector.broadcast %309 : vector<1x32xf32> to vector<16x32xf32>
    %329 = arith.mulf %327, %328 : vector<16x32xf32>
    %330 = vector.broadcast %311 : vector<1x32xf32> to vector<16x32xf32>
    %331 = arith.addf %329, %330 : vector<16x32xf32>
    %c0_163 = arith.constant 0 : index
    %c0_164 = arith.constant 0 : index
    %332 = vector.load %arg36[%c0_163, %c0_164] : memref<1x32xf32, #tpu.memory_space<vmem>>, vector<1x32xf32>
    %c0_165 = arith.constant 0 : index
    %c0_166 = arith.constant 0 : index
    %333 = vector.load %arg37[%c0_165, %c0_166] : memref<1x32xf32, #tpu.memory_space<vmem>>, vector<1x32xf32>
    %cst_167 = arith.constant dense<0.000000e+00> : vector<16xf32>
    %334 = vector.multi_reduction <add>, %331, %cst_167 [1] : vector<16x32xf32> to vector<16xf32>
    %335 = vector.shape_cast %334 : vector<16xf32> to vector<16x1xf32>
    %cst_168 = arith.constant 3.200000e+01 : f32
    %336 = vector.broadcast %cst_168 : f32 to vector<16x1xf32>
    %337 = arith.divf %335, %336 : vector<16x1xf32>
    %338 = vector.broadcast %337 : vector<16x1xf32> to vector<16x32xf32>
    %339 = arith.subf %331, %338 : vector<16x32xf32>
    %340 = arith.mulf %339, %339 : vector<16x32xf32>
    %cst_169 = arith.constant dense<0.000000e+00> : vector<16xf32>
    %341 = vector.multi_reduction <add>, %340, %cst_169 [1] : vector<16x32xf32> to vector<16xf32>
    %342 = vector.shape_cast %341 : vector<16xf32> to vector<16x1xf32>
    %cst_170 = arith.constant 3.200000e+01 : f32
    %343 = vector.broadcast %cst_170 : f32 to vector<16x1xf32>
    %344 = arith.divf %342, %343 : vector<16x1xf32>
    %cst_171 = arith.constant 9.99999974E-6 : f32
    %345 = vector.broadcast %cst_171 : f32 to vector<16x1xf32>
    %346 = arith.addf %344, %345 : vector<16x1xf32>
    %347 = math.rsqrt %346 : vector<16x1xf32>
    %348 = vector.broadcast %347 : vector<16x1xf32> to vector<16x32xf32>
    %349 = arith.mulf %339, %348 : vector<16x32xf32>
    %350 = vector.broadcast %332 : vector<1x32xf32> to vector<16x32xf32>
    %351 = arith.mulf %349, %350 : vector<16x32xf32>
    %352 = vector.broadcast %333 : vector<1x32xf32> to vector<16x32xf32>
    %353 = arith.addf %351, %352 : vector<16x32xf32>
    %c0_172 = arith.constant 0 : index
    %c0_173 = arith.constant 0 : index
    %354 = vector.load %arg1[%c0_172, %c0_173] : memref<16x32xf32, #tpu.memory_space<vmem>>, vector<16x32xf32>
    %c0_174 = arith.constant 0 : index
    %c0_175 = arith.constant 0 : index
    %c0_176 = arith.constant 0 : index
    %355 = vector.load %arg18[%c0_174, %c0_175, %c0_176] : memref<2x32x96xf32, #tpu.memory_space<vmem>>, vector<1x32x96xf32>
    %356 = vector.shape_cast %355 : vector<1x32x96xf32> to vector<32x96xf32>
    %c0_177 = arith.constant 0 : index
    %c0_178 = arith.constant 0 : index
    %c0_179 = arith.constant 0 : index
    %357 = vector.load %arg19[%c0_177, %c0_178, %c0_179] : memref<2x1x96xf32, #tpu.memory_space<vmem>>, vector<1x1x96xf32>
    %358 = vector.shape_cast %357 : vector<1x1x96xf32> to vector<1x96xf32>
    %c0_180 = arith.constant 0 : index
    %c0_181 = arith.constant 0 : index
    %c0_182 = arith.constant 0 : index
    %359 = vector.load %arg20[%c0_180, %c0_181, %c0_182] : memref<2x32x32xf32, #tpu.memory_space<vmem>>, vector<1x32x32xf32>
    %360 = vector.shape_cast %359 : vector<1x32x32xf32> to vector<32x32xf32>
    %c0_183 = arith.constant 0 : index
    %c0_184 = arith.constant 0 : index
    %c0_185 = arith.constant 0 : index
    %361 = vector.load %arg21[%c0_183, %c0_184, %c0_185] : memref<2x1x32xf32, #tpu.memory_space<vmem>>, vector<1x1x32xf32>
    %362 = vector.shape_cast %361 : vector<1x1x32xf32> to vector<1x32xf32>
    %cst_186 = arith.constant dense<0.000000e+00> : vector<16x96xf32>
    %363 = tpu.matmul %354, %356, %cst_186 {dimension_numbers = #tpu.dot_dimension_numbers<[1], [0], [0], [1], [0, 0, 1, 1], [], []>} : vector<16x32xf32>, vector<32x96xf32>, vector<16x96xf32> -> vector<16x96xf32>
    %364 = vector.broadcast %358 : vector<1x96xf32> to vector<16x96xf32>
    %365 = arith.addf %363, %364 : vector<16x96xf32>
    %366 = vector.extract_strided_slice %365 {offsets = [0, 0], sizes = [16, 32], strides = [1, 1]} : vector<16x96xf32> to vector<16x32xf32>
    %367 = vector.extract_strided_slice %365 {offsets = [0, 32], sizes = [16, 32], strides = [1, 1]} : vector<16x96xf32> to vector<16x32xf32>
    %368 = vector.extract_strided_slice %365 {offsets = [0, 64], sizes = [16, 32], strides = [1, 1]} : vector<16x96xf32> to vector<16x32xf32>
    %cst_187 = arith.constant 0.000000e+00 : f32
    %369 = vector.broadcast %cst_187 : f32 to vector<16x32xf32>
    %c0_188 = arith.constant 0 : index
    %c0_189 = arith.constant 0 : index
    %c0_190 = arith.constant 0 : index
    %370 = vector.load %arg5[%c0_188, %c0_189, %c0_190] : memref<4x1x32xf32, #tpu.memory_space<vmem>>, vector<1x1x32xf32>
    %371 = vector.shape_cast %370 : vector<1x1x32xf32> to vector<1x32xf32>
    %372 = vector.broadcast %371 : vector<1x32xf32> to vector<16x32xf32>
    %373 = arith.mulf %366, %372 : vector<16x32xf32>
    %cst_191 = arith.constant dense<0.000000e+00> : vector<16x16xf32>
    %374 = tpu.matmul %373, %367, %cst_191 {dimension_numbers = #tpu.dot_dimension_numbers<[1], [1], [0], [0], [0, 0, 1, 0], [], []>} : vector<16x32xf32>, vector<16x32xf32>, vector<16x16xf32> -> vector<16x16xf32>
    %375 = arith.addf %374, %1 : vector<16x16xf32>
    %cst_192 = arith.constant dense<0xFF800000> : vector<16xf32>
    %376 = vector.multi_reduction <maximumf>, %375, %cst_192 [1] : vector<16x16xf32> to vector<16xf32>
    %377 = vector.shape_cast %376 : vector<16xf32> to vector<16x1xf32>
    %378 = vector.broadcast %377 : vector<16x1xf32> to vector<16x16xf32>
    %379 = arith.subf %375, %378 : vector<16x16xf32>
    %380 = math.exp %379 : vector<16x16xf32>
    %cst_193 = arith.constant dense<0.000000e+00> : vector<16xf32>
    %381 = vector.multi_reduction <add>, %380, %cst_193 [1] : vector<16x16xf32> to vector<16xf32>
    %382 = vector.shape_cast %381 : vector<16xf32> to vector<16x1xf32>
    %383 = tpu.reciprocal %382 {approx = true} : vector<16x1xf32> -> vector<16x1xf32>
    %384 = vector.broadcast %383 : vector<16x1xf32> to vector<16x16xf32>
    %385 = arith.mulf %380, %384 : vector<16x16xf32>
    %386 = vector.broadcast %371 : vector<1x32xf32> to vector<16x32xf32>
    %387 = arith.mulf %368, %386 : vector<16x32xf32>
    %cst_194 = arith.constant dense<0.000000e+00> : vector<16x32xf32>
    %388 = tpu.matmul %385, %387, %cst_194 {dimension_numbers = #tpu.dot_dimension_numbers<[1], [0], [0], [1], [0, 0, 1, 1], [], []>} : vector<16x16xf32>, vector<16x32xf32>, vector<16x32xf32> -> vector<16x32xf32>
    %389 = arith.addf %369, %388 : vector<16x32xf32>
    %c1_195 = arith.constant 1 : index
    %c0_196 = arith.constant 0 : index
    %c0_197 = arith.constant 0 : index
    %390 = vector.load %arg5[%c1_195, %c0_196, %c0_197] : memref<4x1x32xf32, #tpu.memory_space<vmem>>, vector<1x1x32xf32>
    %391 = vector.shape_cast %390 : vector<1x1x32xf32> to vector<1x32xf32>
    %392 = vector.broadcast %391 : vector<1x32xf32> to vector<16x32xf32>
    %393 = arith.mulf %366, %392 : vector<16x32xf32>
    %cst_198 = arith.constant dense<0.000000e+00> : vector<16x16xf32>
    %394 = tpu.matmul %393, %367, %cst_198 {dimension_numbers = #tpu.dot_dimension_numbers<[1], [1], [0], [0], [0, 0, 1, 0], [], []>} : vector<16x32xf32>, vector<16x32xf32>, vector<16x16xf32> -> vector<16x16xf32>
    %395 = arith.addf %394, %1 : vector<16x16xf32>
    %cst_199 = arith.constant dense<0xFF800000> : vector<16xf32>
    %396 = vector.multi_reduction <maximumf>, %395, %cst_199 [1] : vector<16x16xf32> to vector<16xf32>
    %397 = vector.shape_cast %396 : vector<16xf32> to vector<16x1xf32>
    %398 = vector.broadcast %397 : vector<16x1xf32> to vector<16x16xf32>
    %399 = arith.subf %395, %398 : vector<16x16xf32>
    %400 = math.exp %399 : vector<16x16xf32>
    %cst_200 = arith.constant dense<0.000000e+00> : vector<16xf32>
    %401 = vector.multi_reduction <add>, %400, %cst_200 [1] : vector<16x16xf32> to vector<16xf32>
    %402 = vector.shape_cast %401 : vector<16xf32> to vector<16x1xf32>
    %403 = tpu.reciprocal %402 {approx = true} : vector<16x1xf32> -> vector<16x1xf32>
    %404 = vector.broadcast %403 : vector<16x1xf32> to vector<16x16xf32>
    %405 = arith.mulf %400, %404 : vector<16x16xf32>
    %406 = vector.broadcast %391 : vector<1x32xf32> to vector<16x32xf32>
    %407 = arith.mulf %368, %406 : vector<16x32xf32>
    %cst_201 = arith.constant dense<0.000000e+00> : vector<16x32xf32>
    %408 = tpu.matmul %405, %407, %cst_201 {dimension_numbers = #tpu.dot_dimension_numbers<[1], [0], [0], [1], [0, 0, 1, 1], [], []>} : vector<16x16xf32>, vector<16x32xf32>, vector<16x32xf32> -> vector<16x32xf32>
    %409 = arith.addf %389, %408 : vector<16x32xf32>
    %c2_202 = arith.constant 2 : index
    %c0_203 = arith.constant 0 : index
    %c0_204 = arith.constant 0 : index
    %410 = vector.load %arg5[%c2_202, %c0_203, %c0_204] : memref<4x1x32xf32, #tpu.memory_space<vmem>>, vector<1x1x32xf32>
    %411 = vector.shape_cast %410 : vector<1x1x32xf32> to vector<1x32xf32>
    %412 = vector.broadcast %411 : vector<1x32xf32> to vector<16x32xf32>
    %413 = arith.mulf %366, %412 : vector<16x32xf32>
    %cst_205 = arith.constant dense<0.000000e+00> : vector<16x16xf32>
    %414 = tpu.matmul %413, %367, %cst_205 {dimension_numbers = #tpu.dot_dimension_numbers<[1], [1], [0], [0], [0, 0, 1, 0], [], []>} : vector<16x32xf32>, vector<16x32xf32>, vector<16x16xf32> -> vector<16x16xf32>
    %415 = arith.addf %414, %1 : vector<16x16xf32>
    %cst_206 = arith.constant dense<0xFF800000> : vector<16xf32>
    %416 = vector.multi_reduction <maximumf>, %415, %cst_206 [1] : vector<16x16xf32> to vector<16xf32>
    %417 = vector.shape_cast %416 : vector<16xf32> to vector<16x1xf32>
    %418 = vector.broadcast %417 : vector<16x1xf32> to vector<16x16xf32>
    %419 = arith.subf %415, %418 : vector<16x16xf32>
    %420 = math.exp %419 : vector<16x16xf32>
    %cst_207 = arith.constant dense<0.000000e+00> : vector<16xf32>
    %421 = vector.multi_reduction <add>, %420, %cst_207 [1] : vector<16x16xf32> to vector<16xf32>
    %422 = vector.shape_cast %421 : vector<16xf32> to vector<16x1xf32>
    %423 = tpu.reciprocal %422 {approx = true} : vector<16x1xf32> -> vector<16x1xf32>
    %424 = vector.broadcast %423 : vector<16x1xf32> to vector<16x16xf32>
    %425 = arith.mulf %420, %424 : vector<16x16xf32>
    %426 = vector.broadcast %411 : vector<1x32xf32> to vector<16x32xf32>
    %427 = arith.mulf %368, %426 : vector<16x32xf32>
    %cst_208 = arith.constant dense<0.000000e+00> : vector<16x32xf32>
    %428 = tpu.matmul %425, %427, %cst_208 {dimension_numbers = #tpu.dot_dimension_numbers<[1], [0], [0], [1], [0, 0, 1, 1], [], []>} : vector<16x16xf32>, vector<16x32xf32>, vector<16x32xf32> -> vector<16x32xf32>
    %429 = arith.addf %409, %428 : vector<16x32xf32>
    %c3_209 = arith.constant 3 : index
    %c0_210 = arith.constant 0 : index
    %c0_211 = arith.constant 0 : index
    %430 = vector.load %arg5[%c3_209, %c0_210, %c0_211] : memref<4x1x32xf32, #tpu.memory_space<vmem>>, vector<1x1x32xf32>
    %431 = vector.shape_cast %430 : vector<1x1x32xf32> to vector<1x32xf32>
    %432 = vector.broadcast %431 : vector<1x32xf32> to vector<16x32xf32>
    %433 = arith.mulf %366, %432 : vector<16x32xf32>
    %cst_212 = arith.constant dense<0.000000e+00> : vector<16x16xf32>
    %434 = tpu.matmul %433, %367, %cst_212 {dimension_numbers = #tpu.dot_dimension_numbers<[1], [1], [0], [0], [0, 0, 1, 0], [], []>} : vector<16x32xf32>, vector<16x32xf32>, vector<16x16xf32> -> vector<16x16xf32>
    %435 = arith.addf %434, %1 : vector<16x16xf32>
    %cst_213 = arith.constant dense<0xFF800000> : vector<16xf32>
    %436 = vector.multi_reduction <maximumf>, %435, %cst_213 [1] : vector<16x16xf32> to vector<16xf32>
    %437 = vector.shape_cast %436 : vector<16xf32> to vector<16x1xf32>
    %438 = vector.broadcast %437 : vector<16x1xf32> to vector<16x16xf32>
    %439 = arith.subf %435, %438 : vector<16x16xf32>
    %440 = math.exp %439 : vector<16x16xf32>
    %cst_214 = arith.constant dense<0.000000e+00> : vector<16xf32>
    %441 = vector.multi_reduction <add>, %440, %cst_214 [1] : vector<16x16xf32> to vector<16xf32>
    %442 = vector.shape_cast %441 : vector<16xf32> to vector<16x1xf32>
    %443 = tpu.reciprocal %442 {approx = true} : vector<16x1xf32> -> vector<16x1xf32>
    %444 = vector.broadcast %443 : vector<16x1xf32> to vector<16x16xf32>
    %445 = arith.mulf %440, %444 : vector<16x16xf32>
    %446 = vector.broadcast %431 : vector<1x32xf32> to vector<16x32xf32>
    %447 = arith.mulf %368, %446 : vector<16x32xf32>
    %cst_215 = arith.constant dense<0.000000e+00> : vector<16x32xf32>
    %448 = tpu.matmul %445, %447, %cst_215 {dimension_numbers = #tpu.dot_dimension_numbers<[1], [0], [0], [1], [0, 0, 1, 1], [], []>} : vector<16x16xf32>, vector<16x32xf32>, vector<16x32xf32> -> vector<16x32xf32>
    %449 = arith.addf %429, %448 : vector<16x32xf32>
    %cst_216 = arith.constant dense<0.000000e+00> : vector<16x32xf32>
    %450 = tpu.matmul %449, %360, %cst_216 {dimension_numbers = #tpu.dot_dimension_numbers<[1], [0], [0], [1], [0, 0, 1, 1], [], []>} : vector<16x32xf32>, vector<32x32xf32>, vector<16x32xf32> -> vector<16x32xf32>
    %451 = vector.broadcast %362 : vector<1x32xf32> to vector<16x32xf32>
    %452 = arith.addf %450, %451 : vector<16x32xf32>
    %453 = arith.addf %354, %452 : vector<16x32xf32>
    %c0_217 = arith.constant 0 : index
    %c0_218 = arith.constant 0 : index
    %c0_219 = arith.constant 0 : index
    %454 = vector.load %arg30[%c0_217, %c0_218, %c0_219] : memref<2x1x32xf32, #tpu.memory_space<vmem>>, vector<1x1x32xf32>
    %455 = vector.shape_cast %454 : vector<1x1x32xf32> to vector<1x32xf32>
    %c0_220 = arith.constant 0 : index
    %c0_221 = arith.constant 0 : index
    %c0_222 = arith.constant 0 : index
    %456 = vector.load %arg31[%c0_220, %c0_221, %c0_222] : memref<2x1x32xf32, #tpu.memory_space<vmem>>, vector<1x1x32xf32>
    %457 = vector.shape_cast %456 : vector<1x1x32xf32> to vector<1x32xf32>
    %cst_223 = arith.constant dense<0.000000e+00> : vector<16xf32>
    %458 = vector.multi_reduction <add>, %453, %cst_223 [1] : vector<16x32xf32> to vector<16xf32>
    %459 = vector.shape_cast %458 : vector<16xf32> to vector<16x1xf32>
    %cst_224 = arith.constant 3.200000e+01 : f32
    %460 = vector.broadcast %cst_224 : f32 to vector<16x1xf32>
    %461 = arith.divf %459, %460 : vector<16x1xf32>
    %462 = vector.broadcast %461 : vector<16x1xf32> to vector<16x32xf32>
    %463 = arith.subf %453, %462 : vector<16x32xf32>
    %464 = arith.mulf %463, %463 : vector<16x32xf32>
    %cst_225 = arith.constant dense<0.000000e+00> : vector<16xf32>
    %465 = vector.multi_reduction <add>, %464, %cst_225 [1] : vector<16x32xf32> to vector<16xf32>
    %466 = vector.shape_cast %465 : vector<16xf32> to vector<16x1xf32>
    %cst_226 = arith.constant 3.200000e+01 : f32
    %467 = vector.broadcast %cst_226 : f32 to vector<16x1xf32>
    %468 = arith.divf %466, %467 : vector<16x1xf32>
    %cst_227 = arith.constant 9.99999974E-6 : f32
    %469 = vector.broadcast %cst_227 : f32 to vector<16x1xf32>
    %470 = arith.addf %468, %469 : vector<16x1xf32>
    %471 = math.rsqrt %470 : vector<16x1xf32>
    %472 = vector.broadcast %471 : vector<16x1xf32> to vector<16x32xf32>
    %473 = arith.mulf %463, %472 : vector<16x32xf32>
    %474 = vector.broadcast %455 : vector<1x32xf32> to vector<16x32xf32>
    %475 = arith.mulf %473, %474 : vector<16x32xf32>
    %476 = vector.broadcast %457 : vector<1x32xf32> to vector<16x32xf32>
    %477 = arith.addf %475, %476 : vector<16x32xf32>
    %c0_228 = arith.constant 0 : index
    %c0_229 = arith.constant 0 : index
    %c0_230 = arith.constant 0 : index
    %478 = vector.load %arg22[%c0_228, %c0_229, %c0_230] : memref<2x32x96xf32, #tpu.memory_space<vmem>>, vector<1x32x96xf32>
    %479 = vector.shape_cast %478 : vector<1x32x96xf32> to vector<32x96xf32>
    %c0_231 = arith.constant 0 : index
    %c0_232 = arith.constant 0 : index
    %c0_233 = arith.constant 0 : index
    %480 = vector.load %arg23[%c0_231, %c0_232, %c0_233] : memref<2x1x96xf32, #tpu.memory_space<vmem>>, vector<1x1x96xf32>
    %481 = vector.shape_cast %480 : vector<1x1x96xf32> to vector<1x96xf32>
    %c0_234 = arith.constant 0 : index
    %c0_235 = arith.constant 0 : index
    %c0_236 = arith.constant 0 : index
    %482 = vector.load %arg24[%c0_234, %c0_235, %c0_236] : memref<2x32x32xf32, #tpu.memory_space<vmem>>, vector<1x32x32xf32>
    %483 = vector.shape_cast %482 : vector<1x32x32xf32> to vector<32x32xf32>
    %c0_237 = arith.constant 0 : index
    %c0_238 = arith.constant 0 : index
    %c0_239 = arith.constant 0 : index
    %484 = vector.load %arg25[%c0_237, %c0_238, %c0_239] : memref<2x1x32xf32, #tpu.memory_space<vmem>>, vector<1x1x32xf32>
    %485 = vector.shape_cast %484 : vector<1x1x32xf32> to vector<1x32xf32>
    %486 = vector.extract_strided_slice %479 {offsets = [0, 0], sizes = [32, 32], strides = [1, 1]} : vector<32x96xf32> to vector<32x32xf32>
    %487 = vector.extract_strided_slice %481 {offsets = [0, 0], sizes = [1, 32], strides = [1, 1]} : vector<1x96xf32> to vector<1x32xf32>
    %cst_240 = arith.constant dense<0.000000e+00> : vector<16x32xf32>
    %488 = tpu.matmul %477, %486, %cst_240 {dimension_numbers = #tpu.dot_dimension_numbers<[1], [0], [0], [1], [0, 0, 1, 1], [], []>} : vector<16x32xf32>, vector<32x32xf32>, vector<16x32xf32> -> vector<16x32xf32>
    %489 = vector.broadcast %487 : vector<1x32xf32> to vector<16x32xf32>
    %490 = arith.addf %488, %489 : vector<16x32xf32>
    %491 = vector.extract_strided_slice %479 {offsets = [0, 32], sizes = [32, 64], strides = [1, 1]} : vector<32x96xf32> to vector<32x64xf32>
    %492 = vector.extract_strided_slice %481 {offsets = [0, 32], sizes = [1, 64], strides = [1, 1]} : vector<1x96xf32> to vector<1x64xf32>
    %cst_241 = arith.constant dense<0.000000e+00> : vector<16x64xf32>
    %493 = tpu.matmul %353, %491, %cst_241 {dimension_numbers = #tpu.dot_dimension_numbers<[1], [0], [0], [1], [0, 0, 1, 1], [], []>} : vector<16x32xf32>, vector<32x64xf32>, vector<16x64xf32> -> vector<16x64xf32>
    %494 = vector.broadcast %492 : vector<1x64xf32> to vector<16x64xf32>
    %495 = arith.addf %493, %494 : vector<16x64xf32>
    %496 = vector.extract_strided_slice %495 {offsets = [0, 0], sizes = [16, 32], strides = [1, 1]} : vector<16x64xf32> to vector<16x32xf32>
    %497 = vector.extract_strided_slice %495 {offsets = [0, 32], sizes = [16, 32], strides = [1, 1]} : vector<16x64xf32> to vector<16x32xf32>
    %cst_242 = arith.constant 0.000000e+00 : f32
    %498 = vector.broadcast %cst_242 : f32 to vector<16x32xf32>
    %c0_243 = arith.constant 0 : index
    %c0_244 = arith.constant 0 : index
    %c0_245 = arith.constant 0 : index
    %499 = vector.load %arg5[%c0_243, %c0_244, %c0_245] : memref<4x1x32xf32, #tpu.memory_space<vmem>>, vector<1x1x32xf32>
    %500 = vector.shape_cast %499 : vector<1x1x32xf32> to vector<1x32xf32>
    %501 = vector.broadcast %500 : vector<1x32xf32> to vector<16x32xf32>
    %502 = arith.mulf %490, %501 : vector<16x32xf32>
    %cst_246 = arith.constant dense<0.000000e+00> : vector<16x16xf32>
    %503 = tpu.matmul %502, %496, %cst_246 {dimension_numbers = #tpu.dot_dimension_numbers<[1], [1], [0], [0], [0, 0, 1, 0], [], []>} : vector<16x32xf32>, vector<16x32xf32>, vector<16x16xf32> -> vector<16x16xf32>
    %504 = arith.addf %503, %2 : vector<16x16xf32>
    %cst_247 = arith.constant dense<0xFF800000> : vector<16xf32>
    %505 = vector.multi_reduction <maximumf>, %504, %cst_247 [1] : vector<16x16xf32> to vector<16xf32>
    %506 = vector.shape_cast %505 : vector<16xf32> to vector<16x1xf32>
    %507 = vector.broadcast %506 : vector<16x1xf32> to vector<16x16xf32>
    %508 = arith.subf %504, %507 : vector<16x16xf32>
    %509 = math.exp %508 : vector<16x16xf32>
    %cst_248 = arith.constant dense<0.000000e+00> : vector<16xf32>
    %510 = vector.multi_reduction <add>, %509, %cst_248 [1] : vector<16x16xf32> to vector<16xf32>
    %511 = vector.shape_cast %510 : vector<16xf32> to vector<16x1xf32>
    %512 = tpu.reciprocal %511 {approx = true} : vector<16x1xf32> -> vector<16x1xf32>
    %513 = vector.broadcast %512 : vector<16x1xf32> to vector<16x16xf32>
    %514 = arith.mulf %509, %513 : vector<16x16xf32>
    %515 = vector.broadcast %500 : vector<1x32xf32> to vector<16x32xf32>
    %516 = arith.mulf %497, %515 : vector<16x32xf32>
    %cst_249 = arith.constant dense<0.000000e+00> : vector<16x32xf32>
    %517 = tpu.matmul %514, %516, %cst_249 {dimension_numbers = #tpu.dot_dimension_numbers<[1], [0], [0], [1], [0, 0, 1, 1], [], []>} : vector<16x16xf32>, vector<16x32xf32>, vector<16x32xf32> -> vector<16x32xf32>
    %518 = arith.addf %498, %517 : vector<16x32xf32>
    %c1_250 = arith.constant 1 : index
    %c0_251 = arith.constant 0 : index
    %c0_252 = arith.constant 0 : index
    %519 = vector.load %arg5[%c1_250, %c0_251, %c0_252] : memref<4x1x32xf32, #tpu.memory_space<vmem>>, vector<1x1x32xf32>
    %520 = vector.shape_cast %519 : vector<1x1x32xf32> to vector<1x32xf32>
    %521 = vector.broadcast %520 : vector<1x32xf32> to vector<16x32xf32>
    %522 = arith.mulf %490, %521 : vector<16x32xf32>
    %cst_253 = arith.constant dense<0.000000e+00> : vector<16x16xf32>
    %523 = tpu.matmul %522, %496, %cst_253 {dimension_numbers = #tpu.dot_dimension_numbers<[1], [1], [0], [0], [0, 0, 1, 0], [], []>} : vector<16x32xf32>, vector<16x32xf32>, vector<16x16xf32> -> vector<16x16xf32>
    %524 = arith.addf %523, %2 : vector<16x16xf32>
    %cst_254 = arith.constant dense<0xFF800000> : vector<16xf32>
    %525 = vector.multi_reduction <maximumf>, %524, %cst_254 [1] : vector<16x16xf32> to vector<16xf32>
    %526 = vector.shape_cast %525 : vector<16xf32> to vector<16x1xf32>
    %527 = vector.broadcast %526 : vector<16x1xf32> to vector<16x16xf32>
    %528 = arith.subf %524, %527 : vector<16x16xf32>
    %529 = math.exp %528 : vector<16x16xf32>
    %cst_255 = arith.constant dense<0.000000e+00> : vector<16xf32>
    %530 = vector.multi_reduction <add>, %529, %cst_255 [1] : vector<16x16xf32> to vector<16xf32>
    %531 = vector.shape_cast %530 : vector<16xf32> to vector<16x1xf32>
    %532 = tpu.reciprocal %531 {approx = true} : vector<16x1xf32> -> vector<16x1xf32>
    %533 = vector.broadcast %532 : vector<16x1xf32> to vector<16x16xf32>
    %534 = arith.mulf %529, %533 : vector<16x16xf32>
    %535 = vector.broadcast %520 : vector<1x32xf32> to vector<16x32xf32>
    %536 = arith.mulf %497, %535 : vector<16x32xf32>
    %cst_256 = arith.constant dense<0.000000e+00> : vector<16x32xf32>
    %537 = tpu.matmul %534, %536, %cst_256 {dimension_numbers = #tpu.dot_dimension_numbers<[1], [0], [0], [1], [0, 0, 1, 1], [], []>} : vector<16x16xf32>, vector<16x32xf32>, vector<16x32xf32> -> vector<16x32xf32>
    %538 = arith.addf %518, %537 : vector<16x32xf32>
    %c2_257 = arith.constant 2 : index
    %c0_258 = arith.constant 0 : index
    %c0_259 = arith.constant 0 : index
    %539 = vector.load %arg5[%c2_257, %c0_258, %c0_259] : memref<4x1x32xf32, #tpu.memory_space<vmem>>, vector<1x1x32xf32>
    %540 = vector.shape_cast %539 : vector<1x1x32xf32> to vector<1x32xf32>
    %541 = vector.broadcast %540 : vector<1x32xf32> to vector<16x32xf32>
    %542 = arith.mulf %490, %541 : vector<16x32xf32>
    %cst_260 = arith.constant dense<0.000000e+00> : vector<16x16xf32>
    %543 = tpu.matmul %542, %496, %cst_260 {dimension_numbers = #tpu.dot_dimension_numbers<[1], [1], [0], [0], [0, 0, 1, 0], [], []>} : vector<16x32xf32>, vector<16x32xf32>, vector<16x16xf32> -> vector<16x16xf32>
    %544 = arith.addf %543, %2 : vector<16x16xf32>
    %cst_261 = arith.constant dense<0xFF800000> : vector<16xf32>
    %545 = vector.multi_reduction <maximumf>, %544, %cst_261 [1] : vector<16x16xf32> to vector<16xf32>
    %546 = vector.shape_cast %545 : vector<16xf32> to vector<16x1xf32>
    %547 = vector.broadcast %546 : vector<16x1xf32> to vector<16x16xf32>
    %548 = arith.subf %544, %547 : vector<16x16xf32>
    %549 = math.exp %548 : vector<16x16xf32>
    %cst_262 = arith.constant dense<0.000000e+00> : vector<16xf32>
    %550 = vector.multi_reduction <add>, %549, %cst_262 [1] : vector<16x16xf32> to vector<16xf32>
    %551 = vector.shape_cast %550 : vector<16xf32> to vector<16x1xf32>
    %552 = tpu.reciprocal %551 {approx = true} : vector<16x1xf32> -> vector<16x1xf32>
    %553 = vector.broadcast %552 : vector<16x1xf32> to vector<16x16xf32>
    %554 = arith.mulf %549, %553 : vector<16x16xf32>
    %555 = vector.broadcast %540 : vector<1x32xf32> to vector<16x32xf32>
    %556 = arith.mulf %497, %555 : vector<16x32xf32>
    %cst_263 = arith.constant dense<0.000000e+00> : vector<16x32xf32>
    %557 = tpu.matmul %554, %556, %cst_263 {dimension_numbers = #tpu.dot_dimension_numbers<[1], [0], [0], [1], [0, 0, 1, 1], [], []>} : vector<16x16xf32>, vector<16x32xf32>, vector<16x32xf32> -> vector<16x32xf32>
    %558 = arith.addf %538, %557 : vector<16x32xf32>
    %c3_264 = arith.constant 3 : index
    %c0_265 = arith.constant 0 : index
    %c0_266 = arith.constant 0 : index
    %559 = vector.load %arg5[%c3_264, %c0_265, %c0_266] : memref<4x1x32xf32, #tpu.memory_space<vmem>>, vector<1x1x32xf32>
    %560 = vector.shape_cast %559 : vector<1x1x32xf32> to vector<1x32xf32>
    %561 = vector.broadcast %560 : vector<1x32xf32> to vector<16x32xf32>
    %562 = arith.mulf %490, %561 : vector<16x32xf32>
    %cst_267 = arith.constant dense<0.000000e+00> : vector<16x16xf32>
    %563 = tpu.matmul %562, %496, %cst_267 {dimension_numbers = #tpu.dot_dimension_numbers<[1], [1], [0], [0], [0, 0, 1, 0], [], []>} : vector<16x32xf32>, vector<16x32xf32>, vector<16x16xf32> -> vector<16x16xf32>
    %564 = arith.addf %563, %2 : vector<16x16xf32>
    %cst_268 = arith.constant dense<0xFF800000> : vector<16xf32>
    %565 = vector.multi_reduction <maximumf>, %564, %cst_268 [1] : vector<16x16xf32> to vector<16xf32>
    %566 = vector.shape_cast %565 : vector<16xf32> to vector<16x1xf32>
    %567 = vector.broadcast %566 : vector<16x1xf32> to vector<16x16xf32>
    %568 = arith.subf %564, %567 : vector<16x16xf32>
    %569 = math.exp %568 : vector<16x16xf32>
    %cst_269 = arith.constant dense<0.000000e+00> : vector<16xf32>
    %570 = vector.multi_reduction <add>, %569, %cst_269 [1] : vector<16x16xf32> to vector<16xf32>
    %571 = vector.shape_cast %570 : vector<16xf32> to vector<16x1xf32>
    %572 = tpu.reciprocal %571 {approx = true} : vector<16x1xf32> -> vector<16x1xf32>
    %573 = vector.broadcast %572 : vector<16x1xf32> to vector<16x16xf32>
    %574 = arith.mulf %569, %573 : vector<16x16xf32>
    %575 = vector.broadcast %560 : vector<1x32xf32> to vector<16x32xf32>
    %576 = arith.mulf %497, %575 : vector<16x32xf32>
    %cst_270 = arith.constant dense<0.000000e+00> : vector<16x32xf32>
    %577 = tpu.matmul %574, %576, %cst_270 {dimension_numbers = #tpu.dot_dimension_numbers<[1], [0], [0], [1], [0, 0, 1, 1], [], []>} : vector<16x16xf32>, vector<16x32xf32>, vector<16x32xf32> -> vector<16x32xf32>
    %578 = arith.addf %558, %577 : vector<16x32xf32>
    %cst_271 = arith.constant dense<0.000000e+00> : vector<16x32xf32>
    %579 = tpu.matmul %578, %483, %cst_271 {dimension_numbers = #tpu.dot_dimension_numbers<[1], [0], [0], [1], [0, 0, 1, 1], [], []>} : vector<16x32xf32>, vector<32x32xf32>, vector<16x32xf32> -> vector<16x32xf32>
    %580 = vector.broadcast %485 : vector<1x32xf32> to vector<16x32xf32>
    %581 = arith.addf %579, %580 : vector<16x32xf32>
    %582 = arith.addf %477, %581 : vector<16x32xf32>
    %c0_272 = arith.constant 0 : index
    %c0_273 = arith.constant 0 : index
    %c0_274 = arith.constant 0 : index
    %583 = vector.load %arg32[%c0_272, %c0_273, %c0_274] : memref<2x1x32xf32, #tpu.memory_space<vmem>>, vector<1x1x32xf32>
    %584 = vector.shape_cast %583 : vector<1x1x32xf32> to vector<1x32xf32>
    %c0_275 = arith.constant 0 : index
    %c0_276 = arith.constant 0 : index
    %c0_277 = arith.constant 0 : index
    %585 = vector.load %arg33[%c0_275, %c0_276, %c0_277] : memref<2x1x32xf32, #tpu.memory_space<vmem>>, vector<1x1x32xf32>
    %586 = vector.shape_cast %585 : vector<1x1x32xf32> to vector<1x32xf32>
    %cst_278 = arith.constant dense<0.000000e+00> : vector<16xf32>
    %587 = vector.multi_reduction <add>, %582, %cst_278 [1] : vector<16x32xf32> to vector<16xf32>
    %588 = vector.shape_cast %587 : vector<16xf32> to vector<16x1xf32>
    %cst_279 = arith.constant 3.200000e+01 : f32
    %589 = vector.broadcast %cst_279 : f32 to vector<16x1xf32>
    %590 = arith.divf %588, %589 : vector<16x1xf32>
    %591 = vector.broadcast %590 : vector<16x1xf32> to vector<16x32xf32>
    %592 = arith.subf %582, %591 : vector<16x32xf32>
    %593 = arith.mulf %592, %592 : vector<16x32xf32>
    %cst_280 = arith.constant dense<0.000000e+00> : vector<16xf32>
    %594 = vector.multi_reduction <add>, %593, %cst_280 [1] : vector<16x32xf32> to vector<16xf32>
    %595 = vector.shape_cast %594 : vector<16xf32> to vector<16x1xf32>
    %cst_281 = arith.constant 3.200000e+01 : f32
    %596 = vector.broadcast %cst_281 : f32 to vector<16x1xf32>
    %597 = arith.divf %595, %596 : vector<16x1xf32>
    %cst_282 = arith.constant 9.99999974E-6 : f32
    %598 = vector.broadcast %cst_282 : f32 to vector<16x1xf32>
    %599 = arith.addf %597, %598 : vector<16x1xf32>
    %600 = math.rsqrt %599 : vector<16x1xf32>
    %601 = vector.broadcast %600 : vector<16x1xf32> to vector<16x32xf32>
    %602 = arith.mulf %592, %601 : vector<16x32xf32>
    %603 = vector.broadcast %584 : vector<1x32xf32> to vector<16x32xf32>
    %604 = arith.mulf %602, %603 : vector<16x32xf32>
    %605 = vector.broadcast %586 : vector<1x32xf32> to vector<16x32xf32>
    %606 = arith.addf %604, %605 : vector<16x32xf32>
    %c0_283 = arith.constant 0 : index
    %c0_284 = arith.constant 0 : index
    %c0_285 = arith.constant 0 : index
    %607 = vector.load %arg26[%c0_283, %c0_284, %c0_285] : memref<2x32x64xf32, #tpu.memory_space<vmem>>, vector<1x32x64xf32>
    %608 = vector.shape_cast %607 : vector<1x32x64xf32> to vector<32x64xf32>
    %c0_286 = arith.constant 0 : index
    %c0_287 = arith.constant 0 : index
    %c0_288 = arith.constant 0 : index
    %609 = vector.load %arg27[%c0_286, %c0_287, %c0_288] : memref<2x1x64xf32, #tpu.memory_space<vmem>>, vector<1x1x64xf32>
    %610 = vector.shape_cast %609 : vector<1x1x64xf32> to vector<1x64xf32>
    %cst_289 = arith.constant dense<0.000000e+00> : vector<16x64xf32>
    %611 = tpu.matmul %606, %608, %cst_289 {dimension_numbers = #tpu.dot_dimension_numbers<[1], [0], [0], [1], [0, 0, 1, 1], [], []>} : vector<16x32xf32>, vector<32x64xf32>, vector<16x64xf32> -> vector<16x64xf32>
    %612 = vector.broadcast %610 : vector<1x64xf32> to vector<16x64xf32>
    %613 = arith.addf %611, %612 : vector<16x64xf32>
    %cst_290 = arith.constant 0.000000e+00 : f32
    %614 = vector.broadcast %cst_290 : f32 to vector<16x64xf32>
    %615 = arith.maximumf %613, %614 : vector<16x64xf32>
    %c0_291 = arith.constant 0 : index
    %c0_292 = arith.constant 0 : index
    %c0_293 = arith.constant 0 : index
    %616 = vector.load %arg28[%c0_291, %c0_292, %c0_293] : memref<2x64x32xf32, #tpu.memory_space<vmem>>, vector<1x64x32xf32>
    %617 = vector.shape_cast %616 : vector<1x64x32xf32> to vector<64x32xf32>
    %c0_294 = arith.constant 0 : index
    %c0_295 = arith.constant 0 : index
    %c0_296 = arith.constant 0 : index
    %618 = vector.load %arg29[%c0_294, %c0_295, %c0_296] : memref<2x1x32xf32, #tpu.memory_space<vmem>>, vector<1x1x32xf32>
    %619 = vector.shape_cast %618 : vector<1x1x32xf32> to vector<1x32xf32>
    %cst_297 = arith.constant dense<0.000000e+00> : vector<16x32xf32>
    %620 = tpu.matmul %615, %617, %cst_297 {dimension_numbers = #tpu.dot_dimension_numbers<[1], [0], [0], [1], [0, 0, 1, 1], [], []>} : vector<16x64xf32>, vector<64x32xf32>, vector<16x32xf32> -> vector<16x32xf32>
    %621 = vector.broadcast %619 : vector<1x32xf32> to vector<16x32xf32>
    %622 = arith.addf %620, %621 : vector<16x32xf32>
    %623 = arith.addf %606, %622 : vector<16x32xf32>
    %c0_298 = arith.constant 0 : index
    %c0_299 = arith.constant 0 : index
    %c0_300 = arith.constant 0 : index
    %624 = vector.load %arg34[%c0_298, %c0_299, %c0_300] : memref<2x1x32xf32, #tpu.memory_space<vmem>>, vector<1x1x32xf32>
    %625 = vector.shape_cast %624 : vector<1x1x32xf32> to vector<1x32xf32>
    %c0_301 = arith.constant 0 : index
    %c0_302 = arith.constant 0 : index
    %c0_303 = arith.constant 0 : index
    %626 = vector.load %arg35[%c0_301, %c0_302, %c0_303] : memref<2x1x32xf32, #tpu.memory_space<vmem>>, vector<1x1x32xf32>
    %627 = vector.shape_cast %626 : vector<1x1x32xf32> to vector<1x32xf32>
    %cst_304 = arith.constant dense<0.000000e+00> : vector<16xf32>
    %628 = vector.multi_reduction <add>, %623, %cst_304 [1] : vector<16x32xf32> to vector<16xf32>
    %629 = vector.shape_cast %628 : vector<16xf32> to vector<16x1xf32>
    %cst_305 = arith.constant 3.200000e+01 : f32
    %630 = vector.broadcast %cst_305 : f32 to vector<16x1xf32>
    %631 = arith.divf %629, %630 : vector<16x1xf32>
    %632 = vector.broadcast %631 : vector<16x1xf32> to vector<16x32xf32>
    %633 = arith.subf %623, %632 : vector<16x32xf32>
    %634 = arith.mulf %633, %633 : vector<16x32xf32>
    %cst_306 = arith.constant dense<0.000000e+00> : vector<16xf32>
    %635 = vector.multi_reduction <add>, %634, %cst_306 [1] : vector<16x32xf32> to vector<16xf32>
    %636 = vector.shape_cast %635 : vector<16xf32> to vector<16x1xf32>
    %cst_307 = arith.constant 3.200000e+01 : f32
    %637 = vector.broadcast %cst_307 : f32 to vector<16x1xf32>
    %638 = arith.divf %636, %637 : vector<16x1xf32>
    %cst_308 = arith.constant 9.99999974E-6 : f32
    %639 = vector.broadcast %cst_308 : f32 to vector<16x1xf32>
    %640 = arith.addf %638, %639 : vector<16x1xf32>
    %641 = math.rsqrt %640 : vector<16x1xf32>
    %642 = vector.broadcast %641 : vector<16x1xf32> to vector<16x32xf32>
    %643 = arith.mulf %633, %642 : vector<16x32xf32>
    %644 = vector.broadcast %625 : vector<1x32xf32> to vector<16x32xf32>
    %645 = arith.mulf %643, %644 : vector<16x32xf32>
    %646 = vector.broadcast %627 : vector<1x32xf32> to vector<16x32xf32>
    %647 = arith.addf %645, %646 : vector<16x32xf32>
    %c1_309 = arith.constant 1 : index
    %c0_310 = arith.constant 0 : index
    %c0_311 = arith.constant 0 : index
    %648 = vector.load %arg18[%c1_309, %c0_310, %c0_311] : memref<2x32x96xf32, #tpu.memory_space<vmem>>, vector<1x32x96xf32>
    %649 = vector.shape_cast %648 : vector<1x32x96xf32> to vector<32x96xf32>
    %c1_312 = arith.constant 1 : index
    %c0_313 = arith.constant 0 : index
    %c0_314 = arith.constant 0 : index
    %650 = vector.load %arg19[%c1_312, %c0_313, %c0_314] : memref<2x1x96xf32, #tpu.memory_space<vmem>>, vector<1x1x96xf32>
    %651 = vector.shape_cast %650 : vector<1x1x96xf32> to vector<1x96xf32>
    %c1_315 = arith.constant 1 : index
    %c0_316 = arith.constant 0 : index
    %c0_317 = arith.constant 0 : index
    %652 = vector.load %arg20[%c1_315, %c0_316, %c0_317] : memref<2x32x32xf32, #tpu.memory_space<vmem>>, vector<1x32x32xf32>
    %653 = vector.shape_cast %652 : vector<1x32x32xf32> to vector<32x32xf32>
    %c1_318 = arith.constant 1 : index
    %c0_319 = arith.constant 0 : index
    %c0_320 = arith.constant 0 : index
    %654 = vector.load %arg21[%c1_318, %c0_319, %c0_320] : memref<2x1x32xf32, #tpu.memory_space<vmem>>, vector<1x1x32xf32>
    %655 = vector.shape_cast %654 : vector<1x1x32xf32> to vector<1x32xf32>
    %cst_321 = arith.constant dense<0.000000e+00> : vector<16x96xf32>
    %656 = tpu.matmul %647, %649, %cst_321 {dimension_numbers = #tpu.dot_dimension_numbers<[1], [0], [0], [1], [0, 0, 1, 1], [], []>} : vector<16x32xf32>, vector<32x96xf32>, vector<16x96xf32> -> vector<16x96xf32>
    %657 = vector.broadcast %651 : vector<1x96xf32> to vector<16x96xf32>
    %658 = arith.addf %656, %657 : vector<16x96xf32>
    %659 = vector.extract_strided_slice %658 {offsets = [0, 0], sizes = [16, 32], strides = [1, 1]} : vector<16x96xf32> to vector<16x32xf32>
    %660 = vector.extract_strided_slice %658 {offsets = [0, 32], sizes = [16, 32], strides = [1, 1]} : vector<16x96xf32> to vector<16x32xf32>
    %661 = vector.extract_strided_slice %658 {offsets = [0, 64], sizes = [16, 32], strides = [1, 1]} : vector<16x96xf32> to vector<16x32xf32>
    %cst_322 = arith.constant 0.000000e+00 : f32
    %662 = vector.broadcast %cst_322 : f32 to vector<16x32xf32>
    %c0_323 = arith.constant 0 : index
    %c0_324 = arith.constant 0 : index
    %c0_325 = arith.constant 0 : index
    %663 = vector.load %arg5[%c0_323, %c0_324, %c0_325] : memref<4x1x32xf32, #tpu.memory_space<vmem>>, vector<1x1x32xf32>
    %664 = vector.shape_cast %663 : vector<1x1x32xf32> to vector<1x32xf32>
    %665 = vector.broadcast %664 : vector<1x32xf32> to vector<16x32xf32>
    %666 = arith.mulf %659, %665 : vector<16x32xf32>
    %cst_326 = arith.constant dense<0.000000e+00> : vector<16x16xf32>
    %667 = tpu.matmul %666, %660, %cst_326 {dimension_numbers = #tpu.dot_dimension_numbers<[1], [1], [0], [0], [0, 0, 1, 0], [], []>} : vector<16x32xf32>, vector<16x32xf32>, vector<16x16xf32> -> vector<16x16xf32>
    %668 = arith.addf %667, %1 : vector<16x16xf32>
    %cst_327 = arith.constant dense<0xFF800000> : vector<16xf32>
    %669 = vector.multi_reduction <maximumf>, %668, %cst_327 [1] : vector<16x16xf32> to vector<16xf32>
    %670 = vector.shape_cast %669 : vector<16xf32> to vector<16x1xf32>
    %671 = vector.broadcast %670 : vector<16x1xf32> to vector<16x16xf32>
    %672 = arith.subf %668, %671 : vector<16x16xf32>
    %673 = math.exp %672 : vector<16x16xf32>
    %cst_328 = arith.constant dense<0.000000e+00> : vector<16xf32>
    %674 = vector.multi_reduction <add>, %673, %cst_328 [1] : vector<16x16xf32> to vector<16xf32>
    %675 = vector.shape_cast %674 : vector<16xf32> to vector<16x1xf32>
    %676 = tpu.reciprocal %675 {approx = true} : vector<16x1xf32> -> vector<16x1xf32>
    %677 = vector.broadcast %676 : vector<16x1xf32> to vector<16x16xf32>
    %678 = arith.mulf %673, %677 : vector<16x16xf32>
    %679 = vector.broadcast %664 : vector<1x32xf32> to vector<16x32xf32>
    %680 = arith.mulf %661, %679 : vector<16x32xf32>
    %cst_329 = arith.constant dense<0.000000e+00> : vector<16x32xf32>
    %681 = tpu.matmul %678, %680, %cst_329 {dimension_numbers = #tpu.dot_dimension_numbers<[1], [0], [0], [1], [0, 0, 1, 1], [], []>} : vector<16x16xf32>, vector<16x32xf32>, vector<16x32xf32> -> vector<16x32xf32>
    %682 = arith.addf %662, %681 : vector<16x32xf32>
    %c1_330 = arith.constant 1 : index
    %c0_331 = arith.constant 0 : index
    %c0_332 = arith.constant 0 : index
    %683 = vector.load %arg5[%c1_330, %c0_331, %c0_332] : memref<4x1x32xf32, #tpu.memory_space<vmem>>, vector<1x1x32xf32>
    %684 = vector.shape_cast %683 : vector<1x1x32xf32> to vector<1x32xf32>
    %685 = vector.broadcast %684 : vector<1x32xf32> to vector<16x32xf32>
    %686 = arith.mulf %659, %685 : vector<16x32xf32>
    %cst_333 = arith.constant dense<0.000000e+00> : vector<16x16xf32>
    %687 = tpu.matmul %686, %660, %cst_333 {dimension_numbers = #tpu.dot_dimension_numbers<[1], [1], [0], [0], [0, 0, 1, 0], [], []>} : vector<16x32xf32>, vector<16x32xf32>, vector<16x16xf32> -> vector<16x16xf32>
    %688 = arith.addf %687, %1 : vector<16x16xf32>
    %cst_334 = arith.constant dense<0xFF800000> : vector<16xf32>
    %689 = vector.multi_reduction <maximumf>, %688, %cst_334 [1] : vector<16x16xf32> to vector<16xf32>
    %690 = vector.shape_cast %689 : vector<16xf32> to vector<16x1xf32>
    %691 = vector.broadcast %690 : vector<16x1xf32> to vector<16x16xf32>
    %692 = arith.subf %688, %691 : vector<16x16xf32>
    %693 = math.exp %692 : vector<16x16xf32>
    %cst_335 = arith.constant dense<0.000000e+00> : vector<16xf32>
    %694 = vector.multi_reduction <add>, %693, %cst_335 [1] : vector<16x16xf32> to vector<16xf32>
    %695 = vector.shape_cast %694 : vector<16xf32> to vector<16x1xf32>
    %696 = tpu.reciprocal %695 {approx = true} : vector<16x1xf32> -> vector<16x1xf32>
    %697 = vector.broadcast %696 : vector<16x1xf32> to vector<16x16xf32>
    %698 = arith.mulf %693, %697 : vector<16x16xf32>
    %699 = vector.broadcast %684 : vector<1x32xf32> to vector<16x32xf32>
    %700 = arith.mulf %661, %699 : vector<16x32xf32>
    %cst_336 = arith.constant dense<0.000000e+00> : vector<16x32xf32>
    %701 = tpu.matmul %698, %700, %cst_336 {dimension_numbers = #tpu.dot_dimension_numbers<[1], [0], [0], [1], [0, 0, 1, 1], [], []>} : vector<16x16xf32>, vector<16x32xf32>, vector<16x32xf32> -> vector<16x32xf32>
    %702 = arith.addf %682, %701 : vector<16x32xf32>
    %c2_337 = arith.constant 2 : index
    %c0_338 = arith.constant 0 : index
    %c0_339 = arith.constant 0 : index
    %703 = vector.load %arg5[%c2_337, %c0_338, %c0_339] : memref<4x1x32xf32, #tpu.memory_space<vmem>>, vector<1x1x32xf32>
    %704 = vector.shape_cast %703 : vector<1x1x32xf32> to vector<1x32xf32>
    %705 = vector.broadcast %704 : vector<1x32xf32> to vector<16x32xf32>
    %706 = arith.mulf %659, %705 : vector<16x32xf32>
    %cst_340 = arith.constant dense<0.000000e+00> : vector<16x16xf32>
    %707 = tpu.matmul %706, %660, %cst_340 {dimension_numbers = #tpu.dot_dimension_numbers<[1], [1], [0], [0], [0, 0, 1, 0], [], []>} : vector<16x32xf32>, vector<16x32xf32>, vector<16x16xf32> -> vector<16x16xf32>
    %708 = arith.addf %707, %1 : vector<16x16xf32>
    %cst_341 = arith.constant dense<0xFF800000> : vector<16xf32>
    %709 = vector.multi_reduction <maximumf>, %708, %cst_341 [1] : vector<16x16xf32> to vector<16xf32>
    %710 = vector.shape_cast %709 : vector<16xf32> to vector<16x1xf32>
    %711 = vector.broadcast %710 : vector<16x1xf32> to vector<16x16xf32>
    %712 = arith.subf %708, %711 : vector<16x16xf32>
    %713 = math.exp %712 : vector<16x16xf32>
    %cst_342 = arith.constant dense<0.000000e+00> : vector<16xf32>
    %714 = vector.multi_reduction <add>, %713, %cst_342 [1] : vector<16x16xf32> to vector<16xf32>
    %715 = vector.shape_cast %714 : vector<16xf32> to vector<16x1xf32>
    %716 = tpu.reciprocal %715 {approx = true} : vector<16x1xf32> -> vector<16x1xf32>
    %717 = vector.broadcast %716 : vector<16x1xf32> to vector<16x16xf32>
    %718 = arith.mulf %713, %717 : vector<16x16xf32>
    %719 = vector.broadcast %704 : vector<1x32xf32> to vector<16x32xf32>
    %720 = arith.mulf %661, %719 : vector<16x32xf32>
    %cst_343 = arith.constant dense<0.000000e+00> : vector<16x32xf32>
    %721 = tpu.matmul %718, %720, %cst_343 {dimension_numbers = #tpu.dot_dimension_numbers<[1], [0], [0], [1], [0, 0, 1, 1], [], []>} : vector<16x16xf32>, vector<16x32xf32>, vector<16x32xf32> -> vector<16x32xf32>
    %722 = arith.addf %702, %721 : vector<16x32xf32>
    %c3_344 = arith.constant 3 : index
    %c0_345 = arith.constant 0 : index
    %c0_346 = arith.constant 0 : index
    %723 = vector.load %arg5[%c3_344, %c0_345, %c0_346] : memref<4x1x32xf32, #tpu.memory_space<vmem>>, vector<1x1x32xf32>
    %724 = vector.shape_cast %723 : vector<1x1x32xf32> to vector<1x32xf32>
    %725 = vector.broadcast %724 : vector<1x32xf32> to vector<16x32xf32>
    %726 = arith.mulf %659, %725 : vector<16x32xf32>
    %cst_347 = arith.constant dense<0.000000e+00> : vector<16x16xf32>
    %727 = tpu.matmul %726, %660, %cst_347 {dimension_numbers = #tpu.dot_dimension_numbers<[1], [1], [0], [0], [0, 0, 1, 0], [], []>} : vector<16x32xf32>, vector<16x32xf32>, vector<16x16xf32> -> vector<16x16xf32>
    %728 = arith.addf %727, %1 : vector<16x16xf32>
    %cst_348 = arith.constant dense<0xFF800000> : vector<16xf32>
    %729 = vector.multi_reduction <maximumf>, %728, %cst_348 [1] : vector<16x16xf32> to vector<16xf32>
    %730 = vector.shape_cast %729 : vector<16xf32> to vector<16x1xf32>
    %731 = vector.broadcast %730 : vector<16x1xf32> to vector<16x16xf32>
    %732 = arith.subf %728, %731 : vector<16x16xf32>
    %733 = math.exp %732 : vector<16x16xf32>
    %cst_349 = arith.constant dense<0.000000e+00> : vector<16xf32>
    %734 = vector.multi_reduction <add>, %733, %cst_349 [1] : vector<16x16xf32> to vector<16xf32>
    %735 = vector.shape_cast %734 : vector<16xf32> to vector<16x1xf32>
    %736 = tpu.reciprocal %735 {approx = true} : vector<16x1xf32> -> vector<16x1xf32>
    %737 = vector.broadcast %736 : vector<16x1xf32> to vector<16x16xf32>
    %738 = arith.mulf %733, %737 : vector<16x16xf32>
    %739 = vector.broadcast %724 : vector<1x32xf32> to vector<16x32xf32>
    %740 = arith.mulf %661, %739 : vector<16x32xf32>
    %cst_350 = arith.constant dense<0.000000e+00> : vector<16x32xf32>
    %741 = tpu.matmul %738, %740, %cst_350 {dimension_numbers = #tpu.dot_dimension_numbers<[1], [0], [0], [1], [0, 0, 1, 1], [], []>} : vector<16x16xf32>, vector<16x32xf32>, vector<16x32xf32> -> vector<16x32xf32>
    %742 = arith.addf %722, %741 : vector<16x32xf32>
    %cst_351 = arith.constant dense<0.000000e+00> : vector<16x32xf32>
    %743 = tpu.matmul %742, %653, %cst_351 {dimension_numbers = #tpu.dot_dimension_numbers<[1], [0], [0], [1], [0, 0, 1, 1], [], []>} : vector<16x32xf32>, vector<32x32xf32>, vector<16x32xf32> -> vector<16x32xf32>
    %744 = vector.broadcast %655 : vector<1x32xf32> to vector<16x32xf32>
    %745 = arith.addf %743, %744 : vector<16x32xf32>
    %746 = arith.addf %647, %745 : vector<16x32xf32>
    %c1_352 = arith.constant 1 : index
    %c0_353 = arith.constant 0 : index
    %c0_354 = arith.constant 0 : index
    %747 = vector.load %arg30[%c1_352, %c0_353, %c0_354] : memref<2x1x32xf32, #tpu.memory_space<vmem>>, vector<1x1x32xf32>
    %748 = vector.shape_cast %747 : vector<1x1x32xf32> to vector<1x32xf32>
    %c1_355 = arith.constant 1 : index
    %c0_356 = arith.constant 0 : index
    %c0_357 = arith.constant 0 : index
    %749 = vector.load %arg31[%c1_355, %c0_356, %c0_357] : memref<2x1x32xf32, #tpu.memory_space<vmem>>, vector<1x1x32xf32>
    %750 = vector.shape_cast %749 : vector<1x1x32xf32> to vector<1x32xf32>
    %cst_358 = arith.constant dense<0.000000e+00> : vector<16xf32>
    %751 = vector.multi_reduction <add>, %746, %cst_358 [1] : vector<16x32xf32> to vector<16xf32>
    %752 = vector.shape_cast %751 : vector<16xf32> to vector<16x1xf32>
    %cst_359 = arith.constant 3.200000e+01 : f32
    %753 = vector.broadcast %cst_359 : f32 to vector<16x1xf32>
    %754 = arith.divf %752, %753 : vector<16x1xf32>
    %755 = vector.broadcast %754 : vector<16x1xf32> to vector<16x32xf32>
    %756 = arith.subf %746, %755 : vector<16x32xf32>
    %757 = arith.mulf %756, %756 : vector<16x32xf32>
    %cst_360 = arith.constant dense<0.000000e+00> : vector<16xf32>
    %758 = vector.multi_reduction <add>, %757, %cst_360 [1] : vector<16x32xf32> to vector<16xf32>
    %759 = vector.shape_cast %758 : vector<16xf32> to vector<16x1xf32>
    %cst_361 = arith.constant 3.200000e+01 : f32
    %760 = vector.broadcast %cst_361 : f32 to vector<16x1xf32>
    %761 = arith.divf %759, %760 : vector<16x1xf32>
    %cst_362 = arith.constant 9.99999974E-6 : f32
    %762 = vector.broadcast %cst_362 : f32 to vector<16x1xf32>
    %763 = arith.addf %761, %762 : vector<16x1xf32>
    %764 = math.rsqrt %763 : vector<16x1xf32>
    %765 = vector.broadcast %764 : vector<16x1xf32> to vector<16x32xf32>
    %766 = arith.mulf %756, %765 : vector<16x32xf32>
    %767 = vector.broadcast %748 : vector<1x32xf32> to vector<16x32xf32>
    %768 = arith.mulf %766, %767 : vector<16x32xf32>
    %769 = vector.broadcast %750 : vector<1x32xf32> to vector<16x32xf32>
    %770 = arith.addf %768, %769 : vector<16x32xf32>
    %c1_363 = arith.constant 1 : index
    %c0_364 = arith.constant 0 : index
    %c0_365 = arith.constant 0 : index
    %771 = vector.load %arg22[%c1_363, %c0_364, %c0_365] : memref<2x32x96xf32, #tpu.memory_space<vmem>>, vector<1x32x96xf32>
    %772 = vector.shape_cast %771 : vector<1x32x96xf32> to vector<32x96xf32>
    %c1_366 = arith.constant 1 : index
    %c0_367 = arith.constant 0 : index
    %c0_368 = arith.constant 0 : index
    %773 = vector.load %arg23[%c1_366, %c0_367, %c0_368] : memref<2x1x96xf32, #tpu.memory_space<vmem>>, vector<1x1x96xf32>
    %774 = vector.shape_cast %773 : vector<1x1x96xf32> to vector<1x96xf32>
    %c1_369 = arith.constant 1 : index
    %c0_370 = arith.constant 0 : index
    %c0_371 = arith.constant 0 : index
    %775 = vector.load %arg24[%c1_369, %c0_370, %c0_371] : memref<2x32x32xf32, #tpu.memory_space<vmem>>, vector<1x32x32xf32>
    %776 = vector.shape_cast %775 : vector<1x32x32xf32> to vector<32x32xf32>
    %c1_372 = arith.constant 1 : index
    %c0_373 = arith.constant 0 : index
    %c0_374 = arith.constant 0 : index
    %777 = vector.load %arg25[%c1_372, %c0_373, %c0_374] : memref<2x1x32xf32, #tpu.memory_space<vmem>>, vector<1x1x32xf32>
    %778 = vector.shape_cast %777 : vector<1x1x32xf32> to vector<1x32xf32>
    %779 = vector.extract_strided_slice %772 {offsets = [0, 0], sizes = [32, 32], strides = [1, 1]} : vector<32x96xf32> to vector<32x32xf32>
    %780 = vector.extract_strided_slice %774 {offsets = [0, 0], sizes = [1, 32], strides = [1, 1]} : vector<1x96xf32> to vector<1x32xf32>
    %cst_375 = arith.constant dense<0.000000e+00> : vector<16x32xf32>
    %781 = tpu.matmul %770, %779, %cst_375 {dimension_numbers = #tpu.dot_dimension_numbers<[1], [0], [0], [1], [0, 0, 1, 1], [], []>} : vector<16x32xf32>, vector<32x32xf32>, vector<16x32xf32> -> vector<16x32xf32>
    %782 = vector.broadcast %780 : vector<1x32xf32> to vector<16x32xf32>
    %783 = arith.addf %781, %782 : vector<16x32xf32>
    %784 = vector.extract_strided_slice %772 {offsets = [0, 32], sizes = [32, 64], strides = [1, 1]} : vector<32x96xf32> to vector<32x64xf32>
    %785 = vector.extract_strided_slice %774 {offsets = [0, 32], sizes = [1, 64], strides = [1, 1]} : vector<1x96xf32> to vector<1x64xf32>
    %cst_376 = arith.constant dense<0.000000e+00> : vector<16x64xf32>
    %786 = tpu.matmul %353, %784, %cst_376 {dimension_numbers = #tpu.dot_dimension_numbers<[1], [0], [0], [1], [0, 0, 1, 1], [], []>} : vector<16x32xf32>, vector<32x64xf32>, vector<16x64xf32> -> vector<16x64xf32>
    %787 = vector.broadcast %785 : vector<1x64xf32> to vector<16x64xf32>
    %788 = arith.addf %786, %787 : vector<16x64xf32>
    %789 = vector.extract_strided_slice %788 {offsets = [0, 0], sizes = [16, 32], strides = [1, 1]} : vector<16x64xf32> to vector<16x32xf32>
    %790 = vector.extract_strided_slice %788 {offsets = [0, 32], sizes = [16, 32], strides = [1, 1]} : vector<16x64xf32> to vector<16x32xf32>
    %cst_377 = arith.constant 0.000000e+00 : f32
    %791 = vector.broadcast %cst_377 : f32 to vector<16x32xf32>
    %c0_378 = arith.constant 0 : index
    %c0_379 = arith.constant 0 : index
    %c0_380 = arith.constant 0 : index
    %792 = vector.load %arg5[%c0_378, %c0_379, %c0_380] : memref<4x1x32xf32, #tpu.memory_space<vmem>>, vector<1x1x32xf32>
    %793 = vector.shape_cast %792 : vector<1x1x32xf32> to vector<1x32xf32>
    %794 = vector.broadcast %793 : vector<1x32xf32> to vector<16x32xf32>
    %795 = arith.mulf %783, %794 : vector<16x32xf32>
    %cst_381 = arith.constant dense<0.000000e+00> : vector<16x16xf32>
    %796 = tpu.matmul %795, %789, %cst_381 {dimension_numbers = #tpu.dot_dimension_numbers<[1], [1], [0], [0], [0, 0, 1, 0], [], []>} : vector<16x32xf32>, vector<16x32xf32>, vector<16x16xf32> -> vector<16x16xf32>
    %797 = arith.addf %796, %2 : vector<16x16xf32>
    %cst_382 = arith.constant dense<0xFF800000> : vector<16xf32>
    %798 = vector.multi_reduction <maximumf>, %797, %cst_382 [1] : vector<16x16xf32> to vector<16xf32>
    %799 = vector.shape_cast %798 : vector<16xf32> to vector<16x1xf32>
    %800 = vector.broadcast %799 : vector<16x1xf32> to vector<16x16xf32>
    %801 = arith.subf %797, %800 : vector<16x16xf32>
    %802 = math.exp %801 : vector<16x16xf32>
    %cst_383 = arith.constant dense<0.000000e+00> : vector<16xf32>
    %803 = vector.multi_reduction <add>, %802, %cst_383 [1] : vector<16x16xf32> to vector<16xf32>
    %804 = vector.shape_cast %803 : vector<16xf32> to vector<16x1xf32>
    %805 = tpu.reciprocal %804 {approx = true} : vector<16x1xf32> -> vector<16x1xf32>
    %806 = vector.broadcast %805 : vector<16x1xf32> to vector<16x16xf32>
    %807 = arith.mulf %802, %806 : vector<16x16xf32>
    %808 = vector.broadcast %793 : vector<1x32xf32> to vector<16x32xf32>
    %809 = arith.mulf %790, %808 : vector<16x32xf32>
    %cst_384 = arith.constant dense<0.000000e+00> : vector<16x32xf32>
    %810 = tpu.matmul %807, %809, %cst_384 {dimension_numbers = #tpu.dot_dimension_numbers<[1], [0], [0], [1], [0, 0, 1, 1], [], []>} : vector<16x16xf32>, vector<16x32xf32>, vector<16x32xf32> -> vector<16x32xf32>
    %811 = arith.addf %791, %810 : vector<16x32xf32>
    %c1_385 = arith.constant 1 : index
    %c0_386 = arith.constant 0 : index
    %c0_387 = arith.constant 0 : index
    %812 = vector.load %arg5[%c1_385, %c0_386, %c0_387] : memref<4x1x32xf32, #tpu.memory_space<vmem>>, vector<1x1x32xf32>
    %813 = vector.shape_cast %812 : vector<1x1x32xf32> to vector<1x32xf32>
    %814 = vector.broadcast %813 : vector<1x32xf32> to vector<16x32xf32>
    %815 = arith.mulf %783, %814 : vector<16x32xf32>
    %cst_388 = arith.constant dense<0.000000e+00> : vector<16x16xf32>
    %816 = tpu.matmul %815, %789, %cst_388 {dimension_numbers = #tpu.dot_dimension_numbers<[1], [1], [0], [0], [0, 0, 1, 0], [], []>} : vector<16x32xf32>, vector<16x32xf32>, vector<16x16xf32> -> vector<16x16xf32>
    %817 = arith.addf %816, %2 : vector<16x16xf32>
    %cst_389 = arith.constant dense<0xFF800000> : vector<16xf32>
    %818 = vector.multi_reduction <maximumf>, %817, %cst_389 [1] : vector<16x16xf32> to vector<16xf32>
    %819 = vector.shape_cast %818 : vector<16xf32> to vector<16x1xf32>
    %820 = vector.broadcast %819 : vector<16x1xf32> to vector<16x16xf32>
    %821 = arith.subf %817, %820 : vector<16x16xf32>
    %822 = math.exp %821 : vector<16x16xf32>
    %cst_390 = arith.constant dense<0.000000e+00> : vector<16xf32>
    %823 = vector.multi_reduction <add>, %822, %cst_390 [1] : vector<16x16xf32> to vector<16xf32>
    %824 = vector.shape_cast %823 : vector<16xf32> to vector<16x1xf32>
    %825 = tpu.reciprocal %824 {approx = true} : vector<16x1xf32> -> vector<16x1xf32>
    %826 = vector.broadcast %825 : vector<16x1xf32> to vector<16x16xf32>
    %827 = arith.mulf %822, %826 : vector<16x16xf32>
    %828 = vector.broadcast %813 : vector<1x32xf32> to vector<16x32xf32>
    %829 = arith.mulf %790, %828 : vector<16x32xf32>
    %cst_391 = arith.constant dense<0.000000e+00> : vector<16x32xf32>
    %830 = tpu.matmul %827, %829, %cst_391 {dimension_numbers = #tpu.dot_dimension_numbers<[1], [0], [0], [1], [0, 0, 1, 1], [], []>} : vector<16x16xf32>, vector<16x32xf32>, vector<16x32xf32> -> vector<16x32xf32>
    %831 = arith.addf %811, %830 : vector<16x32xf32>
    %c2_392 = arith.constant 2 : index
    %c0_393 = arith.constant 0 : index
    %c0_394 = arith.constant 0 : index
    %832 = vector.load %arg5[%c2_392, %c0_393, %c0_394] : memref<4x1x32xf32, #tpu.memory_space<vmem>>, vector<1x1x32xf32>
    %833 = vector.shape_cast %832 : vector<1x1x32xf32> to vector<1x32xf32>
    %834 = vector.broadcast %833 : vector<1x32xf32> to vector<16x32xf32>
    %835 = arith.mulf %783, %834 : vector<16x32xf32>
    %cst_395 = arith.constant dense<0.000000e+00> : vector<16x16xf32>
    %836 = tpu.matmul %835, %789, %cst_395 {dimension_numbers = #tpu.dot_dimension_numbers<[1], [1], [0], [0], [0, 0, 1, 0], [], []>} : vector<16x32xf32>, vector<16x32xf32>, vector<16x16xf32> -> vector<16x16xf32>
    %837 = arith.addf %836, %2 : vector<16x16xf32>
    %cst_396 = arith.constant dense<0xFF800000> : vector<16xf32>
    %838 = vector.multi_reduction <maximumf>, %837, %cst_396 [1] : vector<16x16xf32> to vector<16xf32>
    %839 = vector.shape_cast %838 : vector<16xf32> to vector<16x1xf32>
    %840 = vector.broadcast %839 : vector<16x1xf32> to vector<16x16xf32>
    %841 = arith.subf %837, %840 : vector<16x16xf32>
    %842 = math.exp %841 : vector<16x16xf32>
    %cst_397 = arith.constant dense<0.000000e+00> : vector<16xf32>
    %843 = vector.multi_reduction <add>, %842, %cst_397 [1] : vector<16x16xf32> to vector<16xf32>
    %844 = vector.shape_cast %843 : vector<16xf32> to vector<16x1xf32>
    %845 = tpu.reciprocal %844 {approx = true} : vector<16x1xf32> -> vector<16x1xf32>
    %846 = vector.broadcast %845 : vector<16x1xf32> to vector<16x16xf32>
    %847 = arith.mulf %842, %846 : vector<16x16xf32>
    %848 = vector.broadcast %833 : vector<1x32xf32> to vector<16x32xf32>
    %849 = arith.mulf %790, %848 : vector<16x32xf32>
    %cst_398 = arith.constant dense<0.000000e+00> : vector<16x32xf32>
    %850 = tpu.matmul %847, %849, %cst_398 {dimension_numbers = #tpu.dot_dimension_numbers<[1], [0], [0], [1], [0, 0, 1, 1], [], []>} : vector<16x16xf32>, vector<16x32xf32>, vector<16x32xf32> -> vector<16x32xf32>
    %851 = arith.addf %831, %850 : vector<16x32xf32>
    %c3_399 = arith.constant 3 : index
    %c0_400 = arith.constant 0 : index
    %c0_401 = arith.constant 0 : index
    %852 = vector.load %arg5[%c3_399, %c0_400, %c0_401] : memref<4x1x32xf32, #tpu.memory_space<vmem>>, vector<1x1x32xf32>
    %853 = vector.shape_cast %852 : vector<1x1x32xf32> to vector<1x32xf32>
    %854 = vector.broadcast %853 : vector<1x32xf32> to vector<16x32xf32>
    %855 = arith.mulf %783, %854 : vector<16x32xf32>
    %cst_402 = arith.constant dense<0.000000e+00> : vector<16x16xf32>
    %856 = tpu.matmul %855, %789, %cst_402 {dimension_numbers = #tpu.dot_dimension_numbers<[1], [1], [0], [0], [0, 0, 1, 0], [], []>} : vector<16x32xf32>, vector<16x32xf32>, vector<16x16xf32> -> vector<16x16xf32>
    %857 = arith.addf %856, %2 : vector<16x16xf32>
    %cst_403 = arith.constant dense<0xFF800000> : vector<16xf32>
    %858 = vector.multi_reduction <maximumf>, %857, %cst_403 [1] : vector<16x16xf32> to vector<16xf32>
    %859 = vector.shape_cast %858 : vector<16xf32> to vector<16x1xf32>
    %860 = vector.broadcast %859 : vector<16x1xf32> to vector<16x16xf32>
    %861 = arith.subf %857, %860 : vector<16x16xf32>
    %862 = math.exp %861 : vector<16x16xf32>
    %cst_404 = arith.constant dense<0.000000e+00> : vector<16xf32>
    %863 = vector.multi_reduction <add>, %862, %cst_404 [1] : vector<16x16xf32> to vector<16xf32>
    %864 = vector.shape_cast %863 : vector<16xf32> to vector<16x1xf32>
    %865 = tpu.reciprocal %864 {approx = true} : vector<16x1xf32> -> vector<16x1xf32>
    %866 = vector.broadcast %865 : vector<16x1xf32> to vector<16x16xf32>
    %867 = arith.mulf %862, %866 : vector<16x16xf32>
    %868 = vector.broadcast %853 : vector<1x32xf32> to vector<16x32xf32>
    %869 = arith.mulf %790, %868 : vector<16x32xf32>
    %cst_405 = arith.constant dense<0.000000e+00> : vector<16x32xf32>
    %870 = tpu.matmul %867, %869, %cst_405 {dimension_numbers = #tpu.dot_dimension_numbers<[1], [0], [0], [1], [0, 0, 1, 1], [], []>} : vector<16x16xf32>, vector<16x32xf32>, vector<16x32xf32> -> vector<16x32xf32>
    %871 = arith.addf %851, %870 : vector<16x32xf32>
    %cst_406 = arith.constant dense<0.000000e+00> : vector<16x32xf32>
    %872 = tpu.matmul %871, %776, %cst_406 {dimension_numbers = #tpu.dot_dimension_numbers<[1], [0], [0], [1], [0, 0, 1, 1], [], []>} : vector<16x32xf32>, vector<32x32xf32>, vector<16x32xf32> -> vector<16x32xf32>
    %873 = vector.broadcast %778 : vector<1x32xf32> to vector<16x32xf32>
    %874 = arith.addf %872, %873 : vector<16x32xf32>
    %875 = arith.addf %770, %874 : vector<16x32xf32>
    %c1_407 = arith.constant 1 : index
    %c0_408 = arith.constant 0 : index
    %c0_409 = arith.constant 0 : index
    %876 = vector.load %arg32[%c1_407, %c0_408, %c0_409] : memref<2x1x32xf32, #tpu.memory_space<vmem>>, vector<1x1x32xf32>
    %877 = vector.shape_cast %876 : vector<1x1x32xf32> to vector<1x32xf32>
    %c1_410 = arith.constant 1 : index
    %c0_411 = arith.constant 0 : index
    %c0_412 = arith.constant 0 : index
    %878 = vector.load %arg33[%c1_410, %c0_411, %c0_412] : memref<2x1x32xf32, #tpu.memory_space<vmem>>, vector<1x1x32xf32>
    %879 = vector.shape_cast %878 : vector<1x1x32xf32> to vector<1x32xf32>
    %cst_413 = arith.constant dense<0.000000e+00> : vector<16xf32>
    %880 = vector.multi_reduction <add>, %875, %cst_413 [1] : vector<16x32xf32> to vector<16xf32>
    %881 = vector.shape_cast %880 : vector<16xf32> to vector<16x1xf32>
    %cst_414 = arith.constant 3.200000e+01 : f32
    %882 = vector.broadcast %cst_414 : f32 to vector<16x1xf32>
    %883 = arith.divf %881, %882 : vector<16x1xf32>
    %884 = vector.broadcast %883 : vector<16x1xf32> to vector<16x32xf32>
    %885 = arith.subf %875, %884 : vector<16x32xf32>
    %886 = arith.mulf %885, %885 : vector<16x32xf32>
    %cst_415 = arith.constant dense<0.000000e+00> : vector<16xf32>
    %887 = vector.multi_reduction <add>, %886, %cst_415 [1] : vector<16x32xf32> to vector<16xf32>
    %888 = vector.shape_cast %887 : vector<16xf32> to vector<16x1xf32>
    %cst_416 = arith.constant 3.200000e+01 : f32
    %889 = vector.broadcast %cst_416 : f32 to vector<16x1xf32>
    %890 = arith.divf %888, %889 : vector<16x1xf32>
    %cst_417 = arith.constant 9.99999974E-6 : f32
    %891 = vector.broadcast %cst_417 : f32 to vector<16x1xf32>
    %892 = arith.addf %890, %891 : vector<16x1xf32>
    %893 = math.rsqrt %892 : vector<16x1xf32>
    %894 = vector.broadcast %893 : vector<16x1xf32> to vector<16x32xf32>
    %895 = arith.mulf %885, %894 : vector<16x32xf32>
    %896 = vector.broadcast %877 : vector<1x32xf32> to vector<16x32xf32>
    %897 = arith.mulf %895, %896 : vector<16x32xf32>
    %898 = vector.broadcast %879 : vector<1x32xf32> to vector<16x32xf32>
    %899 = arith.addf %897, %898 : vector<16x32xf32>
    %c1_418 = arith.constant 1 : index
    %c0_419 = arith.constant 0 : index
    %c0_420 = arith.constant 0 : index
    %900 = vector.load %arg26[%c1_418, %c0_419, %c0_420] : memref<2x32x64xf32, #tpu.memory_space<vmem>>, vector<1x32x64xf32>
    %901 = vector.shape_cast %900 : vector<1x32x64xf32> to vector<32x64xf32>
    %c1_421 = arith.constant 1 : index
    %c0_422 = arith.constant 0 : index
    %c0_423 = arith.constant 0 : index
    %902 = vector.load %arg27[%c1_421, %c0_422, %c0_423] : memref<2x1x64xf32, #tpu.memory_space<vmem>>, vector<1x1x64xf32>
    %903 = vector.shape_cast %902 : vector<1x1x64xf32> to vector<1x64xf32>
    %cst_424 = arith.constant dense<0.000000e+00> : vector<16x64xf32>
    %904 = tpu.matmul %899, %901, %cst_424 {dimension_numbers = #tpu.dot_dimension_numbers<[1], [0], [0], [1], [0, 0, 1, 1], [], []>} : vector<16x32xf32>, vector<32x64xf32>, vector<16x64xf32> -> vector<16x64xf32>
    %905 = vector.broadcast %903 : vector<1x64xf32> to vector<16x64xf32>
    %906 = arith.addf %904, %905 : vector<16x64xf32>
    %cst_425 = arith.constant 0.000000e+00 : f32
    %907 = vector.broadcast %cst_425 : f32 to vector<16x64xf32>
    %908 = arith.maximumf %906, %907 : vector<16x64xf32>
    %c1_426 = arith.constant 1 : index
    %c0_427 = arith.constant 0 : index
    %c0_428 = arith.constant 0 : index
    %909 = vector.load %arg28[%c1_426, %c0_427, %c0_428] : memref<2x64x32xf32, #tpu.memory_space<vmem>>, vector<1x64x32xf32>
    %910 = vector.shape_cast %909 : vector<1x64x32xf32> to vector<64x32xf32>
    %c1_429 = arith.constant 1 : index
    %c0_430 = arith.constant 0 : index
    %c0_431 = arith.constant 0 : index
    %911 = vector.load %arg29[%c1_429, %c0_430, %c0_431] : memref<2x1x32xf32, #tpu.memory_space<vmem>>, vector<1x1x32xf32>
    %912 = vector.shape_cast %911 : vector<1x1x32xf32> to vector<1x32xf32>
    %cst_432 = arith.constant dense<0.000000e+00> : vector<16x32xf32>
    %913 = tpu.matmul %908, %910, %cst_432 {dimension_numbers = #tpu.dot_dimension_numbers<[1], [0], [0], [1], [0, 0, 1, 1], [], []>} : vector<16x64xf32>, vector<64x32xf32>, vector<16x32xf32> -> vector<16x32xf32>
    %914 = vector.broadcast %912 : vector<1x32xf32> to vector<16x32xf32>
    %915 = arith.addf %913, %914 : vector<16x32xf32>
    %916 = arith.addf %899, %915 : vector<16x32xf32>
    %c1_433 = arith.constant 1 : index
    %c0_434 = arith.constant 0 : index
    %c0_435 = arith.constant 0 : index
    %917 = vector.load %arg34[%c1_433, %c0_434, %c0_435] : memref<2x1x32xf32, #tpu.memory_space<vmem>>, vector<1x1x32xf32>
    %918 = vector.shape_cast %917 : vector<1x1x32xf32> to vector<1x32xf32>
    %c1_436 = arith.constant 1 : index
    %c0_437 = arith.constant 0 : index
    %c0_438 = arith.constant 0 : index
    %919 = vector.load %arg35[%c1_436, %c0_437, %c0_438] : memref<2x1x32xf32, #tpu.memory_space<vmem>>, vector<1x1x32xf32>
    %920 = vector.shape_cast %919 : vector<1x1x32xf32> to vector<1x32xf32>
    %cst_439 = arith.constant dense<0.000000e+00> : vector<16xf32>
    %921 = vector.multi_reduction <add>, %916, %cst_439 [1] : vector<16x32xf32> to vector<16xf32>
    %922 = vector.shape_cast %921 : vector<16xf32> to vector<16x1xf32>
    %cst_440 = arith.constant 3.200000e+01 : f32
    %923 = vector.broadcast %cst_440 : f32 to vector<16x1xf32>
    %924 = arith.divf %922, %923 : vector<16x1xf32>
    %925 = vector.broadcast %924 : vector<16x1xf32> to vector<16x32xf32>
    %926 = arith.subf %916, %925 : vector<16x32xf32>
    %927 = arith.mulf %926, %926 : vector<16x32xf32>
    %cst_441 = arith.constant dense<0.000000e+00> : vector<16xf32>
    %928 = vector.multi_reduction <add>, %927, %cst_441 [1] : vector<16x32xf32> to vector<16xf32>
    %929 = vector.shape_cast %928 : vector<16xf32> to vector<16x1xf32>
    %cst_442 = arith.constant 3.200000e+01 : f32
    %930 = vector.broadcast %cst_442 : f32 to vector<16x1xf32>
    %931 = arith.divf %929, %930 : vector<16x1xf32>
    %cst_443 = arith.constant 9.99999974E-6 : f32
    %932 = vector.broadcast %cst_443 : f32 to vector<16x1xf32>
    %933 = arith.addf %931, %932 : vector<16x1xf32>
    %934 = math.rsqrt %933 : vector<16x1xf32>
    %935 = vector.broadcast %934 : vector<16x1xf32> to vector<16x32xf32>
    %936 = arith.mulf %926, %935 : vector<16x32xf32>
    %937 = vector.broadcast %918 : vector<1x32xf32> to vector<16x32xf32>
    %938 = arith.mulf %936, %937 : vector<16x32xf32>
    %939 = vector.broadcast %920 : vector<1x32xf32> to vector<16x32xf32>
    %940 = arith.addf %938, %939 : vector<16x32xf32>
    %c0_444 = arith.constant 0 : index
    %c0_445 = arith.constant 0 : index
    %941 = vector.load %arg38[%c0_444, %c0_445] : memref<1x32xf32, #tpu.memory_space<vmem>>, vector<1x32xf32>
    %c0_446 = arith.constant 0 : index
    %c0_447 = arith.constant 0 : index
    %942 = vector.load %arg39[%c0_446, %c0_447] : memref<1x32xf32, #tpu.memory_space<vmem>>, vector<1x32xf32>
    %cst_448 = arith.constant dense<0.000000e+00> : vector<16xf32>
    %943 = vector.multi_reduction <add>, %940, %cst_448 [1] : vector<16x32xf32> to vector<16xf32>
    %944 = vector.shape_cast %943 : vector<16xf32> to vector<16x1xf32>
    %cst_449 = arith.constant 3.200000e+01 : f32
    %945 = vector.broadcast %cst_449 : f32 to vector<16x1xf32>
    %946 = arith.divf %944, %945 : vector<16x1xf32>
    %947 = vector.broadcast %946 : vector<16x1xf32> to vector<16x32xf32>
    %948 = arith.subf %940, %947 : vector<16x32xf32>
    %949 = arith.mulf %948, %948 : vector<16x32xf32>
    %cst_450 = arith.constant dense<0.000000e+00> : vector<16xf32>
    %950 = vector.multi_reduction <add>, %949, %cst_450 [1] : vector<16x32xf32> to vector<16xf32>
    %951 = vector.shape_cast %950 : vector<16xf32> to vector<16x1xf32>
    %cst_451 = arith.constant 3.200000e+01 : f32
    %952 = vector.broadcast %cst_451 : f32 to vector<16x1xf32>
    %953 = arith.divf %951, %952 : vector<16x1xf32>
    %cst_452 = arith.constant 9.99999974E-6 : f32
    %954 = vector.broadcast %cst_452 : f32 to vector<16x1xf32>
    %955 = arith.addf %953, %954 : vector<16x1xf32>
    %956 = math.rsqrt %955 : vector<16x1xf32>
    %957 = vector.broadcast %956 : vector<16x1xf32> to vector<16x32xf32>
    %958 = arith.mulf %948, %957 : vector<16x32xf32>
    %959 = vector.broadcast %941 : vector<1x32xf32> to vector<16x32xf32>
    %960 = arith.mulf %958, %959 : vector<16x32xf32>
    %961 = vector.broadcast %942 : vector<1x32xf32> to vector<16x32xf32>
    %962 = arith.addf %960, %961 : vector<16x32xf32>
    %c0_453 = arith.constant 0 : index
    %c0_454 = arith.constant 0 : index
    %963 = vector.load %arg40[%c0_453, %c0_454] : memref<16x32xf32, #tpu.memory_space<vmem>>, vector<16x32xf32>
    tpu.vector_store %arg40[%c0_453, %c0_454], %962 {strides = array<i32>} : memref<16x32xf32, #tpu.memory_space<vmem>>, vector<16x32xf32>,
    return
  }
}

</mosaic_0001>

<llo_original>
// kernel: transformer_forward.1
$region0: #{transformer_forward.1}
  #allocation0 [shape = 'u32[]', space=smem, size = 0x4, offset = 0x4, fixed_abs, tag = 'smem constant byte address 0x4 - core index']
  #allocation1 [shape = 'u32[144,128]{1,0:T(1,128)}', space=vmem, size = 0x12000, scoped, tag = 'internal scratch']
  %s0 = inlined_call_operand.smem [shape: u32[41], index: -1, kind: input, shape index: {}]
  %s1 = sld [smem:[%s0]]
  %s2 = scalar_lea.smem %s0, 1
  %s3 = sld [smem:[%s2]]
  %s4 = scalar_lea.smem %s0, 2
  %s5 = sld [smem:[%s4]]
  %s6 = scalar_lea.smem %s0, 3
  %s7 = sld [smem:[%s6]]
  %s8 = scalar_lea.smem %s0, 4
  %s9 = sld [smem:[%s8]]
  %s10 = scalar_lea.smem %s0, 5
  %s11 = sld [smem:[%s10]]
  %s12 = scalar_lea.smem %s0, 6
  %s13 = sld [smem:[%s12]]
  %s14 = scalar_lea.smem %s0, 7
  %s15 = sld [smem:[%s14]]
  %s16 = scalar_lea.smem %s0, 8
  %s17 = sld [smem:[%s16]]
  %s18 = scalar_lea.smem %s0, 9
  %s19 = sld [smem:[%s18]]
  %s20 = scalar_lea.smem %s0, 10
  %s21 = sld [smem:[%s20]]
  %s22 = scalar_lea.smem %s0, 11
  %s23 = sld [smem:[%s22]]
  %s24 = scalar_lea.smem %s0, 12
  %s25 = sld [smem:[%s24]]
  %s26 = scalar_lea.smem %s0, 13
  %s27 = sld [smem:[%s26]]
  %s28 = scalar_lea.smem %s0, 14
  %s29 = sld [smem:[%s28]]
  %s30 = scalar_lea.smem %s0, 15
  %s31 = sld [smem:[%s30]]
  %s32 = scalar_lea.smem %s0, 16
  %s33 = sld [smem:[%s32]]
  %s34 = scalar_lea.smem %s0, 17
  %s35 = sld [smem:[%s34]]
  %s36 = scalar_lea.smem %s0, 18
  %s37 = sld [smem:[%s36]]
  %s38 = scalar_lea.smem %s0, 19
  %s39 = sld [smem:[%s38]]
  %s40 = scalar_lea.smem %s0, 20
  %s41 = sld [smem:[%s40]]
  %s42 = scalar_lea.smem %s0, 21
  %s43 = sld [smem:[%s42]]
  %s44 = scalar_lea.smem %s0, 22
  %s45 = sld [smem:[%s44]]
  %s46 = scalar_lea.smem %s0, 23
  %s47 = sld [smem:[%s46]]
  %s48 = scalar_lea.smem %s0, 24
  %s49 = sld [smem:[%s48]]
  %s50 = scalar_lea.smem %s0, 25
  %s51 = sld [smem:[%s50]]
  %s52 = scalar_lea.smem %s0, 26
  %s53 = sld [smem:[%s52]]
  %s54 = scalar_lea.smem %s0, 27
  %s55 = sld [smem:[%s54]]
  %s56 = scalar_lea.smem %s0, 28
  %s57 = sld [smem:[%s56]]
  %s58 = scalar_lea.smem %s0, 29
  %s59 = sld [smem:[%s58]]
  %s60 = scalar_lea.smem %s0, 30
  %s61 = sld [smem:[%s60]]
  %s62 = scalar_lea.smem %s0, 31
  %s63 = sld [smem:[%s62]]
  %s64 = scalar_lea.smem %s0, 32
  %s65 = sld [smem:[%s64]]
  %s66 = scalar_lea.smem %s0, 33
  %s67 = sld [smem:[%s66]]
  %s68 = scalar_lea.smem %s0, 34
  %s69 = sld [smem:[%s68]]
  %s70 = scalar_lea.smem %s0, 35
  %s71 = sld [smem:[%s70]]
  %s72 = scalar_lea.smem %s0, 36
  %s73 = sld [smem:[%s72]]
  %s74 = scalar_lea.smem %s0, 37
  %s75 = sld [smem:[%s74]]
  %s76 = scalar_lea.smem %s0, 38
  %s77 = sld [smem:[%s76]]
  %s78 = scalar_lea.smem %s0, 39
  %s79 = sld [smem:[%s78]]
  %s80 = scalar_lea.smem %s0, 40
  %s81 = sld [smem:[%s80]]
  %s82 = sld [smem:[#allocation0]]
  $region234: #{transformer_forward.1} parent=0
    _
  %s84 = ssub.s32 1, %s82
  %s85 = scalar_select 0, %s84, %s82
  $region1: #{transformer_forward.1} parent=0
    #allocation2 [shape = 'u8[8192]{0}', space=vmem, size = 0x2000, scoped, tag = 'input window, operand 0, single buffered']
    #allocation3 [shape = 's32[1]{0}', space=sflag, size = 0x4, scoped, tag = 'scoped memory for transformer_forward.1']
    #allocation4 [shape = 's32[1]{0}', space=sflag, size = 0x4, scoped, tag = 'scoped memory for transformer_forward.1']
    #allocation5 [shape = 'u8[8192]{0}', space=vmem, size = 0x2000, scoped, tag = 'input window, operand 1, single buffered']
    #allocation6 [shape = 's32[1]{0}', space=sflag, size = 0x4, scoped, tag = 'scoped memory for transformer_forward.1']
    #allocation7 [shape = 'u8[1024]{0}', space=vmem, size = 0x400, scoped, tag = 'input window, operand 7, single buffered']
    #allocation8 [shape = 'u8[1024]{0}', space=vmem, size = 0x400, scoped, tag = 'input window, operand 9, single buffered']
    #allocation9 [shape = 's32[1]{0}', space=sflag, size = 0x4, scoped, tag = 'scoped memory for transformer_forward.1']
    #allocation10 [shape = 'u8[1024]{0}', space=vmem, size = 0x400, scoped, tag = 'input window, operand 11, single buffered']
    #allocation11 [shape = 'u8[1024]{0}', space=vmem, size = 0x400, scoped, tag = 'input window, operand 13, single buffered']
    #allocation12 [shape = 's32[1]{0}', space=sflag, size = 0x4, scoped, tag = 'scoped memory for transformer_forward.1']
    #allocation13 [shape = 'u8[1024]{0}', space=vmem, size = 0x400, scoped, tag = 'input window, operand 14, single buffered']
    #allocation14 [shape = 'u8[1024]{0}', space=vmem, size = 0x400, scoped, tag = 'input window, operand 15, single buffered']
    #allocation15 [shape = 's32[1]{0}', space=sflag, size = 0x4, scoped, tag = 'scoped memory for transformer_forward.1']
    #allocation16 [shape = 'u8[1024]{0}', space=vmem, size = 0x400, scoped, tag = 'input window, operand 16, single buffered']
    #allocation17 [shape = 'u8[1024]{0}', space=vmem, size = 0x400, scoped, tag = 'input window, operand 17, single buffered']
    #allocation18 [shape = 's32[1]{0}', space=sflag, size = 0x4, scoped, tag = 'scoped memory for transformer_forward.1']
    #allocation19 [shape = 'u8[1024]{0}', space=vmem, size = 0x400, scoped, tag = 'input window, operand 19, single buffered']
    #allocation20 [shape = 'u8[1024]{0}', space=vmem, size = 0x400, scoped, tag = 'input window, operand 21, single buffered']
    #allocation21 [shape = 's32[1]{0}', space=sflag, size = 0x4, scoped, tag = 'scoped memory for transformer_forward.1']
    #allocation22 [shape = 'u8[1024]{0}', space=vmem, size = 0x400, scoped, tag = 'input window, operand 23, single buffered']
    #allocation23 [shape = 'u8[1024]{0}', space=vmem, size = 0x400, scoped, tag = 'input window, operand 25, single buffered']
    #allocation24 [shape = 's32[1]{0}', space=sflag, size = 0x4, scoped, tag = 'scoped memory for transformer_forward.1']
    #allocation25 [shape = 'u8[32768]{0}', space=vmem, size = 0x8000, scoped, tag = 'input window, operand 26, single buffered']
    #allocation26 [shape = 'u8[1024]{0}', space=vmem, size = 0x400, scoped, tag = 'input window, operand 27, single buffered']
    #allocation27 [shape = 's32[1]{0}', space=sflag, size = 0x4, scoped, tag = 'scoped memory for transformer_forward.1']
    #allocation28 [shape = 'u8[8192]{0}', space=vmem, size = 0x2000, scoped, tag = 'output window, operand 0, single buffered']
    %86 = vsyncpa [#allocation3], 0
    %87 = vsyncpa [#allocation6], 0
    %88 = vsyncpa [#allocation9], 0
    %89 = vsyncpa [#allocation12], 0
    %90 = vsyncpa [#allocation15], 0
    %91 = vsyncpa [#allocation18], 0
    %92 = vsyncpa [#allocation21], 0
    %93 = vsyncpa [#allocation24], 0
    %94 = vsyncpa [#allocation27], 0
    %95 = vsyncpa [#allocation4], 0
    // Predicated region
    $region2: #{transformer_forward.1} parent=1 // pred_check
      _
    $region3: #{transformer_forward.1} parent=1 // pred_check_branch
      %97 = sbr.rel (0) target = $region5
    $region4: #{transformer_forward.1} parent=1 // pred_region
      %s99 = ssub.s32 256, 256
      %100 = vsyncadd [#allocation3], %s99
      %s101 = sshll.u32 [#allocation2], 4
      %s102 = int_to_ptr.vmem [resolvable:$true] %s101
      %107 = dma.hbm_to_vmem [thread:$0]  %s1, 256, %s102, [#allocation3], 128, 128, 8
    $region5: #{transformer_forward.1} parent=1 // pred_fallthru
      _
    // Predicated region
    $region6: #{transformer_forward.1} parent=1 // pred_check
      _
    $region7: #{transformer_forward.1} parent=1 // pred_check_branch
      %109 = sbr.rel (0) target = $region9
    $region8: #{transformer_forward.1} parent=1 // pred_region
      %s111 = ssub.s32 256, 256
      %112 = vsyncadd [#allocation6], %s111
      %s113 = sshll.u32 [#allocation5], 4
      %s114 = int_to_ptr.vmem [resolvable:$true] %s113
      %119 = dma.hbm_to_vmem [thread:$0]  %s3, 256, %s114, [#allocation6], 128, 128, 8
    $region9: #{transformer_forward.1} parent=1 // pred_fallthru
      _
    // Predicated region
    $region10: #{transformer_forward.1} parent=1 // pred_check
      _
    $region11: #{transformer_forward.1} parent=1 // pred_check_branch
      %121 = sbr.rel (0) target = $region13
    $region12: #{transformer_forward.1} parent=1 // pred_region
      _
    $region13: #{transformer_forward.1} parent=1 // pred_fallthru
      _
    // Predicated region
    $region14: #{transformer_forward.1} parent=1 // pred_check
      _
    $region15: #{transformer_forward.1} parent=1 // pred_check_branch
      %123 = sbr.rel (0) target = $region17
    $region16: #{transformer_forward.1} parent=1 // pred_region
      _
    $region17: #{transformer_forward.1} parent=1 // pred_fallthru
      _
    // Predicated region
    $region18: #{transformer_forward.1} parent=1 // pred_check
      _
    $region19: #{transformer_forward.1} parent=1 // pred_check_branch
      %125 = sbr.rel (0) target = $region21
    $region20: #{transformer_forward.1} parent=1 // pred_region
      _
    $region21: #{transformer_forward.1} parent=1 // pred_fallthru
      _
    // Predicated region
    $region22: #{transformer_forward.1} parent=1 // pred_check
      _
    $region23: #{transformer_forward.1} parent=1 // pred_check_branch
      %127 = sbr.rel (0) target = $region25
    $region24: #{transformer_forward.1} parent=1 // pred_region
      _
    $region25: #{transformer_forward.1} parent=1 // pred_fallthru
      _
    // Predicated region
    $region26: #{transformer_forward.1} parent=1 // pred_check
      _
    $region27: #{transformer_forward.1} parent=1 // pred_check_branch
      %129 = sbr.rel (0) target = $region29
    $region28: #{transformer_forward.1} parent=1 // pred_region
      _
    $region29: #{transformer_forward.1} parent=1 // pred_fallthru
      _
    // Predicated region
    $region30: #{transformer_forward.1} parent=1 // pred_check
      _
    $region31: #{transformer_forward.1} parent=1 // pred_check_branch
      %131 = sbr.rel (0) target = $region33
    $region32: #{transformer_forward.1} parent=1 // pred_region
      %s133 = ssub.s32 32, 32
      %134 = vsyncadd [#allocation6], %s133
      %s135 = sshll.u32 [#allocation7], 4
      %s136 = int_to_ptr.vmem [resolvable:$true] %s135
      %141 = dma.hbm_to_vmem [thread:$0]  %s15, 32, %s136, [#allocation6], 16, 16, 1
    $region33: #{transformer_forward.1} parent=1 // pred_fallthru
      _
    // Predicated region
    $region34: #{transformer_forward.1} parent=1 // pred_check
      _
    $region35: #{transformer_forward.1} parent=1 // pred_check_branch
      %143 = sbr.rel (0) target = $region37
    $region36: #{transformer_forward.1} parent=1 // pred_region
      _
    $region37: #{transformer_forward.1} parent=1 // pred_fallthru
      _
    // Predicated region
    $region38: #{transformer_forward.1} parent=1 // pred_check
      _
    $region39: #{transformer_forward.1} parent=1 // pred_check_branch
      %145 = sbr.rel (0) target = $region41
    $region40: #{transformer_forward.1} parent=1 // pred_region
      %s147 = ssub.s32 32, 32
      %148 = vsyncadd [#allocation9], %s147
      %s149 = sshll.u32 [#allocation8], 4
      %s150 = int_to_ptr.vmem [resolvable:$true] %s149
      %155 = dma.hbm_to_vmem [thread:$0]  %s19, 32, %s150, [#allocation9], 16, 16, 1
    $region41: #{transformer_forward.1} parent=1 // pred_fallthru
      _
    // Predicated region
    $region42: #{transformer_forward.1} parent=1 // pred_check
      _
    $region43: #{transformer_forward.1} parent=1 // pred_check_branch
      %157 = sbr.rel (0) target = $region45
    $region44: #{transformer_forward.1} parent=1 // pred_region
      _
    $region45: #{transformer_forward.1} parent=1 // pred_fallthru
      _
    // Predicated region
    $region46: #{transformer_forward.1} parent=1 // pred_check
      _
    $region47: #{transformer_forward.1} parent=1 // pred_check_branch
      %159 = sbr.rel (0) target = $region49
    $region48: #{transformer_forward.1} parent=1 // pred_region
      %s161 = ssub.s32 32, 32
      %162 = vsyncadd [#allocation9], %s161
      %s163 = sshll.u32 [#allocation10], 4
      %s164 = int_to_ptr.vmem [resolvable:$true] %s163
      %169 = dma.hbm_to_vmem [thread:$0]  %s23, 32, %s164, [#allocation9], 16, 16, 1
    $region49: #{transformer_forward.1} parent=1 // pred_fallthru
      _
    // Predicated region
    $region50: #{transformer_forward.1} parent=1 // pred_check
      _
    $region51: #{transformer_forward.1} parent=1 // pred_check_branch
      %171 = sbr.rel (0) target = $region53
    $region52: #{transformer_forward.1} parent=1 // pred_region
      _
    $region53: #{transformer_forward.1} parent=1 // pred_fallthru
      _
    // Predicated region
    $region54: #{transformer_forward.1} parent=1 // pred_check
      _
    $region55: #{transformer_forward.1} parent=1 // pred_check_branch
      %173 = sbr.rel (0) target = $region57
    $region56: #{transformer_forward.1} parent=1 // pred_region
      %s175 = ssub.s32 32, 32
      %176 = vsyncadd [#allocation12], %s175
      %s177 = sshll.u32 [#allocation11], 4
      %s178 = int_to_ptr.vmem [resolvable:$true] %s177
      %183 = dma.hbm_to_vmem [thread:$0]  %s27, 32, %s178, [#allocation12], 16, 16, 1
    $region57: #{transformer_forward.1} parent=1 // pred_fallthru
      _
    // Predicated region
    $region58: #{transformer_forward.1} parent=1 // pred_check
      _
    $region59: #{transformer_forward.1} parent=1 // pred_check_branch
      %185 = sbr.rel (0) target = $region61
    $region60: #{transformer_forward.1} parent=1 // pred_region
      %s187 = ssub.s32 32, 32
      %188 = vsyncadd [#allocation12], %s187
      %s189 = sshll.u32 [#allocation13], 4
      %s190 = int_to_ptr.vmem [resolvable:$true] %s189
      %195 = dma.hbm_to_vmem [thread:$0]  %s29, 32, %s190, [#allocation12], 16, 16, 1
    $region61: #{transformer_forward.1} parent=1 // pred_fallthru
      _
    // Predicated region
    $region62: #{transformer_forward.1} parent=1 // pred_check
      _
    $region63: #{transformer_forward.1} parent=1 // pred_check_branch
      %197 = sbr.rel (0) target = $region65
    $region64: #{transformer_forward.1} parent=1 // pred_region
      %s199 = ssub.s32 32, 32
      %200 = vsyncadd [#allocation15], %s199
      %s201 = sshll.u32 [#allocation14], 4
      %s202 = int_to_ptr.vmem [resolvable:$true] %s201
      %207 = dma.hbm_to_vmem [thread:$0]  %s31, 32, %s202, [#allocation15], 16, 16, 1
    $region65: #{transformer_forward.1} parent=1 // pred_fallthru
      _
    // Predicated region
    $region66: #{transformer_forward.1} parent=1 // pred_check
      _
    $region67: #{transformer_forward.1} parent=1 // pred_check_branch
      %209 = sbr.rel (0) target = $region69
    $region68: #{transformer_forward.1} parent=1 // pred_region
      %s211 = ssub.s32 32, 32
      %212 = vsyncadd [#allocation15], %s211
      %s213 = sshll.u32 [#allocation16], 4
      %s214 = int_to_ptr.vmem [resolvable:$true] %s213
      %219 = dma.hbm_to_vmem [thread:$0]  %s33, 32, %s214, [#allocation15], 16, 16, 1
    $region69: #{transformer_forward.1} parent=1 // pred_fallthru
      _
    // Predicated region
    $region70: #{transformer_forward.1} parent=1 // pred_check
      _
    $region71: #{transformer_forward.1} parent=1 // pred_check_branch
      %221 = sbr.rel (0) target = $region73
    $region72: #{transformer_forward.1} parent=1 // pred_region
      %s223 = ssub.s32 32, 32
      %224 = vsyncadd [#allocation18], %s223
      %s225 = sshll.u32 [#allocation17], 4
      %s226 = int_to_ptr.vmem [resolvable:$true] %s225
      %231 = dma.hbm_to_vmem [thread:$0]  %s35, 32, %s226, [#allocation18], 16, 16, 1
    $region73: #{transformer_forward.1} parent=1 // pred_fallthru
      _
    // Predicated region
    $region74: #{transformer_forward.1} parent=1 // pred_check
      _
    $region75: #{transformer_forward.1} parent=1 // pred_check_branch
      %233 = sbr.rel (0) target = $region77
    $region76: #{transformer_forward.1} parent=1 // pred_region
      _
    $region77: #{transformer_forward.1} parent=1 // pred_fallthru
      _
    // Predicated region
    $region78: #{transformer_forward.1} parent=1 // pred_check
      _
    $region79: #{transformer_forward.1} parent=1 // pred_check_branch
      %235 = sbr.rel (0) target = $region81
    $region80: #{transformer_forward.1} parent=1 // pred_region
      %s237 = ssub.s32 32, 32
      %238 = vsyncadd [#allocation18], %s237
      %s239 = sshll.u32 [#allocation19], 4
      %s240 = int_to_ptr.vmem [resolvable:$true] %s239
      %245 = dma.hbm_to_vmem [thread:$0]  %s39, 32, %s240, [#allocation18], 16, 16, 1
    $region81: #{transformer_forward.1} parent=1 // pred_fallthru
      _
    // Predicated region
    $region82: #{transformer_forward.1} parent=1 // pred_check
      _
    $region83: #{transformer_forward.1} parent=1 // pred_check_branch
      %247 = sbr.rel (0) target = $region85
    $region84: #{transformer_forward.1} parent=1 // pred_region
      _
    $region85: #{transformer_forward.1} parent=1 // pred_fallthru
      _
    // Predicated region
    $region86: #{transformer_forward.1} parent=1 // pred_check
      _
    $region87: #{transformer_forward.1} parent=1 // pred_check_branch
      %249 = sbr.rel (0) target = $region89
    $region88: #{transformer_forward.1} parent=1 // pred_region
      %s251 = ssub.s32 32, 32
      %252 = vsyncadd [#allocation21], %s251
      %s253 = sshll.u32 [#allocation20], 4
      %s254 = int_to_ptr.vmem [resolvable:$true] %s253
      %259 = dma.hbm_to_vmem [thread:$0]  %s43, 32, %s254, [#allocation21], 16, 16, 1
    $region89: #{transformer_forward.1} parent=1 // pred_fallthru
      _
    // Predicated region
    $region90: #{transformer_forward.1} parent=1 // pred_check
      _
    $region91: #{transformer_forward.1} parent=1 // pred_check_branch
      %261 = sbr.rel (0) target = $region93
    $region92: #{transformer_forward.1} parent=1 // pred_region
      _
    $region93: #{transformer_forward.1} parent=1 // pred_fallthru
      _
    // Predicated region
    $region94: #{transformer_forward.1} parent=1 // pred_check
      _
    $region95: #{transformer_forward.1} parent=1 // pred_check_branch
      %263 = sbr.rel (0) target = $region97
    $region96: #{transformer_forward.1} parent=1 // pred_region
      %s265 = ssub.s32 32, 32
      %266 = vsyncadd [#allocation21], %s265
      %s267 = sshll.u32 [#allocation22], 4
      %s268 = int_to_ptr.vmem [resolvable:$true] %s267
      %273 = dma.hbm_to_vmem [thread:$0]  %s47, 32, %s268, [#allocation21], 16, 16, 1
    $region97: #{transformer_forward.1} parent=1 // pred_fallthru
      _
    // Predicated region
    $region98: #{transformer_forward.1} parent=1 // pred_check
      _
    $region99: #{transformer_forward.1} parent=1 // pred_check_branch
      %275 = sbr.rel (0) target = $region101
    $region100: #{transformer_forward.1} parent=1 // pred_region
      _
    $region101: #{transformer_forward.1} parent=1 // pred_fallthru
      _
    // Predicated region
    $region102: #{transformer_forward.1} parent=1 // pred_check
      _
    $region103: #{transformer_forward.1} parent=1 // pred_check_branch
      %277 = sbr.rel (0) target = $region105
    $region104: #{transformer_forward.1} parent=1 // pred_region
      %s279 = ssub.s32 32, 32
      %280 = vsyncadd [#allocation24], %s279
      %s281 = sshll.u32 [#allocation23], 4
      %s282 = int_to_ptr.vmem [resolvable:$true] %s281
      %287 = dma.hbm_to_vmem [thread:$0]  %s51, 32, %s282, [#allocation24], 16, 16, 1
    $region105: #{transformer_forward.1} parent=1 // pred_fallthru
      _
    // Predicated region
    $region106: #{transformer_forward.1} parent=1 // pred_check
      _
    $region107: #{transformer_forward.1} parent=1 // pred_check_branch
      %289 = sbr.rel (0) target = $region109
    $region108: #{transformer_forward.1} parent=1 // pred_region
      %s291 = ssub.s32 1024, 1024
      %292 = vsyncadd [#allocation24], %s291
      %s293 = sshll.u32 [#allocation25], 4
      %s294 = int_to_ptr.vmem [resolvable:$true] %s293
      %299 = dma.hbm_to_vmem [thread:$0]  %s53, 1024, %s294, [#allocation24], 128, 128, 8
    $region109: #{transformer_forward.1} parent=1 // pred_fallthru
      _
    // Predicated region
    $region110: #{transformer_forward.1} parent=1 // pred_check
      _
    $region111: #{transformer_forward.1} parent=1 // pred_check_branch
      %301 = sbr.rel (0) target = $region113
    $region112: #{transformer_forward.1} parent=1 // pred_region
      %s303 = ssub.s32 32, 32
      %304 = vsyncadd [#allocation27], %s303
      %s305 = sshll.u32 [#allocation26], 4
      %s306 = int_to_ptr.vmem [resolvable:$true] %s305
      %311 = dma.hbm_to_vmem [thread:$0]  %s55, 32, %s306, [#allocation27], 16, 16, 1
    $region113: #{transformer_forward.1} parent=1 // pred_fallthru
      _
    // Predicated region
    $region114: #{transformer_forward.1} parent=1 // pred_check
      _
    $region115: #{transformer_forward.1} parent=1 // pred_check_branch
      %313 = sbr.rel (0) target = $region117
    $region116: #{transformer_forward.1} parent=1 // pred_region
      _
    $region117: #{transformer_forward.1} parent=1 // pred_fallthru
      _
    // Predicated region
    $region118: #{transformer_forward.1} parent=1 // pred_check
      _
    $region119: #{transformer_forward.1} parent=1 // pred_check_branch
      %315 = sbr.rel (0) target = $region121
    $region120: #{transformer_forward.1} parent=1 // pred_region
      _
    $region121: #{transformer_forward.1} parent=1 // pred_fallthru
      _
    // Predicated region
    $region122: #{transformer_forward.1} parent=1 // pred_check
      _
    $region123: #{transformer_forward.1} parent=1 // pred_check_branch
      %317 = sbr.rel (0) target = $region125
    $region124: #{transformer_forward.1} parent=1 // pred_region
      _
    $region125: #{transformer_forward.1} parent=1 // pred_fallthru
      _
    // Predicated region
    $region126: #{transformer_forward.1} parent=1 // pred_check
      _
    $region127: #{transformer_forward.1} parent=1 // pred_check_branch
      %319 = sbr.rel (0) target = $region129
    $region128: #{transformer_forward.1} parent=1 // pred_region
      _
    $region129: #{transformer_forward.1} parent=1 // pred_fallthru
      _
    // Predicated region
    $region130: #{transformer_forward.1} parent=1 // pred_check
      _
    $region131: #{transformer_forward.1} parent=1 // pred_check_branch
      %321 = sbr.rel (0) target = $region133
    $region132: #{transformer_forward.1} parent=1 // pred_region
      _
    $region133: #{transformer_forward.1} parent=1 // pred_fallthru
      _
    // Predicated region
    $region134: #{transformer_forward.1} parent=1 // pred_check
      _
    $region135: #{transformer_forward.1} parent=1 // pred_check_branch
      %323 = sbr.rel (0) target = $region137
    $region136: #{transformer_forward.1} parent=1 // pred_region
      _
    $region137: #{transformer_forward.1} parent=1 // pred_fallthru
      _
    // Predicated region
    $region138: #{transformer_forward.1} parent=1 // pred_check
      _
    $region139: #{transformer_forward.1} parent=1 // pred_check_branch
      %325 = sbr.rel (0) target = $region141
    $region140: #{transformer_forward.1} parent=1 // pred_region
      _
    $region141: #{transformer_forward.1} parent=1 // pred_fallthru
      _
    // Predicated region
    $region142: #{transformer_forward.1} parent=1 // pred_check
      _
    $region143: #{transformer_forward.1} parent=1 // pred_check_branch
      %327 = sbr.rel (0) target = $region145
    $region144: #{transformer_forward.1} parent=1 // pred_region
      _
    $region145: #{transformer_forward.1} parent=1 // pred_fallthru
      _
    // Predicated region
    $region146: #{transformer_forward.1} parent=1 // pred_check
      _
    $region147: #{transformer_forward.1} parent=1 // pred_check_branch
      %329 = sbr.rel (0) target = $region149
    $region148: #{transformer_forward.1} parent=1 // pred_region
      _
    $region149: #{transformer_forward.1} parent=1 // pred_fallthru
      _
    // Predicated region
    $region150: #{transformer_forward.1} parent=1 // pred_check
      _
    $region151: #{transformer_forward.1} parent=1 // pred_check_branch
      %331 = sbr.rel (0) target = $region153
    $region152: #{transformer_forward.1} parent=1 // pred_region
      _
    $region153: #{transformer_forward.1} parent=1 // pred_fallthru
      _
    // Predicated region
    $region154: #{transformer_forward.1} parent=1 // pred_check
      _
    $region155: #{transformer_forward.1} parent=1 // pred_check_branch
      %333 = sbr.rel (0) target = $region157
    $region156: #{transformer_forward.1} parent=1 // pred_region
      _
    $region157: #{transformer_forward.1} parent=1 // pred_fallthru
      _
    // Predicated region
    $region158: #{transformer_forward.1} parent=1 // pred_check
      _
    $region159: #{transformer_forward.1} parent=1 // pred_check_branch
      %335 = sbr.rel (0) target = $region161
    $region160: #{transformer_forward.1} parent=1 // pred_region
      _
    $region161: #{transformer_forward.1} parent=1 // pred_fallthru
      _
    // Predicated region
    $region162: #{transformer_forward.1} parent=1 // pred_check
      _
    $region163: #{transformer_forward.1} parent=1 // pred_check_branch
      %337 = sbr.rel (0) target = $region165
    $region164: #{transformer_forward.1} parent=1 // pred_region
      %338 = dma.done [#allocation3], 256
    $region165: #{transformer_forward.1} parent=1 // pred_fallthru
      _
    // Predicated region
    $region166: #{transformer_forward.1} parent=1 // pred_check
      _
    $region167: #{transformer_forward.1} parent=1 // pred_check_branch
      %340 = sbr.rel (0) target = $region169
    $region168: #{transformer_forward.1} parent=1 // pred_region
      %341 = dma.done [#allocation6], 256
    $region169: #{transformer_forward.1} parent=1 // pred_fallthru
      _
    // Predicated region
    $region170: #{transformer_forward.1} parent=1 // pred_check
      _
    $region171: #{transformer_forward.1} parent=1 // pred_check_branch
      %343 = sbr.rel (0) target = $region173
    $region172: #{transformer_forward.1} parent=1 // pred_region
      %344 = dma.done [#allocation6], 32
    $region173: #{transformer_forward.1} parent=1 // pred_fallthru
      _
    // Predicated region
    $region174: #{transformer_forward.1} parent=1 // pred_check
      _
    $region175: #{transformer_forward.1} parent=1 // pred_check_branch
      %346 = sbr.rel (0) target = $region177
    $region176: #{transformer_forward.1} parent=1 // pred_region
      %347 = dma.done [#allocation9], 32
    $region177: #{transformer_forward.1} parent=1 // pred_fallthru
      _
    // Predicated region
    $region178: #{transformer_forward.1} parent=1 // pred_check
      _
    $region179: #{transformer_forward.1} parent=1 // pred_check_branch
      %349 = sbr.rel (0) target = $region181
    $region180: #{transformer_forward.1} parent=1 // pred_region
      %350 = dma.done [#allocation9], 32
    $region181: #{transformer_forward.1} parent=1 // pred_fallthru
      _
    // Predicated region
    $region182: #{transformer_forward.1} parent=1 // pred_check
      _
    $region183: #{transformer_forward.1} parent=1 // pred_check_branch
      %352 = sbr.rel (0) target = $region185
    $region184: #{transformer_forward.1} parent=1 // pred_region
      %353 = dma.done [#allocation12], 32
    $region185: #{transformer_forward.1} parent=1 // pred_fallthru
      _
    // Predicated region
    $region186: #{transformer_forward.1} parent=1 // pred_check
      _
    $region187: #{transformer_forward.1} parent=1 // pred_check_branch
      %355 = sbr.rel (0) target = $region189
    $region188: #{transformer_forward.1} parent=1 // pred_region
      %356 = dma.done [#allocation12], 32
    $region189: #{transformer_forward.1} parent=1 // pred_fallthru
      _
    // Predicated region
    $region190: #{transformer_forward.1} parent=1 // pred_check
      _
    $region191: #{transformer_forward.1} parent=1 // pred_check_branch
      %358 = sbr.rel (0) target = $region193
    $region192: #{transformer_forward.1} parent=1 // pred_region
      %359 = dma.done [#allocation15], 32
    $region193: #{transformer_forward.1} parent=1 // pred_fallthru
      _
    // Predicated region
    $region194: #{transformer_forward.1} parent=1 // pred_check
      _
    $region195: #{transformer_forward.1} parent=1 // pred_check_branch
      %361 = sbr.rel (0) target = $region197
    $region196: #{transformer_forward.1} parent=1 // pred_region
      %362 = dma.done [#allocation15], 32
    $region197: #{transformer_forward.1} parent=1 // pred_fallthru
      _
    // Predicated region
    $region198: #{transformer_forward.1} parent=1 // pred_check
      _
    $region199: #{transformer_forward.1} parent=1 // pred_check_branch
      %364 = sbr.rel (0) target = $region201
    $region200: #{transformer_forward.1} parent=1 // pred_region
      %365 = dma.done [#allocation18], 32
    $region201: #{transformer_forward.1} parent=1 // pred_fallthru
      _
    // Predicated region
    $region202: #{transformer_forward.1} parent=1 // pred_check
      _
    $region203: #{transformer_forward.1} parent=1 // pred_check_branch
      %367 = sbr.rel (0) target = $region205
    $region204: #{transformer_forward.1} parent=1 // pred_region
      %368 = dma.done [#allocation18], 32
    $region205: #{transformer_forward.1} parent=1 // pred_fallthru
      _
    // Predicated region
    $region206: #{transformer_forward.1} parent=1 // pred_check
      _
    $region207: #{transformer_forward.1} parent=1 // pred_check_branch
      %370 = sbr.rel (0) target = $region209
    $region208: #{transformer_forward.1} parent=1 // pred_region
      %371 = dma.done [#allocation21], 32
    $region209: #{transformer_forward.1} parent=1 // pred_fallthru
      _
    // Predicated region
    $region210: #{transformer_forward.1} parent=1 // pred_check
      _
    $region211: #{transformer_forward.1} parent=1 // pred_check_branch
      %373 = sbr.rel (0) target = $region213
    $region212: #{transformer_forward.1} parent=1 // pred_region
      %374 = dma.done [#allocation21], 32
    $region213: #{transformer_forward.1} parent=1 // pred_fallthru
      _
    // Predicated region
    $region214: #{transformer_forward.1} parent=1 // pred_check
      _
    $region215: #{transformer_forward.1} parent=1 // pred_check_branch
      %376 = sbr.rel (0) target = $region217
    $region216: #{transformer_forward.1} parent=1 // pred_region
      %377 = dma.done [#allocation24], 32
    $region217: #{transformer_forward.1} parent=1 // pred_fallthru
      _
    // Predicated region
    $region218: #{transformer_forward.1} parent=1 // pred_check
      _
    $region219: #{transformer_forward.1} parent=1 // pred_check_branch
      %379 = sbr.rel (0) target = $region221
    $region220: #{transformer_forward.1} parent=1 // pred_region
      %380 = dma.done [#allocation24], 1024
    $region221: #{transformer_forward.1} parent=1 // pred_fallthru
      _
    // Predicated region
    $region222: #{transformer_forward.1} parent=1 // pred_check
      _
    $region223: #{transformer_forward.1} parent=1 // pred_check_branch
      %382 = sbr.rel (0) target = $region225
    $region224: #{transformer_forward.1} parent=1 // pred_region
      %383 = dma.done [#allocation27], 32
    $region225: #{transformer_forward.1} parent=1 // pred_fallthru
      _
    %v384 = vld [vmem:[%s5] sm:$0xff]
    %v385 = vld [vmem:[%s5 + $0x8] sm:$0xff]
    %v386 = vld [vmem:[%s7] sm:$0xff]
    %v387 = vld [vmem:[%s7 + $0x8] sm:$0xff]
    %v388 = vld [vmem:[%s9] sm:$0xff]
    %v389 = vld [vmem:[%s9 + $0x8] sm:$0xff]
    %v390 = vld [vmem:[#allocation2] sm:$0xff]
    %v391 = vld [vmem:[#allocation2 + $0x8] sm:$0xff]
    %v392 = vld [vmem:[%s13] sm:$0xff]
    %v393 = vld [vmem:[%s13 + $0x8] sm:$0xff]
    %v394 = vld [vmem:[%s13 + $0x10] sm:$0xff]
    %v395 = vld [vmem:[%s13 + $0x18] sm:$0xff]
    %v396 = vld [vmem:[#allocation7] sm:$0x1]
    %v397 = vld [vmem:[%s17] sm:$0xff]
    %v398 = vld [vmem:[%s17 + $0x8] sm:$0xff]
    %v399 = vld [vmem:[%s17 + $0x10] sm:$0xff]
    %v400 = vld [vmem:[%s17 + $0x18] sm:$0xff]
    %v401 = vld [vmem:[#allocation8] sm:$0x1]
    %v403 = vlaneseq
    %v404 = vshrl.u32 %v403, 7
    %v405 = vsub.s32 0, %v404
    %v406 = vrot.slane %v396, %v405
    %vm408 = vcmask 261120
    %v410 = vsel %vm408, %v390, 0
    %v413 = vsel %vm408, %v391, 0
    %415 = vmatprep.subr.mxu0 0.0
    %416 = vmatpush1.msra.mxu0 %v392
    %417 = vmatprep.subr.mxu0 0.0
    %418 = vmatpush1.msra.mxu0 %v393
    %419 = vmatprep.subr.mxu0 0.0
    %420 = vmatpush1.msra.mxu0 %v394
    %421 = vmatprep.subr.mxu0 0.0
    %422 = vmatpush1.msra.mxu0 %v395
    %423 = vmatprep.subr.mxu0 0.0
    %424 = vmatpush1.msra.mxu0 0.0
    %425 = vmatprep.subr.mxu0 0.0
    %426 = vmatpush1.msra.mxu0 0.0
    %427 = vmatprep.subr.mxu0 0.0
    %428 = vmatpush1.msra.mxu0 0.0
    %429 = vmatprep.subr.mxu0 0.0
    %430 = vmatpush1.msra.mxu0 0.0
    %431 = vmatprep.subr.mxu0 0.0
    %432 = vmatpush1.msra.mxu0 0.0
    %433 = vmatprep.subr.mxu0 0.0
    %434 = vmatpush1.msra.mxu0 0.0
    %435 = vmatprep.subr.mxu0 0.0
    %436 = vmatpush1.msra.mxu0 0.0
    %437 = vmatprep.subr.mxu0 0.0
    %438 = vmatpush1.msra.mxu0 0.0
    %439 = vmatprep.subr.mxu0 0.0
    %440 = vmatpush1.msra.mxu0 0.0
    %441 = vmatprep.subr.mxu0 0.0
    %442 = vmatpush1.msra.mxu0 0.0
    %443 = vmatprep.subr.mxu0 0.0
    %444 = vmatpush1.msra.mxu0 0.0
    %445 = vmatprep.subr.mxu0 0.0
    %446 = vmatpush1.msra.mxu0 0.0
    %447 = vmatprep.subr.mxu0 0.0
    %448 = vmatpush1.msra.mxu0 0.0
    %449 = vmatprep.subr.mxu0 0.0
    %450 = vmatpush1.msra.mxu0 0.0
    %451 = vmatprep.subr.mxu0 0.0
    %452 = vmatpush1.msra.mxu0 0.0
    %453 = vmatprep.subr.mxu0 0.0
    %454 = vmatpush1.msra.mxu0 0.0
    %455 = vmatprep.subr.mxu0 0.0
    %456 = vmatpush1.msra.mxu0 0.0
    %457 = vmatprep.subr.mxu0 0.0
    %458 = vmatpush1.msra.mxu0 0.0
    %459 = vmatprep.subr.mxu0 0.0
    %460 = vmatpush1.msra.mxu0 0.0
    %461 = vmatprep.subr.mxu0 0.0
    %462 = vmatpush1.msra.mxu0 0.0
    %463 = vmatprep.subr.mxu0 0.0
    %464 = vmatpush1.msra.mxu0 0.0
    %465 = vmatprep.subr.mxu0 0.0
    %466 = vmatpush1.msra.mxu0 0.0
    %467 = vmatprep.subr.mxu0 0.0
    %468 = vmatpush1.msra.mxu0 0.0
    %469 = vmatprep.subr.mxu0 0.0
    %470 = vmatpush1.msra.mxu0 0.0
    %471 = vmatprep.subr.mxu0 0.0
    %472 = vmatpush1.msra.mxu0 0.0
    %473 = vmatprep.subr.mxu0 0.0
    %474 = vmatpush1.msra.mxu0 0.0
    %475 = vmatprep.subr.mxu0 0.0
    %476 = vmatpush1.msra.mxu0 0.0
    %477 = vmatprep.subr.mxu0 0.0
    %478 = vmatpush1.msra.mxu0 0.0
    %479 = vmatprep.mubr.f32.mxu0 0.0
    %480 = vmatmul.mubr.f32.gmra.mrb[0].mxu0 %v410
    %v481 = vpop.f32.mrb[0].mxu0
    %v482 = vadd.f32 %v406, %v481
    %v483 = vpop.f32.mrb[0].mxu0
    %484 = vmatprep.mubr.f32.mxu0 0.0
    %485 = vmatmul.mubr.f32.gmra.mrb[0].mxu0 %v413
    %v486 = vpop.f32.mrb[0].mxu0
    %v487 = vadd.f32 %v406, %v486
    %v488 = vpop.f32.mrb[0].mxu0
    %489 = vdwg.mxu0
    %v490 = vld [vmem:[%s11] sm:$0x1]
    %v492 = vlaneseq
    %v493 = vshrl.u32 %v492, 7
    %v494 = vsub.s32 0, %v493
    %v495 = vrot.slane %v490, %v494
    %v497 = vmul.f32 %v482, %v495
    %v498 = vmul.f32 %v487, %v495
    %501 = vrot.lane.b32.xlu0 %v482, 96
    %v502 = vpop.permute.xlu0 %501
    %503 = vrot.lane.b32.xlu0 %v487, 96
    %v504 = vpop.permute.xlu0 %503
    %v506 = vsel %vm408, %v497, 0
    %v509 = vsel %vm408, %v498, 0
    %v511 = vsel %vm408, %v502, 0
    %v513 = vsel %vm408, %v504, 0
    %515 = vmatprep.subr.mxu0 0.0
    %516 = vmatpush1.xpose.msra.mxu0 %v511
    %517 = vmatprep.subr.mxu0 0.0
    %518 = vmatpush1.xpose.msra.mxu0 %v513
    %519 = vmatprep.subr.mxu0 0.0
    %520 = vmatpush1.xpose.msra.mxu0 0.0
    %521 = vmatprep.subr.mxu0 0.0
    %522 = vmatpush1.xpose.msra.mxu0 0.0
    %523 = vmatprep.subr.mxu0 0.0
    %524 = vmatpush1.xpose.msra.mxu0 0.0
    %525 = vmatprep.subr.mxu0 0.0
    %526 = vmatpush1.xpose.msra.mxu0 0.0
    %527 = vmatprep.subr.mxu0 0.0
    %528 = vmatpush1.xpose.msra.mxu0 0.0
    %529 = vmatprep.subr.mxu0 0.0
    %530 = vmatpush1.xpose.msra.mxu0 0.0
    %531 = vmatprep.subr.mxu0 0.0
    %532 = vmatpush1.xpose.msra.mxu0 0.0
    %533 = vmatprep.subr.mxu0 0.0
    %534 = vmatpush1.xpose.msra.mxu0 0.0
    %535 = vmatprep.subr.mxu0 0.0
    %536 = vmatpush1.xpose.msra.mxu0 0.0
    %537 = vmatprep.subr.mxu0 0.0
    %538 = vmatpush1.xpose.msra.mxu0 0.0
    %539 = vmatprep.subr.mxu0 0.0
    %540 = vmatpush1.xpose.msra.mxu0 0.0
    %541 = vmatprep.subr.mxu0 0.0
    %542 = vmatpush1.xpose.msra.mxu0 0.0
    %543 = vmatprep.subr.mxu0 0.0
    %544 = vmatpush1.xpose.msra.mxu0 0.0
    %545 = vmatprep.subr.mxu0 0.0
    %546 = vmatpush1.xpose.msra.mxu0 0.0
    %547 = vmatprep.subr.mxu0 0.0
    %548 = vmatpush1.xpose.msra.mxu0 0.0
    %549 = vmatprep.subr.mxu0 0.0
    %550 = vmatpush1.xpose.msra.mxu0 0.0
    %551 = vmatprep.subr.mxu0 0.0
    %552 = vmatpush1.xpose.msra.mxu0 0.0
    %553 = vmatprep.subr.mxu0 0.0
    %554 = vmatpush1.xpose.msra.mxu0 0.0
    %555 = vmatprep.subr.mxu0 0.0
    %556 = vmatpush1.xpose.msra.mxu0 0.0
    %557 = vmatprep.subr.mxu0 0.0
    %558 = vmatpush1.xpose.msra.mxu0 0.0
    %559 = vmatprep.subr.mxu0 0.0
    %560 = vmatpush1.xpose.msra.mxu0 0.0
    %561 = vmatprep.subr.mxu0 0.0
    %562 = vmatpush1.xpose.msra.mxu0 0.0
    %563 = vmatprep.subr.mxu0 0.0
    %564 = vmatpush1.xpose.msra.mxu0 0.0
    %565 = vmatprep.subr.mxu0 0.0
    %566 = vmatpush1.xpose.msra.mxu0 0.0
    %567 = vmatprep.subr.mxu0 0.0
    %568 = vmatpush1.xpose.msra.mxu0 0.0
    %569 = vmatprep.subr.mxu0 0.0
    %570 = vmatpush1.xpose.msra.mxu0 0.0
    %571 = vmatprep.subr.mxu0 0.0
    %572 = vmatpush1.xpose.msra.mxu0 0.0
    %573 = vmatprep.subr.mxu0 0.0
    %574 = vmatpush1.xpose.msra.mxu0 0.0
    %575 = vmatprep.subr.mxu0 0.0
    %576 = vmatpush1.xpose.msra.mxu0 0.0
    %577 = vmatprep.subr.mxu0 0.0
    %578 = vmatpush1.xpose.msra.mxu0 0.0
    %579 = vmatprep.mubr.f32.mxu0 0.0
    %580 = vmatmul.mubr.f32.gmra.mrb[0].mxu0 %v506
    %v581 = vpop.f32.mrb[0].mxu0
    %v582 = vadd.f32 %v384, %v581
    %v583 = vpop.f32.mrb[0].mxu0
    %584 = vmatprep.mubr.f32.mxu0 0.0
    %585 = vmatmul.mubr.f32.gmra.mrb[0].mxu0 %v509
    %v586 = vpop.f32.mrb[0].mxu0
    %v587 = vadd.f32 %v385, %v586
    %v588 = vpop.f32.mrb[0].mxu0
    %589 = vdwg.mxu0
    %vm590 = vcmask 130048
    %v591 = vsel %vm590, %v582, -inf
    %592 = vmax.xlane.f32.xlu0 %v591
    %v593 = vpop.xlane.xlu0 %592
    %v594 = vsel %vm590, %v587, -inf
    %595 = vmax.xlane.f32.xlu0 %v594
    %v596 = vpop.xlane.xlu0 %595
    %v597 = vsub.f32 %v582, %v593
    %v598 = vsub.f32 %v587, %v596
    %v599 = vmul.f32 %v597, 1.442695
    %v600 = vpow.pop %v599
    %v601 = vmul.f32 %v598, 1.442695
    %v602 = vpow.pop %v601
    %v603 = vsel %vm590, %v600, 0.0
    %604 = vadd.xlane.f32.xlu0 %v603
    %v605 = vpop.xlane.xlu0 %604
    %v606 = vsel %vm590, %v602, 0.0
    %607 = vadd.xlane.f32.xlu0 %v606
    %v608 = vpop.xlane.xlu0 %607
    %v609 = vrcp.pop %v605
    %v610 = vrcp.pop %v608
    %v611 = vmul.f32 %v600, %v609
    %v612 = vmul.f32 %v602, %v610
    %613 = vrot.lane.b32.xlu0 %v495, 64
    %v614 = vpop.permute.xlu0 %613
    %v616 = vmul.f32 %v482, %v614
    %v617 = vmul.f32 %v487, %v614
    %s618 = scalar_lea.vmem %s11, 1
    %v619 = vld [vmem:[%s618] sm:$0x1]
    %v621 = vlaneseq
    %v622 = vshrl.u32 %v621, 7
    %v623 = vsub.s32 0, %v622
    %v624 = vrot.slane %v619, %v623
    %v626 = vmul.f32 %v482, %v624
    %v627 = vmul.f32 %v487, %v624
    %v629 = vsel %vm408, %v626, 0
    %v632 = vsel %vm408, %v627, 0
    %634 = vmatprep.subr.mxu0 0.0
    %635 = vmatpush1.xpose.msra.mxu0 %v511
    %636 = vmatprep.subr.mxu0 0.0
    %637 = vmatpush1.xpose.msra.mxu0 %v513
    %638 = vmatprep.subr.mxu0 0.0
    %639 = vmatpush1.xpose.msra.mxu0 0.0
    %640 = vmatprep.subr.mxu0 0.0
    %641 = vmatpush1.xpose.msra.mxu0 0.0
    %642 = vmatprep.subr.mxu0 0.0
    %643 = vmatpush1.xpose.msra.mxu0 0.0
    %644 = vmatprep.subr.mxu0 0.0
    %645 = vmatpush1.xpose.msra.mxu0 0.0
    %646 = vmatprep.subr.mxu0 0.0
    %647 = vmatpush1.xpose.msra.mxu0 0.0
    %648 = vmatprep.subr.mxu0 0.0
    %649 = vmatpush1.xpose.msra.mxu0 0.0
    %650 = vmatprep.subr.mxu0 0.0
    %651 = vmatpush1.xpose.msra.mxu0 0.0
    %652 = vmatprep.subr.mxu0 0.0
    %653 = vmatpush1.xpose.msra.mxu0 0.0
    %654 = vmatprep.subr.mxu0 0.0
    %655 = vmatpush1.xpose.msra.mxu0 0.0
    %656 = vmatprep.subr.mxu0 0.0
    %657 = vmatpush1.xpose.msra.mxu0 0.0
    %658 = vmatprep.subr.mxu0 0.0
    %659 = vmatpush1.xpose.msra.mxu0 0.0
    %660 = vmatprep.subr.mxu0 0.0
    %661 = vmatpush1.xpose.msra.mxu0 0.0
    %662 = vmatprep.subr.mxu0 0.0
    %663 = vmatpush1.xpose.msra.mxu0 0.0
    %664 = vmatprep.subr.mxu0 0.0
    %665 = vmatpush1.xpose.msra.mxu0 0.0
    %666 = vmatprep.subr.mxu0 0.0
    %667 = vmatpush1.xpose.msra.mxu0 0.0
    %668 = vmatprep.subr.mxu0 0.0
    %669 = vmatpush1.xpose.msra.mxu0 0.0
    %670 = vmatprep.subr.mxu0 0.0
    %671 = vmatpush1.xpose.msra.mxu0 0.0
    %672 = vmatprep.subr.mxu0 0.0
    %673 = vmatpush1.xpose.msra.mxu0 0.0
    %674 = vmatprep.subr.mxu0 0.0
    %675 = vmatpush1.xpose.msra.mxu0 0.0
    %676 = vmatprep.subr.mxu0 0.0
    %677 = vmatpush1.xpose.msra.mxu0 0.0
    %678 = vmatprep.subr.mxu0 0.0
    %679 = vmatpush1.xpose.msra.mxu0 0.0
    %680 = vmatprep.subr.mxu0 0.0
    %681 = vmatpush1.xpose.msra.mxu0 0.0
    %682 = vmatprep.subr.mxu0 0.0
    %683 = vmatpush1.xpose.msra.mxu0 0.0
    %684 = vmatprep.subr.mxu0 0.0
    %685 = vmatpush1.xpose.msra.mxu0 0.0
    %686 = vmatprep.subr.mxu0 0.0
    %687 = vmatpush1.xpose.msra.mxu0 0.0
    %688 = vmatprep.subr.mxu0 0.0
    %689 = vmatpush1.xpose.msra.mxu0 0.0
    %690 = vmatprep.subr.mxu0 0.0
    %691 = vmatpush1.xpose.msra.mxu0 0.0
    %692 = vmatprep.subr.mxu0 0.0
    %693 = vmatpush1.xpose.msra.mxu0 0.0
    %694 = vmatprep.subr.mxu0 0.0
    %695 = vmatpush1.xpose.msra.mxu0 0.0
    %696 = vmatprep.subr.mxu0 0.0
    %697 = vmatpush1.xpose.msra.mxu0 0.0
    %698 = vmatprep.mubr.f32.mxu0 0.0
    %699 = vmatmul.mubr.f32.gmra.mrb[0].mxu0 %v629
    %v700 = vpop.f32.mrb[0].mxu0
    %v701 = vadd.f32 %v384, %v700
    %v702 = vpop.f32.mrb[0].mxu0
    %703 = vmatprep.mubr.f32.mxu0 0.0
    %704 = vmatmul.mubr.f32.gmra.mrb[0].mxu0 %v632
    %v705 = vpop.f32.mrb[0].mxu0
    %v706 = vadd.f32 %v385, %v705
    %v707 = vpop.f32.mrb[0].mxu0
    %708 = vdwg.mxu0
    %v709 = vsel %vm590, %v701, -inf
    %710 = vmax.xlane.f32.xlu0 %v709
    %v711 = vpop.xlane.xlu0 %710
    %v712 = vsel %vm590, %v706, -inf
    %713 = vmax.xlane.f32.xlu0 %v712
    %v714 = vpop.xlane.xlu0 %713
    %v715 = vsub.f32 %v701, %v711
    %v716 = vsub.f32 %v706, %v714
    %v717 = vmul.f32 %v715, 1.442695
    %v718 = vpow.pop %v717
    %v719 = vmul.f32 %v716, 1.442695
    %v720 = vpow.pop %v719
    %v721 = vsel %vm590, %v718, 0.0
    %722 = vadd.xlane.f32.xlu0 %v721
    %v723 = vpop.xlane.xlu0 %722
    %v724 = vsel %vm590, %v720, 0.0
    %725 = vadd.xlane.f32.xlu0 %v724
    %v726 = vpop.xlane.xlu0 %725
    %v727 = vrcp.pop %v723
    %v728 = vrcp.pop %v726
    %v729 = vmul.f32 %v718, %v727
    %v730 = vmul.f32 %v720, %v728
    %731 = vrot.lane.b32.xlu0 %v624, 64
    %v732 = vpop.permute.xlu0 %731
    %v734 = vmul.f32 %v482, %v732
    %v735 = vmul.f32 %v487, %v732
    %738 = vrot.lane.b32.xlu0 %v734, 64
    %v739 = vpop.permute.xlu0 %738
    %740 = vrot.lane.b32.xlu0 %v735, 64
    %v741 = vpop.permute.xlu0 %740
    %v745 = vsel %vm590, %v729, 0
    %v748 = vsel %vm590, %v730, 0
    %750 = vmatprep.subr.mxu0 0.0
    %751 = vmatpush1.msra.mxu0 %v739
    %752 = vmatprep.subr.mxu0 0.0
    %753 = vmatpush1.msra.mxu0 %v741
    %754 = vmatprep.subr.mxu0 0.0
    %755 = vmatpush1.msra.mxu0 0.0
    %756 = vmatprep.subr.mxu0 0.0
    %757 = vmatpush1.msra.mxu0 0.0
    %758 = vmatprep.subr.mxu0 0.0
    %759 = vmatpush1.msra.mxu0 0.0
    %760 = vmatprep.subr.mxu0 0.0
    %761 = vmatpush1.msra.mxu0 0.0
    %762 = vmatprep.subr.mxu0 0.0
    %763 = vmatpush1.msra.mxu0 0.0
    %764 = vmatprep.subr.mxu0 0.0
    %765 = vmatpush1.msra.mxu0 0.0
    %766 = vmatprep.subr.mxu0 0.0
    %767 = vmatpush1.msra.mxu0 0.0
    %768 = vmatprep.subr.mxu0 0.0
    %769 = vmatpush1.msra.mxu0 0.0
    %770 = vmatprep.subr.mxu0 0.0
    %771 = vmatpush1.msra.mxu0 0.0
    %772 = vmatprep.subr.mxu0 0.0
    %773 = vmatpush1.msra.mxu0 0.0
    %774 = vmatprep.subr.mxu0 0.0
    %775 = vmatpush1.msra.mxu0 0.0
    %776 = vmatprep.subr.mxu0 0.0
    %777 = vmatpush1.msra.mxu0 0.0
    %778 = vmatprep.subr.mxu0 0.0
    %779 = vmatpush1.msra.mxu0 0.0
    %780 = vmatprep.subr.mxu0 0.0
    %781 = vmatpush1.msra.mxu0 0.0
    %782 = vmatprep.subr.mxu0 0.0
    %783 = vmatpush1.msra.mxu0 0.0
    %784 = vmatprep.subr.mxu0 0.0
    %785 = vmatpush1.msra.mxu0 0.0
    %786 = vmatprep.subr.mxu0 0.0
    %787 = vmatpush1.msra.mxu0 0.0
    %788 = vmatprep.subr.mxu0 0.0
    %789 = vmatpush1.msra.mxu0 0.0
    %790 = vmatprep.subr.mxu0 0.0
    %791 = vmatpush1.msra.mxu0 0.0
    %792 = vmatprep.subr.mxu0 0.0
    %793 = vmatpush1.msra.mxu0 0.0
    %794 = vmatprep.subr.mxu0 0.0
    %795 = vmatpush1.msra.mxu0 0.0
    %796 = vmatprep.subr.mxu0 0.0
    %797 = vmatpush1.msra.mxu0 0.0
    %798 = vmatprep.subr.mxu0 0.0
    %799 = vmatpush1.msra.mxu0 0.0
    %800 = vmatprep.subr.mxu0 0.0
    %801 = vmatpush1.msra.mxu0 0.0
    %802 = vmatprep.subr.mxu0 0.0
    %803 = vmatpush1.msra.mxu0 0.0
    %804 = vmatprep.subr.mxu0 0.0
    %805 = vmatpush1.msra.mxu0 0.0
    %806 = vmatprep.subr.mxu0 0.0
    %807 = vmatpush1.msra.mxu0 0.0
    %808 = vmatprep.subr.mxu0 0.0
    %809 = vmatpush1.msra.mxu0 0.0
    %810 = vmatprep.subr.mxu0 0.0
    %811 = vmatpush1.msra.mxu0 0.0
    %812 = vmatprep.subr.mxu0 0.0
    %813 = vmatpush1.msra.mxu0 0.0
    %814 = vmatprep.mubr.f32.mxu0 0.0
    %815 = vmatmul.mubr.f32.gmra.mrb[0].mxu0 %v745
    %v816 = vpop.f32.mrb[0].mxu0
    %v817 = vadd.f32 0.0, %v816
    %v818 = vpop.f32.mrb[0].mxu0
    %819 = vmatprep.mubr.f32.mxu0 0.0
    %820 = vmatmul.mubr.f32.gmra.mrb[0].mxu0 %v748
    %v821 = vpop.f32.mrb[0].mxu0
    %v822 = vadd.f32 0.0, %v821
    %v823 = vpop.f32.mrb[0].mxu0
    %824 = vdwg.mxu0
    %827 = vrot.lane.b32.xlu0 %v616, 64
    %v828 = vpop.permute.xlu0 %827
    %829 = vrot.lane.b32.xlu0 %v617, 64
    %v830 = vpop.permute.xlu0 %829
    %v834 = vsel %vm590, %v611, 0
    %v837 = vsel %vm590, %v612, 0
    %839 = vmatprep.subr.mxu0 0.0
    %840 = vmatpush1.msra.mxu0 %v828
    %841 = vmatprep.subr.mxu0 0.0
    %842 = vmatpush1.msra.mxu0 %v830
    %843 = vmatprep.subr.mxu0 0.0
    %844 = vmatpush1.msra.mxu0 0.0
    %845 = vmatprep.subr.mxu0 0.0
    %846 = vmatpush1.msra.mxu0 0.0
    %847 = vmatprep.subr.mxu0 0.0
    %848 = vmatpush1.msra.mxu0 0.0
    %849 = vmatprep.subr.mxu0 0.0
    %850 = vmatpush1.msra.mxu0 0.0
    %851 = vmatprep.subr.mxu0 0.0
    %852 = vmatpush1.msra.mxu0 0.0
    %853 = vmatprep.subr.mxu0 0.0
    %854 = vmatpush1.msra.mxu0 0.0
    %855 = vmatprep.subr.mxu0 0.0
    %856 = vmatpush1.msra.mxu0 0.0
    %857 = vmatprep.subr.mxu0 0.0
    %858 = vmatpush1.msra.mxu0 0.0
    %859 = vmatprep.subr.mxu0 0.0
    %860 = vmatpush1.msra.mxu0 0.0
    %861 = vmatprep.subr.mxu0 0.0
    %862 = vmatpush1.msra.mxu0 0.0
    %863 = vmatprep.subr.mxu0 0.0
    %864 = vmatpush1.msra.mxu0 0.0
    %865 = vmatprep.subr.mxu0 0.0
    %866 = vmatpush1.msra.mxu0 0.0
    %867 = vmatprep.subr.mxu0 0.0
    %868 = vmatpush1.msra.mxu0 0.0
    %869 = vmatprep.subr.mxu0 0.0
    %870 = vmatpush1.msra.mxu0 0.0
    %871 = vmatprep.subr.mxu0 0.0
    %872 = vmatpush1.msra.mxu0 0.0
    %873 = vmatprep.subr.mxu0 0.0
    %874 = vmatpush1.msra.mxu0 0.0
    %875 = vmatprep.subr.mxu0 0.0
    %876 = vmatpush1.msra.mxu0 0.0
    %877 = vmatprep.subr.mxu0 0.0
    %878 = vmatpush1.msra.mxu0 0.0
    %879 = vmatprep.subr.mxu0 0.0
    %880 = vmatpush1.msra.mxu0 0.0
    %881 = vmatprep.subr.mxu0 0.0
    %882 = vmatpush1.msra.mxu0 0.0
    %883 = vmatprep.subr.mxu0 0.0
    %884 = vmatpush1.msra.mxu0 0.0
    %885 = vmatprep.subr.mxu0 0.0
    %886 = vmatpush1.msra.mxu0 0.0
    %887 = vmatprep.subr.mxu0 0.0
    %888 = vmatpush1.msra.mxu0 0.0
    %889 = vmatprep.subr.mxu0 0.0
    %890 = vmatpush1.msra.mxu0 0.0
    %891 = vmatprep.subr.mxu0 0.0
    %892 = vmatpush1.msra.mxu0 0.0
    %893 = vmatprep.subr.mxu0 0.0
    %894 = vmatpush1.msra.mxu0 0.0
    %895 = vmatprep.subr.mxu0 0.0
    %896 = vmatpush1.msra.mxu0 0.0
    %897 = vmatprep.subr.mxu0 0.0
    %898 = vmatpush1.msra.mxu0 0.0
    %899 = vmatprep.subr.mxu0 0.0
    %900 = vmatpush1.msra.mxu0 0.0
    %901 = vmatprep.subr.mxu0 0.0
    %902 = vmatpush1.msra.mxu0 0.0
    %903 = vmatprep.mubr.f32.mxu0 0.0
    %904 = vmatmul.mubr.f32.gmra.mrb[0].mxu0 %v834
    %v905 = vpop.f32.mrb[0].mxu0
    %v906 = vadd.f32 %v817, %v905
    %v907 = vpop.f32.mrb[0].mxu0
    %908 = vmatprep.mubr.f32.mxu0 0.0
    %909 = vmatmul.mubr.f32.gmra.mrb[0].mxu0 %v837
    %v910 = vpop.f32.mrb[0].mxu0
    %v911 = vadd.f32 %v822, %v910
    %v912 = vpop.f32.mrb[0].mxu0
    %913 = vdwg.mxu0
    %s914 = scalar_lea.vmem %s11, 2
    %v915 = vld [vmem:[%s914] sm:$0x1]
    %v917 = vlaneseq
    %v918 = vshrl.u32 %v917, 7
    %v919 = vsub.s32 0, %v918
    %v920 = vrot.slane %v915, %v919
    %v922 = vmul.f32 %v482, %v920
    %v923 = vmul.f32 %v487, %v920
    %v925 = vsel %vm408, %v922, 0
    %v928 = vsel %vm408, %v923, 0
    %930 = vmatprep.subr.mxu0 0.0
    %931 = vmatpush1.xpose.msra.mxu0 %v511
    %932 = vmatprep.subr.mxu0 0.0
    %933 = vmatpush1.xpose.msra.mxu0 %v513
    %934 = vmatprep.subr.mxu0 0.0
    %935 = vmatpush1.xpose.msra.mxu0 0.0
    %936 = vmatprep.subr.mxu0 0.0
    %937 = vmatpush1.xpose.msra.mxu0 0.0
    %938 = vmatprep.subr.mxu0 0.0
    %939 = vmatpush1.xpose.msra.mxu0 0.0
    %940 = vmatprep.subr.mxu0 0.0
    %941 = vmatpush1.xpose.msra.mxu0 0.0
    %942 = vmatprep.subr.mxu0 0.0
    %943 = vmatpush1.xpose.msra.mxu0 0.0
    %944 = vmatprep.subr.mxu0 0.0
    %945 = vmatpush1.xpose.msra.mxu0 0.0
    %946 = vmatprep.subr.mxu0 0.0
    %947 = vmatpush1.xpose.msra.mxu0 0.0
    %948 = vmatprep.subr.mxu0 0.0
    %949 = vmatpush1.xpose.msra.mxu0 0.0
    %950 = vmatprep.subr.mxu0 0.0
    %951 = vmatpush1.xpose.msra.mxu0 0.0
    %952 = vmatprep.subr.mxu0 0.0
    %953 = vmatpush1.xpose.msra.mxu0 0.0
    %954 = vmatprep.subr.mxu0 0.0
    %955 = vmatpush1.xpose.msra.mxu0 0.0
    %956 = vmatprep.subr.mxu0 0.0
    %957 = vmatpush1.xpose.msra.mxu0 0.0
    %958 = vmatprep.subr.mxu0 0.0
    %959 = vmatpush1.xpose.msra.mxu0 0.0
    %960 = vmatprep.subr.mxu0 0.0
    %961 = vmatpush1.xpose.msra.mxu0 0.0
    %962 = vmatprep.subr.mxu0 0.0
    %963 = vmatpush1.xpose.msra.mxu0 0.0
    %964 = vmatprep.subr.mxu0 0.0
    %965 = vmatpush1.xpose.msra.mxu0 0.0
    %966 = vmatprep.subr.mxu0 0.0
    %967 = vmatpush1.xpose.msra.mxu0 0.0
    %968 = vmatprep.subr.mxu0 0.0
    %969 = vmatpush1.xpose.msra.mxu0 0.0
    %970 = vmatprep.subr.mxu0 0.0
    %971 = vmatpush1.xpose.msra.mxu0 0.0
    %972 = vmatprep.subr.mxu0 0.0
    %973 = vmatpush1.xpose.msra.mxu0 0.0
    %974 = vmatprep.subr.mxu0 0.0
    %975 = vmatpush1.xpose.msra.mxu0 0.0
    %976 = vmatprep.subr.mxu0 0.0
    %977 = vmatpush1.xpose.msra.mxu0 0.0
    %978 = vmatprep.subr.mxu0 0.0
    %979 = vmatpush1.xpose.msra.mxu0 0.0
    %980 = vmatprep.subr.mxu0 0.0
    %981 = vmatpush1.xpose.msra.mxu0 0.0
    %982 = vmatprep.subr.mxu0 0.0
    %983 = vmatpush1.xpose.msra.mxu0 0.0
    %984 = vmatprep.subr.mxu0 0.0
    %985 = vmatpush1.xpose.msra.mxu0 0.0
    %986 = vmatprep.subr.mxu0 0.0
    %987 = vmatpush1.xpose.msra.mxu0 0.0
    %988 = vmatprep.subr.mxu0 0.0
    %989 = vmatpush1.xpose.msra.mxu0 0.0
    %990 = vmatprep.subr.mxu0 0.0
    %991 = vmatpush1.xpose.msra.mxu0 0.0
    %992 = vmatprep.subr.mxu0 0.0
    %993 = vmatpush1.xpose.msra.mxu0 0.0
    %994 = vmatprep.mubr.f32.mxu0 0.0
    %995 = vmatmul.mubr.f32.gmra.mrb[0].mxu0 %v925
    %v996 = vpop.f32.mrb[0].mxu0
    %v997 = vadd.f32 %v384, %v996
    %v998 = vpop.f32.mrb[0].mxu0
    %999 = vmatprep.mubr.f32.mxu0 0.0
    %1000 = vmatmul.mubr.f32.gmra.mrb[0].mxu0 %v928
    %v1001 = vpop.f32.mrb[0].mxu0
    %v1002 = vadd.f32 %v385, %v1001
    %v1003 = vpop.f32.mrb[0].mxu0
    %1004 = vdwg.mxu0
    %v1005 = vsel %vm590, %v997, -inf
    %1006 = vmax.xlane.f32.xlu0 %v1005
    %v1007 = vpop.xlane.xlu0 %1006
    %v1008 = vsel %vm590, %v1002, -inf
    %1009 = vmax.xlane.f32.xlu0 %v1008
    %v1010 = vpop.xlane.xlu0 %1009
    %v1011 = vsub.f32 %v997, %v1007
    %v1012 = vsub.f32 %v1002, %v1010
    %v1013 = vmul.f32 %v1011, 1.442695
    %v1014 = vpow.pop %v1013
    %v1015 = vmul.f32 %v1012, 1.442695
    %v1016 = vpow.pop %v1015
    %v1017 = vsel %vm590, %v1014, 0.0
    %1018 = vadd.xlane.f32.xlu0 %v1017
    %v1019 = vpop.xlane.xlu0 %1018
    %v1020 = vsel %vm590, %v1016, 0.0
    %1021 = vadd.xlane.f32.xlu0 %v1020
    %v1022 = vpop.xlane.xlu0 %1021
    %v1023 = vrcp.pop %v1019
    %v1024 = vrcp.pop %v1022
    %v1025 = vmul.f32 %v1014, %v1023
    %v1026 = vmul.f32 %v1016, %v1024
    %1027 = vrot.lane.b32.xlu0 %v920, 64
    %v1028 = vpop.permute.xlu0 %1027
    %v1030 = vmul.f32 %v482, %v1028
    %v1031 = vmul.f32 %v487, %v1028
    %1034 = vrot.lane.b32.xlu0 %v1030, 64
    %v1035 = vpop.permute.xlu0 %1034
    %1036 = vrot.lane.b32.xlu0 %v1031, 64
    %v1037 = vpop.permute.xlu0 %1036
    %v1041 = vsel %vm590, %v1025, 0
    %v1044 = vsel %vm590, %v1026, 0
    %1046 = vmatprep.subr.mxu0 0.0
    %1047 = vmatpush1.msra.mxu0 %v1035
    %1048 = vmatprep.subr.mxu0 0.0
    %1049 = vmatpush1.msra.mxu0 %v1037
    %1050 = vmatprep.subr.mxu0 0.0
    %1051 = vmatpush1.msra.mxu0 0.0
    %1052 = vmatprep.subr.mxu0 0.0
    %1053 = vmatpush1.msra.mxu0 0.0
    %1054 = vmatprep.subr.mxu0 0.0
    %1055 = vmatpush1.msra.mxu0 0.0
    %1056 = vmatprep.subr.mxu0 0.0
    %1057 = vmatpush1.msra.mxu0 0.0
    %1058 = vmatprep.subr.mxu0 0.0
    %1059 = vmatpush1.msra.mxu0 0.0
    %1060 = vmatprep.subr.mxu0 0.0
    %1061 = vmatpush1.msra.mxu0 0.0
    %1062 = vmatprep.subr.mxu0 0.0
    %1063 = vmatpush1.msra.mxu0 0.0
    %1064 = vmatprep.subr.mxu0 0.0
    %1065 = vmatpush1.msra.mxu0 0.0
    %1066 = vmatprep.subr.mxu0 0.0
    %1067 = vmatpush1.msra.mxu0 0.0
    %1068 = vmatprep.subr.mxu0 0.0
    %1069 = vmatpush1.msra.mxu0 0.0
    %1070 = vmatprep.subr.mxu0 0.0
    %1071 = vmatpush1.msra.mxu0 0.0
    %1072 = vmatprep.subr.mxu0 0.0
    %1073 = vmatpush1.msra.mxu0 0.0
    %1074 = vmatprep.subr.mxu0 0.0
    %1075 = vmatpush1.msra.mxu0 0.0
    %1076 = vmatprep.subr.mxu0 0.0
    %1077 = vmatpush1.msra.mxu0 0.0
    %1078 = vmatprep.subr.mxu0 0.0
    %1079 = vmatpush1.msra.mxu0 0.0
    %1080 = vmatprep.subr.mxu0 0.0
    %1081 = vmatpush1.msra.mxu0 0.0
    %1082 = vmatprep.subr.mxu0 0.0
    %1083 = vmatpush1.msra.mxu0 0.0
    %1084 = vmatprep.subr.mxu0 0.0
    %1085 = vmatpush1.msra.mxu0 0.0
    %1086 = vmatprep.subr.mxu0 0.0
    %1087 = vmatpush1.msra.mxu0 0.0
    %1088 = vmatprep.subr.mxu0 0.0
    %1089 = vmatpush1.msra.mxu0 0.0
    %1090 = vmatprep.subr.mxu0 0.0
    %1091 = vmatpush1.msra.mxu0 0.0
    %1092 = vmatprep.subr.mxu0 0.0
    %1093 = vmatpush1.msra.mxu0 0.0
    %1094 = vmatprep.subr.mxu0 0.0
    %1095 = vmatpush1.msra.mxu0 0.0
    %1096 = vmatprep.subr.mxu0 0.0
    %1097 = vmatpush1.msra.mxu0 0.0
    %1098 = vmatprep.subr.mxu0 0.0
    %1099 = vmatpush1.msra.mxu0 0.0
    %1100 = vmatprep.subr.mxu0 0.0
    %1101 = vmatpush1.msra.mxu0 0.0
    %1102 = vmatprep.subr.mxu0 0.0
    %1103 = vmatpush1.msra.mxu0 0.0
    %1104 = vmatprep.subr.mxu0 0.0
    %1105 = vmatpush1.msra.mxu0 0.0
    %1106 = vmatprep.subr.mxu0 0.0
    %1107 = vmatpush1.msra.mxu0 0.0
    %1108 = vmatprep.subr.mxu0 0.0
    %1109 = vmatpush1.msra.mxu0 0.0
    %1110 = vmatprep.mubr.f32.mxu0 0.0
    %1111 = vmatmul.mubr.f32.gmra.mrb[0].mxu0 %v1041
    %v1112 = vpop.f32.mrb[0].mxu0
    %v1113 = vadd.f32 0.0, %v1112
    %v1114 = vpop.f32.mrb[0].mxu0
    %1115 = vmatprep.mubr.f32.mxu0 0.0
    %1116 = vmatmul.mubr.f32.gmra.mrb[0].mxu0 %v1044
    %v1117 = vpop.f32.mrb[0].mxu0
    %v1118 = vadd.f32 0.0, %v1117
    %v1119 = vpop.f32.mrb[0].mxu0
    %1120 = vdwg.mxu0
    %v1121 = vadd.f32 %v906, %v1113
    %v1122 = vadd.f32 %v911, %v1118
    %s1123 = scalar_lea.vmem %s11, 3
    %v1124 = vld [vmem:[%s1123] sm:$0x1]
    %v1126 = vlaneseq
    %v1127 = vshrl.u32 %v1126, 7
    %v1128 = vsub.s32 0, %v1127
    %v1129 = vrot.slane %v1124, %v1128
    %v1131 = vmul.f32 %v482, %v1129
    %v1132 = vmul.f32 %v487, %v1129
    %v1134 = vsel %vm408, %v1131, 0
    %v1137 = vsel %vm408, %v1132, 0
    %1139 = vmatprep.subr.mxu0 0.0
    %1140 = vmatpush1.xpose.msra.mxu0 %v511
    %1141 = vmatprep.subr.mxu0 0.0
    %1142 = vmatpush1.xpose.msra.mxu0 %v513
    %1143 = vmatprep.subr.mxu0 0.0
    %1144 = vmatpush1.xpose.msra.mxu0 0.0
    %1145 = vmatprep.subr.mxu0 0.0
    %1146 = vmatpush1.xpose.msra.mxu0 0.0
    %1147 = vmatprep.subr.mxu0 0.0
    %1148 = vmatpush1.xpose.msra.mxu0 0.0
    %1149 = vmatprep.subr.mxu0 0.0
    %1150 = vmatpush1.xpose.msra.mxu0 0.0
    %1151 = vmatprep.subr.mxu0 0.0
    %1152 = vmatpush1.xpose.msra.mxu0 0.0
    %1153 = vmatprep.subr.mxu0 0.0
    %1154 = vmatpush1.xpose.msra.mxu0 0.0
    %1155 = vmatprep.subr.mxu0 0.0
    %1156 = vmatpush1.xpose.msra.mxu0 0.0
    %1157 = vmatprep.subr.mxu0 0.0
    %1158 = vmatpush1.xpose.msra.mxu0 0.0
    %1159 = vmatprep.subr.mxu0 0.0
    %1160 = vmatpush1.xpose.msra.mxu0 0.0
    %1161 = vmatprep.subr.mxu0 0.0
    %1162 = vmatpush1.xpose.msra.mxu0 0.0
    %1163 = vmatprep.subr.mxu0 0.0
    %1164 = vmatpush1.xpose.msra.mxu0 0.0
    %1165 = vmatprep.subr.mxu0 0.0
    %1166 = vmatpush1.xpose.msra.mxu0 0.0
    %1167 = vmatprep.subr.mxu0 0.0
    %1168 = vmatpush1.xpose.msra.mxu0 0.0
    %1169 = vmatprep.subr.mxu0 0.0
    %1170 = vmatpush1.xpose.msra.mxu0 0.0
    %1171 = vmatprep.subr.mxu0 0.0
    %1172 = vmatpush1.xpose.msra.mxu0 0.0
    %1173 = vmatprep.subr.mxu0 0.0
    %1174 = vmatpush1.xpose.msra.mxu0 0.0
    %1175 = vmatprep.subr.mxu0 0.0
    %1176 = vmatpush1.xpose.msra.mxu0 0.0
    %1177 = vmatprep.subr.mxu0 0.0
    %1178 = vmatpush1.xpose.msra.mxu0 0.0
    %1179 = vmatprep.subr.mxu0 0.0
    %1180 = vmatpush1.xpose.msra.mxu0 0.0
    %1181 = vmatprep.subr.mxu0 0.0
    %1182 = vmatpush1.xpose.msra.mxu0 0.0
    %1183 = vmatprep.subr.mxu0 0.0
    %1184 = vmatpush1.xpose.msra.mxu0 0.0
    %1185 = vmatprep.subr.mxu0 0.0
    %1186 = vmatpush1.xpose.msra.mxu0 0.0
    %1187 = vmatprep.subr.mxu0 0.0
    %1188 = vmatpush1.xpose.msra.mxu0 0.0
    %1189 = vmatprep.subr.mxu0 0.0
    %1190 = vmatpush1.xpose.msra.mxu0 0.0
    %1191 = vmatprep.subr.mxu0 0.0
    %1192 = vmatpush1.xpose.msra.mxu0 0.0
    %1193 = vmatprep.subr.mxu0 0.0
    %1194 = vmatpush1.xpose.msra.mxu0 0.0
    %1195 = vmatprep.subr.mxu0 0.0
    %1196 = vmatpush1.xpose.msra.mxu0 0.0
    %1197 = vmatprep.subr.mxu0 0.0
    %1198 = vmatpush1.xpose.msra.mxu0 0.0
    %1199 = vmatprep.subr.mxu0 0.0
    %1200 = vmatpush1.xpose.msra.mxu0 0.0
    %1201 = vmatprep.subr.mxu0 0.0
    %1202 = vmatpush1.xpose.msra.mxu0 0.0
    %1203 = vmatprep.mubr.f32.mxu0 0.0
    %1204 = vmatmul.mubr.f32.gmra.mrb[0].mxu0 %v1134
    %v1205 = vpop.f32.mrb[0].mxu0
    %v1206 = vadd.f32 %v384, %v1205
    %v1207 = vpop.f32.mrb[0].mxu0
    %1208 = vmatprep.mubr.f32.mxu0 0.0
    %1209 = vmatmul.mubr.f32.gmra.mrb[0].mxu0 %v1137
    %v1210 = vpop.f32.mrb[0].mxu0
    %v1211 = vadd.f32 %v385, %v1210
    %v1212 = vpop.f32.mrb[0].mxu0
    %1213 = vdwg.mxu0
    %v1214 = vsel %vm590, %v1206, -inf
    %1215 = vmax.xlane.f32.xlu0 %v1214
    %v1216 = vpop.xlane.xlu0 %1215
    %v1217 = vsel %vm590, %v1211, -inf
    %1218 = vmax.xlane.f32.xlu0 %v1217
    %v1219 = vpop.xlane.xlu0 %1218
    %v1220 = vsub.f32 %v1206, %v1216
    %v1221 = vsub.f32 %v1211, %v1219
    %v1222 = vmul.f32 %v1220, 1.442695
    %v1223 = vpow.pop %v1222
    %v1224 = vmul.f32 %v1221, 1.442695
    %v1225 = vpow.pop %v1224
    %v1226 = vsel %vm590, %v1223, 0.0
    %1227 = vadd.xlane.f32.xlu0 %v1226
    %v1228 = vpop.xlane.xlu0 %1227
    %v1229 = vsel %vm590, %v1225, 0.0
    %1230 = vadd.xlane.f32.xlu0 %v1229
    %v1231 = vpop.xlane.xlu0 %1230
    %v1232 = vrcp.pop %v1228
    %v1233 = vrcp.pop %v1231
    %v1234 = vmul.f32 %v1223, %v1232
    %v1235 = vmul.f32 %v1225, %v1233
    %1236 = vrot.lane.b32.xlu0 %v1129, 64
    %v1237 = vpop.permute.xlu0 %1236
    %v1239 = vmul.f32 %v482, %v1237
    %v1240 = vmul.f32 %v487, %v1237
    %1243 = vrot.lane.b32.xlu0 %v1239, 64
    %v1244 = vpop.permute.xlu0 %1243
    %1245 = vrot.lane.b32.xlu0 %v1240, 64
    %v1246 = vpop.permute.xlu0 %1245
    %v1250 = vsel %vm590, %v1234, 0
    %v1253 = vsel %vm590, %v1235, 0
    %1255 = vmatprep.subr.mxu0 0.0
    %1256 = vmatpush1.msra.mxu0 %v1244
    %1257 = vmatprep.subr.mxu0 0.0
    %1258 = vmatpush1.msra.mxu0 %v1246
    %1259 = vmatprep.subr.mxu0 0.0
    %1260 = vmatpush1.msra.mxu0 0.0
    %1261 = vmatprep.subr.mxu0 0.0
    %1262 = vmatpush1.msra.mxu0 0.0
    %1263 = vmatprep.subr.mxu0 0.0
    %1264 = vmatpush1.msra.mxu0 0.0
    %1265 = vmatprep.subr.mxu0 0.0
    %1266 = vmatpush1.msra.mxu0 0.0
    %1267 = vmatprep.subr.mxu0 0.0
    %1268 = vmatpush1.msra.mxu0 0.0
    %1269 = vmatprep.subr.mxu0 0.0
    %1270 = vmatpush1.msra.mxu0 0.0
    %1271 = vmatprep.subr.mxu0 0.0
    %1272 = vmatpush1.msra.mxu0 0.0
    %1273 = vmatprep.subr.mxu0 0.0
    %1274 = vmatpush1.msra.mxu0 0.0
    %1275 = vmatprep.subr.mxu0 0.0
    %1276 = vmatpush1.msra.mxu0 0.0
    %1277 = vmatprep.subr.mxu0 0.0
    %1278 = vmatpush1.msra.mxu0 0.0
    %1279 = vmatprep.subr.mxu0 0.0
    %1280 = vmatpush1.msra.mxu0 0.0
    %1281 = vmatprep.subr.mxu0 0.0
    %1282 = vmatpush1.msra.mxu0 0.0
    %1283 = vmatprep.subr.mxu0 0.0
    %1284 = vmatpush1.msra.mxu0 0.0
    %1285 = vmatprep.subr.mxu0 0.0
    %1286 = vmatpush1.msra.mxu0 0.0
    %1287 = vmatprep.subr.mxu0 0.0
    %1288 = vmatpush1.msra.mxu0 0.0
    %1289 = vmatprep.subr.mxu0 0.0
    %1290 = vmatpush1.msra.mxu0 0.0
    %1291 = vmatprep.subr.mxu0 0.0
    %1292 = vmatpush1.msra.mxu0 0.0
    %1293 = vmatprep.subr.mxu0 0.0
    %1294 = vmatpush1.msra.mxu0 0.0
    %1295 = vmatprep.subr.mxu0 0.0
    %1296 = vmatpush1.msra.mxu0 0.0
    %1297 = vmatprep.subr.mxu0 0.0
    %1298 = vmatpush1.msra.mxu0 0.0
    %1299 = vmatprep.subr.mxu0 0.0
    %1300 = vmatpush1.msra.mxu0 0.0
    %1301 = vmatprep.subr.mxu0 0.0
    %1302 = vmatpush1.msra.mxu0 0.0
    %1303 = vmatprep.subr.mxu0 0.0
    %1304 = vmatpush1.msra.mxu0 0.0
    %1305 = vmatprep.subr.mxu0 0.0
    %1306 = vmatpush1.msra.mxu0 0.0
    %1307 = vmatprep.subr.mxu0 0.0
    %1308 = vmatpush1.msra.mxu0 0.0
    %1309 = vmatprep.subr.mxu0 0.0
    %1310 = vmatpush1.msra.mxu0 0.0
    %1311 = vmatprep.subr.mxu0 0.0
    %1312 = vmatpush1.msra.mxu0 0.0
    %1313 = vmatprep.subr.mxu0 0.0
    %1314 = vmatpush1.msra.mxu0 0.0
    %1315 = vmatprep.subr.mxu0 0.0
    %1316 = vmatpush1.msra.mxu0 0.0
    %1317 = vmatprep.subr.mxu0 0.0
    %1318 = vmatpush1.msra.mxu0 0.0
    %1319 = vmatprep.mubr.f32.mxu0 0.0
    %1320 = vmatmul.mubr.f32.gmra.mrb[0].mxu0 %v1250
    %v1321 = vpop.f32.mrb[0].mxu0
    %v1322 = vadd.f32 0.0, %v1321
    %v1323 = vpop.f32.mrb[0].mxu0
    %1324 = vmatprep.mubr.f32.mxu0 0.0
    %1325 = vmatmul.mubr.f32.gmra.mrb[0].mxu0 %v1253
    %v1326 = vpop.f32.mrb[0].mxu0
    %v1327 = vadd.f32 0.0, %v1326
    %v1328 = vpop.f32.mrb[0].mxu0
    %1329 = vdwg.mxu0
    %v1330 = vadd.f32 %v1121, %v1322
    %v1331 = vadd.f32 %v1122, %v1327
    %v1333 = vlaneseq
    %v1334 = vshrl.u32 %v1333, 7
    %v1335 = vsub.s32 0, %v1334
    %v1336 = vrot.slane %v401, %v1335
    %v1339 = vsel %vm408, %v1330, 0
    %v1342 = vsel %vm408, %v1331, 0
    %1344 = vmatprep.subr.mxu0 0.0
    %1345 = vmatpush1.msra.mxu0 %v397
    %1346 = vmatprep.subr.mxu0 0.0
    %1347 = vmatpush1.msra.mxu0 %v398
    %1348 = vmatprep.subr.mxu0 0.0
    %1349 = vmatpush1.msra.mxu0 %v399
    %1350 = vmatprep.subr.mxu0 0.0
    %1351 = vmatpush1.msra.mxu0 %v400
    %1352 = vmatprep.subr.mxu0 0.0
    %1353 = vmatpush1.msra.mxu0 0.0
    %1354 = vmatprep.subr.mxu0 0.0
    %1355 = vmatpush1.msra.mxu0 0.0
    %1356 = vmatprep.subr.mxu0 0.0
    %1357 = vmatpush1.msra.mxu0 0.0
    %1358 = vmatprep.subr.mxu0 0.0
    %1359 = vmatpush1.msra.mxu0 0.0
    %1360 = vmatprep.subr.mxu0 0.0
    %1361 = vmatpush1.msra.mxu0 0.0
    %1362 = vmatprep.subr.mxu0 0.0
    %1363 = vmatpush1.msra.mxu0 0.0
    %1364 = vmatprep.subr.mxu0 0.0
    %1365 = vmatpush1.msra.mxu0 0.0
    %1366 = vmatprep.subr.mxu0 0.0
    %1367 = vmatpush1.msra.mxu0 0.0
    %1368 = vmatprep.subr.mxu0 0.0
    %1369 = vmatpush1.msra.mxu0 0.0
    %1370 = vmatprep.subr.mxu0 0.0
    %1371 = vmatpush1.msra.mxu0 0.0
    %1372 = vmatprep.subr.mxu0 0.0
    %1373 = vmatpush1.msra.mxu0 0.0
    %1374 = vmatprep.subr.mxu0 0.0
    %1375 = vmatpush1.msra.mxu0 0.0
    %1376 = vmatprep.subr.mxu0 0.0
    %1377 = vmatpush1.msra.mxu0 0.0
    %1378 = vmatprep.subr.mxu0 0.0
    %1379 = vmatpush1.msra.mxu0 0.0
    %1380 = vmatprep.subr.mxu0 0.0
    %1381 = vmatpush1.msra.mxu0 0.0
    %1382 = vmatprep.subr.mxu0 0.0
    %1383 = vmatpush1.msra.mxu0 0.0
    %1384 = vmatprep.subr.mxu0 0.0
    %1385 = vmatpush1.msra.mxu0 0.0
    %1386 = vmatprep.subr.mxu0 0.0
    %1387 = vmatpush1.msra.mxu0 0.0
    %1388 = vmatprep.subr.mxu0 0.0
    %1389 = vmatpush1.msra.mxu0 0.0
    %1390 = vmatprep.subr.mxu0 0.0
    %1391 = vmatpush1.msra.mxu0 0.0
    %1392 = vmatprep.subr.mxu0 0.0
    %1393 = vmatpush1.msra.mxu0 0.0
    %1394 = vmatprep.subr.mxu0 0.0
    %1395 = vmatpush1.msra.mxu0 0.0
    %1396 = vmatprep.subr.mxu0 0.0
    %1397 = vmatpush1.msra.mxu0 0.0
    %1398 = vmatprep.subr.mxu0 0.0
    %1399 = vmatpush1.msra.mxu0 0.0
    %1400 = vmatprep.subr.mxu0 0.0
    %1401 = vmatpush1.msra.mxu0 0.0
    %1402 = vmatprep.subr.mxu0 0.0
    %1403 = vmatpush1.msra.mxu0 0.0
    %1404 = vmatprep.subr.mxu0 0.0
    %1405 = vmatpush1.msra.mxu0 0.0
    %1406 = vmatprep.subr.mxu0 0.0
    %1407 = vmatpush1.msra.mxu0 0.0
    %1408 = vmatprep.mubr.f32.mxu0 0.0
    %1409 = vmatmul.mubr.f32.gmra.mrb[0].mxu0 %v1339
    %v1410 = vpop.f32.mrb[0].mxu0
    %v1411 = vadd.f32 %v1336, %v1410
    %v1412 = vpop.f32.mrb[0].mxu0
    %1413 = vmatprep.mubr.f32.mxu0 0.0
    %1414 = vmatmul.mubr.f32.gmra.mrb[0].mxu0 %v1342
    %v1415 = vpop.f32.mrb[0].mxu0
    %v1416 = vadd.f32 %v1336, %v1415
    %v1417 = vpop.f32.mrb[0].mxu0
    %1418 = vdwg.mxu0
    %v1419 = vadd.f32 %v390, %v1411
    %v1420 = vadd.f32 %v391, %v1416
    %v1421 = vld [vmem:[#allocation13] sm:$0x1]
    %v1422 = vld [vmem:[#allocation14] sm:$0x1]
    %v1423 = vsel %vm408, %v1419, 0.0
    %1424 = vadd.xlane.f32.xlu0 %v1423
    %v1425 = vpop.xlane.xlu0 %1424
    %v1426 = vsel %vm408, %v1420, 0.0
    %1427 = vadd.xlane.f32.xlu0 %v1426
    %v1428 = vpop.xlane.xlu0 %1427
    %v1429 = vrcp.pop 32.0
    %v1430 = vmul.f32 %v1425, %v1429
    %v1431 = vmul.f32 %v1428, %v1429
    %v1432 = vsub.f32 %v1419, %v1430
    %v1433 = vsub.f32 %v1420, %v1431
    %v1434 = vmul.f32 %v1432, %v1432
    %v1435 = vmul.f32 %v1433, %v1433
    %v1436 = vsel %vm408, %v1434, 0.0
    %1437 = vadd.xlane.f32.xlu0 %v1436
    %v1438 = vpop.xlane.xlu0 %1437
    %v1439 = vsel %vm408, %v1435, 0.0
    %1440 = vadd.xlane.f32.xlu0 %v1439
    %v1441 = vpop.xlane.xlu0 %1440
    %v1442 = vmul.f32 %v1438, %v1429
    %v1443 = vmul.f32 %v1441, %v1429
    %v1444 = vadd.f32 %v1442, 1e-05
    %v1445 = vadd.f32 %v1443, 1e-05
    %v1446 = vrsqrt.pop %v1444
    %v1447 = vrsqrt.pop %v1445
    %v1448 = vmul.f32 %v1432, %v1446
    %v1449 = vmul.f32 %v1433, %v1447
    %v1451 = vlaneseq
    %v1452 = vshrl.u32 %v1451, 7
    %v1453 = vsub.s32 0, %v1452
    %v1454 = vrot.slane %v1421, %v1453
    %v1456 = vmul.f32 %v1448, %v1454
    %v1457 = vmul.f32 %v1449, %v1454
    %v1459 = vlaneseq
    %v1460 = vshrl.u32 %v1459, 7
    %v1461 = vsub.s32 0, %v1460
    %v1462 = vrot.slane %v1422, %v1461
    %v1464 = vadd.f32 %v1456, %v1462
    %v1465 = vadd.f32 %v1457, %v1462
    %v1466 = vld [vmem:[%s21] sm:$0xff]
    %v1467 = vld [vmem:[%s21 + $0x8] sm:$0xff]
    %v1468 = vld [vmem:[%s21 + $0x10] sm:$0xff]
    %v1469 = vld [vmem:[%s21 + $0x18] sm:$0xff]
    %v1470 = vld [vmem:[#allocation10] sm:$0x1]
    %v1472 = vlaneseq
    %v1473 = vshrl.u32 %v1472, 7
    %v1474 = vsub.s32 0, %v1473
    %v1475 = vrot.slane %v1470, %v1474
    %v1478 = vsel %vm408, %v1464, 0
    %v1481 = vsel %vm408, %v1465, 0
    %1483 = vmatprep.subr.mxu0 0.0
    %1484 = vmatpush1.msra.mxu0 %v1466
    %1485 = vmatprep.subr.mxu0 0.0
    %1486 = vmatpush1.msra.mxu0 %v1467
    %1487 = vmatprep.subr.mxu0 0.0
    %1488 = vmatpush1.msra.mxu0 %v1468
    %1489 = vmatprep.subr.mxu0 0.0
    %1490 = vmatpush1.msra.mxu0 %v1469
    %1491 = vmatprep.subr.mxu0 0.0
    %1492 = vmatpush1.msra.mxu0 0.0
    %1493 = vmatprep.subr.mxu0 0.0
    %1494 = vmatpush1.msra.mxu0 0.0
    %1495 = vmatprep.subr.mxu0 0.0
    %1496 = vmatpush1.msra.mxu0 0.0
    %1497 = vmatprep.subr.mxu0 0.0
    %1498 = vmatpush1.msra.mxu0 0.0
    %1499 = vmatprep.subr.mxu0 0.0
    %1500 = vmatpush1.msra.mxu0 0.0
    %1501 = vmatprep.subr.mxu0 0.0
    %1502 = vmatpush1.msra.mxu0 0.0
    %1503 = vmatprep.subr.mxu0 0.0
    %1504 = vmatpush1.msra.mxu0 0.0
    %1505 = vmatprep.subr.mxu0 0.0
    %1506 = vmatpush1.msra.mxu0 0.0
    %1507 = vmatprep.subr.mxu0 0.0
    %1508 = vmatpush1.msra.mxu0 0.0
    %1509 = vmatprep.subr.mxu0 0.0
    %1510 = vmatpush1.msra.mxu0 0.0
    %1511 = vmatprep.subr.mxu0 0.0
    %1512 = vmatpush1.msra.mxu0 0.0
    %1513 = vmatprep.subr.mxu0 0.0
    %1514 = vmatpush1.msra.mxu0 0.0
    %1515 = vmatprep.subr.mxu0 0.0
    %1516 = vmatpush1.msra.mxu0 0.0
    %1517 = vmatprep.subr.mxu0 0.0
    %1518 = vmatpush1.msra.mxu0 0.0
    %1519 = vmatprep.subr.mxu0 0.0
    %1520 = vmatpush1.msra.mxu0 0.0
    %1521 = vmatprep.subr.mxu0 0.0
    %1522 = vmatpush1.msra.mxu0 0.0
    %1523 = vmatprep.subr.mxu0 0.0
    %1524 = vmatpush1.msra.mxu0 0.0
    %1525 = vmatprep.subr.mxu0 0.0
    %1526 = vmatpush1.msra.mxu0 0.0
    %1527 = vmatprep.subr.mxu0 0.0
    %1528 = vmatpush1.msra.mxu0 0.0
    %1529 = vmatprep.subr.mxu0 0.0
    %1530 = vmatpush1.msra.mxu0 0.0
    %1531 = vmatprep.subr.mxu0 0.0
    %1532 = vmatpush1.msra.mxu0 0.0
    %1533 = vmatprep.subr.mxu0 0.0
    %1534 = vmatpush1.msra.mxu0 0.0
    %1535 = vmatprep.subr.mxu0 0.0
    %1536 = vmatpush1.msra.mxu0 0.0
    %1537 = vmatprep.subr.mxu0 0.0
    %1538 = vmatpush1.msra.mxu0 0.0
    %1539 = vmatprep.subr.mxu0 0.0
    %1540 = vmatpush1.msra.mxu0 0.0
    %1541 = vmatprep.subr.mxu0 0.0
    %1542 = vmatpush1.msra.mxu0 0.0
    %1543 = vmatprep.subr.mxu0 0.0
    %1544 = vmatpush1.msra.mxu0 0.0
    %1545 = vmatprep.subr.mxu0 0.0
    %1546 = vmatpush1.msra.mxu0 0.0
    %1547 = vmatprep.mubr.f32.mxu0 0.0
    %1548 = vmatmul.mubr.f32.gmra.mrb[0].mxu0 %v1478
    %v1549 = vpop.f32.mrb[0].mxu0
    %v1550 = vadd.f32 %v1475, %v1549
    %v1551 = vpop.f32.mrb[0].mxu0
    %1552 = vmatprep.mubr.f32.mxu0 0.0
    %1553 = vmatmul.mubr.f32.gmra.mrb[0].mxu0 %v1481
    %v1554 = vpop.f32.mrb[0].mxu0
    %v1555 = vadd.f32 %v1475, %v1554
    %v1556 = vpop.f32.mrb[0].mxu0
    %1557 = vdwg.mxu0
    %v1558 = vmax.f32 %v1550, 0.0
    %v1559 = vmax.f32 %v1555, 0.0
    %v1560 = vld [vmem:[%s25] sm:$0xff]
    %v1561 = vld [vmem:[%s25 + $0x8] sm:$0xff]
    %v1562 = vld [vmem:[%s25 + $0x10] sm:$0xff]
    %v1563 = vld [vmem:[%s25 + $0x18] sm:$0xff]
    %v1564 = vld [vmem:[%s25 + $0x20] sm:$0xff]
    %v1565 = vld [vmem:[%s25 + $0x28] sm:$0xff]
    %v1566 = vld [vmem:[%s25 + $0x30] sm:$0xff]
    %v1567 = vld [vmem:[%s25 + $0x38] sm:$0xff]
    %v1568 = vld [vmem:[#allocation11] sm:$0x1]
    %v1570 = vlaneseq
    %v1571 = vshrl.u32 %v1570, 7
    %v1572 = vsub.s32 0, %v1571
    %v1573 = vrot.slane %v1568, %v1572
    %vm1575 = vcmask 523264
    %v1577 = vsel %vm1575, %v1558, 0
    %v1580 = vsel %vm1575, %v1559, 0
    %1582 = vmatprep.subr.mxu0 0.0
    %1583 = vmatpush1.msra.mxu0 %v1560
    %1584 = vmatprep.subr.mxu0 0.0
    %1585 = vmatpush1.msra.mxu0 %v1561
    %1586 = vmatprep.subr.mxu0 0.0
    %1587 = vmatpush1.msra.mxu0 %v1562
    %1588 = vmatprep.subr.mxu0 0.0
    %1589 = vmatpush1.msra.mxu0 %v1563
    %1590 = vmatprep.subr.mxu0 0.0
    %1591 = vmatpush1.msra.mxu0 %v1564
    %1592 = vmatprep.subr.mxu0 0.0
    %1593 = vmatpush1.msra.mxu0 %v1565
    %1594 = vmatprep.subr.mxu0 0.0
    %1595 = vmatpush1.msra.mxu0 %v1566
    %1596 = vmatprep.subr.mxu0 0.0
    %1597 = vmatpush1.msra.mxu0 %v1567
    %1598 = vmatprep.subr.mxu0 0.0
    %1599 = vmatpush1.msra.mxu0 0.0
    %1600 = vmatprep.subr.mxu0 0.0
    %1601 = vmatpush1.msra.mxu0 0.0
    %1602 = vmatprep.subr.mxu0 0.0
    %1603 = vmatpush1.msra.mxu0 0.0
    %1604 = vmatprep.subr.mxu0 0.0
    %1605 = vmatpush1.msra.mxu0 0.0
    %1606 = vmatprep.subr.mxu0 0.0
    %1607 = vmatpush1.msra.mxu0 0.0
    %1608 = vmatprep.subr.mxu0 0.0
    %1609 = vmatpush1.msra.mxu0 0.0
    %1610 = vmatprep.subr.mxu0 0.0
    %1611 = vmatpush1.msra.mxu0 0.0
    %1612 = vmatprep.subr.mxu0 0.0
    %1613 = vmatpush1.msra.mxu0 0.0
    %1614 = vmatprep.subr.mxu0 0.0
    %1615 = vmatpush1.msra.mxu0 0.0
    %1616 = vmatprep.subr.mxu0 0.0
    %1617 = vmatpush1.msra.mxu0 0.0
    %1618 = vmatprep.subr.mxu0 0.0
    %1619 = vmatpush1.msra.mxu0 0.0
    %1620 = vmatprep.subr.mxu0 0.0
    %1621 = vmatpush1.msra.mxu0 0.0
    %1622 = vmatprep.subr.mxu0 0.0
    %1623 = vmatpush1.msra.mxu0 0.0
    %1624 = vmatprep.subr.mxu0 0.0
    %1625 = vmatpush1.msra.mxu0 0.0
    %1626 = vmatprep.subr.mxu0 0.0
    %1627 = vmatpush1.msra.mxu0 0.0
    %1628 = vmatprep.subr.mxu0 0.0
    %1629 = vmatpush1.msra.mxu0 0.0
    %1630 = vmatprep.subr.mxu0 0.0
    %1631 = vmatpush1.msra.mxu0 0.0
    %1632 = vmatprep.subr.mxu0 0.0
    %1633 = vmatpush1.msra.mxu0 0.0
    %1634 = vmatprep.subr.mxu0 0.0
    %1635 = vmatpush1.msra.mxu0 0.0
    %1636 = vmatprep.subr.mxu0 0.0
    %1637 = vmatpush1.msra.mxu0 0.0
    %1638 = vmatprep.subr.mxu0 0.0
    %1639 = vmatpush1.msra.mxu0 0.0
    %1640 = vmatprep.subr.mxu0 0.0
    %1641 = vmatpush1.msra.mxu0 0.0
    %1642 = vmatprep.subr.mxu0 0.0
    %1643 = vmatpush1.msra.mxu0 0.0
    %1644 = vmatprep.subr.mxu0 0.0
    %1645 = vmatpush1.msra.mxu0 0.0
    %1646 = vmatprep.mubr.f32.mxu0 0.0
    %1647 = vmatmul.mubr.f32.gmra.mrb[0].mxu0 %v1577
    %v1648 = vpop.f32.mrb[0].mxu0
    %v1649 = vadd.f32 %v1573, %v1648
    %v1650 = vpop.f32.mrb[0].mxu0
    %1651 = vmatprep.mubr.f32.mxu0 0.0
    %1652 = vmatmul.mubr.f32.gmra.mrb[0].mxu0 %v1580
    %v1653 = vpop.f32.mrb[0].mxu0
    %v1654 = vadd.f32 %v1573, %v1653
    %v1655 = vpop.f32.mrb[0].mxu0
    %1656 = vdwg.mxu0
    %v1657 = vadd.f32 %v1464, %v1649
    %v1658 = vadd.f32 %v1465, %v1654
    %v1659 = vld [vmem:[#allocation16] sm:$0x1]
    %v1660 = vld [vmem:[#allocation17] sm:$0x1]
    %v1661 = vsel %vm408, %v1657, 0.0
    %1662 = vadd.xlane.f32.xlu0 %v1661
    %v1663 = vpop.xlane.xlu0 %1662
    %v1664 = vsel %vm408, %v1658, 0.0
    %1665 = vadd.xlane.f32.xlu0 %v1664
    %v1666 = vpop.xlane.xlu0 %1665
    %v1667 = vmul.f32 %v1663, %v1429
    %v1668 = vmul.f32 %v1666, %v1429
    %v1669 = vsub.f32 %v1657, %v1667
    %v1670 = vsub.f32 %v1658, %v1668
    %v1671 = vmul.f32 %v1669, %v1669
    %v1672 = vmul.f32 %v1670, %v1670
    %v1673 = vsel %vm408, %v1671, 0.0
    %1674 = vadd.xlane.f32.xlu0 %v1673
    %v1675 = vpop.xlane.xlu0 %1674
    %v1676 = vsel %vm408, %v1672, 0.0
    %1677 = vadd.xlane.f32.xlu0 %v1676
    %v1678 = vpop.xlane.xlu0 %1677
    %v1679 = vmul.f32 %v1675, %v1429
    %v1680 = vmul.f32 %v1678, %v1429
    %v1681 = vadd.f32 %v1679, 1e-05
    %v1682 = vadd.f32 %v1680, 1e-05
    %v1683 = vrsqrt.pop %v1681
    %v1684 = vrsqrt.pop %v1682
    %v1685 = vmul.f32 %v1669, %v1683
    %v1686 = vmul.f32 %v1670, %v1684
    %v1688 = vlaneseq
    %v1689 = vshrl.u32 %v1688, 7
    %v1690 = vsub.s32 0, %v1689
    %v1691 = vrot.slane %v1659, %v1690
    %v1693 = vmul.f32 %v1685, %v1691
    %v1694 = vmul.f32 %v1686, %v1691
    %v1696 = vlaneseq
    %v1697 = vshrl.u32 %v1696, 7
    %v1698 = vsub.s32 0, %v1697
    %v1699 = vrot.slane %v1660, %v1698
    %v1701 = vadd.f32 %v1693, %v1699
    %v1702 = vadd.f32 %v1694, %v1699
    %s1703 = scalar_lea.vmem %s13, 32
    %v1704 = vld [vmem:[%s1703] sm:$0xff]
    %v1705 = vld [vmem:[%s1703 + $0x8] sm:$0xff]
    %v1706 = vld [vmem:[%s1703 + $0x10] sm:$0xff]
    %v1707 = vld [vmem:[%s1703 + $0x18] sm:$0xff]
    %s1708 = scalar_lea.vmem [#allocation7], 1
    %v1709 = vld [vmem:[%s1708] sm:$0x1]
    %s1710 = scalar_lea.vmem %s17, 32
    %v1711 = vld [vmem:[%s1710] sm:$0xff]
    %v1712 = vld [vmem:[%s1710 + $0x8] sm:$0xff]
    %v1713 = vld [vmem:[%s1710 + $0x10] sm:$0xff]
    %v1714 = vld [vmem:[%s1710 + $0x18] sm:$0xff]
    %s1715 = scalar_lea.vmem [#allocation8], 1
    %v1716 = vld [vmem:[%s1715] sm:$0x1]
    %v1718 = vlaneseq
    %v1719 = vshrl.u32 %v1718, 7
    %v1720 = vsub.s32 0, %v1719
    %v1721 = vrot.slane %v1709, %v1720
    %v1724 = vsel %vm408, %v1701, 0
    %v1727 = vsel %vm408, %v1702, 0
    %1729 = vmatprep.subr.mxu0 0.0
    %1730 = vmatpush1.msra.mxu0 %v1704
    %1731 = vmatprep.subr.mxu0 0.0
    %1732 = vmatpush1.msra.mxu0 %v1705
    %1733 = vmatprep.subr.mxu0 0.0
    %1734 = vmatpush1.msra.mxu0 %v1706
    %1735 = vmatprep.subr.mxu0 0.0
    %1736 = vmatpush1.msra.mxu0 %v1707
    %1737 = vmatprep.subr.mxu0 0.0
    %1738 = vmatpush1.msra.mxu0 0.0
    %1739 = vmatprep.subr.mxu0 0.0
    %1740 = vmatpush1.msra.mxu0 0.0
    %1741 = vmatprep.subr.mxu0 0.0
    %1742 = vmatpush1.msra.mxu0 0.0
    %1743 = vmatprep.subr.mxu0 0.0
    %1744 = vmatpush1.msra.mxu0 0.0
    %1745 = vmatprep.subr.mxu0 0.0
    %1746 = vmatpush1.msra.mxu0 0.0
    %1747 = vmatprep.subr.mxu0 0.0
    %1748 = vmatpush1.msra.mxu0 0.0
    %1749 = vmatprep.subr.mxu0 0.0
    %1750 = vmatpush1.msra.mxu0 0.0
    %1751 = vmatprep.subr.mxu0 0.0
    %1752 = vmatpush1.msra.mxu0 0.0
    %1753 = vmatprep.subr.mxu0 0.0
    %1754 = vmatpush1.msra.mxu0 0.0
    %1755 = vmatprep.subr.mxu0 0.0
    %1756 = vmatpush1.msra.mxu0 0.0
    %1757 = vmatprep.subr.mxu0 0.0
    %1758 = vmatpush1.msra.mxu0 0.0
    %1759 = vmatprep.subr.mxu0 0.0
    %1760 = vmatpush1.msra.mxu0 0.0
    %1761 = vmatprep.subr.mxu0 0.0
    %1762 = vmatpush1.msra.mxu0 0.0
    %1763 = vmatprep.subr.mxu0 0.0
    %1764 = vmatpush1.msra.mxu0 0.0
    %1765 = vmatprep.subr.mxu0 0.0
    %1766 = vmatpush1.msra.mxu0 0.0
    %1767 = vmatprep.subr.mxu0 0.0
    %1768 = vmatpush1.msra.mxu0 0.0
    %1769 = vmatprep.subr.mxu0 0.0
    %1770 = vmatpush1.msra.mxu0 0.0
    %1771 = vmatprep.subr.mxu0 0.0
    %1772 = vmatpush1.msra.mxu0 0.0
    %1773 = vmatprep.subr.mxu0 0.0
    %1774 = vmatpush1.msra.mxu0 0.0
    %1775 = vmatprep.subr.mxu0 0.0
    %1776 = vmatpush1.msra.mxu0 0.0
    %1777 = vmatprep.subr.mxu0 0.0
    %1778 = vmatpush1.msra.mxu0 0.0
    %1779 = vmatprep.subr.mxu0 0.0
    %1780 = vmatpush1.msra.mxu0 0.0
    %1781 = vmatprep.subr.mxu0 0.0
    %1782 = vmatpush1.msra.mxu0 0.0
    %1783 = vmatprep.subr.mxu0 0.0
    %1784 = vmatpush1.msra.mxu0 0.0
    %1785 = vmatprep.subr.mxu0 0.0
    %1786 = vmatpush1.msra.mxu0 0.0
    %1787 = vmatprep.subr.mxu0 0.0
    %1788 = vmatpush1.msra.mxu0 0.0
    %1789 = vmatprep.subr.mxu0 0.0
    %1790 = vmatpush1.msra.mxu0 0.0
    %1791 = vmatprep.subr.mxu0 0.0
    %1792 = vmatpush1.msra.mxu0 0.0
    %1793 = vmatprep.mubr.f32.mxu0 0.0
    %1794 = vmatmul.mubr.f32.gmra.mrb[0].mxu0 %v1724
    %v1795 = vpop.f32.mrb[0].mxu0
    %v1796 = vadd.f32 %v1721, %v1795
    %v1797 = vpop.f32.mrb[0].mxu0
    %1798 = vmatprep.mubr.f32.mxu0 0.0
    %1799 = vmatmul.mubr.f32.gmra.mrb[0].mxu0 %v1727
    %v1800 = vpop.f32.mrb[0].mxu0
    %v1801 = vadd.f32 %v1721, %v1800
    %v1802 = vpop.f32.mrb[0].mxu0
    %1803 = vdwg.mxu0
    %v1804 = vmul.f32 %v1796, %v495
    %v1805 = vmul.f32 %v1801, %v495
    %1808 = vrot.lane.b32.xlu0 %v1796, 96
    %v1809 = vpop.permute.xlu0 %1808
    %1810 = vrot.lane.b32.xlu0 %v1801, 96
    %v1811 = vpop.permute.xlu0 %1810
    %v1813 = vsel %vm408, %v1804, 0
    %v1816 = vsel %vm408, %v1805, 0
    %v1818 = vsel %vm408, %v1809, 0
    %v1820 = vsel %vm408, %v1811, 0
    %1822 = vmatprep.subr.mxu0 0.0
    %1823 = vmatpush1.xpose.msra.mxu0 %v1818
    %1824 = vmatprep.subr.mxu0 0.0
    %1825 = vmatpush1.xpose.msra.mxu0 %v1820
    %1826 = vmatprep.subr.mxu0 0.0
    %1827 = vmatpush1.xpose.msra.mxu0 0.0
    %1828 = vmatprep.subr.mxu0 0.0
    %1829 = vmatpush1.xpose.msra.mxu0 0.0
    %1830 = vmatprep.subr.mxu0 0.0
    %1831 = vmatpush1.xpose.msra.mxu0 0.0
    %1832 = vmatprep.subr.mxu0 0.0
    %1833 = vmatpush1.xpose.msra.mxu0 0.0
    %1834 = vmatprep.subr.mxu0 0.0
    %1835 = vmatpush1.xpose.msra.mxu0 0.0
    %1836 = vmatprep.subr.mxu0 0.0
    %1837 = vmatpush1.xpose.msra.mxu0 0.0
    %1838 = vmatprep.subr.mxu0 0.0
    %1839 = vmatpush1.xpose.msra.mxu0 0.0
    %1840 = vmatprep.subr.mxu0 0.0
    %1841 = vmatpush1.xpose.msra.mxu0 0.0
    %1842 = vmatprep.subr.mxu0 0.0
    %1843 = vmatpush1.xpose.msra.mxu0 0.0
    %1844 = vmatprep.subr.mxu0 0.0
    %1845 = vmatpush1.xpose.msra.mxu0 0.0
    %1846 = vmatprep.subr.mxu0 0.0
    %1847 = vmatpush1.xpose.msra.mxu0 0.0
    %1848 = vmatprep.subr.mxu0 0.0
    %1849 = vmatpush1.xpose.msra.mxu0 0.0
    %1850 = vmatprep.subr.mxu0 0.0
    %1851 = vmatpush1.xpose.msra.mxu0 0.0
    %1852 = vmatprep.subr.mxu0 0.0
    %1853 = vmatpush1.xpose.msra.mxu0 0.0
    %1854 = vmatprep.subr.mxu0 0.0
    %1855 = vmatpush1.xpose.msra.mxu0 0.0
    %1856 = vmatprep.subr.mxu0 0.0
    %1857 = vmatpush1.xpose.msra.mxu0 0.0
    %1858 = vmatprep.subr.mxu0 0.0
    %1859 = vmatpush1.xpose.msra.mxu0 0.0
    %1860 = vmatprep.subr.mxu0 0.0
    %1861 = vmatpush1.xpose.msra.mxu0 0.0
    %1862 = vmatprep.subr.mxu0 0.0
    %1863 = vmatpush1.xpose.msra.mxu0 0.0
    %1864 = vmatprep.subr.mxu0 0.0
    %1865 = vmatpush1.xpose.msra.mxu0 0.0
    %1866 = vmatprep.subr.mxu0 0.0
    %1867 = vmatpush1.xpose.msra.mxu0 0.0
    %1868 = vmatprep.subr.mxu0 0.0
    %1869 = vmatpush1.xpose.msra.mxu0 0.0
    %1870 = vmatprep.subr.mxu0 0.0
    %1871 = vmatpush1.xpose.msra.mxu0 0.0
    %1872 = vmatprep.subr.mxu0 0.0
    %1873 = vmatpush1.xpose.msra.mxu0 0.0
    %1874 = vmatprep.subr.mxu0 0.0
    %1875 = vmatpush1.xpose.msra.mxu0 0.0
    %1876 = vmatprep.subr.mxu0 0.0
    %1877 = vmatpush1.xpose.msra.mxu0 0.0
    %1878 = vmatprep.subr.mxu0 0.0
    %1879 = vmatpush1.xpose.msra.mxu0 0.0
    %1880 = vmatprep.subr.mxu0 0.0
    %1881 = vmatpush1.xpose.msra.mxu0 0.0
    %1882 = vmatprep.subr.mxu0 0.0
    %1883 = vmatpush1.xpose.msra.mxu0 0.0
    %1884 = vmatprep.subr.mxu0 0.0
    %1885 = vmatpush1.xpose.msra.mxu0 0.0
    %1886 = vmatprep.mubr.f32.mxu0 0.0
    %1887 = vmatmul.mubr.f32.gmra.mrb[0].mxu0 %v1813
    %v1888 = vpop.f32.mrb[0].mxu0
    %v1889 = vadd.f32 %v384, %v1888
    %v1890 = vpop.f32.mrb[0].mxu0
    %1891 = vmatprep.mubr.f32.mxu0 0.0
    %1892 = vmatmul.mubr.f32.gmra.mrb[0].mxu0 %v1816
    %v1893 = vpop.f32.mrb[0].mxu0
    %v1894 = vadd.f32 %v385, %v1893
    %v1895 = vpop.f32.mrb[0].mxu0
    %1896 = vdwg.mxu0
    %v1897 = vsel %vm590, %v1889, -inf
    %1898 = vmax.xlane.f32.xlu0 %v1897
    %v1899 = vpop.xlane.xlu0 %1898
    %v1900 = vsel %vm590, %v1894, -inf
    %1901 = vmax.xlane.f32.xlu0 %v1900
    %v1902 = vpop.xlane.xlu0 %1901
    %v1903 = vsub.f32 %v1889, %v1899
    %v1904 = vsub.f32 %v1894, %v1902
    %v1905 = vmul.f32 %v1903, 1.442695
    %v1906 = vpow.pop %v1905
    %v1907 = vmul.f32 %v1904, 1.442695
    %v1908 = vpow.pop %v1907
    %v1909 = vsel %vm590, %v1906, 0.0
    %1910 = vadd.xlane.f32.xlu0 %v1909
    %v1911 = vpop.xlane.xlu0 %1910
    %v1912 = vsel %vm590, %v1908, 0.0
    %1913 = vadd.xlane.f32.xlu0 %v1912
    %v1914 = vpop.xlane.xlu0 %1913
    %v1915 = vrcp.pop %v1911
    %v1916 = vrcp.pop %v1914
    %v1917 = vmul.f32 %v1906, %v1915
    %v1918 = vmul.f32 %v1908, %v1916
    %v1919 = vmul.f32 %v1796, %v614
    %v1920 = vmul.f32 %v1801, %v614
    %v1921 = vmul.f32 %v1796, %v624
    %v1922 = vmul.f32 %v1801, %v624
    %v1924 = vsel %vm408, %v1921, 0
    %v1927 = vsel %vm408, %v1922, 0
    %1929 = vmatprep.subr.mxu0 0.0
    %1930 = vmatpush1.xpose.msra.mxu0 %v1818
    %1931 = vmatprep.subr.mxu0 0.0
    %1932 = vmatpush1.xpose.msra.mxu0 %v1820
    %1933 = vmatprep.subr.mxu0 0.0
    %1934 = vmatpush1.xpose.msra.mxu0 0.0
    %1935 = vmatprep.subr.mxu0 0.0
    %1936 = vmatpush1.xpose.msra.mxu0 0.0
    %1937 = vmatprep.subr.mxu0 0.0
    %1938 = vmatpush1.xpose.msra.mxu0 0.0
    %1939 = vmatprep.subr.mxu0 0.0
    %1940 = vmatpush1.xpose.msra.mxu0 0.0
    %1941 = vmatprep.subr.mxu0 0.0
    %1942 = vmatpush1.xpose.msra.mxu0 0.0
    %1943 = vmatprep.subr.mxu0 0.0
    %1944 = vmatpush1.xpose.msra.mxu0 0.0
    %1945 = vmatprep.subr.mxu0 0.0
    %1946 = vmatpush1.xpose.msra.mxu0 0.0
    %1947 = vmatprep.subr.mxu0 0.0
    %1948 = vmatpush1.xpose.msra.mxu0 0.0
    %1949 = vmatprep.subr.mxu0 0.0
    %1950 = vmatpush1.xpose.msra.mxu0 0.0
    %1951 = vmatprep.subr.mxu0 0.0
    %1952 = vmatpush1.xpose.msra.mxu0 0.0
    %1953 = vmatprep.subr.mxu0 0.0
    %1954 = vmatpush1.xpose.msra.mxu0 0.0
    %1955 = vmatprep.subr.mxu0 0.0
    %1956 = vmatpush1.xpose.msra.mxu0 0.0
    %1957 = vmatprep.subr.mxu0 0.0
    %1958 = vmatpush1.xpose.msra.mxu0 0.0
    %1959 = vmatprep.subr.mxu0 0.0
    %1960 = vmatpush1.xpose.msra.mxu0 0.0
    %1961 = vmatprep.subr.mxu0 0.0
    %1962 = vmatpush1.xpose.msra.mxu0 0.0
    %1963 = vmatprep.subr.mxu0 0.0
    %1964 = vmatpush1.xpose.msra.mxu0 0.0
    %1965 = vmatprep.subr.mxu0 0.0
    %1966 = vmatpush1.xpose.msra.mxu0 0.0
    %1967 = vmatprep.subr.mxu0 0.0
    %1968 = vmatpush1.xpose.msra.mxu0 0.0
    %1969 = vmatprep.subr.mxu0 0.0
    %1970 = vmatpush1.xpose.msra.mxu0 0.0
    %1971 = vmatprep.subr.mxu0 0.0
    %1972 = vmatpush1.xpose.msra.mxu0 0.0
    %1973 = vmatprep.subr.mxu0 0.0
    %1974 = vmatpush1.xpose.msra.mxu0 0.0
    %1975 = vmatprep.subr.mxu0 0.0
    %1976 = vmatpush1.xpose.msra.mxu0 0.0
    %1977 = vmatprep.subr.mxu0 0.0
    %1978 = vmatpush1.xpose.msra.mxu0 0.0
    %1979 = vmatprep.subr.mxu0 0.0
    %1980 = vmatpush1.xpose.msra.mxu0 0.0
    %1981 = vmatprep.subr.mxu0 0.0
    %1982 = vmatpush1.xpose.msra.mxu0 0.0
    %1983 = vmatprep.subr.mxu0 0.0
    %1984 = vmatpush1.xpose.msra.mxu0 0.0
    %1985 = vmatprep.subr.mxu0 0.0
    %1986 = vmatpush1.xpose.msra.mxu0 0.0
    %1987 = vmatprep.subr.mxu0 0.0
    %1988 = vmatpush1.xpose.msra.mxu0 0.0
    %1989 = vmatprep.subr.mxu0 0.0
    %1990 = vmatpush1.xpose.msra.mxu0 0.0
    %1991 = vmatprep.subr.mxu0 0.0
    %1992 = vmatpush1.xpose.msra.mxu0 0.0
    %1993 = vmatprep.mubr.f32.mxu0 0.0
    %1994 = vmatmul.mubr.f32.gmra.mrb[0].mxu0 %v1924
    %v1995 = vpop.f32.mrb[0].mxu0
    %v1996 = vadd.f32 %v384, %v1995
    %v1997 = vpop.f32.mrb[0].mxu0
    %1998 = vmatprep.mubr.f32.mxu0 0.0
    %1999 = vmatmul.mubr.f32.gmra.mrb[0].mxu0 %v1927
    %v2000 = vpop.f32.mrb[0].mxu0
    %v2001 = vadd.f32 %v385, %v2000
    %v2002 = vpop.f32.mrb[0].mxu0
    %2003 = vdwg.mxu0
    %v2004 = vsel %vm590, %v1996, -inf
    %2005 = vmax.xlane.f32.xlu0 %v2004
    %v2006 = vpop.xlane.xlu0 %2005
    %v2007 = vsel %vm590, %v2001, -inf
    %2008 = vmax.xlane.f32.xlu0 %v2007
    %v2009 = vpop.xlane.xlu0 %2008
    %v2010 = vsub.f32 %v1996, %v2006
    %v2011 = vsub.f32 %v2001, %v2009
    %v2012 = vmul.f32 %v2010, 1.442695
    %v2013 = vpow.pop %v2012
    %v2014 = vmul.f32 %v2011, 1.442695
    %v2015 = vpow.pop %v2014
    %v2016 = vsel %vm590, %v2013, 0.0
    %2017 = vadd.xlane.f32.xlu0 %v2016
    %v2018 = vpop.xlane.xlu0 %2017
    %v2019 = vsel %vm590, %v2015, 0.0
    %2020 = vadd.xlane.f32.xlu0 %v2019
    %v2021 = vpop.xlane.xlu0 %2020
    %v2022 = vrcp.pop %v2018
    %v2023 = vrcp.pop %v2021
    %v2024 = vmul.f32 %v2013, %v2022
    %v2025 = vmul.f32 %v2015, %v2023
    %v2026 = vmul.f32 %v1796, %v732
    %v2027 = vmul.f32 %v1801, %v732
    %2030 = vrot.lane.b32.xlu0 %v2026, 64
    %v2031 = vpop.permute.xlu0 %2030
    %2032 = vrot.lane.b32.xlu0 %v2027, 64
    %v2033 = vpop.permute.xlu0 %2032
    %v2037 = vsel %vm590, %v2024, 0
    %v2040 = vsel %vm590, %v2025, 0
    %2042 = vmatprep.subr.mxu0 0.0
    %2043 = vmatpush1.msra.mxu0 %v2031
    %2044 = vmatprep.subr.mxu0 0.0
    %2045 = vmatpush1.msra.mxu0 %v2033
    %2046 = vmatprep.subr.mxu0 0.0
    %2047 = vmatpush1.msra.mxu0 0.0
    %2048 = vmatprep.subr.mxu0 0.0
    %2049 = vmatpush1.msra.mxu0 0.0
    %2050 = vmatprep.subr.mxu0 0.0
    %2051 = vmatpush1.msra.mxu0 0.0
    %2052 = vmatprep.subr.mxu0 0.0
    %2053 = vmatpush1.msra.mxu0 0.0
    %2054 = vmatprep.subr.mxu0 0.0
    %2055 = vmatpush1.msra.mxu0 0.0
    %2056 = vmatprep.subr.mxu0 0.0
    %2057 = vmatpush1.msra.mxu0 0.0
    %2058 = vmatprep.subr.mxu0 0.0
    %2059 = vmatpush1.msra.mxu0 0.0
    %2060 = vmatprep.subr.mxu0 0.0
    %2061 = vmatpush1.msra.mxu0 0.0
    %2062 = vmatprep.subr.mxu0 0.0
    %2063 = vmatpush1.msra.mxu0 0.0
    %2064 = vmatprep.subr.mxu0 0.0
    %2065 = vmatpush1.msra.mxu0 0.0
    %2066 = vmatprep.subr.mxu0 0.0
    %2067 = vmatpush1.msra.mxu0 0.0
    %2068 = vmatprep.subr.mxu0 0.0
    %2069 = vmatpush1.msra.mxu0 0.0
    %2070 = vmatprep.subr.mxu0 0.0
    %2071 = vmatpush1.msra.mxu0 0.0
    %2072 = vmatprep.subr.mxu0 0.0
    %2073 = vmatpush1.msra.mxu0 0.0
    %2074 = vmatprep.subr.mxu0 0.0
    %2075 = vmatpush1.msra.mxu0 0.0
    %2076 = vmatprep.subr.mxu0 0.0
    %2077 = vmatpush1.msra.mxu0 0.0
    %2078 = vmatprep.subr.mxu0 0.0
    %2079 = vmatpush1.msra.mxu0 0.0
    %2080 = vmatprep.subr.mxu0 0.0
    %2081 = vmatpush1.msra.mxu0 0.0
    %2082 = vmatprep.subr.mxu0 0.0
    %2083 = vmatpush1.msra.mxu0 0.0
    %2084 = vmatprep.subr.mxu0 0.0
    %2085 = vmatpush1.msra.mxu0 0.0
    %2086 = vmatprep.subr.mxu0 0.0
    %2087 = vmatpush1.msra.mxu0 0.0
    %2088 = vmatprep.subr.mxu0 0.0
    %2089 = vmatpush1.msra.mxu0 0.0
    %2090 = vmatprep.subr.mxu0 0.0
    %2091 = vmatpush1.msra.mxu0 0.0
    %2092 = vmatprep.subr.mxu0 0.0
    %2093 = vmatpush1.msra.mxu0 0.0
    %2094 = vmatprep.subr.mxu0 0.0
    %2095 = vmatpush1.msra.mxu0 0.0
    %2096 = vmatprep.subr.mxu0 0.0
    %2097 = vmatpush1.msra.mxu0 0.0
    %2098 = vmatprep.subr.mxu0 0.0
    %2099 = vmatpush1.msra.mxu0 0.0
    %2100 = vmatprep.subr.mxu0 0.0
    %2101 = vmatpush1.msra.mxu0 0.0
    %2102 = vmatprep.subr.mxu0 0.0
    %2103 = vmatpush1.msra.mxu0 0.0
    %2104 = vmatprep.subr.mxu0 0.0
    %2105 = vmatpush1.msra.mxu0 0.0
    %2106 = vmatprep.mubr.f32.mxu0 0.0
    %2107 = vmatmul.mubr.f32.gmra.mrb[0].mxu0 %v2037
    %v2108 = vpop.f32.mrb[0].mxu0
    %v2109 = vadd.f32 0.0, %v2108
    %v2110 = vpop.f32.mrb[0].mxu0
    %2111 = vmatprep.mubr.f32.mxu0 0.0
    %2112 = vmatmul.mubr.f32.gmra.mrb[0].mxu0 %v2040
    %v2113 = vpop.f32.mrb[0].mxu0
    %v2114 = vadd.f32 0.0, %v2113
    %v2115 = vpop.f32.mrb[0].mxu0
    %2116 = vdwg.mxu0
    %2119 = vrot.lane.b32.xlu0 %v1919, 64
    %v2120 = vpop.permute.xlu0 %2119
    %2121 = vrot.lane.b32.xlu0 %v1920, 64
    %v2122 = vpop.permute.xlu0 %2121
    %v2126 = vsel %vm590, %v1917, 0
    %v2129 = vsel %vm590, %v1918, 0
    %2131 = vmatprep.subr.mxu0 0.0
    %2132 = vmatpush1.msra.mxu0 %v2120
    %2133 = vmatprep.subr.mxu0 0.0
    %2134 = vmatpush1.msra.mxu0 %v2122
    %2135 = vmatprep.subr.mxu0 0.0
    %2136 = vmatpush1.msra.mxu0 0.0
    %2137 = vmatprep.subr.mxu0 0.0
    %2138 = vmatpush1.msra.mxu0 0.0
    %2139 = vmatprep.subr.mxu0 0.0
    %2140 = vmatpush1.msra.mxu0 0.0
    %2141 = vmatprep.subr.mxu0 0.0
    %2142 = vmatpush1.msra.mxu0 0.0
    %2143 = vmatprep.subr.mxu0 0.0
    %2144 = vmatpush1.msra.mxu0 0.0
    %2145 = vmatprep.subr.mxu0 0.0
    %2146 = vmatpush1.msra.mxu0 0.0
    %2147 = vmatprep.subr.mxu0 0.0
    %2148 = vmatpush1.msra.mxu0 0.0
    %2149 = vmatprep.subr.mxu0 0.0
    %2150 = vmatpush1.msra.mxu0 0.0
    %2151 = vmatprep.subr.mxu0 0.0
    %2152 = vmatpush1.msra.mxu0 0.0
    %2153 = vmatprep.subr.mxu0 0.0
    %2154 = vmatpush1.msra.mxu0 0.0
    %2155 = vmatprep.subr.mxu0 0.0
    %2156 = vmatpush1.msra.mxu0 0.0
    %2157 = vmatprep.subr.mxu0 0.0
    %2158 = vmatpush1.msra.mxu0 0.0
    %2159 = vmatprep.subr.mxu0 0.0
    %2160 = vmatpush1.msra.mxu0 0.0
    %2161 = vmatprep.subr.mxu0 0.0
    %2162 = vmatpush1.msra.mxu0 0.0
    %2163 = vmatprep.subr.mxu0 0.0
    %2164 = vmatpush1.msra.mxu0 0.0
    %2165 = vmatprep.subr.mxu0 0.0
    %2166 = vmatpush1.msra.mxu0 0.0
    %2167 = vmatprep.subr.mxu0 0.0
    %2168 = vmatpush1.msra.mxu0 0.0
    %2169 = vmatprep.subr.mxu0 0.0
    %2170 = vmatpush1.msra.mxu0 0.0
    %2171 = vmatprep.subr.mxu0 0.0
    %2172 = vmatpush1.msra.mxu0 0.0
    %2173 = vmatprep.subr.mxu0 0.0
    %2174 = vmatpush1.msra.mxu0 0.0
    %2175 = vmatprep.subr.mxu0 0.0
    %2176 = vmatpush1.msra.mxu0 0.0
    %2177 = vmatprep.subr.mxu0 0.0
    %2178 = vmatpush1.msra.mxu0 0.0
    %2179 = vmatprep.subr.mxu0 0.0
    %2180 = vmatpush1.msra.mxu0 0.0
    %2181 = vmatprep.subr.mxu0 0.0
    %2182 = vmatpush1.msra.mxu0 0.0
    %2183 = vmatprep.subr.mxu0 0.0
    %2184 = vmatpush1.msra.mxu0 0.0
    %2185 = vmatprep.subr.mxu0 0.0
    %2186 = vmatpush1.msra.mxu0 0.0
    %2187 = vmatprep.subr.mxu0 0.0
    %2188 = vmatpush1.msra.mxu0 0.0
    %2189 = vmatprep.subr.mxu0 0.0
    %2190 = vmatpush1.msra.mxu0 0.0
    %2191 = vmatprep.subr.mxu0 0.0
    %2192 = vmatpush1.msra.mxu0 0.0
    %2193 = vmatprep.subr.mxu0 0.0
    %2194 = vmatpush1.msra.mxu0 0.0
    %2195 = vmatprep.mubr.f32.mxu0 0.0
    %2196 = vmatmul.mubr.f32.gmra.mrb[0].mxu0 %v2126
    %v2197 = vpop.f32.mrb[0].mxu0
    %v2198 = vadd.f32 %v2109, %v2197
    %v2199 = vpop.f32.mrb[0].mxu0
    %2200 = vmatprep.mubr.f32.mxu0 0.0
    %2201 = vmatmul.mubr.f32.gmra.mrb[0].mxu0 %v2129
    %v2202 = vpop.f32.mrb[0].mxu0
    %v2203 = vadd.f32 %v2114, %v2202
    %v2204 = vpop.f32.mrb[0].mxu0
    %2205 = vdwg.mxu0
    %v2206 = vmul.f32 %v1796, %v920
    %v2207 = vmul.f32 %v1801, %v920
    %v2209 = vsel %vm408, %v2206, 0
    %v2212 = vsel %vm408, %v2207, 0
    %2214 = vmatprep.subr.mxu0 0.0
    %2215 = vmatpush1.xpose.msra.mxu0 %v1818
    %2216 = vmatprep.subr.mxu0 0.0
    %2217 = vmatpush1.xpose.msra.mxu0 %v1820
    %2218 = vmatprep.subr.mxu0 0.0
    %2219 = vmatpush1.xpose.msra.mxu0 0.0
    %2220 = vmatprep.subr.mxu0 0.0
    %2221 = vmatpush1.xpose.msra.mxu0 0.0
    %2222 = vmatprep.subr.mxu0 0.0
    %2223 = vmatpush1.xpose.msra.mxu0 0.0
    %2224 = vmatprep.subr.mxu0 0.0
    %2225 = vmatpush1.xpose.msra.mxu0 0.0
    %2226 = vmatprep.subr.mxu0 0.0
    %2227 = vmatpush1.xpose.msra.mxu0 0.0
    %2228 = vmatprep.subr.mxu0 0.0
    %2229 = vmatpush1.xpose.msra.mxu0 0.0
    %2230 = vmatprep.subr.mxu0 0.0
    %2231 = vmatpush1.xpose.msra.mxu0 0.0
    %2232 = vmatprep.subr.mxu0 0.0
    %2233 = vmatpush1.xpose.msra.mxu0 0.0
    %2234 = vmatprep.subr.mxu0 0.0
    %2235 = vmatpush1.xpose.msra.mxu0 0.0
    %2236 = vmatprep.subr.mxu0 0.0
    %2237 = vmatpush1.xpose.msra.mxu0 0.0
    %2238 = vmatprep.subr.mxu0 0.0
    %2239 = vmatpush1.xpose.msra.mxu0 0.0
    %2240 = vmatprep.subr.mxu0 0.0
    %2241 = vmatpush1.xpose.msra.mxu0 0.0
    %2242 = vmatprep.subr.mxu0 0.0
    %2243 = vmatpush1.xpose.msra.mxu0 0.0
    %2244 = vmatprep.subr.mxu0 0.0
    %2245 = vmatpush1.xpose.msra.mxu0 0.0
    %2246 = vmatprep.subr.mxu0 0.0
    %2247 = vmatpush1.xpose.msra.mxu0 0.0
    %2248 = vmatprep.subr.mxu0 0.0
    %2249 = vmatpush1.xpose.msra.mxu0 0.0
    %2250 = vmatprep.subr.mxu0 0.0
    %2251 = vmatpush1.xpose.msra.mxu0 0.0
    %2252 = vmatprep.subr.mxu0 0.0
    %2253 = vmatpush1.xpose.msra.mxu0 0.0
    %2254 = vmatprep.subr.mxu0 0.0
    %2255 = vmatpush1.xpose.msra.mxu0 0.0
    %2256 = vmatprep.subr.mxu0 0.0
    %2257 = vmatpush1.xpose.msra.mxu0 0.0
    %2258 = vmatprep.subr.mxu0 0.0
    %2259 = vmatpush1.xpose.msra.mxu0 0.0
    %2260 = vmatprep.subr.mxu0 0.0
    %2261 = vmatpush1.xpose.msra.mxu0 0.0
    %2262 = vmatprep.subr.mxu0 0.0
    %2263 = vmatpush1.xpose.msra.mxu0 0.0
    %2264 = vmatprep.subr.mxu0 0.0
    %2265 = vmatpush1.xpose.msra.mxu0 0.0
    %2266 = vmatprep.subr.mxu0 0.0
    %2267 = vmatpush1.xpose.msra.mxu0 0.0
    %2268 = vmatprep.subr.mxu0 0.0
    %2269 = vmatpush1.xpose.msra.mxu0 0.0
    %2270 = vmatprep.subr.mxu0 0.0
    %2271 = vmatpush1.xpose.msra.mxu0 0.0
    %2272 = vmatprep.subr.mxu0 0.0
    %2273 = vmatpush1.xpose.msra.mxu0 0.0
    %2274 = vmatprep.subr.mxu0 0.0
    %2275 = vmatpush1.xpose.msra.mxu0 0.0
    %2276 = vmatprep.subr.mxu0 0.0
    %2277 = vmatpush1.xpose.msra.mxu0 0.0
    %2278 = vmatprep.mubr.f32.mxu0 0.0
    %2279 = vmatmul.mubr.f32.gmra.mrb[0].mxu0 %v2209
    %v2280 = vpop.f32.mrb[0].mxu0
    %v2281 = vadd.f32 %v384, %v2280
    %v2282 = vpop.f32.mrb[0].mxu0
    %2283 = vmatprep.mubr.f32.mxu0 0.0
    %2284 = vmatmul.mubr.f32.gmra.mrb[0].mxu0 %v2212
    %v2285 = vpop.f32.mrb[0].mxu0
    %v2286 = vadd.f32 %v385, %v2285
    %v2287 = vpop.f32.mrb[0].mxu0
    %2288 = vdwg.mxu0
    %v2289 = vsel %vm590, %v2281, -inf
    %2290 = vmax.xlane.f32.xlu0 %v2289
    %v2291 = vpop.xlane.xlu0 %2290
    %v2292 = vsel %vm590, %v2286, -inf
    %2293 = vmax.xlane.f32.xlu0 %v2292
    %v2294 = vpop.xlane.xlu0 %2293
    %v2295 = vsub.f32 %v2281, %v2291
    %v2296 = vsub.f32 %v2286, %v2294
    %v2297 = vmul.f32 %v2295, 1.442695
    %v2298 = vpow.pop %v2297
    %v2299 = vmul.f32 %v2296, 1.442695
    %v2300 = vpow.pop %v2299
    %v2301 = vsel %vm590, %v2298, 0.0
    %2302 = vadd.xlane.f32.xlu0 %v2301
    %v2303 = vpop.xlane.xlu0 %2302
    %v2304 = vsel %vm590, %v2300, 0.0
    %2305 = vadd.xlane.f32.xlu0 %v2304
    %v2306 = vpop.xlane.xlu0 %2305
    %v2307 = vrcp.pop %v2303
    %v2308 = vrcp.pop %v2306
    %v2309 = vmul.f32 %v2298, %v2307
    %v2310 = vmul.f32 %v2300, %v2308
    %v2311 = vmul.f32 %v1796, %v1028
    %v2312 = vmul.f32 %v1801, %v1028
    %2315 = vrot.lane.b32.xlu0 %v2311, 64
    %v2316 = vpop.permute.xlu0 %2315
    %2317 = vrot.lane.b32.xlu0 %v2312, 64
    %v2318 = vpop.permute.xlu0 %2317
    %v2322 = vsel %vm590, %v2309, 0
    %v2325 = vsel %vm590, %v2310, 0
    %2327 = vmatprep.subr.mxu0 0.0
    %2328 = vmatpush1.msra.mxu0 %v2316
    %2329 = vmatprep.subr.mxu0 0.0
    %2330 = vmatpush1.msra.mxu0 %v2318
    %2331 = vmatprep.subr.mxu0 0.0
    %2332 = vmatpush1.msra.mxu0 0.0
    %2333 = vmatprep.subr.mxu0 0.0
    %2334 = vmatpush1.msra.mxu0 0.0
    %2335 = vmatprep.subr.mxu0 0.0
    %2336 = vmatpush1.msra.mxu0 0.0
    %2337 = vmatprep.subr.mxu0 0.0
    %2338 = vmatpush1.msra.mxu0 0.0
    %2339 = vmatprep.subr.mxu0 0.0
    %2340 = vmatpush1.msra.mxu0 0.0
    %2341 = vmatprep.subr.mxu0 0.0
    %2342 = vmatpush1.msra.mxu0 0.0
    %2343 = vmatprep.subr.mxu0 0.0
    %2344 = vmatpush1.msra.mxu0 0.0
    %2345 = vmatprep.subr.mxu0 0.0
    %2346 = vmatpush1.msra.mxu0 0.0
    %2347 = vmatprep.subr.mxu0 0.0
    %2348 = vmatpush1.msra.mxu0 0.0
    %2349 = vmatprep.subr.mxu0 0.0
    %2350 = vmatpush1.msra.mxu0 0.0
    %2351 = vmatprep.subr.mxu0 0.0
    %2352 = vmatpush1.msra.mxu0 0.0
    %2353 = vmatprep.subr.mxu0 0.0
    %2354 = vmatpush1.msra.mxu0 0.0
    %2355 = vmatprep.subr.mxu0 0.0
    %2356 = vmatpush1.msra.mxu0 0.0
    %2357 = vmatprep.subr.mxu0 0.0
    %2358 = vmatpush1.msra.mxu0 0.0
    %2359 = vmatprep.subr.mxu0 0.0
    %2360 = vmatpush1.msra.mxu0 0.0
    %2361 = vmatprep.subr.mxu0 0.0
    %2362 = vmatpush1.msra.mxu0 0.0
    %2363 = vmatprep.subr.mxu0 0.0
    %2364 = vmatpush1.msra.mxu0 0.0
    %2365 = vmatprep.subr.mxu0 0.0
    %2366 = vmatpush1.msra.mxu0 0.0
    %2367 = vmatprep.subr.mxu0 0.0
    %2368 = vmatpush1.msra.mxu0 0.0
    %2369 = vmatprep.subr.mxu0 0.0
    %2370 = vmatpush1.msra.mxu0 0.0
    %2371 = vmatprep.subr.mxu0 0.0
    %2372 = vmatpush1.msra.mxu0 0.0
    %2373 = vmatprep.subr.mxu0 0.0
    %2374 = vmatpush1.msra.mxu0 0.0
    %2375 = vmatprep.subr.mxu0 0.0
    %2376 = vmatpush1.msra.mxu0 0.0
    %2377 = vmatprep.subr.mxu0 0.0
    %2378 = vmatpush1.msra.mxu0 0.0
    %2379 = vmatprep.subr.mxu0 0.0
    %2380 = vmatpush1.msra.mxu0 0.0
    %2381 = vmatprep.subr.mxu0 0.0
    %2382 = vmatpush1.msra.mxu0 0.0
    %2383 = vmatprep.subr.mxu0 0.0
    %2384 = vmatpush1.msra.mxu0 0.0
    %2385 = vmatprep.subr.mxu0 0.0
    %2386 = vmatpush1.msra.mxu0 0.0
    %2387 = vmatprep.subr.mxu0 0.0
    %2388 = vmatpush1.msra.mxu0 0.0
    %2389 = vmatprep.subr.mxu0 0.0
    %2390 = vmatpush1.msra.mxu0 0.0
    %2391 = vmatprep.mubr.f32.mxu0 0.0
    %2392 = vmatmul.mubr.f32.gmra.mrb[0].mxu0 %v2322
    %v2393 = vpop.f32.mrb[0].mxu0
    %v2394 = vadd.f32 0.0, %v2393
    %v2395 = vpop.f32.mrb[0].mxu0
    %2396 = vmatprep.mubr.f32.mxu0 0.0
    %2397 = vmatmul.mubr.f32.gmra.mrb[0].mxu0 %v2325
    %v2398 = vpop.f32.mrb[0].mxu0
    %v2399 = vadd.f32 0.0, %v2398
    %v2400 = vpop.f32.mrb[0].mxu0
    %2401 = vdwg.mxu0
    %v2402 = vadd.f32 %v2198, %v2394
    %v2403 = vadd.f32 %v2203, %v2399
    %v2404 = vmul.f32 %v1796, %v1129
    %v2405 = vmul.f32 %v1801, %v1129
    %v2407 = vsel %vm408, %v2404, 0
    %v2410 = vsel %vm408, %v2405, 0
    %2412 = vmatprep.subr.mxu0 0.0
    %2413 = vmatpush1.xpose.msra.mxu0 %v1818
    %2414 = vmatprep.subr.mxu0 0.0
    %2415 = vmatpush1.xpose.msra.mxu0 %v1820
    %2416 = vmatprep.subr.mxu0 0.0
    %2417 = vmatpush1.xpose.msra.mxu0 0.0
    %2418 = vmatprep.subr.mxu0 0.0
    %2419 = vmatpush1.xpose.msra.mxu0 0.0
    %2420 = vmatprep.subr.mxu0 0.0
    %2421 = vmatpush1.xpose.msra.mxu0 0.0
    %2422 = vmatprep.subr.mxu0 0.0
    %2423 = vmatpush1.xpose.msra.mxu0 0.0
    %2424 = vmatprep.subr.mxu0 0.0
    %2425 = vmatpush1.xpose.msra.mxu0 0.0
    %2426 = vmatprep.subr.mxu0 0.0
    %2427 = vmatpush1.xpose.msra.mxu0 0.0
    %2428 = vmatprep.subr.mxu0 0.0
    %2429 = vmatpush1.xpose.msra.mxu0 0.0
    %2430 = vmatprep.subr.mxu0 0.0
    %2431 = vmatpush1.xpose.msra.mxu0 0.0
    %2432 = vmatprep.subr.mxu0 0.0
    %2433 = vmatpush1.xpose.msra.mxu0 0.0
    %2434 = vmatprep.subr.mxu0 0.0
    %2435 = vmatpush1.xpose.msra.mxu0 0.0
    %2436 = vmatprep.subr.mxu0 0.0
    %2437 = vmatpush1.xpose.msra.mxu0 0.0
    %2438 = vmatprep.subr.mxu0 0.0
    %2439 = vmatpush1.xpose.msra.mxu0 0.0
    %2440 = vmatprep.subr.mxu0 0.0
    %2441 = vmatpush1.xpose.msra.mxu0 0.0
    %2442 = vmatprep.subr.mxu0 0.0
    %2443 = vmatpush1.xpose.msra.mxu0 0.0
    %2444 = vmatprep.subr.mxu0 0.0
    %2445 = vmatpush1.xpose.msra.mxu0 0.0
    %2446 = vmatprep.subr.mxu0 0.0
    %2447 = vmatpush1.xpose.msra.mxu0 0.0
    %2448 = vmatprep.subr.mxu0 0.0
    %2449 = vmatpush1.xpose.msra.mxu0 0.0
    %2450 = vmatprep.subr.mxu0 0.0
    %2451 = vmatpush1.xpose.msra.mxu0 0.0
    %2452 = vmatprep.subr.mxu0 0.0
    %2453 = vmatpush1.xpose.msra.mxu0 0.0
    %2454 = vmatprep.subr.mxu0 0.0
    %2455 = vmatpush1.xpose.msra.mxu0 0.0
    %2456 = vmatprep.subr.mxu0 0.0
    %2457 = vmatpush1.xpose.msra.mxu0 0.0
    %2458 = vmatprep.subr.mxu0 0.0
    %2459 = vmatpush1.xpose.msra.mxu0 0.0
    %2460 = vmatprep.subr.mxu0 0.0
    %2461 = vmatpush1.xpose.msra.mxu0 0.0
    %2462 = vmatprep.subr.mxu0 0.0
    %2463 = vmatpush1.xpose.msra.mxu0 0.0
    %2464 = vmatprep.subr.mxu0 0.0
    %2465 = vmatpush1.xpose.msra.mxu0 0.0
    %2466 = vmatprep.subr.mxu0 0.0
    %2467 = vmatpush1.xpose.msra.mxu0 0.0
    %2468 = vmatprep.subr.mxu0 0.0
    %2469 = vmatpush1.xpose.msra.mxu0 0.0
    %2470 = vmatprep.subr.mxu0 0.0
    %2471 = vmatpush1.xpose.msra.mxu0 0.0
    %2472 = vmatprep.subr.mxu0 0.0
    %2473 = vmatpush1.xpose.msra.mxu0 0.0
    %2474 = vmatprep.subr.mxu0 0.0
    %2475 = vmatpush1.xpose.msra.mxu0 0.0
    %2476 = vmatprep.mubr.f32.mxu0 0.0
    %2477 = vmatmul.mubr.f32.gmra.mrb[0].mxu0 %v2407
    %v2478 = vpop.f32.mrb[0].mxu0
    %v2479 = vadd.f32 %v384, %v2478
    %v2480 = vpop.f32.mrb[0].mxu0
    %2481 = vmatprep.mubr.f32.mxu0 0.0
    %2482 = vmatmul.mubr.f32.gmra.mrb[0].mxu0 %v2410
    %v2483 = vpop.f32.mrb[0].mxu0
    %v2484 = vadd.f32 %v385, %v2483
    %v2485 = vpop.f32.mrb[0].mxu0
    %2486 = vdwg.mxu0
    %v2487 = vsel %vm590, %v2479, -inf
    %2488 = vmax.xlane.f32.xlu0 %v2487
    %v2489 = vpop.xlane.xlu0 %2488
    %v2490 = vsel %vm590, %v2484, -inf
    %2491 = vmax.xlane.f32.xlu0 %v2490
    %v2492 = vpop.xlane.xlu0 %2491
    %v2493 = vsub.f32 %v2479, %v2489
    %v2494 = vsub.f32 %v2484, %v2492
    %v2495 = vmul.f32 %v2493, 1.442695
    %v2496 = vpow.pop %v2495
    %v2497 = vmul.f32 %v2494, 1.442695
    %v2498 = vpow.pop %v2497
    %v2499 = vsel %vm590, %v2496, 0.0
    %2500 = vadd.xlane.f32.xlu0 %v2499
    %v2501 = vpop.xlane.xlu0 %2500
    %v2502 = vsel %vm590, %v2498, 0.0
    %2503 = vadd.xlane.f32.xlu0 %v2502
    %v2504 = vpop.xlane.xlu0 %2503
    %v2505 = vrcp.pop %v2501
    %v2506 = vrcp.pop %v2504
    %v2507 = vmul.f32 %v2496, %v2505
    %v2508 = vmul.f32 %v2498, %v2506
    %v2509 = vmul.f32 %v1796, %v1237
    %v2510 = vmul.f32 %v1801, %v1237
    %2513 = vrot.lane.b32.xlu0 %v2509, 64
    %v2514 = vpop.permute.xlu0 %2513
    %2515 = vrot.lane.b32.xlu0 %v2510, 64
    %v2516 = vpop.permute.xlu0 %2515
    %v2520 = vsel %vm590, %v2507, 0
    %v2523 = vsel %vm590, %v2508, 0
    %2525 = vmatprep.subr.mxu0 0.0
    %2526 = vmatpush1.msra.mxu0 %v2514
    %2527 = vmatprep.subr.mxu0 0.0
    %2528 = vmatpush1.msra.mxu0 %v2516
    %2529 = vmatprep.subr.mxu0 0.0
    %2530 = vmatpush1.msra.mxu0 0.0
    %2531 = vmatprep.subr.mxu0 0.0
    %2532 = vmatpush1.msra.mxu0 0.0
    %2533 = vmatprep.subr.mxu0 0.0
    %2534 = vmatpush1.msra.mxu0 0.0
    %2535 = vmatprep.subr.mxu0 0.0
    %2536 = vmatpush1.msra.mxu0 0.0
    %2537 = vmatprep.subr.mxu0 0.0
    %2538 = vmatpush1.msra.mxu0 0.0
    %2539 = vmatprep.subr.mxu0 0.0
    %2540 = vmatpush1.msra.mxu0 0.0
    %2541 = vmatprep.subr.mxu0 0.0
    %2542 = vmatpush1.msra.mxu0 0.0
    %2543 = vmatprep.subr.mxu0 0.0
    %2544 = vmatpush1.msra.mxu0 0.0
    %2545 = vmatprep.subr.mxu0 0.0
    %2546 = vmatpush1.msra.mxu0 0.0
    %2547 = vmatprep.subr.mxu0 0.0
    %2548 = vmatpush1.msra.mxu0 0.0
    %2549 = vmatprep.subr.mxu0 0.0
    %2550 = vmatpush1.msra.mxu0 0.0
    %2551 = vmatprep.subr.mxu0 0.0
    %2552 = vmatpush1.msra.mxu0 0.0
    %2553 = vmatprep.subr.mxu0 0.0
    %2554 = vmatpush1.msra.mxu0 0.0
    %2555 = vmatprep.subr.mxu0 0.0
    %2556 = vmatpush1.msra.mxu0 0.0
    %2557 = vmatprep.subr.mxu0 0.0
    %2558 = vmatpush1.msra.mxu0 0.0
    %2559 = vmatprep.subr.mxu0 0.0
    %2560 = vmatpush1.msra.mxu0 0.0
    %2561 = vmatprep.subr.mxu0 0.0
    %2562 = vmatpush1.msra.mxu0 0.0
    %2563 = vmatprep.subr.mxu0 0.0
    %2564 = vmatpush1.msra.mxu0 0.0
    %2565 = vmatprep.subr.mxu0 0.0
    %2566 = vmatpush1.msra.mxu0 0.0
    %2567 = vmatprep.subr.mxu0 0.0
    %2568 = vmatpush1.msra.mxu0 0.0
    %2569 = vmatprep.subr.mxu0 0.0
    %2570 = vmatpush1.msra.mxu0 0.0
    %2571 = vmatprep.subr.mxu0 0.0
    %2572 = vmatpush1.msra.mxu0 0.0
    %2573 = vmatprep.subr.mxu0 0.0
    %2574 = vmatpush1.msra.mxu0 0.0
    %2575 = vmatprep.subr.mxu0 0.0
    %2576 = vmatpush1.msra.mxu0 0.0
    %2577 = vmatprep.subr.mxu0 0.0
    %2578 = vmatpush1.msra.mxu0 0.0
    %2579 = vmatprep.subr.mxu0 0.0
    %2580 = vmatpush1.msra.mxu0 0.0
    %2581 = vmatprep.subr.mxu0 0.0
    %2582 = vmatpush1.msra.mxu0 0.0
    %2583 = vmatprep.subr.mxu0 0.0
    %2584 = vmatpush1.msra.mxu0 0.0
    %2585 = vmatprep.subr.mxu0 0.0
    %2586 = vmatpush1.msra.mxu0 0.0
    %2587 = vmatprep.subr.mxu0 0.0
    %2588 = vmatpush1.msra.mxu0 0.0
    %2589 = vmatprep.mubr.f32.mxu0 0.0
    %2590 = vmatmul.mubr.f32.gmra.mrb[0].mxu0 %v2520
    %v2591 = vpop.f32.mrb[0].mxu0
    %v2592 = vadd.f32 0.0, %v2591
    %v2593 = vpop.f32.mrb[0].mxu0
    %2594 = vmatprep.mubr.f32.mxu0 0.0
    %2595 = vmatmul.mubr.f32.gmra.mrb[0].mxu0 %v2523
    %v2596 = vpop.f32.mrb[0].mxu0
    %v2597 = vadd.f32 0.0, %v2596
    %v2598 = vpop.f32.mrb[0].mxu0
    %2599 = vdwg.mxu0
    %v2600 = vadd.f32 %v2402, %v2592
    %v2601 = vadd.f32 %v2403, %v2597
    %v2603 = vlaneseq
    %v2604 = vshrl.u32 %v2603, 7
    %v2605 = vsub.s32 0, %v2604
    %v2606 = vrot.slane %v1716, %v2605
    %v2609 = vsel %vm408, %v2600, 0
    %v2612 = vsel %vm408, %v2601, 0
    %2614 = vmatprep.subr.mxu0 0.0
    %2615 = vmatpush1.msra.mxu0 %v1711
    %2616 = vmatprep.subr.mxu0 0.0
    %2617 = vmatpush1.msra.mxu0 %v1712
    %2618 = vmatprep.subr.mxu0 0.0
    %2619 = vmatpush1.msra.mxu0 %v1713
    %2620 = vmatprep.subr.mxu0 0.0
    %2621 = vmatpush1.msra.mxu0 %v1714
    %2622 = vmatprep.subr.mxu0 0.0
    %2623 = vmatpush1.msra.mxu0 0.0
    %2624 = vmatprep.subr.mxu0 0.0
    %2625 = vmatpush1.msra.mxu0 0.0
    %2626 = vmatprep.subr.mxu0 0.0
    %2627 = vmatpush1.msra.mxu0 0.0
    %2628 = vmatprep.subr.mxu0 0.0
    %2629 = vmatpush1.msra.mxu0 0.0
    %2630 = vmatprep.subr.mxu0 0.0
    %2631 = vmatpush1.msra.mxu0 0.0
    %2632 = vmatprep.subr.mxu0 0.0
    %2633 = vmatpush1.msra.mxu0 0.0
    %2634 = vmatprep.subr.mxu0 0.0
    %2635 = vmatpush1.msra.mxu0 0.0
    %2636 = vmatprep.subr.mxu0 0.0
    %2637 = vmatpush1.msra.mxu0 0.0
    %2638 = vmatprep.subr.mxu0 0.0
    %2639 = vmatpush1.msra.mxu0 0.0
    %2640 = vmatprep.subr.mxu0 0.0
    %2641 = vmatpush1.msra.mxu0 0.0
    %2642 = vmatprep.subr.mxu0 0.0
    %2643 = vmatpush1.msra.mxu0 0.0
    %2644 = vmatprep.subr.mxu0 0.0
    %2645 = vmatpush1.msra.mxu0 0.0
    %2646 = vmatprep.subr.mxu0 0.0
    %2647 = vmatpush1.msra.mxu0 0.0
    %2648 = vmatprep.subr.mxu0 0.0
    %2649 = vmatpush1.msra.mxu0 0.0
    %2650 = vmatprep.subr.mxu0 0.0
    %2651 = vmatpush1.msra.mxu0 0.0
    %2652 = vmatprep.subr.mxu0 0.0
    %2653 = vmatpush1.msra.mxu0 0.0
    %2654 = vmatprep.subr.mxu0 0.0
    %2655 = vmatpush1.msra.mxu0 0.0
    %2656 = vmatprep.subr.mxu0 0.0
    %2657 = vmatpush1.msra.mxu0 0.0
    %2658 = vmatprep.subr.mxu0 0.0
    %2659 = vmatpush1.msra.mxu0 0.0
    %2660 = vmatprep.subr.mxu0 0.0
    %2661 = vmatpush1.msra.mxu0 0.0
    %2662 = vmatprep.subr.mxu0 0.0
    %2663 = vmatpush1.msra.mxu0 0.0
    %2664 = vmatprep.subr.mxu0 0.0
    %2665 = vmatpush1.msra.mxu0 0.0
    %2666 = vmatprep.subr.mxu0 0.0
    %2667 = vmatpush1.msra.mxu0 0.0
    %2668 = vmatprep.subr.mxu0 0.0
    %2669 = vmatpush1.msra.mxu0 0.0
    %2670 = vmatprep.subr.mxu0 0.0
    %2671 = vmatpush1.msra.mxu0 0.0
    %2672 = vmatprep.subr.mxu0 0.0
    %2673 = vmatpush1.msra.mxu0 0.0
    %2674 = vmatprep.subr.mxu0 0.0
    %2675 = vmatpush1.msra.mxu0 0.0
    %2676 = vmatprep.subr.mxu0 0.0
    %2677 = vmatpush1.msra.mxu0 0.0
    %2678 = vmatprep.mubr.f32.mxu0 0.0
    %2679 = vmatmul.mubr.f32.gmra.mrb[0].mxu0 %v2609
    %v2680 = vpop.f32.mrb[0].mxu0
    %v2681 = vadd.f32 %v2606, %v2680
    %v2682 = vpop.f32.mrb[0].mxu0
    %2683 = vmatprep.mubr.f32.mxu0 0.0
    %2684 = vmatmul.mubr.f32.gmra.mrb[0].mxu0 %v2612
    %v2685 = vpop.f32.mrb[0].mxu0
    %v2686 = vadd.f32 %v2606, %v2685
    %v2687 = vpop.f32.mrb[0].mxu0
    %2688 = vdwg.mxu0
    %v2689 = vadd.f32 %v1701, %v2681
    %v2690 = vadd.f32 %v1702, %v2686
    %s2691 = scalar_lea.vmem [#allocation13], 1
    %v2692 = vld [vmem:[%s2691] sm:$0x1]
    %s2693 = scalar_lea.vmem [#allocation14], 1
    %v2694 = vld [vmem:[%s2693] sm:$0x1]
    %v2695 = vsel %vm408, %v2689, 0.0
    %2696 = vadd.xlane.f32.xlu0 %v2695
    %v2697 = vpop.xlane.xlu0 %2696
    %v2698 = vsel %vm408, %v2690, 0.0
    %2699 = vadd.xlane.f32.xlu0 %v2698
    %v2700 = vpop.xlane.xlu0 %2699
    %v2701 = vmul.f32 %v2697, %v1429
    %v2702 = vmul.f32 %v2700, %v1429
    %v2703 = vsub.f32 %v2689, %v2701
    %v2704 = vsub.f32 %v2690, %v2702
    %v2705 = vmul.f32 %v2703, %v2703
    %v2706 = vmul.f32 %v2704, %v2704
    %v2707 = vsel %vm408, %v2705, 0.0
    %2708 = vadd.xlane.f32.xlu0 %v2707
    %v2709 = vpop.xlane.xlu0 %2708
    %v2710 = vsel %vm408, %v2706, 0.0
    %2711 = vadd.xlane.f32.xlu0 %v2710
    %v2712 = vpop.xlane.xlu0 %2711
    %v2713 = vmul.f32 %v2709, %v1429
    %v2714 = vmul.f32 %v2712, %v1429
    %v2715 = vadd.f32 %v2713, 1e-05
    %v2716 = vadd.f32 %v2714, 1e-05
    %v2717 = vrsqrt.pop %v2715
    %v2718 = vrsqrt.pop %v2716
    %v2719 = vmul.f32 %v2703, %v2717
    %v2720 = vmul.f32 %v2704, %v2718
    %v2722 = vlaneseq
    %v2723 = vshrl.u32 %v2722, 7
    %v2724 = vsub.s32 0, %v2723
    %v2725 = vrot.slane %v2692, %v2724
    %v2727 = vmul.f32 %v2719, %v2725
    %v2728 = vmul.f32 %v2720, %v2725
    %v2730 = vlaneseq
    %v2731 = vshrl.u32 %v2730, 7
    %v2732 = vsub.s32 0, %v2731
    %v2733 = vrot.slane %v2694, %v2732
    %v2735 = vadd.f32 %v2727, %v2733
    %v2736 = vadd.f32 %v2728, %v2733
    %s2737 = scalar_lea.vmem %s21, 32
    %v2738 = vld [vmem:[%s2737] sm:$0xff]
    %v2739 = vld [vmem:[%s2737 + $0x8] sm:$0xff]
    %v2740 = vld [vmem:[%s2737 + $0x10] sm:$0xff]
    %v2741 = vld [vmem:[%s2737 + $0x18] sm:$0xff]
    %s2742 = scalar_lea.vmem [#allocation10], 1
    %v2743 = vld [vmem:[%s2742] sm:$0x1]
    %v2745 = vlaneseq
    %v2746 = vshrl.u32 %v2745, 7
    %v2747 = vsub.s32 0, %v2746
    %v2748 = vrot.slane %v2743, %v2747
    %v2751 = vsel %vm408, %v2735, 0
    %v2754 = vsel %vm408, %v2736, 0
    %2756 = vmatprep.subr.mxu0 0.0
    %2757 = vmatpush1.msra.mxu0 %v2738
    %2758 = vmatprep.subr.mxu0 0.0
    %2759 = vmatpush1.msra.mxu0 %v2739
    %2760 = vmatprep.subr.mxu0 0.0
    %2761 = vmatpush1.msra.mxu0 %v2740
    %2762 = vmatprep.subr.mxu0 0.0
    %2763 = vmatpush1.msra.mxu0 %v2741
    %2764 = vmatprep.subr.mxu0 0.0
    %2765 = vmatpush1.msra.mxu0 0.0
    %2766 = vmatprep.subr.mxu0 0.0
    %2767 = vmatpush1.msra.mxu0 0.0
    %2768 = vmatprep.subr.mxu0 0.0
    %2769 = vmatpush1.msra.mxu0 0.0
    %2770 = vmatprep.subr.mxu0 0.0
    %2771 = vmatpush1.msra.mxu0 0.0
    %2772 = vmatprep.subr.mxu0 0.0
    %2773 = vmatpush1.msra.mxu0 0.0
    %2774 = vmatprep.subr.mxu0 0.0
    %2775 = vmatpush1.msra.mxu0 0.0
    %2776 = vmatprep.subr.mxu0 0.0
    %2777 = vmatpush1.msra.mxu0 0.0
    %2778 = vmatprep.subr.mxu0 0.0
    %2779 = vmatpush1.msra.mxu0 0.0
    %2780 = vmatprep.subr.mxu0 0.0
    %2781 = vmatpush1.msra.mxu0 0.0
    %2782 = vmatprep.subr.mxu0 0.0
    %2783 = vmatpush1.msra.mxu0 0.0
    %2784 = vmatprep.subr.mxu0 0.0
    %2785 = vmatpush1.msra.mxu0 0.0
    %2786 = vmatprep.subr.mxu0 0.0
    %2787 = vmatpush1.msra.mxu0 0.0
    %2788 = vmatprep.subr.mxu0 0.0
    %2789 = vmatpush1.msra.mxu0 0.0
    %2790 = vmatprep.subr.mxu0 0.0
    %2791 = vmatpush1.msra.mxu0 0.0
    %2792 = vmatprep.subr.mxu0 0.0
    %2793 = vmatpush1.msra.mxu0 0.0
    %2794 = vmatprep.subr.mxu0 0.0
    %2795 = vmatpush1.msra.mxu0 0.0
    %2796 = vmatprep.subr.mxu0 0.0
    %2797 = vmatpush1.msra.mxu0 0.0
    %2798 = vmatprep.subr.mxu0 0.0
    %2799 = vmatpush1.msra.mxu0 0.0
    %2800 = vmatprep.subr.mxu0 0.0
    %2801 = vmatpush1.msra.mxu0 0.0
    %2802 = vmatprep.subr.mxu0 0.0
    %2803 = vmatpush1.msra.mxu0 0.0
    %2804 = vmatprep.subr.mxu0 0.0
    %2805 = vmatpush1.msra.mxu0 0.0
    %2806 = vmatprep.subr.mxu0 0.0
    %2807 = vmatpush1.msra.mxu0 0.0
    %2808 = vmatprep.subr.mxu0 0.0
    %2809 = vmatpush1.msra.mxu0 0.0
    %2810 = vmatprep.subr.mxu0 0.0
    %2811 = vmatpush1.msra.mxu0 0.0
    %2812 = vmatprep.subr.mxu0 0.0
    %2813 = vmatpush1.msra.mxu0 0.0
    %2814 = vmatprep.subr.mxu0 0.0
    %2815 = vmatpush1.msra.mxu0 0.0
    %2816 = vmatprep.subr.mxu0 0.0
    %2817 = vmatpush1.msra.mxu0 0.0
    %2818 = vmatprep.subr.mxu0 0.0
    %2819 = vmatpush1.msra.mxu0 0.0
    %2820 = vmatprep.mubr.f32.mxu0 0.0
    %2821 = vmatmul.mubr.f32.gmra.mrb[0].mxu0 %v2751
    %v2822 = vpop.f32.mrb[0].mxu0
    %v2823 = vadd.f32 %v2748, %v2822
    %v2824 = vpop.f32.mrb[0].mxu0
    %2825 = vmatprep.mubr.f32.mxu0 0.0
    %2826 = vmatmul.mubr.f32.gmra.mrb[0].mxu0 %v2754
    %v2827 = vpop.f32.mrb[0].mxu0
    %v2828 = vadd.f32 %v2748, %v2827
    %v2829 = vpop.f32.mrb[0].mxu0
    %2830 = vdwg.mxu0
    %v2831 = vmax.f32 %v2823, 0.0
    %v2832 = vmax.f32 %v2828, 0.0
    %s2833 = scalar_lea.vmem %s25, 64
    %v2834 = vld [vmem:[%s2833] sm:$0xff]
    %v2835 = vld [vmem:[%s2833 + $0x8] sm:$0xff]
    %v2836 = vld [vmem:[%s2833 + $0x10] sm:$0xff]
    %v2837 = vld [vmem:[%s2833 + $0x18] sm:$0xff]
    %v2838 = vld [vmem:[%s2833 + $0x20] sm:$0xff]
    %v2839 = vld [vmem:[%s2833 + $0x28] sm:$0xff]
    %v2840 = vld [vmem:[%s2833 + $0x30] sm:$0xff]
    %v2841 = vld [vmem:[%s2833 + $0x38] sm:$0xff]
    %s2842 = scalar_lea.vmem [#allocation11], 1
    %v2843 = vld [vmem:[%s2842] sm:$0x1]
    %v2845 = vlaneseq
    %v2846 = vshrl.u32 %v2845, 7
    %v2847 = vsub.s32 0, %v2846
    %v2848 = vrot.slane %v2843, %v2847
    %v2851 = vsel %vm1575, %v2831, 0
    %v2854 = vsel %vm1575, %v2832, 0
    %2856 = vmatprep.subr.mxu0 0.0
    %2857 = vmatpush1.msra.mxu0 %v2834
    %2858 = vmatprep.subr.mxu0 0.0
    %2859 = vmatpush1.msra.mxu0 %v2835
    %2860 = vmatprep.subr.mxu0 0.0
    %2861 = vmatpush1.msra.mxu0 %v2836
    %2862 = vmatprep.subr.mxu0 0.0
    %2863 = vmatpush1.msra.mxu0 %v2837
    %2864 = vmatprep.subr.mxu0 0.0
    %2865 = vmatpush1.msra.mxu0 %v2838
    %2866 = vmatprep.subr.mxu0 0.0
    %2867 = vmatpush1.msra.mxu0 %v2839
    %2868 = vmatprep.subr.mxu0 0.0
    %2869 = vmatpush1.msra.mxu0 %v2840
    %2870 = vmatprep.subr.mxu0 0.0
    %2871 = vmatpush1.msra.mxu0 %v2841
    %2872 = vmatprep.subr.mxu0 0.0
    %2873 = vmatpush1.msra.mxu0 0.0
    %2874 = vmatprep.subr.mxu0 0.0
    %2875 = vmatpush1.msra.mxu0 0.0
    %2876 = vmatprep.subr.mxu0 0.0
    %2877 = vmatpush1.msra.mxu0 0.0
    %2878 = vmatprep.subr.mxu0 0.0
    %2879 = vmatpush1.msra.mxu0 0.0
    %2880 = vmatprep.subr.mxu0 0.0
    %2881 = vmatpush1.msra.mxu0 0.0
    %2882 = vmatprep.subr.mxu0 0.0
    %2883 = vmatpush1.msra.mxu0 0.0
    %2884 = vmatprep.subr.mxu0 0.0
    %2885 = vmatpush1.msra.mxu0 0.0
    %2886 = vmatprep.subr.mxu0 0.0
    %2887 = vmatpush1.msra.mxu0 0.0
    %2888 = vmatprep.subr.mxu0 0.0
    %2889 = vmatpush1.msra.mxu0 0.0
    %2890 = vmatprep.subr.mxu0 0.0
    %2891 = vmatpush1.msra.mxu0 0.0
    %2892 = vmatprep.subr.mxu0 0.0
    %2893 = vmatpush1.msra.mxu0 0.0
    %2894 = vmatprep.subr.mxu0 0.0
    %2895 = vmatpush1.msra.mxu0 0.0
    %2896 = vmatprep.subr.mxu0 0.0
    %2897 = vmatpush1.msra.mxu0 0.0
    %2898 = vmatprep.subr.mxu0 0.0
    %2899 = vmatpush1.msra.mxu0 0.0
    %2900 = vmatprep.subr.mxu0 0.0
    %2901 = vmatpush1.msra.mxu0 0.0
    %2902 = vmatprep.subr.mxu0 0.0
    %2903 = vmatpush1.msra.mxu0 0.0
    %2904 = vmatprep.subr.mxu0 0.0
    %2905 = vmatpush1.msra.mxu0 0.0
    %2906 = vmatprep.subr.mxu0 0.0
    %2907 = vmatpush1.msra.mxu0 0.0
    %2908 = vmatprep.subr.mxu0 0.0
    %2909 = vmatpush1.msra.mxu0 0.0
    %2910 = vmatprep.subr.mxu0 0.0
    %2911 = vmatpush1.msra.mxu0 0.0
    %2912 = vmatprep.subr.mxu0 0.0
    %2913 = vmatpush1.msra.mxu0 0.0
    %2914 = vmatprep.subr.mxu0 0.0
    %2915 = vmatpush1.msra.mxu0 0.0
    %2916 = vmatprep.subr.mxu0 0.0
    %2917 = vmatpush1.msra.mxu0 0.0
    %2918 = vmatprep.subr.mxu0 0.0
    %2919 = vmatpush1.msra.mxu0 0.0
    %2920 = vmatprep.mubr.f32.mxu0 0.0
    %2921 = vmatmul.mubr.f32.gmra.mrb[0].mxu0 %v2851
    %v2922 = vpop.f32.mrb[0].mxu0
    %v2923 = vadd.f32 %v2848, %v2922
    %v2924 = vpop.f32.mrb[0].mxu0
    %2925 = vmatprep.mubr.f32.mxu0 0.0
    %2926 = vmatmul.mubr.f32.gmra.mrb[0].mxu0 %v2854
    %v2927 = vpop.f32.mrb[0].mxu0
    %v2928 = vadd.f32 %v2848, %v2927
    %v2929 = vpop.f32.mrb[0].mxu0
    %2930 = vdwg.mxu0
    %v2931 = vadd.f32 %v2735, %v2923
    %v2932 = vadd.f32 %v2736, %v2928
    %s2933 = scalar_lea.vmem [#allocation16], 1
    %v2934 = vld [vmem:[%s2933] sm:$0x1]
    %s2935 = scalar_lea.vmem [#allocation17], 1
    %v2936 = vld [vmem:[%s2935] sm:$0x1]
    %v2937 = vsel %vm408, %v2931, 0.0
    %2938 = vadd.xlane.f32.xlu0 %v2937
    %v2939 = vpop.xlane.xlu0 %2938
    %v2940 = vsel %vm408, %v2932, 0.0
    %2941 = vadd.xlane.f32.xlu0 %v2940
    %v2942 = vpop.xlane.xlu0 %2941
    %v2943 = vmul.f32 %v2939, %v1429
    %v2944 = vmul.f32 %v2942, %v1429
    %v2945 = vsub.f32 %v2931, %v2943
    %v2946 = vsub.f32 %v2932, %v2944
    %v2947 = vmul.f32 %v2945, %v2945
    %v2948 = vmul.f32 %v2946, %v2946
    %v2949 = vsel %vm408, %v2947, 0.0
    %2950 = vadd.xlane.f32.xlu0 %v2949
    %v2951 = vpop.xlane.xlu0 %2950
    %v2952 = vsel %vm408, %v2948, 0.0
    %2953 = vadd.xlane.f32.xlu0 %v2952
    %v2954 = vpop.xlane.xlu0 %2953
    %v2955 = vmul.f32 %v2951, %v1429
    %v2956 = vmul.f32 %v2954, %v1429
    %v2957 = vadd.f32 %v2955, 1e-05
    %v2958 = vadd.f32 %v2956, 1e-05
    %v2959 = vrsqrt.pop %v2957
    %v2960 = vrsqrt.pop %v2958
    %v2961 = vmul.f32 %v2945, %v2959
    %v2962 = vmul.f32 %v2946, %v2960
    %v2964 = vlaneseq
    %v2965 = vshrl.u32 %v2964, 7
    %v2966 = vsub.s32 0, %v2965
    %v2967 = vrot.slane %v2934, %v2966
    %v2969 = vmul.f32 %v2961, %v2967
    %v2970 = vmul.f32 %v2962, %v2967
    %v2972 = vlaneseq
    %v2973 = vshrl.u32 %v2972, 7
    %v2974 = vsub.s32 0, %v2973
    %v2975 = vrot.slane %v2936, %v2974
    %v2977 = vadd.f32 %v2969, %v2975
    %v2978 = vadd.f32 %v2970, %v2975
    %v2979 = vld [vmem:[%s73] sm:$0x1]
    %v2980 = vld [vmem:[%s75] sm:$0x1]
    %v2981 = vsel %vm408, %v2977, 0.0
    %2982 = vadd.xlane.f32.xlu0 %v2981
    %v2983 = vpop.xlane.xlu0 %2982
    %v2984 = vsel %vm408, %v2978, 0.0
    %2985 = vadd.xlane.f32.xlu0 %v2984
    %v2986 = vpop.xlane.xlu0 %2985
    %v2987 = vmul.f32 %v2983, %v1429
    %v2988 = vmul.f32 %v2986, %v1429
    %v2989 = vsub.f32 %v2977, %v2987
    %v2990 = vsub.f32 %v2978, %v2988
    %v2991 = vmul.f32 %v2989, %v2989
    %v2992 = vmul.f32 %v2990, %v2990
    %v2993 = vsel %vm408, %v2991, 0.0
    %2994 = vadd.xlane.f32.xlu0 %v2993
    %v2995 = vpop.xlane.xlu0 %2994
    %v2996 = vsel %vm408, %v2992, 0.0
    %2997 = vadd.xlane.f32.xlu0 %v2996
    %v2998 = vpop.xlane.xlu0 %2997
    %v2999 = vmul.f32 %v2995, %v1429
    %v3000 = vmul.f32 %v2998, %v1429
    %v3001 = vadd.f32 %v2999, 1e-05
    %v3002 = vadd.f32 %v3000, 1e-05
    %v3003 = vrsqrt.pop %v3001
    %v3004 = vrsqrt.pop %v3002
    %v3005 = vmul.f32 %v2989, %v3003
    %v3006 = vmul.f32 %v2990, %v3004
    %v3008 = vlaneseq
    %v3009 = vshrl.u32 %v3008, 7
    %v3010 = vsub.s32 0, %v3009
    %v3011 = vrot.slane %v2979, %v3010
    %v3013 = vmul.f32 %v3005, %v3011
    %v3014 = vmul.f32 %v3006, %v3011
    %v3016 = vlaneseq
    %v3017 = vshrl.u32 %v3016, 7
    %v3018 = vsub.s32 0, %v3017
    %v3019 = vrot.slane %v2980, %v3018
    %v3021 = vadd.f32 %v3013, %v3019
    %v3022 = vadd.f32 %v3014, %v3019
    %v3023 = vld [vmem:[#allocation5] sm:$0xff]
    %v3024 = vld [vmem:[#allocation5 + $0x8] sm:$0xff]
    %v3025 = vld [vmem:[%s37] sm:$0xff]
    %v3026 = vld [vmem:[%s37 + $0x8] sm:$0xff]
    %v3027 = vld [vmem:[%s37 + $0x10] sm:$0xff]
    %v3028 = vld [vmem:[%s37 + $0x18] sm:$0xff]
    %v3029 = vld [vmem:[#allocation19] sm:$0x1]
    %v3030 = vld [vmem:[%s41] sm:$0xff]
    %v3031 = vld [vmem:[%s41 + $0x8] sm:$0xff]
    %v3032 = vld [vmem:[%s41 + $0x10] sm:$0xff]
    %v3033 = vld [vmem:[%s41 + $0x18] sm:$0xff]
    %v3034 = vld [vmem:[#allocation20] sm:$0x1]
    %v3036 = vlaneseq
    %v3037 = vshrl.u32 %v3036, 7
    %v3038 = vsub.s32 0, %v3037
    %v3039 = vrot.slane %v3029, %v3038
    %v3042 = vsel %vm408, %v3023, 0
    %v3045 = vsel %vm408, %v3024, 0
    %3047 = vmatprep.subr.mxu0 0.0
    %3048 = vmatpush1.msra.mxu0 %v3025
    %3049 = vmatprep.subr.mxu0 0.0
    %3050 = vmatpush1.msra.mxu0 %v3026
    %3051 = vmatprep.subr.mxu0 0.0
    %3052 = vmatpush1.msra.mxu0 %v3027
    %3053 = vmatprep.subr.mxu0 0.0
    %3054 = vmatpush1.msra.mxu0 %v3028
    %3055 = vmatprep.subr.mxu0 0.0
    %3056 = vmatpush1.msra.mxu0 0.0
    %3057 = vmatprep.subr.mxu0 0.0
    %3058 = vmatpush1.msra.mxu0 0.0
    %3059 = vmatprep.subr.mxu0 0.0
    %3060 = vmatpush1.msra.mxu0 0.0
    %3061 = vmatprep.subr.mxu0 0.0
    %3062 = vmatpush1.msra.mxu0 0.0
    %3063 = vmatprep.subr.mxu0 0.0
    %3064 = vmatpush1.msra.mxu0 0.0
    %3065 = vmatprep.subr.mxu0 0.0
    %3066 = vmatpush1.msra.mxu0 0.0
    %3067 = vmatprep.subr.mxu0 0.0
    %3068 = vmatpush1.msra.mxu0 0.0
    %3069 = vmatprep.subr.mxu0 0.0
    %3070 = vmatpush1.msra.mxu0 0.0
    %3071 = vmatprep.subr.mxu0 0.0
    %3072 = vmatpush1.msra.mxu0 0.0
    %3073 = vmatprep.subr.mxu0 0.0
    %3074 = vmatpush1.msra.mxu0 0.0
    %3075 = vmatprep.subr.mxu0 0.0
    %3076 = vmatpush1.msra.mxu0 0.0
    %3077 = vmatprep.subr.mxu0 0.0
    %3078 = vmatpush1.msra.mxu0 0.0
    %3079 = vmatprep.subr.mxu0 0.0
    %3080 = vmatpush1.msra.mxu0 0.0
    %3081 = vmatprep.subr.mxu0 0.0
    %3082 = vmatpush1.msra.mxu0 0.0
    %3083 = vmatprep.subr.mxu0 0.0
    %3084 = vmatpush1.msra.mxu0 0.0
    %3085 = vmatprep.subr.mxu0 0.0
    %3086 = vmatpush1.msra.mxu0 0.0
    %3087 = vmatprep.subr.mxu0 0.0
    %3088 = vmatpush1.msra.mxu0 0.0
    %3089 = vmatprep.subr.mxu0 0.0
    %3090 = vmatpush1.msra.mxu0 0.0
    %3091 = vmatprep.subr.mxu0 0.0
    %3092 = vmatpush1.msra.mxu0 0.0
    %3093 = vmatprep.subr.mxu0 0.0
    %3094 = vmatpush1.msra.mxu0 0.0
    %3095 = vmatprep.subr.mxu0 0.0
    %3096 = vmatpush1.msra.mxu0 0.0
    %3097 = vmatprep.subr.mxu0 0.0
    %3098 = vmatpush1.msra.mxu0 0.0
    %3099 = vmatprep.subr.mxu0 0.0
    %3100 = vmatpush1.msra.mxu0 0.0
    %3101 = vmatprep.subr.mxu0 0.0
    %3102 = vmatpush1.msra.mxu0 0.0
    %3103 = vmatprep.subr.mxu0 0.0
    %3104 = vmatpush1.msra.mxu0 0.0
    %3105 = vmatprep.subr.mxu0 0.0
    %3106 = vmatpush1.msra.mxu0 0.0
    %3107 = vmatprep.subr.mxu0 0.0
    %3108 = vmatpush1.msra.mxu0 0.0
    %3109 = vmatprep.subr.mxu0 0.0
    %3110 = vmatpush1.msra.mxu0 0.0
    %3111 = vmatprep.mubr.f32.mxu0 0.0
    %3112 = vmatmul.mubr.f32.gmra.mrb[0].mxu0 %v3042
    %v3113 = vpop.f32.mrb[0].mxu0
    %v3114 = vadd.f32 %v3039, %v3113
    %v3115 = vpop.f32.mrb[0].mxu0
    %3116 = vmatprep.mubr.f32.mxu0 0.0
    %3117 = vmatmul.mubr.f32.gmra.mrb[0].mxu0 %v3045
    %v3118 = vpop.f32.mrb[0].mxu0
    %v3119 = vadd.f32 %v3039, %v3118
    %v3120 = vpop.f32.mrb[0].mxu0
    %3121 = vdwg.mxu0
    %v3122 = vmul.f32 %v3114, %v495
    %v3123 = vmul.f32 %v3119, %v495
    %3126 = vrot.lane.b32.xlu0 %v3114, 96
    %v3127 = vpop.permute.xlu0 %3126
    %3128 = vrot.lane.b32.xlu0 %v3119, 96
    %v3129 = vpop.permute.xlu0 %3128
    %v3131 = vsel %vm408, %v3122, 0
    %v3134 = vsel %vm408, %v3123, 0
    %v3136 = vsel %vm408, %v3127, 0
    %v3138 = vsel %vm408, %v3129, 0
    %3140 = vmatprep.subr.mxu0 0.0
    %3141 = vmatpush1.xpose.msra.mxu0 %v3136
    %3142 = vmatprep.subr.mxu0 0.0
    %3143 = vmatpush1.xpose.msra.mxu0 %v3138
    %3144 = vmatprep.subr.mxu0 0.0
    %3145 = vmatpush1.xpose.msra.mxu0 0.0
    %3146 = vmatprep.subr.mxu0 0.0
    %3147 = vmatpush1.xpose.msra.mxu0 0.0
    %3148 = vmatprep.subr.mxu0 0.0
    %3149 = vmatpush1.xpose.msra.mxu0 0.0
    %3150 = vmatprep.subr.mxu0 0.0
    %3151 = vmatpush1.xpose.msra.mxu0 0.0
    %3152 = vmatprep.subr.mxu0 0.0
    %3153 = vmatpush1.xpose.msra.mxu0 0.0
    %3154 = vmatprep.subr.mxu0 0.0
    %3155 = vmatpush1.xpose.msra.mxu0 0.0
    %3156 = vmatprep.subr.mxu0 0.0
    %3157 = vmatpush1.xpose.msra.mxu0 0.0
    %3158 = vmatprep.subr.mxu0 0.0
    %3159 = vmatpush1.xpose.msra.mxu0 0.0
    %3160 = vmatprep.subr.mxu0 0.0
    %3161 = vmatpush1.xpose.msra.mxu0 0.0
    %3162 = vmatprep.subr.mxu0 0.0
    %3163 = vmatpush1.xpose.msra.mxu0 0.0
    %3164 = vmatprep.subr.mxu0 0.0
    %3165 = vmatpush1.xpose.msra.mxu0 0.0
    %3166 = vmatprep.subr.mxu0 0.0
    %3167 = vmatpush1.xpose.msra.mxu0 0.0
    %3168 = vmatprep.subr.mxu0 0.0
    %3169 = vmatpush1.xpose.msra.mxu0 0.0
    %3170 = vmatprep.subr.mxu0 0.0
    %3171 = vmatpush1.xpose.msra.mxu0 0.0
    %3172 = vmatprep.subr.mxu0 0.0
    %3173 = vmatpush1.xpose.msra.mxu0 0.0
    %3174 = vmatprep.subr.mxu0 0.0
    %3175 = vmatpush1.xpose.msra.mxu0 0.0
    %3176 = vmatprep.subr.mxu0 0.0
    %3177 = vmatpush1.xpose.msra.mxu0 0.0
    %3178 = vmatprep.subr.mxu0 0.0
    %3179 = vmatpush1.xpose.msra.mxu0 0.0
    %3180 = vmatprep.subr.mxu0 0.0
    %3181 = vmatpush1.xpose.msra.mxu0 0.0
    %3182 = vmatprep.subr.mxu0 0.0
    %3183 = vmatpush1.xpose.msra.mxu0 0.0
    %3184 = vmatprep.subr.mxu0 0.0
    %3185 = vmatpush1.xpose.msra.mxu0 0.0
    %3186 = vmatprep.subr.mxu0 0.0
    %3187 = vmatpush1.xpose.msra.mxu0 0.0
    %3188 = vmatprep.subr.mxu0 0.0
    %3189 = vmatpush1.xpose.msra.mxu0 0.0
    %3190 = vmatprep.subr.mxu0 0.0
    %3191 = vmatpush1.xpose.msra.mxu0 0.0
    %3192 = vmatprep.subr.mxu0 0.0
    %3193 = vmatpush1.xpose.msra.mxu0 0.0
    %3194 = vmatprep.subr.mxu0 0.0
    %3195 = vmatpush1.xpose.msra.mxu0 0.0
    %3196 = vmatprep.subr.mxu0 0.0
    %3197 = vmatpush1.xpose.msra.mxu0 0.0
    %3198 = vmatprep.subr.mxu0 0.0
    %3199 = vmatpush1.xpose.msra.mxu0 0.0
    %3200 = vmatprep.subr.mxu0 0.0
    %3201 = vmatpush1.xpose.msra.mxu0 0.0
    %3202 = vmatprep.subr.mxu0 0.0
    %3203 = vmatpush1.xpose.msra.mxu0 0.0
    %3204 = vmatprep.mubr.f32.mxu0 0.0
    %3205 = vmatmul.mubr.f32.gmra.mrb[0].mxu0 %v3131
    %v3206 = vpop.f32.mrb[0].mxu0
    %v3207 = vadd.f32 %v386, %v3206
    %v3208 = vpop.f32.mrb[0].mxu0
    %3209 = vmatprep.mubr.f32.mxu0 0.0
    %3210 = vmatmul.mubr.f32.gmra.mrb[0].mxu0 %v3134
    %v3211 = vpop.f32.mrb[0].mxu0
    %v3212 = vadd.f32 %v387, %v3211
    %v3213 = vpop.f32.mrb[0].mxu0
    %3214 = vdwg.mxu0
    %v3215 = vsel %vm590, %v3207, -inf
    %3216 = vmax.xlane.f32.xlu0 %v3215
    %v3217 = vpop.xlane.xlu0 %3216
    %v3218 = vsel %vm590, %v3212, -inf
    %3219 = vmax.xlane.f32.xlu0 %v3218
    %v3220 = vpop.xlane.xlu0 %3219
    %v3221 = vsub.f32 %v3207, %v3217
    %v3222 = vsub.f32 %v3212, %v3220
    %v3223 = vmul.f32 %v3221, 1.442695
    %v3224 = vpow.pop %v3223
    %v3225 = vmul.f32 %v3222, 1.442695
    %v3226 = vpow.pop %v3225
    %v3227 = vsel %vm590, %v3224, 0.0
    %3228 = vadd.xlane.f32.xlu0 %v3227
    %v3229 = vpop.xlane.xlu0 %3228
    %v3230 = vsel %vm590, %v3226, 0.0
    %3231 = vadd.xlane.f32.xlu0 %v3230
    %v3232 = vpop.xlane.xlu0 %3231
    %v3233 = vrcp.pop %v3229
    %v3234 = vrcp.pop %v3232
    %v3235 = vmul.f32 %v3224, %v3233
    %v3236 = vmul.f32 %v3226, %v3234
    %v3237 = vmul.f32 %v3114, %v614
    %v3238 = vmul.f32 %v3119, %v614
    %v3239 = vmul.f32 %v3114, %v624
    %v3240 = vmul.f32 %v3119, %v624
    %v3242 = vsel %vm408, %v3239, 0
    %v3245 = vsel %vm408, %v3240, 0
    %3247 = vmatprep.subr.mxu0 0.0
    %3248 = vmatpush1.xpose.msra.mxu0 %v3136
    %3249 = vmatprep.subr.mxu0 0.0
    %3250 = vmatpush1.xpose.msra.mxu0 %v3138
    %3251 = vmatprep.subr.mxu0 0.0
    %3252 = vmatpush1.xpose.msra.mxu0 0.0
    %3253 = vmatprep.subr.mxu0 0.0
    %3254 = vmatpush1.xpose.msra.mxu0 0.0
    %3255 = vmatprep.subr.mxu0 0.0
    %3256 = vmatpush1.xpose.msra.mxu0 0.0
    %3257 = vmatprep.subr.mxu0 0.0
    %3258 = vmatpush1.xpose.msra.mxu0 0.0
    %3259 = vmatprep.subr.mxu0 0.0
    %3260 = vmatpush1.xpose.msra.mxu0 0.0
    %3261 = vmatprep.subr.mxu0 0.0
    %3262 = vmatpush1.xpose.msra.mxu0 0.0
    %3263 = vmatprep.subr.mxu0 0.0
    %3264 = vmatpush1.xpose.msra.mxu0 0.0
    %3265 = vmatprep.subr.mxu0 0.0
    %3266 = vmatpush1.xpose.msra.mxu0 0.0
    %3267 = vmatprep.subr.mxu0 0.0
    %3268 = vmatpush1.xpose.msra.mxu0 0.0
    %3269 = vmatprep.subr.mxu0 0.0
    %3270 = vmatpush1.xpose.msra.mxu0 0.0
    %3271 = vmatprep.subr.mxu0 0.0
    %3272 = vmatpush1.xpose.msra.mxu0 0.0
    %3273 = vmatprep.subr.mxu0 0.0
    %3274 = vmatpush1.xpose.msra.mxu0 0.0
    %3275 = vmatprep.subr.mxu0 0.0
    %3276 = vmatpush1.xpose.msra.mxu0 0.0
    %3277 = vmatprep.subr.mxu0 0.0
    %3278 = vmatpush1.xpose.msra.mxu0 0.0
    %3279 = vmatprep.subr.mxu0 0.0
    %3280 = vmatpush1.xpose.msra.mxu0 0.0
    %3281 = vmatprep.subr.mxu0 0.0
    %3282 = vmatpush1.xpose.msra.mxu0 0.0
    %3283 = vmatprep.subr.mxu0 0.0
    %3284 = vmatpush1.xpose.msra.mxu0 0.0
    %3285 = vmatprep.subr.mxu0 0.0
    %3286 = vmatpush1.xpose.msra.mxu0 0.0
    %3287 = vmatprep.subr.mxu0 0.0
    %3288 = vmatpush1.xpose.msra.mxu0 0.0
    %3289 = vmatprep.subr.mxu0 0.0
    %3290 = vmatpush1.xpose.msra.mxu0 0.0
    %3291 = vmatprep.subr.mxu0 0.0
    %3292 = vmatpush1.xpose.msra.mxu0 0.0
    %3293 = vmatprep.subr.mxu0 0.0
    %3294 = vmatpush1.xpose.msra.mxu0 0.0
    %3295 = vmatprep.subr.mxu0 0.0
    %3296 = vmatpush1.xpose.msra.mxu0 0.0
    %3297 = vmatprep.subr.mxu0 0.0
    %3298 = vmatpush1.xpose.msra.mxu0 0.0
    %3299 = vmatprep.subr.mxu0 0.0
    %3300 = vmatpush1.xpose.msra.mxu0 0.0
    %3301 = vmatprep.subr.mxu0 0.0
    %3302 = vmatpush1.xpose.msra.mxu0 0.0
    %3303 = vmatprep.subr.mxu0 0.0
    %3304 = vmatpush1.xpose.msra.mxu0 0.0
    %3305 = vmatprep.subr.mxu0 0.0
    %3306 = vmatpush1.xpose.msra.mxu0 0.0
    %3307 = vmatprep.subr.mxu0 0.0
    %3308 = vmatpush1.xpose.msra.mxu0 0.0
    %3309 = vmatprep.subr.mxu0 0.0
    %3310 = vmatpush1.xpose.msra.mxu0 0.0
    %3311 = vmatprep.mubr.f32.mxu0 0.0
    %3312 = vmatmul.mubr.f32.gmra.mrb[0].mxu0 %v3242
    %v3313 = vpop.f32.mrb[0].mxu0
    %v3314 = vadd.f32 %v386, %v3313
    %v3315 = vpop.f32.mrb[0].mxu0
    %3316 = vmatprep.mubr.f32.mxu0 0.0
    %3317 = vmatmul.mubr.f32.gmra.mrb[0].mxu0 %v3245
    %v3318 = vpop.f32.mrb[0].mxu0
    %v3319 = vadd.f32 %v387, %v3318
    %v3320 = vpop.f32.mrb[0].mxu0
    %3321 = vdwg.mxu0
    %v3322 = vsel %vm590, %v3314, -inf
    %3323 = vmax.xlane.f32.xlu0 %v3322
    %v3324 = vpop.xlane.xlu0 %3323
    %v3325 = vsel %vm590, %v3319, -inf
    %3326 = vmax.xlane.f32.xlu0 %v3325
    %v3327 = vpop.xlane.xlu0 %3326
    %v3328 = vsub.f32 %v3314, %v3324
    %v3329 = vsub.f32 %v3319, %v3327
    %v3330 = vmul.f32 %v3328, 1.442695
    %v3331 = vpow.pop %v3330
    %v3332 = vmul.f32 %v3329, 1.442695
    %v3333 = vpow.pop %v3332
    %v3334 = vsel %vm590, %v3331, 0.0
    %3335 = vadd.xlane.f32.xlu0 %v3334
    %v3336 = vpop.xlane.xlu0 %3335
    %v3337 = vsel %vm590, %v3333, 0.0
    %3338 = vadd.xlane.f32.xlu0 %v3337
    %v3339 = vpop.xlane.xlu0 %3338
    %v3340 = vrcp.pop %v3336
    %v3341 = vrcp.pop %v3339
    %v3342 = vmul.f32 %v3331, %v3340
    %v3343 = vmul.f32 %v3333, %v3341
    %v3344 = vmul.f32 %v3114, %v732
    %v3345 = vmul.f32 %v3119, %v732
    %3348 = vrot.lane.b32.xlu0 %v3344, 64
    %v3349 = vpop.permute.xlu0 %3348
    %3350 = vrot.lane.b32.xlu0 %v3345, 64
    %v3351 = vpop.permute.xlu0 %3350
    %v3355 = vsel %vm590, %v3342, 0
    %v3358 = vsel %vm590, %v3343, 0
    %3360 = vmatprep.subr.mxu0 0.0
    %3361 = vmatpush1.msra.mxu0 %v3349
    %3362 = vmatprep.subr.mxu0 0.0
    %3363 = vmatpush1.msra.mxu0 %v3351
    %3364 = vmatprep.subr.mxu0 0.0
    %3365 = vmatpush1.msra.mxu0 0.0
    %3366 = vmatprep.subr.mxu0 0.0
    %3367 = vmatpush1.msra.mxu0 0.0
    %3368 = vmatprep.subr.mxu0 0.0
    %3369 = vmatpush1.msra.mxu0 0.0
    %3370 = vmatprep.subr.mxu0 0.0
    %3371 = vmatpush1.msra.mxu0 0.0
    %3372 = vmatprep.subr.mxu0 0.0
    %3373 = vmatpush1.msra.mxu0 0.0
    %3374 = vmatprep.subr.mxu0 0.0
    %3375 = vmatpush1.msra.mxu0 0.0
    %3376 = vmatprep.subr.mxu0 0.0
    %3377 = vmatpush1.msra.mxu0 0.0
    %3378 = vmatprep.subr.mxu0 0.0
    %3379 = vmatpush1.msra.mxu0 0.0
    %3380 = vmatprep.subr.mxu0 0.0
    %3381 = vmatpush1.msra.mxu0 0.0
    %3382 = vmatprep.subr.mxu0 0.0
    %3383 = vmatpush1.msra.mxu0 0.0
    %3384 = vmatprep.subr.mxu0 0.0
    %3385 = vmatpush1.msra.mxu0 0.0
    %3386 = vmatprep.subr.mxu0 0.0
    %3387 = vmatpush1.msra.mxu0 0.0
    %3388 = vmatprep.subr.mxu0 0.0
    %3389 = vmatpush1.msra.mxu0 0.0
    %3390 = vmatprep.subr.mxu0 0.0
    %3391 = vmatpush1.msra.mxu0 0.0
    %3392 = vmatprep.subr.mxu0 0.0
    %3393 = vmatpush1.msra.mxu0 0.0
    %3394 = vmatprep.subr.mxu0 0.0
    %3395 = vmatpush1.msra.mxu0 0.0
    %3396 = vmatprep.subr.mxu0 0.0
    %3397 = vmatpush1.msra.mxu0 0.0
    %3398 = vmatprep.subr.mxu0 0.0
    %3399 = vmatpush1.msra.mxu0 0.0
    %3400 = vmatprep.subr.mxu0 0.0
    %3401 = vmatpush1.msra.mxu0 0.0
    %3402 = vmatprep.subr.mxu0 0.0
    %3403 = vmatpush1.msra.mxu0 0.0
    %3404 = vmatprep.subr.mxu0 0.0
    %3405 = vmatpush1.msra.mxu0 0.0
    %3406 = vmatprep.subr.mxu0 0.0
    %3407 = vmatpush1.msra.mxu0 0.0
    %3408 = vmatprep.subr.mxu0 0.0
    %3409 = vmatpush1.msra.mxu0 0.0
    %3410 = vmatprep.subr.mxu0 0.0
    %3411 = vmatpush1.msra.mxu0 0.0
    %3412 = vmatprep.subr.mxu0 0.0
    %3413 = vmatpush1.msra.mxu0 0.0
    %3414 = vmatprep.subr.mxu0 0.0
    %3415 = vmatpush1.msra.mxu0 0.0
    %3416 = vmatprep.subr.mxu0 0.0
    %3417 = vmatpush1.msra.mxu0 0.0
    %3418 = vmatprep.subr.mxu0 0.0
    %3419 = vmatpush1.msra.mxu0 0.0
    %3420 = vmatprep.subr.mxu0 0.0
    %3421 = vmatpush1.msra.mxu0 0.0
    %3422 = vmatprep.subr.mxu0 0.0
    %3423 = vmatpush1.msra.mxu0 0.0
    %3424 = vmatprep.mubr.f32.mxu0 0.0
    %3425 = vmatmul.mubr.f32.gmra.mrb[0].mxu0 %v3355
    %v3426 = vpop.f32.mrb[0].mxu0
    %v3427 = vadd.f32 0.0, %v3426
    %v3428 = vpop.f32.mrb[0].mxu0
    %3429 = vmatprep.mubr.f32.mxu0 0.0
    %3430 = vmatmul.mubr.f32.gmra.mrb[0].mxu0 %v3358
    %v3431 = vpop.f32.mrb[0].mxu0
    %v3432 = vadd.f32 0.0, %v3431
    %v3433 = vpop.f32.mrb[0].mxu0
    %3434 = vdwg.mxu0
    %3437 = vrot.lane.b32.xlu0 %v3237, 64
    %v3438 = vpop.permute.xlu0 %3437
    %3439 = vrot.lane.b32.xlu0 %v3238, 64
    %v3440 = vpop.permute.xlu0 %3439
    %v3444 = vsel %vm590, %v3235, 0
    %v3447 = vsel %vm590, %v3236, 0
    %3449 = vmatprep.subr.mxu0 0.0
    %3450 = vmatpush1.msra.mxu0 %v3438
    %3451 = vmatprep.subr.mxu0 0.0
    %3452 = vmatpush1.msra.mxu0 %v3440
    %3453 = vmatprep.subr.mxu0 0.0
    %3454 = vmatpush1.msra.mxu0 0.0
    %3455 = vmatprep.subr.mxu0 0.0
    %3456 = vmatpush1.msra.mxu0 0.0
    %3457 = vmatprep.subr.mxu0 0.0
    %3458 = vmatpush1.msra.mxu0 0.0
    %3459 = vmatprep.subr.mxu0 0.0
    %3460 = vmatpush1.msra.mxu0 0.0
    %3461 = vmatprep.subr.mxu0 0.0
    %3462 = vmatpush1.msra.mxu0 0.0
    %3463 = vmatprep.subr.mxu0 0.0
    %3464 = vmatpush1.msra.mxu0 0.0
    %3465 = vmatprep.subr.mxu0 0.0
    %3466 = vmatpush1.msra.mxu0 0.0
    %3467 = vmatprep.subr.mxu0 0.0
    %3468 = vmatpush1.msra.mxu0 0.0
    %3469 = vmatprep.subr.mxu0 0.0
    %3470 = vmatpush1.msra.mxu0 0.0
    %3471 = vmatprep.subr.mxu0 0.0
    %3472 = vmatpush1.msra.mxu0 0.0
    %3473 = vmatprep.subr.mxu0 0.0
    %3474 = vmatpush1.msra.mxu0 0.0
    %3475 = vmatprep.subr.mxu0 0.0
    %3476 = vmatpush1.msra.mxu0 0.0
    %3477 = vmatprep.subr.mxu0 0.0
    %3478 = vmatpush1.msra.mxu0 0.0
    %3479 = vmatprep.subr.mxu0 0.0
    %3480 = vmatpush1.msra.mxu0 0.0
    %3481 = vmatprep.subr.mxu0 0.0
    %3482 = vmatpush1.msra.mxu0 0.0
    %3483 = vmatprep.subr.mxu0 0.0
    %3484 = vmatpush1.msra.mxu0 0.0
    %3485 = vmatprep.subr.mxu0 0.0
    %3486 = vmatpush1.msra.mxu0 0.0
    %3487 = vmatprep.subr.mxu0 0.0
    %3488 = vmatpush1.msra.mxu0 0.0
    %3489 = vmatprep.subr.mxu0 0.0
    %3490 = vmatpush1.msra.mxu0 0.0
    %3491 = vmatprep.subr.mxu0 0.0
    %3492 = vmatpush1.msra.mxu0 0.0
    %3493 = vmatprep.subr.mxu0 0.0
    %3494 = vmatpush1.msra.mxu0 0.0
    %3495 = vmatprep.subr.mxu0 0.0
    %3496 = vmatpush1.msra.mxu0 0.0
    %3497 = vmatprep.subr.mxu0 0.0
    %3498 = vmatpush1.msra.mxu0 0.0
    %3499 = vmatprep.subr.mxu0 0.0
    %3500 = vmatpush1.msra.mxu0 0.0
    %3501 = vmatprep.subr.mxu0 0.0
    %3502 = vmatpush1.msra.mxu0 0.0
    %3503 = vmatprep.subr.mxu0 0.0
    %3504 = vmatpush1.msra.mxu0 0.0
    %3505 = vmatprep.subr.mxu0 0.0
    %3506 = vmatpush1.msra.mxu0 0.0
    %3507 = vmatprep.subr.mxu0 0.0
    %3508 = vmatpush1.msra.mxu0 0.0
    %3509 = vmatprep.subr.mxu0 0.0
    %3510 = vmatpush1.msra.mxu0 0.0
    %3511 = vmatprep.subr.mxu0 0.0
    %3512 = vmatpush1.msra.mxu0 0.0
    %3513 = vmatprep.mubr.f32.mxu0 0.0
    %3514 = vmatmul.mubr.f32.gmra.mrb[0].mxu0 %v3444
    %v3515 = vpop.f32.mrb[0].mxu0
    %v3516 = vadd.f32 %v3427, %v3515
    %v3517 = vpop.f32.mrb[0].mxu0
    %3518 = vmatprep.mubr.f32.mxu0 0.0
    %3519 = vmatmul.mubr.f32.gmra.mrb[0].mxu0 %v3447
    %v3520 = vpop.f32.mrb[0].mxu0
    %v3521 = vadd.f32 %v3432, %v3520
    %v3522 = vpop.f32.mrb[0].mxu0
    %3523 = vdwg.mxu0
    %v3524 = vmul.f32 %v3114, %v920
    %v3525 = vmul.f32 %v3119, %v920
    %v3527 = vsel %vm408, %v3524, 0
    %v3530 = vsel %vm408, %v3525, 0
    %3532 = vmatprep.subr.mxu0 0.0
    %3533 = vmatpush1.xpose.msra.mxu0 %v3136
    %3534 = vmatprep.subr.mxu0 0.0
    %3535 = vmatpush1.xpose.msra.mxu0 %v3138
    %3536 = vmatprep.subr.mxu0 0.0
    %3537 = vmatpush1.xpose.msra.mxu0 0.0
    %3538 = vmatprep.subr.mxu0 0.0
    %3539 = vmatpush1.xpose.msra.mxu0 0.0
    %3540 = vmatprep.subr.mxu0 0.0
    %3541 = vmatpush1.xpose.msra.mxu0 0.0
    %3542 = vmatprep.subr.mxu0 0.0
    %3543 = vmatpush1.xpose.msra.mxu0 0.0
    %3544 = vmatprep.subr.mxu0 0.0
    %3545 = vmatpush1.xpose.msra.mxu0 0.0
    %3546 = vmatprep.subr.mxu0 0.0
    %3547 = vmatpush1.xpose.msra.mxu0 0.0
    %3548 = vmatprep.subr.mxu0 0.0
    %3549 = vmatpush1.xpose.msra.mxu0 0.0
    %3550 = vmatprep.subr.mxu0 0.0
    %3551 = vmatpush1.xpose.msra.mxu0 0.0
    %3552 = vmatprep.subr.mxu0 0.0
    %3553 = vmatpush1.xpose.msra.mxu0 0.0
    %3554 = vmatprep.subr.mxu0 0.0
    %3555 = vmatpush1.xpose.msra.mxu0 0.0
    %3556 = vmatprep.subr.mxu0 0.0
    %3557 = vmatpush1.xpose.msra.mxu0 0.0
    %3558 = vmatprep.subr.mxu0 0.0
    %3559 = vmatpush1.xpose.msra.mxu0 0.0
    %3560 = vmatprep.subr.mxu0 0.0
    %3561 = vmatpush1.xpose.msra.mxu0 0.0
    %3562 = vmatprep.subr.mxu0 0.0
    %3563 = vmatpush1.xpose.msra.mxu0 0.0
    %3564 = vmatprep.subr.mxu0 0.0
    %3565 = vmatpush1.xpose.msra.mxu0 0.0
    %3566 = vmatprep.subr.mxu0 0.0
    %3567 = vmatpush1.xpose.msra.mxu0 0.0
    %3568 = vmatprep.subr.mxu0 0.0
    %3569 = vmatpush1.xpose.msra.mxu0 0.0
    %3570 = vmatprep.subr.mxu0 0.0
    %3571 = vmatpush1.xpose.msra.mxu0 0.0
    %3572 = vmatprep.subr.mxu0 0.0
    %3573 = vmatpush1.xpose.msra.mxu0 0.0
    %3574 = vmatprep.subr.mxu0 0.0
    %3575 = vmatpush1.xpose.msra.mxu0 0.0
    %3576 = vmatprep.subr.mxu0 0.0
    %3577 = vmatpush1.xpose.msra.mxu0 0.0
    %3578 = vmatprep.subr.mxu0 0.0
    %3579 = vmatpush1.xpose.msra.mxu0 0.0
    %3580 = vmatprep.subr.mxu0 0.0
    %3581 = vmatpush1.xpose.msra.mxu0 0.0
    %3582 = vmatprep.subr.mxu0 0.0
    %3583 = vmatpush1.xpose.msra.mxu0 0.0
    %3584 = vmatprep.subr.mxu0 0.0
    %3585 = vmatpush1.xpose.msra.mxu0 0.0
    %3586 = vmatprep.subr.mxu0 0.0
    %3587 = vmatpush1.xpose.msra.mxu0 0.0
    %3588 = vmatprep.subr.mxu0 0.0
    %3589 = vmatpush1.xpose.msra.mxu0 0.0
    %3590 = vmatprep.subr.mxu0 0.0
    %3591 = vmatpush1.xpose.msra.mxu0 0.0
    %3592 = vmatprep.subr.mxu0 0.0
    %3593 = vmatpush1.xpose.msra.mxu0 0.0
    %3594 = vmatprep.subr.mxu0 0.0
    %3595 = vmatpush1.xpose.msra.mxu0 0.0
    %3596 = vmatprep.mubr.f32.mxu0 0.0
    %3597 = vmatmul.mubr.f32.gmra.mrb[0].mxu0 %v3527
    %v3598 = vpop.f32.mrb[0].mxu0
    %v3599 = vadd.f32 %v386, %v3598
    %v3600 = vpop.f32.mrb[0].mxu0
    %3601 = vmatprep.mubr.f32.mxu0 0.0
    %3602 = vmatmul.mubr.f32.gmra.mrb[0].mxu0 %v3530
    %v3603 = vpop.f32.mrb[0].mxu0
    %v3604 = vadd.f32 %v387, %v3603
    %v3605 = vpop.f32.mrb[0].mxu0
    %3606 = vdwg.mxu0
    %v3607 = vsel %vm590, %v3599, -inf
    %3608 = vmax.xlane.f32.xlu0 %v3607
    %v3609 = vpop.xlane.xlu0 %3608
    %v3610 = vsel %vm590, %v3604, -inf
    %3611 = vmax.xlane.f32.xlu0 %v3610
    %v3612 = vpop.xlane.xlu0 %3611
    %v3613 = vsub.f32 %v3599, %v3609
    %v3614 = vsub.f32 %v3604, %v3612
    %v3615 = vmul.f32 %v3613, 1.442695
    %v3616 = vpow.pop %v3615
    %v3617 = vmul.f32 %v3614, 1.442695
    %v3618 = vpow.pop %v3617
    %v3619 = vsel %vm590, %v3616, 0.0
    %3620 = vadd.xlane.f32.xlu0 %v3619
    %v3621 = vpop.xlane.xlu0 %3620
    %v3622 = vsel %vm590, %v3618, 0.0
    %3623 = vadd.xlane.f32.xlu0 %v3622
    %v3624 = vpop.xlane.xlu0 %3623
    %v3625 = vrcp.pop %v3621
    %v3626 = vrcp.pop %v3624
    %v3627 = vmul.f32 %v3616, %v3625
    %v3628 = vmul.f32 %v3618, %v3626
    %v3629 = vmul.f32 %v3114, %v1028
    %v3630 = vmul.f32 %v3119, %v1028
    %3633 = vrot.lane.b32.xlu0 %v3629, 64
    %v3634 = vpop.permute.xlu0 %3633
    %3635 = vrot.lane.b32.xlu0 %v3630, 64
    %v3636 = vpop.permute.xlu0 %3635
    %v3640 = vsel %vm590, %v3627, 0
    %v3643 = vsel %vm590, %v3628, 0
    %3645 = vmatprep.subr.mxu0 0.0
    %3646 = vmatpush1.msra.mxu0 %v3634
    %3647 = vmatprep.subr.mxu0 0.0
    %3648 = vmatpush1.msra.mxu0 %v3636
    %3649 = vmatprep.subr.mxu0 0.0
    %3650 = vmatpush1.msra.mxu0 0.0
    %3651 = vmatprep.subr.mxu0 0.0
    %3652 = vmatpush1.msra.mxu0 0.0
    %3653 = vmatprep.subr.mxu0 0.0
    %3654 = vmatpush1.msra.mxu0 0.0
    %3655 = vmatprep.subr.mxu0 0.0
    %3656 = vmatpush1.msra.mxu0 0.0
    %3657 = vmatprep.subr.mxu0 0.0
    %3658 = vmatpush1.msra.mxu0 0.0
    %3659 = vmatprep.subr.mxu0 0.0
    %3660 = vmatpush1.msra.mxu0 0.0
    %3661 = vmatprep.subr.mxu0 0.0
    %3662 = vmatpush1.msra.mxu0 0.0
    %3663 = vmatprep.subr.mxu0 0.0
    %3664 = vmatpush1.msra.mxu0 0.0
    %3665 = vmatprep.subr.mxu0 0.0
    %3666 = vmatpush1.msra.mxu0 0.0
    %3667 = vmatprep.subr.mxu0 0.0
    %3668 = vmatpush1.msra.mxu0 0.0
    %3669 = vmatprep.subr.mxu0 0.0
    %3670 = vmatpush1.msra.mxu0 0.0
    %3671 = vmatprep.subr.mxu0 0.0
    %3672 = vmatpush1.msra.mxu0 0.0
    %3673 = vmatprep.subr.mxu0 0.0
    %3674 = vmatpush1.msra.mxu0 0.0
    %3675 = vmatprep.subr.mxu0 0.0
    %3676 = vmatpush1.msra.mxu0 0.0
    %3677 = vmatprep.subr.mxu0 0.0
    %3678 = vmatpush1.msra.mxu0 0.0
    %3679 = vmatprep.subr.mxu0 0.0
    %3680 = vmatpush1.msra.mxu0 0.0
    %3681 = vmatprep.subr.mxu0 0.0
    %3682 = vmatpush1.msra.mxu0 0.0
    %3683 = vmatprep.subr.mxu0 0.0
    %3684 = vmatpush1.msra.mxu0 0.0
    %3685 = vmatprep.subr.mxu0 0.0
    %3686 = vmatpush1.msra.mxu0 0.0
    %3687 = vmatprep.subr.mxu0 0.0
    %3688 = vmatpush1.msra.mxu0 0.0
    %3689 = vmatprep.subr.mxu0 0.0
    %3690 = vmatpush1.msra.mxu0 0.0
    %3691 = vmatprep.subr.mxu0 0.0
    %3692 = vmatpush1.msra.mxu0 0.0
    %3693 = vmatprep.subr.mxu0 0.0
    %3694 = vmatpush1.msra.mxu0 0.0
    %3695 = vmatprep.subr.mxu0 0.0
    %3696 = vmatpush1.msra.mxu0 0.0
    %3697 = vmatprep.subr.mxu0 0.0
    %3698 = vmatpush1.msra.mxu0 0.0
    %3699 = vmatprep.subr.mxu0 0.0
    %3700 = vmatpush1.msra.mxu0 0.0
    %3701 = vmatprep.subr.mxu0 0.0
    %3702 = vmatpush1.msra.mxu0 0.0
    %3703 = vmatprep.subr.mxu0 0.0
    %3704 = vmatpush1.msra.mxu0 0.0
    %3705 = vmatprep.subr.mxu0 0.0
    %3706 = vmatpush1.msra.mxu0 0.0
    %3707 = vmatprep.subr.mxu0 0.0
    %3708 = vmatpush1.msra.mxu0 0.0
    %3709 = vmatprep.mubr.f32.mxu0 0.0
    %3710 = vmatmul.mubr.f32.gmra.mrb[0].mxu0 %v3640
    %v3711 = vpop.f32.mrb[0].mxu0
    %v3712 = vadd.f32 0.0, %v3711
    %v3713 = vpop.f32.mrb[0].mxu0
    %3714 = vmatprep.mubr.f32.mxu0 0.0
    %3715 = vmatmul.mubr.f32.gmra.mrb[0].mxu0 %v3643
    %v3716 = vpop.f32.mrb[0].mxu0
    %v3717 = vadd.f32 0.0, %v3716
    %v3718 = vpop.f32.mrb[0].mxu0
    %3719 = vdwg.mxu0
    %v3720 = vadd.f32 %v3516, %v3712
    %v3721 = vadd.f32 %v3521, %v3717
    %v3722 = vmul.f32 %v3114, %v1129
    %v3723 = vmul.f32 %v3119, %v1129
    %v3725 = vsel %vm408, %v3722, 0
    %v3728 = vsel %vm408, %v3723, 0
    %3730 = vmatprep.subr.mxu0 0.0
    %3731 = vmatpush1.xpose.msra.mxu0 %v3136
    %3732 = vmatprep.subr.mxu0 0.0
    %3733 = vmatpush1.xpose.msra.mxu0 %v3138
    %3734 = vmatprep.subr.mxu0 0.0
    %3735 = vmatpush1.xpose.msra.mxu0 0.0
    %3736 = vmatprep.subr.mxu0 0.0
    %3737 = vmatpush1.xpose.msra.mxu0 0.0
    %3738 = vmatprep.subr.mxu0 0.0
    %3739 = vmatpush1.xpose.msra.mxu0 0.0
    %3740 = vmatprep.subr.mxu0 0.0
    %3741 = vmatpush1.xpose.msra.mxu0 0.0
    %3742 = vmatprep.subr.mxu0 0.0
    %3743 = vmatpush1.xpose.msra.mxu0 0.0
    %3744 = vmatprep.subr.mxu0 0.0
    %3745 = vmatpush1.xpose.msra.mxu0 0.0
    %3746 = vmatprep.subr.mxu0 0.0
    %3747 = vmatpush1.xpose.msra.mxu0 0.0
    %3748 = vmatprep.subr.mxu0 0.0
    %3749 = vmatpush1.xpose.msra.mxu0 0.0
    %3750 = vmatprep.subr.mxu0 0.0
    %3751 = vmatpush1.xpose.msra.mxu0 0.0
    %3752 = vmatprep.subr.mxu0 0.0
    %3753 = vmatpush1.xpose.msra.mxu0 0.0
    %3754 = vmatprep.subr.mxu0 0.0
    %3755 = vmatpush1.xpose.msra.mxu0 0.0
    %3756 = vmatprep.subr.mxu0 0.0
    %3757 = vmatpush1.xpose.msra.mxu0 0.0
    %3758 = vmatprep.subr.mxu0 0.0
    %3759 = vmatpush1.xpose.msra.mxu0 0.0
    %3760 = vmatprep.subr.mxu0 0.0
    %3761 = vmatpush1.xpose.msra.mxu0 0.0
    %3762 = vmatprep.subr.mxu0 0.0
    %3763 = vmatpush1.xpose.msra.mxu0 0.0
    %3764 = vmatprep.subr.mxu0 0.0
    %3765 = vmatpush1.xpose.msra.mxu0 0.0
    %3766 = vmatprep.subr.mxu0 0.0
    %3767 = vmatpush1.xpose.msra.mxu0 0.0
    %3768 = vmatprep.subr.mxu0 0.0
    %3769 = vmatpush1.xpose.msra.mxu0 0.0
    %3770 = vmatprep.subr.mxu0 0.0
    %3771 = vmatpush1.xpose.msra.mxu0 0.0
    %3772 = vmatprep.subr.mxu0 0.0
    %3773 = vmatpush1.xpose.msra.mxu0 0.0
    %3774 = vmatprep.subr.mxu0 0.0
    %3775 = vmatpush1.xpose.msra.mxu0 0.0
    %3776 = vmatprep.subr.mxu0 0.0
    %3777 = vmatpush1.xpose.msra.mxu0 0.0
    %3778 = vmatprep.subr.mxu0 0.0
    %3779 = vmatpush1.xpose.msra.mxu0 0.0
    %3780 = vmatprep.subr.mxu0 0.0
    %3781 = vmatpush1.xpose.msra.mxu0 0.0
    %3782 = vmatprep.subr.mxu0 0.0
    %3783 = vmatpush1.xpose.msra.mxu0 0.0
    %3784 = vmatprep.subr.mxu0 0.0
    %3785 = vmatpush1.xpose.msra.mxu0 0.0
    %3786 = vmatprep.subr.mxu0 0.0
    %3787 = vmatpush1.xpose.msra.mxu0 0.0
    %3788 = vmatprep.subr.mxu0 0.0
    %3789 = vmatpush1.xpose.msra.mxu0 0.0
    %3790 = vmatprep.subr.mxu0 0.0
    %3791 = vmatpush1.xpose.msra.mxu0 0.0
    %3792 = vmatprep.subr.mxu0 0.0
    %3793 = vmatpush1.xpose.msra.mxu0 0.0
    %3794 = vmatprep.mubr.f32.mxu0 0.0
    %3795 = vmatmul.mubr.f32.gmra.mrb[0].mxu0 %v3725
    %v3796 = vpop.f32.mrb[0].mxu0
    %v3797 = vadd.f32 %v386, %v3796
    %v3798 = vpop.f32.mrb[0].mxu0
    %3799 = vmatprep.mubr.f32.mxu0 0.0
    %3800 = vmatmul.mubr.f32.gmra.mrb[0].mxu0 %v3728
    %v3801 = vpop.f32.mrb[0].mxu0
    %v3802 = vadd.f32 %v387, %v3801
    %v3803 = vpop.f32.mrb[0].mxu0
    %3804 = vdwg.mxu0
    %v3805 = vsel %vm590, %v3797, -inf
    %3806 = vmax.xlane.f32.xlu0 %v3805
    %v3807 = vpop.xlane.xlu0 %3806
    %v3808 = vsel %vm590, %v3802, -inf
    %3809 = vmax.xlane.f32.xlu0 %v3808
    %v3810 = vpop.xlane.xlu0 %3809
    %v3811 = vsub.f32 %v3797, %v3807
    %v3812 = vsub.f32 %v3802, %v3810
    %v3813 = vmul.f32 %v3811, 1.442695
    %v3814 = vpow.pop %v3813
    %v3815 = vmul.f32 %v3812, 1.442695
    %v3816 = vpow.pop %v3815
    %v3817 = vsel %vm590, %v3814, 0.0
    %3818 = vadd.xlane.f32.xlu0 %v3817
    %v3819 = vpop.xlane.xlu0 %3818
    %v3820 = vsel %vm590, %v3816, 0.0
    %3821 = vadd.xlane.f32.xlu0 %v3820
    %v3822 = vpop.xlane.xlu0 %3821
    %v3823 = vrcp.pop %v3819
    %v3824 = vrcp.pop %v3822
    %v3825 = vmul.f32 %v3814, %v3823
    %v3826 = vmul.f32 %v3816, %v3824
    %v3827 = vmul.f32 %v3114, %v1237
    %v3828 = vmul.f32 %v3119, %v1237
    %3831 = vrot.lane.b32.xlu0 %v3827, 64
    %v3832 = vpop.permute.xlu0 %3831
    %3833 = vrot.lane.b32.xlu0 %v3828, 64
    %v3834 = vpop.permute.xlu0 %3833
    %v3838 = vsel %vm590, %v3825, 0
    %v3841 = vsel %vm590, %v3826, 0
    %3843 = vmatprep.subr.mxu0 0.0
    %3844 = vmatpush1.msra.mxu0 %v3832
    %3845 = vmatprep.subr.mxu0 0.0
    %3846 = vmatpush1.msra.mxu0 %v3834
    %3847 = vmatprep.subr.mxu0 0.0
    %3848 = vmatpush1.msra.mxu0 0.0
    %3849 = vmatprep.subr.mxu0 0.0
    %3850 = vmatpush1.msra.mxu0 0.0
    %3851 = vmatprep.subr.mxu0 0.0
    %3852 = vmatpush1.msra.mxu0 0.0
    %3853 = vmatprep.subr.mxu0 0.0
    %3854 = vmatpush1.msra.mxu0 0.0
    %3855 = vmatprep.subr.mxu0 0.0
    %3856 = vmatpush1.msra.mxu0 0.0
    %3857 = vmatprep.subr.mxu0 0.0
    %3858 = vmatpush1.msra.mxu0 0.0
    %3859 = vmatprep.subr.mxu0 0.0
    %3860 = vmatpush1.msra.mxu0 0.0
    %3861 = vmatprep.subr.mxu0 0.0
    %3862 = vmatpush1.msra.mxu0 0.0
    %3863 = vmatprep.subr.mxu0 0.0
    %3864 = vmatpush1.msra.mxu0 0.0
    %3865 = vmatprep.subr.mxu0 0.0
    %3866 = vmatpush1.msra.mxu0 0.0
    %3867 = vmatprep.subr.mxu0 0.0
    %3868 = vmatpush1.msra.mxu0 0.0
    %3869 = vmatprep.subr.mxu0 0.0
    %3870 = vmatpush1.msra.mxu0 0.0
    %3871 = vmatprep.subr.mxu0 0.0
    %3872 = vmatpush1.msra.mxu0 0.0
    %3873 = vmatprep.subr.mxu0 0.0
    %3874 = vmatpush1.msra.mxu0 0.0
    %3875 = vmatprep.subr.mxu0 0.0
    %3876 = vmatpush1.msra.mxu0 0.0
    %3877 = vmatprep.subr.mxu0 0.0
    %3878 = vmatpush1.msra.mxu0 0.0
    %3879 = vmatprep.subr.mxu0 0.0
    %3880 = vmatpush1.msra.mxu0 0.0
    %3881 = vmatprep.subr.mxu0 0.0
    %3882 = vmatpush1.msra.mxu0 0.0
    %3883 = vmatprep.subr.mxu0 0.0
    %3884 = vmatpush1.msra.mxu0 0.0
    %3885 = vmatprep.subr.mxu0 0.0
    %3886 = vmatpush1.msra.mxu0 0.0
    %3887 = vmatprep.subr.mxu0 0.0
    %3888 = vmatpush1.msra.mxu0 0.0
    %3889 = vmatprep.subr.mxu0 0.0
    %3890 = vmatpush1.msra.mxu0 0.0
    %3891 = vmatprep.subr.mxu0 0.0
    %3892 = vmatpush1.msra.mxu0 0.0
    %3893 = vmatprep.subr.mxu0 0.0
    %3894 = vmatpush1.msra.mxu0 0.0
    %3895 = vmatprep.subr.mxu0 0.0
    %3896 = vmatpush1.msra.mxu0 0.0
    %3897 = vmatprep.subr.mxu0 0.0
    %3898 = vmatpush1.msra.mxu0 0.0
    %3899 = vmatprep.subr.mxu0 0.0
    %3900 = vmatpush1.msra.mxu0 0.0
    %3901 = vmatprep.subr.mxu0 0.0
    %3902 = vmatpush1.msra.mxu0 0.0
    %3903 = vmatprep.subr.mxu0 0.0
    %3904 = vmatpush1.msra.mxu0 0.0
    %3905 = vmatprep.subr.mxu0 0.0
    %3906 = vmatpush1.msra.mxu0 0.0
    %3907 = vmatprep.mubr.f32.mxu0 0.0
    %3908 = vmatmul.mubr.f32.gmra.mrb[0].mxu0 %v3838
    %v3909 = vpop.f32.mrb[0].mxu0
    %v3910 = vadd.f32 0.0, %v3909
    %v3911 = vpop.f32.mrb[0].mxu0
    %3912 = vmatprep.mubr.f32.mxu0 0.0
    %3913 = vmatmul.mubr.f32.gmra.mrb[0].mxu0 %v3841
    %v3914 = vpop.f32.mrb[0].mxu0
    %v3915 = vadd.f32 0.0, %v3914
    %v3916 = vpop.f32.mrb[0].mxu0
    %3917 = vdwg.mxu0
    %v3918 = vadd.f32 %v3720, %v3910
    %v3919 = vadd.f32 %v3721, %v3915
    %v3921 = vlaneseq
    %v3922 = vshrl.u32 %v3921, 7
    %v3923 = vsub.s32 0, %v3922
    %v3924 = vrot.slane %v3034, %v3923
    %v3927 = vsel %vm408, %v3918, 0
    %v3930 = vsel %vm408, %v3919, 0
    %3932 = vmatprep.subr.mxu0 0.0
    %3933 = vmatpush1.msra.mxu0 %v3030
    %3934 = vmatprep.subr.mxu0 0.0
    %3935 = vmatpush1.msra.mxu0 %v3031
    %3936 = vmatprep.subr.mxu0 0.0
    %3937 = vmatpush1.msra.mxu0 %v3032
    %3938 = vmatprep.subr.mxu0 0.0
    %3939 = vmatpush1.msra.mxu0 %v3033
    %3940 = vmatprep.subr.mxu0 0.0
    %3941 = vmatpush1.msra.mxu0 0.0
    %3942 = vmatprep.subr.mxu0 0.0
    %3943 = vmatpush1.msra.mxu0 0.0
    %3944 = vmatprep.subr.mxu0 0.0
    %3945 = vmatpush1.msra.mxu0 0.0
    %3946 = vmatprep.subr.mxu0 0.0
    %3947 = vmatpush1.msra.mxu0 0.0
    %3948 = vmatprep.subr.mxu0 0.0
    %3949 = vmatpush1.msra.mxu0 0.0
    %3950 = vmatprep.subr.mxu0 0.0
    %3951 = vmatpush1.msra.mxu0 0.0
    %3952 = vmatprep.subr.mxu0 0.0
    %3953 = vmatpush1.msra.mxu0 0.0
    %3954 = vmatprep.subr.mxu0 0.0
    %3955 = vmatpush1.msra.mxu0 0.0
    %3956 = vmatprep.subr.mxu0 0.0
    %3957 = vmatpush1.msra.mxu0 0.0
    %3958 = vmatprep.subr.mxu0 0.0
    %3959 = vmatpush1.msra.mxu0 0.0
    %3960 = vmatprep.subr.mxu0 0.0
    %3961 = vmatpush1.msra.mxu0 0.0
    %3962 = vmatprep.subr.mxu0 0.0
    %3963 = vmatpush1.msra.mxu0 0.0
    %3964 = vmatprep.subr.mxu0 0.0
    %3965 = vmatpush1.msra.mxu0 0.0
    %3966 = vmatprep.subr.mxu0 0.0
    %3967 = vmatpush1.msra.mxu0 0.0
    %3968 = vmatprep.subr.mxu0 0.0
    %3969 = vmatpush1.msra.mxu0 0.0
    %3970 = vmatprep.subr.mxu0 0.0
    %3971 = vmatpush1.msra.mxu0 0.0
    %3972 = vmatprep.subr.mxu0 0.0
    %3973 = vmatpush1.msra.mxu0 0.0
    %3974 = vmatprep.subr.mxu0 0.0
    %3975 = vmatpush1.msra.mxu0 0.0
    %3976 = vmatprep.subr.mxu0 0.0
    %3977 = vmatpush1.msra.mxu0 0.0
    %3978 = vmatprep.subr.mxu0 0.0
    %3979 = vmatpush1.msra.mxu0 0.0
    %3980 = vmatprep.subr.mxu0 0.0
    %3981 = vmatpush1.msra.mxu0 0.0
    %3982 = vmatprep.subr.mxu0 0.0
    %3983 = vmatpush1.msra.mxu0 0.0
    %3984 = vmatprep.subr.mxu0 0.0
    %3985 = vmatpush1.msra.mxu0 0.0
    %3986 = vmatprep.subr.mxu0 0.0
    %3987 = vmatpush1.msra.mxu0 0.0
    %3988 = vmatprep.subr.mxu0 0.0
    %3989 = vmatpush1.msra.mxu0 0.0
    %3990 = vmatprep.subr.mxu0 0.0
    %3991 = vmatpush1.msra.mxu0 0.0
    %3992 = vmatprep.subr.mxu0 0.0
    %3993 = vmatpush1.msra.mxu0 0.0
    %3994 = vmatprep.subr.mxu0 0.0
    %3995 = vmatpush1.msra.mxu0 0.0
    %3996 = vmatprep.mubr.f32.mxu0 0.0
    %3997 = vmatmul.mubr.f32.gmra.mrb[0].mxu0 %v3927
    %v3998 = vpop.f32.mrb[0].mxu0
    %v3999 = vadd.f32 %v3924, %v3998
    %v4000 = vpop.f32.mrb[0].mxu0
    %4001 = vmatprep.mubr.f32.mxu0 0.0
    %4002 = vmatmul.mubr.f32.gmra.mrb[0].mxu0 %v3930
    %v4003 = vpop.f32.mrb[0].mxu0
    %v4004 = vadd.f32 %v3924, %v4003
    %v4005 = vpop.f32.mrb[0].mxu0
    %4006 = vdwg.mxu0
    %v4007 = vadd.f32 %v3023, %v3999
    %v4008 = vadd.f32 %v3024, %v4004
    %v4009 = vld [vmem:[%s61] sm:$0x1]
    %v4010 = vld [vmem:[%s63] sm:$0x1]
    %v4011 = vsel %vm408, %v4007, 0.0
    %4012 = vadd.xlane.f32.xlu0 %v4011
    %v4013 = vpop.xlane.xlu0 %4012
    %v4014 = vsel %vm408, %v4008, 0.0
    %4015 = vadd.xlane.f32.xlu0 %v4014
    %v4016 = vpop.xlane.xlu0 %4015
    %v4017 = vmul.f32 %v4013, %v1429
    %v4018 = vmul.f32 %v4016, %v1429
    %v4019 = vsub.f32 %v4007, %v4017
    %v4020 = vsub.f32 %v4008, %v4018
    %v4021 = vmul.f32 %v4019, %v4019
    %v4022 = vmul.f32 %v4020, %v4020
    %v4023 = vsel %vm408, %v4021, 0.0
    %4024 = vadd.xlane.f32.xlu0 %v4023
    %v4025 = vpop.xlane.xlu0 %4024
    %v4026 = vsel %vm408, %v4022, 0.0
    %4027 = vadd.xlane.f32.xlu0 %v4026
    %v4028 = vpop.xlane.xlu0 %4027
    %v4029 = vmul.f32 %v4025, %v1429
    %v4030 = vmul.f32 %v4028, %v1429
    %v4031 = vadd.f32 %v4029, 1e-05
    %v4032 = vadd.f32 %v4030, 1e-05
    %v4033 = vrsqrt.pop %v4031
    %v4034 = vrsqrt.pop %v4032
    %v4035 = vmul.f32 %v4019, %v4033
    %v4036 = vmul.f32 %v4020, %v4034
    %v4038 = vlaneseq
    %v4039 = vshrl.u32 %v4038, 7
    %v4040 = vsub.s32 0, %v4039
    %v4041 = vrot.slane %v4009, %v4040
    %v4043 = vmul.f32 %v4035, %v4041
    %v4044 = vmul.f32 %v4036, %v4041
    %v4046 = vlaneseq
    %v4047 = vshrl.u32 %v4046, 7
    %v4048 = vsub.s32 0, %v4047
    %v4049 = vrot.slane %v4010, %v4048
    %v4051 = vadd.f32 %v4043, %v4049
    %v4052 = vadd.f32 %v4044, %v4049
    %v4053 = vld [vmem:[%s45] sm:$0xff]
    %v4054 = vld [vmem:[%s45 + $0x8] sm:$0xff]
    %v4055 = vld [vmem:[%s45 + $0x10] sm:$0xff]
    %v4056 = vld [vmem:[%s45 + $0x18] sm:$0xff]
    %v4057 = vld [vmem:[#allocation22] sm:$0x1]
    %v4058 = vld [vmem:[%s49] sm:$0xff]
    %v4059 = vld [vmem:[%s49 + $0x8] sm:$0xff]
    %v4060 = vld [vmem:[%s49 + $0x10] sm:$0xff]
    %v4061 = vld [vmem:[%s49 + $0x18] sm:$0xff]
    %v4062 = vld [vmem:[#allocation23] sm:$0x1]
    %v4064 = vlaneseq
    %v4065 = vshrl.u32 %v4064, 7
    %v4066 = vsub.s32 0, %v4065
    %v4067 = vrot.slane %v4057, %v4066
    %v4070 = vsel %vm408, %v4051, 0
    %v4073 = vsel %vm408, %v4052, 0
    %4075 = vmatprep.subr.mxu0 0.0
    %4076 = vmatpush1.msra.mxu0 %v4053
    %4077 = vmatprep.subr.mxu0 0.0
    %4078 = vmatpush1.msra.mxu0 %v4054
    %4079 = vmatprep.subr.mxu0 0.0
    %4080 = vmatpush1.msra.mxu0 %v4055
    %4081 = vmatprep.subr.mxu0 0.0
    %4082 = vmatpush1.msra.mxu0 %v4056
    %4083 = vmatprep.subr.mxu0 0.0
    %4084 = vmatpush1.msra.mxu0 0.0
    %4085 = vmatprep.subr.mxu0 0.0
    %4086 = vmatpush1.msra.mxu0 0.0
    %4087 = vmatprep.subr.mxu0 0.0
    %4088 = vmatpush1.msra.mxu0 0.0
    %4089 = vmatprep.subr.mxu0 0.0
    %4090 = vmatpush1.msra.mxu0 0.0
    %4091 = vmatprep.subr.mxu0 0.0
    %4092 = vmatpush1.msra.mxu0 0.0
    %4093 = vmatprep.subr.mxu0 0.0
    %4094 = vmatpush1.msra.mxu0 0.0
    %4095 = vmatprep.subr.mxu0 0.0
    %4096 = vmatpush1.msra.mxu0 0.0
    %4097 = vmatprep.subr.mxu0 0.0
    %4098 = vmatpush1.msra.mxu0 0.0
    %4099 = vmatprep.subr.mxu0 0.0
    %4100 = vmatpush1.msra.mxu0 0.0
    %4101 = vmatprep.subr.mxu0 0.0
    %4102 = vmatpush1.msra.mxu0 0.0
    %4103 = vmatprep.subr.mxu0 0.0
    %4104 = vmatpush1.msra.mxu0 0.0
    %4105 = vmatprep.subr.mxu0 0.0
    %4106 = vmatpush1.msra.mxu0 0.0
    %4107 = vmatprep.subr.mxu0 0.0
    %4108 = vmatpush1.msra.mxu0 0.0
    %4109 = vmatprep.subr.mxu0 0.0
    %4110 = vmatpush1.msra.mxu0 0.0
    %4111 = vmatprep.subr.mxu0 0.0
    %4112 = vmatpush1.msra.mxu0 0.0
    %4113 = vmatprep.subr.mxu0 0.0
    %4114 = vmatpush1.msra.mxu0 0.0
    %4115 = vmatprep.subr.mxu0 0.0
    %4116 = vmatpush1.msra.mxu0 0.0
    %4117 = vmatprep.subr.mxu0 0.0
    %4118 = vmatpush1.msra.mxu0 0.0
    %4119 = vmatprep.subr.mxu0 0.0
    %4120 = vmatpush1.msra.mxu0 0.0
    %4121 = vmatprep.subr.mxu0 0.0
    %4122 = vmatpush1.msra.mxu0 0.0
    %4123 = vmatprep.subr.mxu0 0.0
    %4124 = vmatpush1.msra.mxu0 0.0
    %4125 = vmatprep.subr.mxu0 0.0
    %4126 = vmatpush1.msra.mxu0 0.0
    %4127 = vmatprep.subr.mxu0 0.0
    %4128 = vmatpush1.msra.mxu0 0.0
    %4129 = vmatprep.subr.mxu0 0.0
    %4130 = vmatpush1.msra.mxu0 0.0
    %4131 = vmatprep.subr.mxu0 0.0
    %4132 = vmatpush1.msra.mxu0 0.0
    %4133 = vmatprep.subr.mxu0 0.0
    %4134 = vmatpush1.msra.mxu0 0.0
    %4135 = vmatprep.subr.mxu0 0.0
    %4136 = vmatpush1.msra.mxu0 0.0
    %4137 = vmatprep.subr.mxu0 0.0
    %4138 = vmatpush1.msra.mxu0 0.0
    %4139 = vmatprep.mubr.f32.mxu0 0.0
    %4140 = vmatmul.mubr.f32.gmra.mrb[0].mxu0 %v4070
    %v4141 = vpop.f32.mrb[0].mxu0
    %v4142 = vadd.f32 %v4067, %v4141
    %v4143 = vpop.f32.mrb[0].mxu0
    %4144 = vmatprep.mubr.f32.mxu0 0.0
    %4145 = vmatmul.mubr.f32.gmra.mrb[0].mxu0 %v4073
    %v4146 = vpop.f32.mrb[0].mxu0
    %v4147 = vadd.f32 %v4067, %v4146
    %v4148 = vpop.f32.mrb[0].mxu0
    %4149 = vdwg.mxu0
    %4154 = vrot.lane.b32.xlu0 %v4053, 96
    %v4155 = vpop.permute.xlu0 %4154
    %4156 = vrot.lane.b32.xlu0 %v4054, 96
    %v4157 = vpop.permute.xlu0 %4156
    %4158 = vrot.lane.b32.xlu0 %v4055, 96
    %v4159 = vpop.permute.xlu0 %4158
    %4160 = vrot.lane.b32.xlu0 %v4056, 96
    %v4161 = vpop.permute.xlu0 %4160
    %4166 = vrot.lane.b32.xlu0 %v4067, 96
    %v4167 = vpop.permute.xlu0 %4166
    %v4170 = vsel %vm408, %v3021, 0
    %v4173 = vsel %vm408, %v3022, 0
    %4175 = vmatprep.subr.mxu0 0.0
    %4176 = vmatpush1.msra.mxu0 %v4155
    %4177 = vmatprep.subr.mxu0 0.0
    %4178 = vmatpush1.msra.mxu0 %v4157
    %4179 = vmatprep.subr.mxu0 0.0
    %4180 = vmatpush1.msra.mxu0 %v4159
    %4181 = vmatprep.subr.mxu0 0.0
    %4182 = vmatpush1.msra.mxu0 %v4161
    %4183 = vmatprep.subr.mxu0 0.0
    %4184 = vmatpush1.msra.mxu0 0.0
    %4185 = vmatprep.subr.mxu0 0.0
    %4186 = vmatpush1.msra.mxu0 0.0
    %4187 = vmatprep.subr.mxu0 0.0
    %4188 = vmatpush1.msra.mxu0 0.0
    %4189 = vmatprep.subr.mxu0 0.0
    %4190 = vmatpush1.msra.mxu0 0.0
    %4191 = vmatprep.subr.mxu0 0.0
    %4192 = vmatpush1.msra.mxu0 0.0
    %4193 = vmatprep.subr.mxu0 0.0
    %4194 = vmatpush1.msra.mxu0 0.0
    %4195 = vmatprep.subr.mxu0 0.0
    %4196 = vmatpush1.msra.mxu0 0.0
    %4197 = vmatprep.subr.mxu0 0.0
    %4198 = vmatpush1.msra.mxu0 0.0
    %4199 = vmatprep.subr.mxu0 0.0
    %4200 = vmatpush1.msra.mxu0 0.0
    %4201 = vmatprep.subr.mxu0 0.0
    %4202 = vmatpush1.msra.mxu0 0.0
    %4203 = vmatprep.subr.mxu0 0.0
    %4204 = vmatpush1.msra.mxu0 0.0
    %4205 = vmatprep.subr.mxu0 0.0
    %4206 = vmatpush1.msra.mxu0 0.0
    %4207 = vmatprep.subr.mxu0 0.0
    %4208 = vmatpush1.msra.mxu0 0.0
    %4209 = vmatprep.subr.mxu0 0.0
    %4210 = vmatpush1.msra.mxu0 0.0
    %4211 = vmatprep.subr.mxu0 0.0
    %4212 = vmatpush1.msra.mxu0 0.0
    %4213 = vmatprep.subr.mxu0 0.0
    %4214 = vmatpush1.msra.mxu0 0.0
    %4215 = vmatprep.subr.mxu0 0.0
    %4216 = vmatpush1.msra.mxu0 0.0
    %4217 = vmatprep.subr.mxu0 0.0
    %4218 = vmatpush1.msra.mxu0 0.0
    %4219 = vmatprep.subr.mxu0 0.0
    %4220 = vmatpush1.msra.mxu0 0.0
    %4221 = vmatprep.subr.mxu0 0.0
    %4222 = vmatpush1.msra.mxu0 0.0
    %4223 = vmatprep.subr.mxu0 0.0
    %4224 = vmatpush1.msra.mxu0 0.0
    %4225 = vmatprep.subr.mxu0 0.0
    %4226 = vmatpush1.msra.mxu0 0.0
    %4227 = vmatprep.subr.mxu0 0.0
    %4228 = vmatpush1.msra.mxu0 0.0
    %4229 = vmatprep.subr.mxu0 0.0
    %4230 = vmatpush1.msra.mxu0 0.0
    %4231 = vmatprep.subr.mxu0 0.0
    %4232 = vmatpush1.msra.mxu0 0.0
    %4233 = vmatprep.subr.mxu0 0.0
    %4234 = vmatpush1.msra.mxu0 0.0
    %4235 = vmatprep.subr.mxu0 0.0
    %4236 = vmatpush1.msra.mxu0 0.0
    %4237 = vmatprep.subr.mxu0 0.0
    %4238 = vmatpush1.msra.mxu0 0.0
    %4239 = vmatprep.mubr.f32.mxu0 0.0
    %4240 = vmatmul.mubr.f32.gmra.mrb[0].mxu0 %v4170
    %v4241 = vpop.f32.mrb[0].mxu0
    %v4242 = vadd.f32 %v4167, %v4241
    %v4243 = vpop.f32.mrb[0].mxu0
    %4244 = vmatprep.mubr.f32.mxu0 0.0
    %4245 = vmatmul.mubr.f32.gmra.mrb[0].mxu0 %v4173
    %v4246 = vpop.f32.mrb[0].mxu0
    %v4247 = vadd.f32 %v4167, %v4246
    %v4248 = vpop.f32.mrb[0].mxu0
    %4249 = vdwg.mxu0
    %v4250 = vmul.f32 %v4142, %v495
    %v4251 = vmul.f32 %v4147, %v495
    %v4253 = vsel %vm408, %v4250, 0
    %v4256 = vsel %vm408, %v4251, 0
    %v4259 = vsel %vm408, %v4242, 0
    %v4262 = vsel %vm408, %v4247, 0
    %4264 = vmatprep.subr.mxu0 0.0
    %4265 = vmatpush1.xpose.msra.mxu0 %v4259
    %4266 = vmatprep.subr.mxu0 0.0
    %4267 = vmatpush1.xpose.msra.mxu0 %v4262
    %4268 = vmatprep.subr.mxu0 0.0
    %4269 = vmatpush1.xpose.msra.mxu0 0.0
    %4270 = vmatprep.subr.mxu0 0.0
    %4271 = vmatpush1.xpose.msra.mxu0 0.0
    %4272 = vmatprep.subr.mxu0 0.0
    %4273 = vmatpush1.xpose.msra.mxu0 0.0
    %4274 = vmatprep.subr.mxu0 0.0
    %4275 = vmatpush1.xpose.msra.mxu0 0.0
    %4276 = vmatprep.subr.mxu0 0.0
    %4277 = vmatpush1.xpose.msra.mxu0 0.0
    %4278 = vmatprep.subr.mxu0 0.0
    %4279 = vmatpush1.xpose.msra.mxu0 0.0
    %4280 = vmatprep.subr.mxu0 0.0
    %4281 = vmatpush1.xpose.msra.mxu0 0.0
    %4282 = vmatprep.subr.mxu0 0.0
    %4283 = vmatpush1.xpose.msra.mxu0 0.0
    %4284 = vmatprep.subr.mxu0 0.0
    %4285 = vmatpush1.xpose.msra.mxu0 0.0
    %4286 = vmatprep.subr.mxu0 0.0
    %4287 = vmatpush1.xpose.msra.mxu0 0.0
    %4288 = vmatprep.subr.mxu0 0.0
    %4289 = vmatpush1.xpose.msra.mxu0 0.0
    %4290 = vmatprep.subr.mxu0 0.0
    %4291 = vmatpush1.xpose.msra.mxu0 0.0
    %4292 = vmatprep.subr.mxu0 0.0
    %4293 = vmatpush1.xpose.msra.mxu0 0.0
    %4294 = vmatprep.subr.mxu0 0.0
    %4295 = vmatpush1.xpose.msra.mxu0 0.0
    %4296 = vmatprep.subr.mxu0 0.0
    %4297 = vmatpush1.xpose.msra.mxu0 0.0
    %4298 = vmatprep.subr.mxu0 0.0
    %4299 = vmatpush1.xpose.msra.mxu0 0.0
    %4300 = vmatprep.subr.mxu0 0.0
    %4301 = vmatpush1.xpose.msra.mxu0 0.0
    %4302 = vmatprep.subr.mxu0 0.0
    %4303 = vmatpush1.xpose.msra.mxu0 0.0
    %4304 = vmatprep.subr.mxu0 0.0
    %4305 = vmatpush1.xpose.msra.mxu0 0.0
    %4306 = vmatprep.subr.mxu0 0.0
    %4307 = vmatpush1.xpose.msra.mxu0 0.0
    %4308 = vmatprep.subr.mxu0 0.0
    %4309 = vmatpush1.xpose.msra.mxu0 0.0
    %4310 = vmatprep.subr.mxu0 0.0
    %4311 = vmatpush1.xpose.msra.mxu0 0.0
    %4312 = vmatprep.subr.mxu0 0.0
    %4313 = vmatpush1.xpose.msra.mxu0 0.0
    %4314 = vmatprep.subr.mxu0 0.0
    %4315 = vmatpush1.xpose.msra.mxu0 0.0
    %4316 = vmatprep.subr.mxu0 0.0
    %4317 = vmatpush1.xpose.msra.mxu0 0.0
    %4318 = vmatprep.subr.mxu0 0.0
    %4319 = vmatpush1.xpose.msra.mxu0 0.0
    %4320 = vmatprep.subr.mxu0 0.0
    %4321 = vmatpush1.xpose.msra.mxu0 0.0
    %4322 = vmatprep.subr.mxu0 0.0
    %4323 = vmatpush1.xpose.msra.mxu0 0.0
    %4324 = vmatprep.subr.mxu0 0.0
    %4325 = vmatpush1.xpose.msra.mxu0 0.0
    %4326 = vmatprep.subr.mxu0 0.0
    %4327 = vmatpush1.xpose.msra.mxu0 0.0
    %4328 = vmatprep.mubr.f32.mxu0 0.0
    %4329 = vmatmul.mubr.f32.gmra.mrb[0].mxu0 %v4253
    %v4330 = vpop.f32.mrb[0].mxu0
    %v4331 = vadd.f32 %v388, %v4330
    %v4332 = vpop.f32.mrb[0].mxu0
    %4333 = vmatprep.mubr.f32.mxu0 0.0
    %4334 = vmatmul.mubr.f32.gmra.mrb[0].mxu0 %v4256
    %v4335 = vpop.f32.mrb[0].mxu0
    %v4336 = vadd.f32 %v389, %v4335
    %v4337 = vpop.f32.mrb[0].mxu0
    %4338 = vdwg.mxu0
    %v4339 = vsel %vm590, %v4331, -inf
    %4340 = vmax.xlane.f32.xlu0 %v4339
    %v4341 = vpop.xlane.xlu0 %4340
    %v4342 = vsel %vm590, %v4336, -inf
    %4343 = vmax.xlane.f32.xlu0 %v4342
    %v4344 = vpop.xlane.xlu0 %4343
    %v4345 = vsub.f32 %v4331, %v4341
    %v4346 = vsub.f32 %v4336, %v4344
    %v4347 = vmul.f32 %v4345, 1.442695
    %v4348 = vpow.pop %v4347
    %v4349 = vmul.f32 %v4346, 1.442695
    %v4350 = vpow.pop %v4349
    %v4351 = vsel %vm590, %v4348, 0.0
    %4352 = vadd.xlane.f32.xlu0 %v4351
    %v4353 = vpop.xlane.xlu0 %4352
    %v4354 = vsel %vm590, %v4350, 0.0
    %4355 = vadd.xlane.f32.xlu0 %v4354
    %v4356 = vpop.xlane.xlu0 %4355
    %v4357 = vrcp.pop %v4353
    %v4358 = vrcp.pop %v4356
    %v4359 = vmul.f32 %v4348, %v4357
    %v4360 = vmul.f32 %v4350, %v4358
    %4361 = vrot.lane.b32.xlu0 %v495, 32
    %v4362 = vpop.permute.xlu0 %4361
    %v4364 = vmul.f32 %v4242, %v4362
    %v4365 = vmul.f32 %v4247, %v4362
    %v4366 = vmul.f32 %v4142, %v624
    %v4367 = vmul.f32 %v4147, %v624
    %v4369 = vsel %vm408, %v4366, 0
    %v4372 = vsel %vm408, %v4367, 0
    %4374 = vmatprep.subr.mxu0 0.0
    %4375 = vmatpush1.xpose.msra.mxu0 %v4259
    %4376 = vmatprep.subr.mxu0 0.0
    %4377 = vmatpush1.xpose.msra.mxu0 %v4262
    %4378 = vmatprep.subr.mxu0 0.0
    %4379 = vmatpush1.xpose.msra.mxu0 0.0
    %4380 = vmatprep.subr.mxu0 0.0
    %4381 = vmatpush1.xpose.msra.mxu0 0.0
    %4382 = vmatprep.subr.mxu0 0.0
    %4383 = vmatpush1.xpose.msra.mxu0 0.0
    %4384 = vmatprep.subr.mxu0 0.0
    %4385 = vmatpush1.xpose.msra.mxu0 0.0
    %4386 = vmatprep.subr.mxu0 0.0
    %4387 = vmatpush1.xpose.msra.mxu0 0.0
    %4388 = vmatprep.subr.mxu0 0.0
    %4389 = vmatpush1.xpose.msra.mxu0 0.0
    %4390 = vmatprep.subr.mxu0 0.0
    %4391 = vmatpush1.xpose.msra.mxu0 0.0
    %4392 = vmatprep.subr.mxu0 0.0
    %4393 = vmatpush1.xpose.msra.mxu0 0.0
    %4394 = vmatprep.subr.mxu0 0.0
    %4395 = vmatpush1.xpose.msra.mxu0 0.0
    %4396 = vmatprep.subr.mxu0 0.0
    %4397 = vmatpush1.xpose.msra.mxu0 0.0
    %4398 = vmatprep.subr.mxu0 0.0
    %4399 = vmatpush1.xpose.msra.mxu0 0.0
    %4400 = vmatprep.subr.mxu0 0.0
    %4401 = vmatpush1.xpose.msra.mxu0 0.0
    %4402 = vmatprep.subr.mxu0 0.0
    %4403 = vmatpush1.xpose.msra.mxu0 0.0
    %4404 = vmatprep.subr.mxu0 0.0
    %4405 = vmatpush1.xpose.msra.mxu0 0.0
    %4406 = vmatprep.subr.mxu0 0.0
    %4407 = vmatpush1.xpose.msra.mxu0 0.0
    %4408 = vmatprep.subr.mxu0 0.0
    %4409 = vmatpush1.xpose.msra.mxu0 0.0
    %4410 = vmatprep.subr.mxu0 0.0
    %4411 = vmatpush1.xpose.msra.mxu0 0.0
    %4412 = vmatprep.subr.mxu0 0.0
    %4413 = vmatpush1.xpose.msra.mxu0 0.0
    %4414 = vmatprep.subr.mxu0 0.0
    %4415 = vmatpush1.xpose.msra.mxu0 0.0
    %4416 = vmatprep.subr.mxu0 0.0
    %4417 = vmatpush1.xpose.msra.mxu0 0.0
    %4418 = vmatprep.subr.mxu0 0.0
    %4419 = vmatpush1.xpose.msra.mxu0 0.0
    %4420 = vmatprep.subr.mxu0 0.0
    %4421 = vmatpush1.xpose.msra.mxu0 0.0
    %4422 = vmatprep.subr.mxu0 0.0
    %4423 = vmatpush1.xpose.msra.mxu0 0.0
    %4424 = vmatprep.subr.mxu0 0.0
    %4425 = vmatpush1.xpose.msra.mxu0 0.0
    %4426 = vmatprep.subr.mxu0 0.0
    %4427 = vmatpush1.xpose.msra.mxu0 0.0
    %4428 = vmatprep.subr.mxu0 0.0
    %4429 = vmatpush1.xpose.msra.mxu0 0.0
    %4430 = vmatprep.subr.mxu0 0.0
    %4431 = vmatpush1.xpose.msra.mxu0 0.0
    %4432 = vmatprep.subr.mxu0 0.0
    %4433 = vmatpush1.xpose.msra.mxu0 0.0
    %4434 = vmatprep.subr.mxu0 0.0
    %4435 = vmatpush1.xpose.msra.mxu0 0.0
    %4436 = vmatprep.subr.mxu0 0.0
    %4437 = vmatpush1.xpose.msra.mxu0 0.0
    %4438 = vmatprep.mubr.f32.mxu0 0.0
    %4439 = vmatmul.mubr.f32.gmra.mrb[0].mxu0 %v4369
    %v4440 = vpop.f32.mrb[0].mxu0
    %v4441 = vadd.f32 %v388, %v4440
    %v4442 = vpop.f32.mrb[0].mxu0
    %4443 = vmatprep.mubr.f32.mxu0 0.0
    %4444 = vmatmul.mubr.f32.gmra.mrb[0].mxu0 %v4372
    %v4445 = vpop.f32.mrb[0].mxu0
    %v4446 = vadd.f32 %v389, %v4445
    %v4447 = vpop.f32.mrb[0].mxu0
    %4448 = vdwg.mxu0
    %v4449 = vsel %vm590, %v4441, -inf
    %4450 = vmax.xlane.f32.xlu0 %v4449
    %v4451 = vpop.xlane.xlu0 %4450
    %v4452 = vsel %vm590, %v4446, -inf
    %4453 = vmax.xlane.f32.xlu0 %v4452
    %v4454 = vpop.xlane.xlu0 %4453
    %v4455 = vsub.f32 %v4441, %v4451
    %v4456 = vsub.f32 %v4446, %v4454
    %v4457 = vmul.f32 %v4455, 1.442695
    %v4458 = vpow.pop %v4457
    %v4459 = vmul.f32 %v4456, 1.442695
    %v4460 = vpow.pop %v4459
    %v4461 = vsel %vm590, %v4458, 0.0
    %4462 = vadd.xlane.f32.xlu0 %v4461
    %v4463 = vpop.xlane.xlu0 %4462
    %v4464 = vsel %vm590, %v4460, 0.0
    %4465 = vadd.xlane.f32.xlu0 %v4464
    %v4466 = vpop.xlane.xlu0 %4465
    %v4467 = vrcp.pop %v4463
    %v4468 = vrcp.pop %v4466
    %v4469 = vmul.f32 %v4458, %v4467
    %v4470 = vmul.f32 %v4460, %v4468
    %4471 = vrot.lane.b32.xlu0 %v624, 32
    %v4472 = vpop.permute.xlu0 %4471
    %v4474 = vmul.f32 %v4242, %v4472
    %v4475 = vmul.f32 %v4247, %v4472
    %4478 = vrot.lane.b32.xlu0 %v4474, 96
    %v4479 = vpop.permute.xlu0 %4478
    %4480 = vrot.lane.b32.xlu0 %v4475, 96
    %v4481 = vpop.permute.xlu0 %4480
    %v4485 = vsel %vm590, %v4469, 0
    %v4488 = vsel %vm590, %v4470, 0
    %4490 = vmatprep.subr.mxu0 0.0
    %4491 = vmatpush1.msra.mxu0 %v4479
    %4492 = vmatprep.subr.mxu0 0.0
    %4493 = vmatpush1.msra.mxu0 %v4481
    %4494 = vmatprep.subr.mxu0 0.0
    %4495 = vmatpush1.msra.mxu0 0.0
    %4496 = vmatprep.subr.mxu0 0.0
    %4497 = vmatpush1.msra.mxu0 0.0
    %4498 = vmatprep.subr.mxu0 0.0
    %4499 = vmatpush1.msra.mxu0 0.0
    %4500 = vmatprep.subr.mxu0 0.0
    %4501 = vmatpush1.msra.mxu0 0.0
    %4502 = vmatprep.subr.mxu0 0.0
    %4503 = vmatpush1.msra.mxu0 0.0
    %4504 = vmatprep.subr.mxu0 0.0
    %4505 = vmatpush1.msra.mxu0 0.0
    %4506 = vmatprep.subr.mxu0 0.0
    %4507 = vmatpush1.msra.mxu0 0.0
    %4508 = vmatprep.subr.mxu0 0.0
    %4509 = vmatpush1.msra.mxu0 0.0
    %4510 = vmatprep.subr.mxu0 0.0
    %4511 = vmatpush1.msra.mxu0 0.0
    %4512 = vmatprep.subr.mxu0 0.0
    %4513 = vmatpush1.msra.mxu0 0.0
    %4514 = vmatprep.subr.mxu0 0.0
    %4515 = vmatpush1.msra.mxu0 0.0
    %4516 = vmatprep.subr.mxu0 0.0
    %4517 = vmatpush1.msra.mxu0 0.0
    %4518 = vmatprep.subr.mxu0 0.0
    %4519 = vmatpush1.msra.mxu0 0.0
    %4520 = vmatprep.subr.mxu0 0.0
    %4521 = vmatpush1.msra.mxu0 0.0
    %4522 = vmatprep.subr.mxu0 0.0
    %4523 = vmatpush1.msra.mxu0 0.0
    %4524 = vmatprep.subr.mxu0 0.0
    %4525 = vmatpush1.msra.mxu0 0.0
    %4526 = vmatprep.subr.mxu0 0.0
    %4527 = vmatpush1.msra.mxu0 0.0
    %4528 = vmatprep.subr.mxu0 0.0
    %4529 = vmatpush1.msra.mxu0 0.0
    %4530 = vmatprep.subr.mxu0 0.0
    %4531 = vmatpush1.msra.mxu0 0.0
    %4532 = vmatprep.subr.mxu0 0.0
    %4533 = vmatpush1.msra.mxu0 0.0
    %4534 = vmatprep.subr.mxu0 0.0
    %4535 = vmatpush1.msra.mxu0 0.0
    %4536 = vmatprep.subr.mxu0 0.0
    %4537 = vmatpush1.msra.mxu0 0.0
    %4538 = vmatprep.subr.mxu0 0.0
    %4539 = vmatpush1.msra.mxu0 0.0
    %4540 = vmatprep.subr.mxu0 0.0
    %4541 = vmatpush1.msra.mxu0 0.0
    %4542 = vmatprep.subr.mxu0 0.0
    %4543 = vmatpush1.msra.mxu0 0.0
    %4544 = vmatprep.subr.mxu0 0.0
    %4545 = vmatpush1.msra.mxu0 0.0
    %4546 = vmatprep.subr.mxu0 0.0
    %4547 = vmatpush1.msra.mxu0 0.0
    %4548 = vmatprep.subr.mxu0 0.0
    %4549 = vmatpush1.msra.mxu0 0.0
    %4550 = vmatprep.subr.mxu0 0.0
    %4551 = vmatpush1.msra.mxu0 0.0
    %4552 = vmatprep.subr.mxu0 0.0
    %4553 = vmatpush1.msra.mxu0 0.0
    %4554 = vmatprep.mubr.f32.mxu0 0.0
    %4555 = vmatmul.mubr.f32.gmra.mrb[0].mxu0 %v4485
    %v4556 = vpop.f32.mrb[0].mxu0
    %v4557 = vadd.f32 0.0, %v4556
    %v4558 = vpop.f32.mrb[0].mxu0
    %4559 = vmatprep.mubr.f32.mxu0 0.0
    %4560 = vmatmul.mubr.f32.gmra.mrb[0].mxu0 %v4488
    %v4561 = vpop.f32.mrb[0].mxu0
    %v4562 = vadd.f32 0.0, %v4561
    %v4563 = vpop.f32.mrb[0].mxu0
    %4564 = vdwg.mxu0
    %4567 = vrot.lane.b32.xlu0 %v4364, 96
    %v4568 = vpop.permute.xlu0 %4567
    %4569 = vrot.lane.b32.xlu0 %v4365, 96
    %v4570 = vpop.permute.xlu0 %4569
    %v4574 = vsel %vm590, %v4359, 0
    %v4577 = vsel %vm590, %v4360, 0
    %4579 = vmatprep.subr.mxu0 0.0
    %4580 = vmatpush1.msra.mxu0 %v4568
    %4581 = vmatprep.subr.mxu0 0.0
    %4582 = vmatpush1.msra.mxu0 %v4570
    %4583 = vmatprep.subr.mxu0 0.0
    %4584 = vmatpush1.msra.mxu0 0.0
    %4585 = vmatprep.subr.mxu0 0.0
    %4586 = vmatpush1.msra.mxu0 0.0
    %4587 = vmatprep.subr.mxu0 0.0
    %4588 = vmatpush1.msra.mxu0 0.0
    %4589 = vmatprep.subr.mxu0 0.0
    %4590 = vmatpush1.msra.mxu0 0.0
    %4591 = vmatprep.subr.mxu0 0.0
    %4592 = vmatpush1.msra.mxu0 0.0
    %4593 = vmatprep.subr.mxu0 0.0
    %4594 = vmatpush1.msra.mxu0 0.0
    %4595 = vmatprep.subr.mxu0 0.0
    %4596 = vmatpush1.msra.mxu0 0.0
    %4597 = vmatprep.subr.mxu0 0.0
    %4598 = vmatpush1.msra.mxu0 0.0
    %4599 = vmatprep.subr.mxu0 0.0
    %4600 = vmatpush1.msra.mxu0 0.0
    %4601 = vmatprep.subr.mxu0 0.0
    %4602 = vmatpush1.msra.mxu0 0.0
    %4603 = vmatprep.subr.mxu0 0.0
    %4604 = vmatpush1.msra.mxu0 0.0
    %4605 = vmatprep.subr.mxu0 0.0
    %4606 = vmatpush1.msra.mxu0 0.0
    %4607 = vmatprep.subr.mxu0 0.0
    %4608 = vmatpush1.msra.mxu0 0.0
    %4609 = vmatprep.subr.mxu0 0.0
    %4610 = vmatpush1.msra.mxu0 0.0
    %4611 = vmatprep.subr.mxu0 0.0
    %4612 = vmatpush1.msra.mxu0 0.0
    %4613 = vmatprep.subr.mxu0 0.0
    %4614 = vmatpush1.msra.mxu0 0.0
    %4615 = vmatprep.subr.mxu0 0.0
    %4616 = vmatpush1.msra.mxu0 0.0
    %4617 = vmatprep.subr.mxu0 0.0
    %4618 = vmatpush1.msra.mxu0 0.0
    %4619 = vmatprep.subr.mxu0 0.0
    %4620 = vmatpush1.msra.mxu0 0.0
    %4621 = vmatprep.subr.mxu0 0.0
    %4622 = vmatpush1.msra.mxu0 0.0
    %4623 = vmatprep.subr.mxu0 0.0
    %4624 = vmatpush1.msra.mxu0 0.0
    %4625 = vmatprep.subr.mxu0 0.0
    %4626 = vmatpush1.msra.mxu0 0.0
    %4627 = vmatprep.subr.mxu0 0.0
    %4628 = vmatpush1.msra.mxu0 0.0
    %4629 = vmatprep.subr.mxu0 0.0
    %4630 = vmatpush1.msra.mxu0 0.0
    %4631 = vmatprep.subr.mxu0 0.0
    %4632 = vmatpush1.msra.mxu0 0.0
    %4633 = vmatprep.subr.mxu0 0.0
    %4634 = vmatpush1.msra.mxu0 0.0
    %4635 = vmatprep.subr.mxu0 0.0
    %4636 = vmatpush1.msra.mxu0 0.0
    %4637 = vmatprep.subr.mxu0 0.0
    %4638 = vmatpush1.msra.mxu0 0.0
    %4639 = vmatprep.subr.mxu0 0.0
    %4640 = vmatpush1.msra.mxu0 0.0
    %4641 = vmatprep.subr.mxu0 0.0
    %4642 = vmatpush1.msra.mxu0 0.0
    %4643 = vmatprep.mubr.f32.mxu0 0.0
    %4644 = vmatmul.mubr.f32.gmra.mrb[0].mxu0 %v4574
    %v4645 = vpop.f32.mrb[0].mxu0
    %v4646 = vadd.f32 %v4557, %v4645
    %v4647 = vpop.f32.mrb[0].mxu0
    %4648 = vmatprep.mubr.f32.mxu0 0.0
    %4649 = vmatmul.mubr.f32.gmra.mrb[0].mxu0 %v4577
    %v4650 = vpop.f32.mrb[0].mxu0
    %v4651 = vadd.f32 %v4562, %v4650
    %v4652 = vpop.f32.mrb[0].mxu0
    %4653 = vdwg.mxu0
    %v4654 = vmul.f32 %v4142, %v920
    %v4655 = vmul.f32 %v4147, %v920
    %v4657 = vsel %vm408, %v4654, 0
    %v4660 = vsel %vm408, %v4655, 0
    %4662 = vmatprep.subr.mxu0 0.0
    %4663 = vmatpush1.xpose.msra.mxu0 %v4259
    %4664 = vmatprep.subr.mxu0 0.0
    %4665 = vmatpush1.xpose.msra.mxu0 %v4262
    %4666 = vmatprep.subr.mxu0 0.0
    %4667 = vmatpush1.xpose.msra.mxu0 0.0
    %4668 = vmatprep.subr.mxu0 0.0
    %4669 = vmatpush1.xpose.msra.mxu0 0.0
    %4670 = vmatprep.subr.mxu0 0.0
    %4671 = vmatpush1.xpose.msra.mxu0 0.0
    %4672 = vmatprep.subr.mxu0 0.0
    %4673 = vmatpush1.xpose.msra.mxu0 0.0
    %4674 = vmatprep.subr.mxu0 0.0
    %4675 = vmatpush1.xpose.msra.mxu0 0.0
    %4676 = vmatprep.subr.mxu0 0.0
    %4677 = vmatpush1.xpose.msra.mxu0 0.0
    %4678 = vmatprep.subr.mxu0 0.0
    %4679 = vmatpush1.xpose.msra.mxu0 0.0
    %4680 = vmatprep.subr.mxu0 0.0
    %4681 = vmatpush1.xpose.msra.mxu0 0.0
    %4682 = vmatprep.subr.mxu0 0.0
    %4683 = vmatpush1.xpose.msra.mxu0 0.0
    %4684 = vmatprep.subr.mxu0 0.0
    %4685 = vmatpush1.xpose.msra.mxu0 0.0
    %4686 = vmatprep.subr.mxu0 0.0
    %4687 = vmatpush1.xpose.msra.mxu0 0.0
    %4688 = vmatprep.subr.mxu0 0.0
    %4689 = vmatpush1.xpose.msra.mxu0 0.0
    %4690 = vmatprep.subr.mxu0 0.0
    %4691 = vmatpush1.xpose.msra.mxu0 0.0
    %4692 = vmatprep.subr.mxu0 0.0
    %4693 = vmatpush1.xpose.msra.mxu0 0.0
    %4694 = vmatprep.subr.mxu0 0.0
    %4695 = vmatpush1.xpose.msra.mxu0 0.0
    %4696 = vmatprep.subr.mxu0 0.0
    %4697 = vmatpush1.xpose.msra.mxu0 0.0
    %4698 = vmatprep.subr.mxu0 0.0
    %4699 = vmatpush1.xpose.msra.mxu0 0.0
    %4700 = vmatprep.subr.mxu0 0.0
    %4701 = vmatpush1.xpose.msra.mxu0 0.0
    %4702 = vmatprep.subr.mxu0 0.0
    %4703 = vmatpush1.xpose.msra.mxu0 0.0
    %4704 = vmatprep.subr.mxu0 0.0
    %4705 = vmatpush1.xpose.msra.mxu0 0.0
    %4706 = vmatprep.subr.mxu0 0.0
    %4707 = vmatpush1.xpose.msra.mxu0 0.0
    %4708 = vmatprep.subr.mxu0 0.0
    %4709 = vmatpush1.xpose.msra.mxu0 0.0
    %4710 = vmatprep.subr.mxu0 0.0
    %4711 = vmatpush1.xpose.msra.mxu0 0.0
    %4712 = vmatprep.subr.mxu0 0.0
    %4713 = vmatpush1.xpose.msra.mxu0 0.0
    %4714 = vmatprep.subr.mxu0 0.0
    %4715 = vmatpush1.xpose.msra.mxu0 0.0
    %4716 = vmatprep.subr.mxu0 0.0
    %4717 = vmatpush1.xpose.msra.mxu0 0.0
    %4718 = vmatprep.subr.mxu0 0.0
    %4719 = vmatpush1.xpose.msra.mxu0 0.0
    %4720 = vmatprep.subr.mxu0 0.0
    %4721 = vmatpush1.xpose.msra.mxu0 0.0
    %4722 = vmatprep.subr.mxu0 0.0
    %4723 = vmatpush1.xpose.msra.mxu0 0.0
    %4724 = vmatprep.subr.mxu0 0.0
    %4725 = vmatpush1.xpose.msra.mxu0 0.0
    %4726 = vmatprep.mubr.f32.mxu0 0.0
    %4727 = vmatmul.mubr.f32.gmra.mrb[0].mxu0 %v4657
    %v4728 = vpop.f32.mrb[0].mxu0
    %v4729 = vadd.f32 %v388, %v4728
    %v4730 = vpop.f32.mrb[0].mxu0
    %4731 = vmatprep.mubr.f32.mxu0 0.0
    %4732 = vmatmul.mubr.f32.gmra.mrb[0].mxu0 %v4660
    %v4733 = vpop.f32.mrb[0].mxu0
    %v4734 = vadd.f32 %v389, %v4733
    %v4735 = vpop.f32.mrb[0].mxu0
    %4736 = vdwg.mxu0
    %v4737 = vsel %vm590, %v4729, -inf
    %4738 = vmax.xlane.f32.xlu0 %v4737
    %v4739 = vpop.xlane.xlu0 %4738
    %v4740 = vsel %vm590, %v4734, -inf
    %4741 = vmax.xlane.f32.xlu0 %v4740
    %v4742 = vpop.xlane.xlu0 %4741
    %v4743 = vsub.f32 %v4729, %v4739
    %v4744 = vsub.f32 %v4734, %v4742
    %v4745 = vmul.f32 %v4743, 1.442695
    %v4746 = vpow.pop %v4745
    %v4747 = vmul.f32 %v4744, 1.442695
    %v4748 = vpow.pop %v4747
    %v4749 = vsel %vm590, %v4746, 0.0
    %4750 = vadd.xlane.f32.xlu0 %v4749
    %v4751 = vpop.xlane.xlu0 %4750
    %v4752 = vsel %vm590, %v4748, 0.0
    %4753 = vadd.xlane.f32.xlu0 %v4752
    %v4754 = vpop.xlane.xlu0 %4753
    %v4755 = vrcp.pop %v4751
    %v4756 = vrcp.pop %v4754
    %v4757 = vmul.f32 %v4746, %v4755
    %v4758 = vmul.f32 %v4748, %v4756
    %4759 = vrot.lane.b32.xlu0 %v920, 32
    %v4760 = vpop.permute.xlu0 %4759
    %v4762 = vmul.f32 %v4242, %v4760
    %v4763 = vmul.f32 %v4247, %v4760
    %4766 = vrot.lane.b32.xlu0 %v4762, 96
    %v4767 = vpop.permute.xlu0 %4766
    %4768 = vrot.lane.b32.xlu0 %v4763, 96
    %v4769 = vpop.permute.xlu0 %4768
    %v4773 = vsel %vm590, %v4757, 0
    %v4776 = vsel %vm590, %v4758, 0
    %4778 = vmatprep.subr.mxu0 0.0
    %4779 = vmatpush1.msra.mxu0 %v4767
    %4780 = vmatprep.subr.mxu0 0.0
    %4781 = vmatpush1.msra.mxu0 %v4769
    %4782 = vmatprep.subr.mxu0 0.0
    %4783 = vmatpush1.msra.mxu0 0.0
    %4784 = vmatprep.subr.mxu0 0.0
    %4785 = vmatpush1.msra.mxu0 0.0
    %4786 = vmatprep.subr.mxu0 0.0
    %4787 = vmatpush1.msra.mxu0 0.0
    %4788 = vmatprep.subr.mxu0 0.0
    %4789 = vmatpush1.msra.mxu0 0.0
    %4790 = vmatprep.subr.mxu0 0.0
    %4791 = vmatpush1.msra.mxu0 0.0
    %4792 = vmatprep.subr.mxu0 0.0
    %4793 = vmatpush1.msra.mxu0 0.0
    %4794 = vmatprep.subr.mxu0 0.0
    %4795 = vmatpush1.msra.mxu0 0.0
    %4796 = vmatprep.subr.mxu0 0.0
    %4797 = vmatpush1.msra.mxu0 0.0
    %4798 = vmatprep.subr.mxu0 0.0
    %4799 = vmatpush1.msra.mxu0 0.0
    %4800 = vmatprep.subr.mxu0 0.0
    %4801 = vmatpush1.msra.mxu0 0.0
    %4802 = vmatprep.subr.mxu0 0.0
    %4803 = vmatpush1.msra.mxu0 0.0
    %4804 = vmatprep.subr.mxu0 0.0
    %4805 = vmatpush1.msra.mxu0 0.0
    %4806 = vmatprep.subr.mxu0 0.0
    %4807 = vmatpush1.msra.mxu0 0.0
    %4808 = vmatprep.subr.mxu0 0.0
    %4809 = vmatpush1.msra.mxu0 0.0
    %4810 = vmatprep.subr.mxu0 0.0
    %4811 = vmatpush1.msra.mxu0 0.0
    %4812 = vmatprep.subr.mxu0 0.0
    %4813 = vmatpush1.msra.mxu0 0.0
    %4814 = vmatprep.subr.mxu0 0.0
    %4815 = vmatpush1.msra.mxu0 0.0
    %4816 = vmatprep.subr.mxu0 0.0
    %4817 = vmatpush1.msra.mxu0 0.0
    %4818 = vmatprep.subr.mxu0 0.0
    %4819 = vmatpush1.msra.mxu0 0.0
    %4820 = vmatprep.subr.mxu0 0.0
    %4821 = vmatpush1.msra.mxu0 0.0
    %4822 = vmatprep.subr.mxu0 0.0
    %4823 = vmatpush1.msra.mxu0 0.0
    %4824 = vmatprep.subr.mxu0 0.0
    %4825 = vmatpush1.msra.mxu0 0.0
    %4826 = vmatprep.subr.mxu0 0.0
    %4827 = vmatpush1.msra.mxu0 0.0
    %4828 = vmatprep.subr.mxu0 0.0
    %4829 = vmatpush1.msra.mxu0 0.0
    %4830 = vmatprep.subr.mxu0 0.0
    %4831 = vmatpush1.msra.mxu0 0.0
    %4832 = vmatprep.subr.mxu0 0.0
    %4833 = vmatpush1.msra.mxu0 0.0
    %4834 = vmatprep.subr.mxu0 0.0
    %4835 = vmatpush1.msra.mxu0 0.0
    %4836 = vmatprep.subr.mxu0 0.0
    %4837 = vmatpush1.msra.mxu0 0.0
    %4838 = vmatprep.subr.mxu0 0.0
    %4839 = vmatpush1.msra.mxu0 0.0
    %4840 = vmatprep.subr.mxu0 0.0
    %4841 = vmatpush1.msra.mxu0 0.0
    %4842 = vmatprep.mubr.f32.mxu0 0.0
    %4843 = vmatmul.mubr.f32.gmra.mrb[0].mxu0 %v4773
    %v4844 = vpop.f32.mrb[0].mxu0
    %v4845 = vadd.f32 0.0, %v4844
    %v4846 = vpop.f32.mrb[0].mxu0
    %4847 = vmatprep.mubr.f32.mxu0 0.0
    %4848 = vmatmul.mubr.f32.gmra.mrb[0].mxu0 %v4776
    %v4849 = vpop.f32.mrb[0].mxu0
    %v4850 = vadd.f32 0.0, %v4849
    %v4851 = vpop.f32.mrb[0].mxu0
    %4852 = vdwg.mxu0
    %v4853 = vadd.f32 %v4646, %v4845
    %v4854 = vadd.f32 %v4651, %v4850
    %v4855 = vmul.f32 %v4142, %v1129
    %v4856 = vmul.f32 %v4147, %v1129
    %v4858 = vsel %vm408, %v4855, 0
    %v4861 = vsel %vm408, %v4856, 0
    %4863 = vmatprep.subr.mxu0 0.0
    %4864 = vmatpush1.xpose.msra.mxu0 %v4259
    %4865 = vmatprep.subr.mxu0 0.0
    %4866 = vmatpush1.xpose.msra.mxu0 %v4262
    %4867 = vmatprep.subr.mxu0 0.0
    %4868 = vmatpush1.xpose.msra.mxu0 0.0
    %4869 = vmatprep.subr.mxu0 0.0
    %4870 = vmatpush1.xpose.msra.mxu0 0.0
    %4871 = vmatprep.subr.mxu0 0.0
    %4872 = vmatpush1.xpose.msra.mxu0 0.0
    %4873 = vmatprep.subr.mxu0 0.0
    %4874 = vmatpush1.xpose.msra.mxu0 0.0
    %4875 = vmatprep.subr.mxu0 0.0
    %4876 = vmatpush1.xpose.msra.mxu0 0.0
    %4877 = vmatprep.subr.mxu0 0.0
    %4878 = vmatpush1.xpose.msra.mxu0 0.0
    %4879 = vmatprep.subr.mxu0 0.0
    %4880 = vmatpush1.xpose.msra.mxu0 0.0
    %4881 = vmatprep.subr.mxu0 0.0
    %4882 = vmatpush1.xpose.msra.mxu0 0.0
    %4883 = vmatprep.subr.mxu0 0.0
    %4884 = vmatpush1.xpose.msra.mxu0 0.0
    %4885 = vmatprep.subr.mxu0 0.0
    %4886 = vmatpush1.xpose.msra.mxu0 0.0
    %4887 = vmatprep.subr.mxu0 0.0
    %4888 = vmatpush1.xpose.msra.mxu0 0.0
    %4889 = vmatprep.subr.mxu0 0.0
    %4890 = vmatpush1.xpose.msra.mxu0 0.0
    %4891 = vmatprep.subr.mxu0 0.0
    %4892 = vmatpush1.xpose.msra.mxu0 0.0
    %4893 = vmatprep.subr.mxu0 0.0
    %4894 = vmatpush1.xpose.msra.mxu0 0.0
    %4895 = vmatprep.subr.mxu0 0.0
    %4896 = vmatpush1.xpose.msra.mxu0 0.0
    %4897 = vmatprep.subr.mxu0 0.0
    %4898 = vmatpush1.xpose.msra.mxu0 0.0
    %4899 = vmatprep.subr.mxu0 0.0
    %4900 = vmatpush1.xpose.msra.mxu0 0.0
    %4901 = vmatprep.subr.mxu0 0.0
    %4902 = vmatpush1.xpose.msra.mxu0 0.0
    %4903 = vmatprep.subr.mxu0 0.0
    %4904 = vmatpush1.xpose.msra.mxu0 0.0
    %4905 = vmatprep.subr.mxu0 0.0
    %4906 = vmatpush1.xpose.msra.mxu0 0.0
    %4907 = vmatprep.subr.mxu0 0.0
    %4908 = vmatpush1.xpose.msra.mxu0 0.0
    %4909 = vmatprep.subr.mxu0 0.0
    %4910 = vmatpush1.xpose.msra.mxu0 0.0
    %4911 = vmatprep.subr.mxu0 0.0
    %4912 = vmatpush1.xpose.msra.mxu0 0.0
    %4913 = vmatprep.subr.mxu0 0.0
    %4914 = vmatpush1.xpose.msra.mxu0 0.0
    %4915 = vmatprep.subr.mxu0 0.0
    %4916 = vmatpush1.xpose.msra.mxu0 0.0
    %4917 = vmatprep.subr.mxu0 0.0
    %4918 = vmatpush1.xpose.msra.mxu0 0.0
    %4919 = vmatprep.subr.mxu0 0.0
    %4920 = vmatpush1.xpose.msra.mxu0 0.0
    %4921 = vmatprep.subr.mxu0 0.0
    %4922 = vmatpush1.xpose.msra.mxu0 0.0
    %4923 = vmatprep.subr.mxu0 0.0
    %4924 = vmatpush1.xpose.msra.mxu0 0.0
    %4925 = vmatprep.subr.mxu0 0.0
    %4926 = vmatpush1.xpose.msra.mxu0 0.0
    %4927 = vmatprep.mubr.f32.mxu0 0.0
    %4928 = vmatmul.mubr.f32.gmra.mrb[0].mxu0 %v4858
    %v4929 = vpop.f32.mrb[0].mxu0
    %v4930 = vadd.f32 %v388, %v4929
    %v4931 = vpop.f32.mrb[0].mxu0
    %4932 = vmatprep.mubr.f32.mxu0 0.0
    %4933 = vmatmul.mubr.f32.gmra.mrb[0].mxu0 %v4861
    %v4934 = vpop.f32.mrb[0].mxu0
    %v4935 = vadd.f32 %v389, %v4934
    %v4936 = vpop.f32.mrb[0].mxu0
    %4937 = vdwg.mxu0
    %v4938 = vsel %vm590, %v4930, -inf
    %4939 = vmax.xlane.f32.xlu0 %v4938
    %v4940 = vpop.xlane.xlu0 %4939
    %v4941 = vsel %vm590, %v4935, -inf
    %4942 = vmax.xlane.f32.xlu0 %v4941
    %v4943 = vpop.xlane.xlu0 %4942
    %v4944 = vsub.f32 %v4930, %v4940
    %v4945 = vsub.f32 %v4935, %v4943
    %v4946 = vmul.f32 %v4944, 1.442695
    %v4947 = vpow.pop %v4946
    %v4948 = vmul.f32 %v4945, 1.442695
    %v4949 = vpow.pop %v4948
    %v4950 = vsel %vm590, %v4947, 0.0
    %4951 = vadd.xlane.f32.xlu0 %v4950
    %v4952 = vpop.xlane.xlu0 %4951
    %v4953 = vsel %vm590, %v4949, 0.0
    %4954 = vadd.xlane.f32.xlu0 %v4953
    %v4955 = vpop.xlane.xlu0 %4954
    %v4956 = vrcp.pop %v4952
    %v4957 = vrcp.pop %v4955
    %v4958 = vmul.f32 %v4947, %v4956
    %v4959 = vmul.f32 %v4949, %v4957
    %4960 = vrot.lane.b32.xlu0 %v1129, 32
    %v4961 = vpop.permute.xlu0 %4960
    %v4963 = vmul.f32 %v4242, %v4961
    %v4964 = vmul.f32 %v4247, %v4961
    %4967 = vrot.lane.b32.xlu0 %v4963, 96
    %v4968 = vpop.permute.xlu0 %4967
    %4969 = vrot.lane.b32.xlu0 %v4964, 96
    %v4970 = vpop.permute.xlu0 %4969
    %v4974 = vsel %vm590, %v4958, 0
    %v4977 = vsel %vm590, %v4959, 0
    %4979 = vmatprep.subr.mxu0 0.0
    %4980 = vmatpush1.msra.mxu0 %v4968
    %4981 = vmatprep.subr.mxu0 0.0
    %4982 = vmatpush1.msra.mxu0 %v4970
    %4983 = vmatprep.subr.mxu0 0.0
    %4984 = vmatpush1.msra.mxu0 0.0
    %4985 = vmatprep.subr.mxu0 0.0
    %4986 = vmatpush1.msra.mxu0 0.0
    %4987 = vmatprep.subr.mxu0 0.0
    %4988 = vmatpush1.msra.mxu0 0.0
    %4989 = vmatprep.subr.mxu0 0.0
    %4990 = vmatpush1.msra.mxu0 0.0
    %4991 = vmatprep.subr.mxu0 0.0
    %4992 = vmatpush1.msra.mxu0 0.0
    %4993 = vmatprep.subr.mxu0 0.0
    %4994 = vmatpush1.msra.mxu0 0.0
    %4995 = vmatprep.subr.mxu0 0.0
    %4996 = vmatpush1.msra.mxu0 0.0
    %4997 = vmatprep.subr.mxu0 0.0
    %4998 = vmatpush1.msra.mxu0 0.0
    %4999 = vmatprep.subr.mxu0 0.0
    %5000 = vmatpush1.msra.mxu0 0.0
    %5001 = vmatprep.subr.mxu0 0.0
    %5002 = vmatpush1.msra.mxu0 0.0
    %5003 = vmatprep.subr.mxu0 0.0
    %5004 = vmatpush1.msra.mxu0 0.0
    %5005 = vmatprep.subr.mxu0 0.0
    %5006 = vmatpush1.msra.mxu0 0.0
    %5007 = vmatprep.subr.mxu0 0.0
    %5008 = vmatpush1.msra.mxu0 0.0
    %5009 = vmatprep.subr.mxu0 0.0
    %5010 = vmatpush1.msra.mxu0 0.0
    %5011 = vmatprep.subr.mxu0 0.0
    %5012 = vmatpush1.msra.mxu0 0.0
    %5013 = vmatprep.subr.mxu0 0.0
    %5014 = vmatpush1.msra.mxu0 0.0
    %5015 = vmatprep.subr.mxu0 0.0
    %5016 = vmatpush1.msra.mxu0 0.0
    %5017 = vmatprep.subr.mxu0 0.0
    %5018 = vmatpush1.msra.mxu0 0.0
    %5019 = vmatprep.subr.mxu0 0.0
    %5020 = vmatpush1.msra.mxu0 0.0
    %5021 = vmatprep.subr.mxu0 0.0
    %5022 = vmatpush1.msra.mxu0 0.0
    %5023 = vmatprep.subr.mxu0 0.0
    %5024 = vmatpush1.msra.mxu0 0.0
    %5025 = vmatprep.subr.mxu0 0.0
    %5026 = vmatpush1.msra.mxu0 0.0
    %5027 = vmatprep.subr.mxu0 0.0
    %5028 = vmatpush1.msra.mxu0 0.0
    %5029 = vmatprep.subr.mxu0 0.0
    %5030 = vmatpush1.msra.mxu0 0.0
    %5031 = vmatprep.subr.mxu0 0.0
    %5032 = vmatpush1.msra.mxu0 0.0
    %5033 = vmatprep.subr.mxu0 0.0
    %5034 = vmatpush1.msra.mxu0 0.0
    %5035 = vmatprep.subr.mxu0 0.0
    %5036 = vmatpush1.msra.mxu0 0.0
    %5037 = vmatprep.subr.mxu0 0.0
    %5038 = vmatpush1.msra.mxu0 0.0
    %5039 = vmatprep.subr.mxu0 0.0
    %5040 = vmatpush1.msra.mxu0 0.0
    %5041 = vmatprep.subr.mxu0 0.0
    %5042 = vmatpush1.msra.mxu0 0.0
    %5043 = vmatprep.mubr.f32.mxu0 0.0
    %5044 = vmatmul.mubr.f32.gmra.mrb[0].mxu0 %v4974
    %v5045 = vpop.f32.mrb[0].mxu0
    %v5046 = vadd.f32 0.0, %v5045
    %v5047 = vpop.f32.mrb[0].mxu0
    %5048 = vmatprep.mubr.f32.mxu0 0.0
    %5049 = vmatmul.mubr.f32.gmra.mrb[0].mxu0 %v4977
    %v5050 = vpop.f32.mrb[0].mxu0
    %v5051 = vadd.f32 0.0, %v5050
    %v5052 = vpop.f32.mrb[0].mxu0
    %5053 = vdwg.mxu0
    %v5054 = vadd.f32 %v4853, %v5046
    %v5055 = vadd.f32 %v4854, %v5051
    %v5057 = vlaneseq
    %v5058 = vshrl.u32 %v5057, 7
    %v5059 = vsub.s32 0, %v5058
    %v5060 = vrot.slane %v4062, %v5059
    %v5063 = vsel %vm408, %v5054, 0
    %v5066 = vsel %vm408, %v5055, 0
    %5068 = vmatprep.subr.mxu0 0.0
    %5069 = vmatpush1.msra.mxu0 %v4058
    %5070 = vmatprep.subr.mxu0 0.0
    %5071 = vmatpush1.msra.mxu0 %v4059
    %5072 = vmatprep.subr.mxu0 0.0
    %5073 = vmatpush1.msra.mxu0 %v4060
    %5074 = vmatprep.subr.mxu0 0.0
    %5075 = vmatpush1.msra.mxu0 %v4061
    %5076 = vmatprep.subr.mxu0 0.0
    %5077 = vmatpush1.msra.mxu0 0.0
    %5078 = vmatprep.subr.mxu0 0.0
    %5079 = vmatpush1.msra.mxu0 0.0
    %5080 = vmatprep.subr.mxu0 0.0
    %5081 = vmatpush1.msra.mxu0 0.0
    %5082 = vmatprep.subr.mxu0 0.0
    %5083 = vmatpush1.msra.mxu0 0.0
    %5084 = vmatprep.subr.mxu0 0.0
    %5085 = vmatpush1.msra.mxu0 0.0
    %5086 = vmatprep.subr.mxu0 0.0
    %5087 = vmatpush1.msra.mxu0 0.0
    %5088 = vmatprep.subr.mxu0 0.0
    %5089 = vmatpush1.msra.mxu0 0.0
    %5090 = vmatprep.subr.mxu0 0.0
    %5091 = vmatpush1.msra.mxu0 0.0
    %5092 = vmatprep.subr.mxu0 0.0
    %5093 = vmatpush1.msra.mxu0 0.0
    %5094 = vmatprep.subr.mxu0 0.0
    %5095 = vmatpush1.msra.mxu0 0.0
    %5096 = vmatprep.subr.mxu0 0.0
    %5097 = vmatpush1.msra.mxu0 0.0
    %5098 = vmatprep.subr.mxu0 0.0
    %5099 = vmatpush1.msra.mxu0 0.0
    %5100 = vmatprep.subr.mxu0 0.0
    %5101 = vmatpush1.msra.mxu0 0.0
    %5102 = vmatprep.subr.mxu0 0.0
    %5103 = vmatpush1.msra.mxu0 0.0
    %5104 = vmatprep.subr.mxu0 0.0
    %5105 = vmatpush1.msra.mxu0 0.0
    %5106 = vmatprep.subr.mxu0 0.0
    %5107 = vmatpush1.msra.mxu0 0.0
    %5108 = vmatprep.subr.mxu0 0.0
    %5109 = vmatpush1.msra.mxu0 0.0
    %5110 = vmatprep.subr.mxu0 0.0
    %5111 = vmatpush1.msra.mxu0 0.0
    %5112 = vmatprep.subr.mxu0 0.0
    %5113 = vmatpush1.msra.mxu0 0.0
    %5114 = vmatprep.subr.mxu0 0.0
    %5115 = vmatpush1.msra.mxu0 0.0
    %5116 = vmatprep.subr.mxu0 0.0
    %5117 = vmatpush1.msra.mxu0 0.0
    %5118 = vmatprep.subr.mxu0 0.0
    %5119 = vmatpush1.msra.mxu0 0.0
    %5120 = vmatprep.subr.mxu0 0.0
    %5121 = vmatpush1.msra.mxu0 0.0
    %5122 = vmatprep.subr.mxu0 0.0
    %5123 = vmatpush1.msra.mxu0 0.0
    %5124 = vmatprep.subr.mxu0 0.0
    %5125 = vmatpush1.msra.mxu0 0.0
    %5126 = vmatprep.subr.mxu0 0.0
    %5127 = vmatpush1.msra.mxu0 0.0
    %5128 = vmatprep.subr.mxu0 0.0
    %5129 = vmatpush1.msra.mxu0 0.0
    %5130 = vmatprep.subr.mxu0 0.0
    %5131 = vmatpush1.msra.mxu0 0.0
    %5132 = vmatprep.mubr.f32.mxu0 0.0
    %5133 = vmatmul.mubr.f32.gmra.mrb[0].mxu0 %v5063
    %v5134 = vpop.f32.mrb[0].mxu0
    %v5135 = vadd.f32 %v5060, %v5134
    %v5136 = vpop.f32.mrb[0].mxu0
    %5137 = vmatprep.mubr.f32.mxu0 0.0
    %5138 = vmatmul.mubr.f32.gmra.mrb[0].mxu0 %v5066
    %v5139 = vpop.f32.mrb[0].mxu0
    %v5140 = vadd.f32 %v5060, %v5139
    %v5141 = vpop.f32.mrb[0].mxu0
    %5142 = vdwg.mxu0
    %v5143 = vadd.f32 %v4051, %v5135
    %v5144 = vadd.f32 %v4052, %v5140
    %v5145 = vld [vmem:[%s65] sm:$0x1]
    %v5146 = vld [vmem:[%s67] sm:$0x1]
    %v5147 = vsel %vm408, %v5143, 0.0
    %5148 = vadd.xlane.f32.xlu0 %v5147
    %v5149 = vpop.xlane.xlu0 %5148
    %v5150 = vsel %vm408, %v5144, 0.0
    %5151 = vadd.xlane.f32.xlu0 %v5150
    %v5152 = vpop.xlane.xlu0 %5151
    %v5153 = vmul.f32 %v5149, %v1429
    %v5154 = vmul.f32 %v5152, %v1429
    %v5155 = vsub.f32 %v5143, %v5153
    %v5156 = vsub.f32 %v5144, %v5154
    %v5157 = vmul.f32 %v5155, %v5155
    %v5158 = vmul.f32 %v5156, %v5156
    %v5159 = vsel %vm408, %v5157, 0.0
    %5160 = vadd.xlane.f32.xlu0 %v5159
    %v5161 = vpop.xlane.xlu0 %5160
    %v5162 = vsel %vm408, %v5158, 0.0
    %5163 = vadd.xlane.f32.xlu0 %v5162
    %v5164 = vpop.xlane.xlu0 %5163
    %v5165 = vmul.f32 %v5161, %v1429
    %v5166 = vmul.f32 %v5164, %v1429
    %v5167 = vadd.f32 %v5165, 1e-05
    %v5168 = vadd.f32 %v5166, 1e-05
    %v5169 = vrsqrt.pop %v5167
    %v5170 = vrsqrt.pop %v5168
    %v5171 = vmul.f32 %v5155, %v5169
    %v5172 = vmul.f32 %v5156, %v5170
    %v5174 = vlaneseq
    %v5175 = vshrl.u32 %v5174, 7
    %v5176 = vsub.s32 0, %v5175
    %v5177 = vrot.slane %v5145, %v5176
    %v5179 = vmul.f32 %v5171, %v5177
    %v5180 = vmul.f32 %v5172, %v5177
    %v5182 = vlaneseq
    %v5183 = vshrl.u32 %v5182, 7
    %v5184 = vsub.s32 0, %v5183
    %v5185 = vrot.slane %v5146, %v5184
    %v5187 = vadd.f32 %v5179, %v5185
    %v5188 = vadd.f32 %v5180, %v5185
    %v5189 = vld [vmem:[#allocation25] sm:$0xff]
    %v5190 = vld [vmem:[#allocation25 + $0x8] sm:$0xff]
    %v5191 = vld [vmem:[#allocation25 + $0x10] sm:$0xff]
    %v5192 = vld [vmem:[#allocation25 + $0x18] sm:$0xff]
    %v5193 = vld [vmem:[#allocation26] sm:$0x1]
    %v5195 = vlaneseq
    %v5196 = vshrl.u32 %v5195, 7
    %v5197 = vsub.s32 0, %v5196
    %v5198 = vrot.slane %v5193, %v5197
    %v5201 = vsel %vm408, %v5187, 0
    %v5204 = vsel %vm408, %v5188, 0
    %5206 = vmatprep.subr.mxu0 0.0
    %5207 = vmatpush1.msra.mxu0 %v5189
    %5208 = vmatprep.subr.mxu0 0.0
    %5209 = vmatpush1.msra.mxu0 %v5190
    %5210 = vmatprep.subr.mxu0 0.0
    %5211 = vmatpush1.msra.mxu0 %v5191
    %5212 = vmatprep.subr.mxu0 0.0
    %5213 = vmatpush1.msra.mxu0 %v5192
    %5214 = vmatprep.subr.mxu0 0.0
    %5215 = vmatpush1.msra.mxu0 0.0
    %5216 = vmatprep.subr.mxu0 0.0
    %5217 = vmatpush1.msra.mxu0 0.0
    %5218 = vmatprep.subr.mxu0 0.0
    %5219 = vmatpush1.msra.mxu0 0.0
    %5220 = vmatprep.subr.mxu0 0.0
    %5221 = vmatpush1.msra.mxu0 0.0
    %5222 = vmatprep.subr.mxu0 0.0
    %5223 = vmatpush1.msra.mxu0 0.0
    %5224 = vmatprep.subr.mxu0 0.0
    %5225 = vmatpush1.msra.mxu0 0.0
    %5226 = vmatprep.subr.mxu0 0.0
    %5227 = vmatpush1.msra.mxu0 0.0
    %5228 = vmatprep.subr.mxu0 0.0
    %5229 = vmatpush1.msra.mxu0 0.0
    %5230 = vmatprep.subr.mxu0 0.0
    %5231 = vmatpush1.msra.mxu0 0.0
    %5232 = vmatprep.subr.mxu0 0.0
    %5233 = vmatpush1.msra.mxu0 0.0
    %5234 = vmatprep.subr.mxu0 0.0
    %5235 = vmatpush1.msra.mxu0 0.0
    %5236 = vmatprep.subr.mxu0 0.0
    %5237 = vmatpush1.msra.mxu0 0.0
    %5238 = vmatprep.subr.mxu0 0.0
    %5239 = vmatpush1.msra.mxu0 0.0
    %5240 = vmatprep.subr.mxu0 0.0
    %5241 = vmatpush1.msra.mxu0 0.0
    %5242 = vmatprep.subr.mxu0 0.0
    %5243 = vmatpush1.msra.mxu0 0.0
    %5244 = vmatprep.subr.mxu0 0.0
    %5245 = vmatpush1.msra.mxu0 0.0
    %5246 = vmatprep.subr.mxu0 0.0
    %5247 = vmatpush1.msra.mxu0 0.0
    %5248 = vmatprep.subr.mxu0 0.0
    %5249 = vmatpush1.msra.mxu0 0.0
    %5250 = vmatprep.subr.mxu0 0.0
    %5251 = vmatpush1.msra.mxu0 0.0
    %5252 = vmatprep.subr.mxu0 0.0
    %5253 = vmatpush1.msra.mxu0 0.0
    %5254 = vmatprep.subr.mxu0 0.0
    %5255 = vmatpush1.msra.mxu0 0.0
    %5256 = vmatprep.subr.mxu0 0.0
    %5257 = vmatpush1.msra.mxu0 0.0
    %5258 = vmatprep.subr.mxu0 0.0
    %5259 = vmatpush1.msra.mxu0 0.0
    %5260 = vmatprep.subr.mxu0 0.0
    %5261 = vmatpush1.msra.mxu0 0.0
    %5262 = vmatprep.subr.mxu0 0.0
    %5263 = vmatpush1.msra.mxu0 0.0
    %5264 = vmatprep.subr.mxu0 0.0
    %5265 = vmatpush1.msra.mxu0 0.0
    %5266 = vmatprep.subr.mxu0 0.0
    %5267 = vmatpush1.msra.mxu0 0.0
    %5268 = vmatprep.subr.mxu0 0.0
    %5269 = vmatpush1.msra.mxu0 0.0
    %5270 = vmatprep.mubr.f32.mxu0 0.0
    %5271 = vmatmul.mubr.f32.gmra.mrb[0].mxu0 %v5201
    %v5272 = vpop.f32.mrb[0].mxu0
    %v5273 = vadd.f32 %v5198, %v5272
    %v5274 = vpop.f32.mrb[0].mxu0
    %5275 = vmatprep.mubr.f32.mxu0 0.0
    %5276 = vmatmul.mubr.f32.gmra.mrb[0].mxu0 %v5204
    %v5277 = vpop.f32.mrb[0].mxu0
    %v5278 = vadd.f32 %v5198, %v5277
    %v5279 = vpop.f32.mrb[0].mxu0
    %5280 = vdwg.mxu0
    %v5281 = vmax.f32 %v5273, 0.0
    %v5282 = vmax.f32 %v5278, 0.0
    %v5283 = vld [vmem:[%s57] sm:$0xff]
    %v5284 = vld [vmem:[%s57 + $0x8] sm:$0xff]
    %v5285 = vld [vmem:[%s57 + $0x10] sm:$0xff]
    %v5286 = vld [vmem:[%s57 + $0x18] sm:$0xff]
    %v5287 = vld [vmem:[%s57 + $0x20] sm:$0xff]
    %v5288 = vld [vmem:[%s57 + $0x28] sm:$0xff]
    %v5289 = vld [vmem:[%s57 + $0x30] sm:$0xff]
    %v5290 = vld [vmem:[%s57 + $0x38] sm:$0xff]
    %v5291 = vld [vmem:[%s59] sm:$0x1]
    %v5293 = vlaneseq
    %v5294 = vshrl.u32 %v5293, 7
    %v5295 = vsub.s32 0, %v5294
    %v5296 = vrot.slane %v5291, %v5295
    %v5299 = vsel %vm1575, %v5281, 0
    %v5302 = vsel %vm1575, %v5282, 0
    %5304 = vmatprep.subr.mxu0 0.0
    %5305 = vmatpush1.msra.mxu0 %v5283
    %5306 = vmatprep.subr.mxu0 0.0
    %5307 = vmatpush1.msra.mxu0 %v5284
    %5308 = vmatprep.subr.mxu0 0.0
    %5309 = vmatpush1.msra.mxu0 %v5285
    %5310 = vmatprep.subr.mxu0 0.0
    %5311 = vmatpush1.msra.mxu0 %v5286
    %5312 = vmatprep.subr.mxu0 0.0
    %5313 = vmatpush1.msra.mxu0 %v5287
    %5314 = vmatprep.subr.mxu0 0.0
    %5315 = vmatpush1.msra.mxu0 %v5288
    %5316 = vmatprep.subr.mxu0 0.0
    %5317 = vmatpush1.msra.mxu0 %v5289
    %5318 = vmatprep.subr.mxu0 0.0
    %5319 = vmatpush1.msra.mxu0 %v5290
    %5320 = vmatprep.subr.mxu0 0.0
    %5321 = vmatpush1.msra.mxu0 0.0
    %5322 = vmatprep.subr.mxu0 0.0
    %5323 = vmatpush1.msra.mxu0 0.0
    %5324 = vmatprep.subr.mxu0 0.0
    %5325 = vmatpush1.msra.mxu0 0.0
    %5326 = vmatprep.subr.mxu0 0.0
    %5327 = vmatpush1.msra.mxu0 0.0
    %5328 = vmatprep.subr.mxu0 0.0
    %5329 = vmatpush1.msra.mxu0 0.0
    %5330 = vmatprep.subr.mxu0 0.0
    %5331 = vmatpush1.msra.mxu0 0.0
    %5332 = vmatprep.subr.mxu0 0.0
    %5333 = vmatpush1.msra.mxu0 0.0
    %5334 = vmatprep.subr.mxu0 0.0
    %5335 = vmatpush1.msra.mxu0 0.0
    %5336 = vmatprep.subr.mxu0 0.0
    %5337 = vmatpush1.msra.mxu0 0.0
    %5338 = vmatprep.subr.mxu0 0.0
    %5339 = vmatpush1.msra.mxu0 0.0
    %5340 = vmatprep.subr.mxu0 0.0
    %5341 = vmatpush1.msra.mxu0 0.0
    %5342 = vmatprep.subr.mxu0 0.0
    %5343 = vmatpush1.msra.mxu0 0.0
    %5344 = vmatprep.subr.mxu0 0.0
    %5345 = vmatpush1.msra.mxu0 0.0
    %5346 = vmatprep.subr.mxu0 0.0
    %5347 = vmatpush1.msra.mxu0 0.0
    %5348 = vmatprep.subr.mxu0 0.0
    %5349 = vmatpush1.msra.mxu0 0.0
    %5350 = vmatprep.subr.mxu0 0.0
    %5351 = vmatpush1.msra.mxu0 0.0
    %5352 = vmatprep.subr.mxu0 0.0
    %5353 = vmatpush1.msra.mxu0 0.0
    %5354 = vmatprep.subr.mxu0 0.0
    %5355 = vmatpush1.msra.mxu0 0.0
    %5356 = vmatprep.subr.mxu0 0.0
    %5357 = vmatpush1.msra.mxu0 0.0
    %5358 = vmatprep.subr.mxu0 0.0
    %5359 = vmatpush1.msra.mxu0 0.0
    %5360 = vmatprep.subr.mxu0 0.0
    %5361 = vmatpush1.msra.mxu0 0.0
    %5362 = vmatprep.subr.mxu0 0.0
    %5363 = vmatpush1.msra.mxu0 0.0
    %5364 = vmatprep.subr.mxu0 0.0
    %5365 = vmatpush1.msra.mxu0 0.0
    %5366 = vmatprep.subr.mxu0 0.0
    %5367 = vmatpush1.msra.mxu0 0.0
    %5368 = vmatprep.mubr.f32.mxu0 0.0
    %5369 = vmatmul.mubr.f32.gmra.mrb[0].mxu0 %v5299
    %v5370 = vpop.f32.mrb[0].mxu0
    %v5371 = vadd.f32 %v5296, %v5370
    %v5372 = vpop.f32.mrb[0].mxu0
    %5373 = vmatprep.mubr.f32.mxu0 0.0
    %5374 = vmatmul.mubr.f32.gmra.mrb[0].mxu0 %v5302
    %v5375 = vpop.f32.mrb[0].mxu0
    %v5376 = vadd.f32 %v5296, %v5375
    %v5377 = vpop.f32.mrb[0].mxu0
    %5378 = vdwg.mxu0
    %v5379 = vadd.f32 %v5187, %v5371
    %v5380 = vadd.f32 %v5188, %v5376
    %v5381 = vld [vmem:[%s69] sm:$0x1]
    %v5382 = vld [vmem:[%s71] sm:$0x1]
    %v5383 = vsel %vm408, %v5379, 0.0
    %5384 = vadd.xlane.f32.xlu0 %v5383
    %v5385 = vpop.xlane.xlu0 %5384
    %v5386 = vsel %vm408, %v5380, 0.0
    %5387 = vadd.xlane.f32.xlu0 %v5386
    %v5388 = vpop.xlane.xlu0 %5387
    %v5389 = vmul.f32 %v5385, %v1429
    %v5390 = vmul.f32 %v5388, %v1429
    %v5391 = vsub.f32 %v5379, %v5389
    %v5392 = vsub.f32 %v5380, %v5390
    %v5393 = vmul.f32 %v5391, %v5391
    %v5394 = vmul.f32 %v5392, %v5392
    %v5395 = vsel %vm408, %v5393, 0.0
    %5396 = vadd.xlane.f32.xlu0 %v5395
    %v5397 = vpop.xlane.xlu0 %5396
    %v5398 = vsel %vm408, %v5394, 0.0
    %5399 = vadd.xlane.f32.xlu0 %v5398
    %v5400 = vpop.xlane.xlu0 %5399
    %v5401 = vmul.f32 %v5397, %v1429
    %v5402 = vmul.f32 %v5400, %v1429
    %v5403 = vadd.f32 %v5401, 1e-05
    %v5404 = vadd.f32 %v5402, 1e-05
    %v5405 = vrsqrt.pop %v5403
    %v5406 = vrsqrt.pop %v5404
    %v5407 = vmul.f32 %v5391, %v5405
    %v5408 = vmul.f32 %v5392, %v5406
    %v5410 = vlaneseq
    %v5411 = vshrl.u32 %v5410, 7
    %v5412 = vsub.s32 0, %v5411
    %v5413 = vrot.slane %v5381, %v5412
    %v5415 = vmul.f32 %v5407, %v5413
    %v5416 = vmul.f32 %v5408, %v5413
    %v5418 = vlaneseq
    %v5419 = vshrl.u32 %v5418, 7
    %v5420 = vsub.s32 0, %v5419
    %v5421 = vrot.slane %v5382, %v5420
    %v5423 = vadd.f32 %v5415, %v5421
    %v5424 = vadd.f32 %v5416, %v5421
    %s5425 = scalar_lea.vmem %s37, 32
    %v5426 = vld [vmem:[%s5425] sm:$0xff]
    %v5427 = vld [vmem:[%s5425 + $0x8] sm:$0xff]
    %v5428 = vld [vmem:[%s5425 + $0x10] sm:$0xff]
    %v5429 = vld [vmem:[%s5425 + $0x18] sm:$0xff]
    %s5430 = scalar_lea.vmem [#allocation19], 1
    %v5431 = vld [vmem:[%s5430] sm:$0x1]
    %s5432 = scalar_lea.vmem %s41, 32
    %v5433 = vld [vmem:[%s5432] sm:$0xff]
    %v5434 = vld [vmem:[%s5432 + $0x8] sm:$0xff]
    %v5435 = vld [vmem:[%s5432 + $0x10] sm:$0xff]
    %v5436 = vld [vmem:[%s5432 + $0x18] sm:$0xff]
    %s5437 = scalar_lea.vmem [#allocation20], 1
    %v5438 = vld [vmem:[%s5437] sm:$0x1]
    %v5440 = vlaneseq
    %v5441 = vshrl.u32 %v5440, 7
    %v5442 = vsub.s32 0, %v5441
    %v5443 = vrot.slane %v5431, %v5442
    %v5446 = vsel %vm408, %v5423, 0
    %v5449 = vsel %vm408, %v5424, 0
    %5451 = vmatprep.subr.mxu0 0.0
    %5452 = vmatpush1.msra.mxu0 %v5426
    %5453 = vmatprep.subr.mxu0 0.0
    %5454 = vmatpush1.msra.mxu0 %v5427
    %5455 = vmatprep.subr.mxu0 0.0
    %5456 = vmatpush1.msra.mxu0 %v5428
    %5457 = vmatprep.subr.mxu0 0.0
    %5458 = vmatpush1.msra.mxu0 %v5429
    %5459 = vmatprep.subr.mxu0 0.0
    %5460 = vmatpush1.msra.mxu0 0.0
    %5461 = vmatprep.subr.mxu0 0.0
    %5462 = vmatpush1.msra.mxu0 0.0
    %5463 = vmatprep.subr.mxu0 0.0
    %5464 = vmatpush1.msra.mxu0 0.0
    %5465 = vmatprep.subr.mxu0 0.0
    %5466 = vmatpush1.msra.mxu0 0.0
    %5467 = vmatprep.subr.mxu0 0.0
    %5468 = vmatpush1.msra.mxu0 0.0
    %5469 = vmatprep.subr.mxu0 0.0
    %5470 = vmatpush1.msra.mxu0 0.0
    %5471 = vmatprep.subr.mxu0 0.0
    %5472 = vmatpush1.msra.mxu0 0.0
    %5473 = vmatprep.subr.mxu0 0.0
    %5474 = vmatpush1.msra.mxu0 0.0
    %5475 = vmatprep.subr.mxu0 0.0
    %5476 = vmatpush1.msra.mxu0 0.0
    %5477 = vmatprep.subr.mxu0 0.0
    %5478 = vmatpush1.msra.mxu0 0.0
    %5479 = vmatprep.subr.mxu0 0.0
    %5480 = vmatpush1.msra.mxu0 0.0
    %5481 = vmatprep.subr.mxu0 0.0
    %5482 = vmatpush1.msra.mxu0 0.0
    %5483 = vmatprep.subr.mxu0 0.0
    %5484 = vmatpush1.msra.mxu0 0.0
    %5485 = vmatprep.subr.mxu0 0.0
    %5486 = vmatpush1.msra.mxu0 0.0
    %5487 = vmatprep.subr.mxu0 0.0
    %5488 = vmatpush1.msra.mxu0 0.0
    %5489 = vmatprep.subr.mxu0 0.0
    %5490 = vmatpush1.msra.mxu0 0.0
    %5491 = vmatprep.subr.mxu0 0.0
    %5492 = vmatpush1.msra.mxu0 0.0
    %5493 = vmatprep.subr.mxu0 0.0
    %5494 = vmatpush1.msra.mxu0 0.0
    %5495 = vmatprep.subr.mxu0 0.0
    %5496 = vmatpush1.msra.mxu0 0.0
    %5497 = vmatprep.subr.mxu0 0.0
    %5498 = vmatpush1.msra.mxu0 0.0
    %5499 = vmatprep.subr.mxu0 0.0
    %5500 = vmatpush1.msra.mxu0 0.0
    %5501 = vmatprep.subr.mxu0 0.0
    %5502 = vmatpush1.msra.mxu0 0.0
    %5503 = vmatprep.subr.mxu0 0.0
    %5504 = vmatpush1.msra.mxu0 0.0
    %5505 = vmatprep.subr.mxu0 0.0
    %5506 = vmatpush1.msra.mxu0 0.0
    %5507 = vmatprep.subr.mxu0 0.0
    %5508 = vmatpush1.msra.mxu0 0.0
    %5509 = vmatprep.subr.mxu0 0.0
    %5510 = vmatpush1.msra.mxu0 0.0
    %5511 = vmatprep.subr.mxu0 0.0
    %5512 = vmatpush1.msra.mxu0 0.0
    %5513 = vmatprep.subr.mxu0 0.0
    %5514 = vmatpush1.msra.mxu0 0.0
    %5515 = vmatprep.mubr.f32.mxu0 0.0
    %5516 = vmatmul.mubr.f32.gmra.mrb[0].mxu0 %v5446
    %v5517 = vpop.f32.mrb[0].mxu0
    %v5518 = vadd.f32 %v5443, %v5517
    %v5519 = vpop.f32.mrb[0].mxu0
    %5520 = vmatprep.mubr.f32.mxu0 0.0
    %5521 = vmatmul.mubr.f32.gmra.mrb[0].mxu0 %v5449
    %v5522 = vpop.f32.mrb[0].mxu0
    %v5523 = vadd.f32 %v5443, %v5522
    %v5524 = vpop.f32.mrb[0].mxu0
    %5525 = vdwg.mxu0
    %v5526 = vmul.f32 %v5518, %v495
    %v5527 = vmul.f32 %v5523, %v495
    %5530 = vrot.lane.b32.xlu0 %v5518, 96
    %v5531 = vpop.permute.xlu0 %5530
    %5532 = vrot.lane.b32.xlu0 %v5523, 96
    %v5533 = vpop.permute.xlu0 %5532
    %v5535 = vsel %vm408, %v5526, 0
    %v5538 = vsel %vm408, %v5527, 0
    %v5540 = vsel %vm408, %v5531, 0
    %v5542 = vsel %vm408, %v5533, 0
    %5544 = vmatprep.subr.mxu0 0.0
    %5545 = vmatpush1.xpose.msra.mxu0 %v5540
    %5546 = vmatprep.subr.mxu0 0.0
    %5547 = vmatpush1.xpose.msra.mxu0 %v5542
    %5548 = vmatprep.subr.mxu0 0.0
    %5549 = vmatpush1.xpose.msra.mxu0 0.0
    %5550 = vmatprep.subr.mxu0 0.0
    %5551 = vmatpush1.xpose.msra.mxu0 0.0
    %5552 = vmatprep.subr.mxu0 0.0
    %5553 = vmatpush1.xpose.msra.mxu0 0.0
    %5554 = vmatprep.subr.mxu0 0.0
    %5555 = vmatpush1.xpose.msra.mxu0 0.0
    %5556 = vmatprep.subr.mxu0 0.0
    %5557 = vmatpush1.xpose.msra.mxu0 0.0
    %5558 = vmatprep.subr.mxu0 0.0
    %5559 = vmatpush1.xpose.msra.mxu0 0.0
    %5560 = vmatprep.subr.mxu0 0.0
    %5561 = vmatpush1.xpose.msra.mxu0 0.0
    %5562 = vmatprep.subr.mxu0 0.0
    %5563 = vmatpush1.xpose.msra.mxu0 0.0
    %5564 = vmatprep.subr.mxu0 0.0
    %5565 = vmatpush1.xpose.msra.mxu0 0.0
    %5566 = vmatprep.subr.mxu0 0.0
    %5567 = vmatpush1.xpose.msra.mxu0 0.0
    %5568 = vmatprep.subr.mxu0 0.0
    %5569 = vmatpush1.xpose.msra.mxu0 0.0
    %5570 = vmatprep.subr.mxu0 0.0
    %5571 = vmatpush1.xpose.msra.mxu0 0.0
    %5572 = vmatprep.subr.mxu0 0.0
    %5573 = vmatpush1.xpose.msra.mxu0 0.0
    %5574 = vmatprep.subr.mxu0 0.0
    %5575 = vmatpush1.xpose.msra.mxu0 0.0
    %5576 = vmatprep.subr.mxu0 0.0
    %5577 = vmatpush1.xpose.msra.mxu0 0.0
    %5578 = vmatprep.subr.mxu0 0.0
    %5579 = vmatpush1.xpose.msra.mxu0 0.0
    %5580 = vmatprep.subr.mxu0 0.0
    %5581 = vmatpush1.xpose.msra.mxu0 0.0
    %5582 = vmatprep.subr.mxu0 0.0
    %5583 = vmatpush1.xpose.msra.mxu0 0.0
    %5584 = vmatprep.subr.mxu0 0.0
    %5585 = vmatpush1.xpose.msra.mxu0 0.0
    %5586 = vmatprep.subr.mxu0 0.0
    %5587 = vmatpush1.xpose.msra.mxu0 0.0
    %5588 = vmatprep.subr.mxu0 0.0
    %5589 = vmatpush1.xpose.msra.mxu0 0.0
    %5590 = vmatprep.subr.mxu0 0.0
    %5591 = vmatpush1.xpose.msra.mxu0 0.0
    %5592 = vmatprep.subr.mxu0 0.0
    %5593 = vmatpush1.xpose.msra.mxu0 0.0
    %5594 = vmatprep.subr.mxu0 0.0
    %5595 = vmatpush1.xpose.msra.mxu0 0.0
    %5596 = vmatprep.subr.mxu0 0.0
    %5597 = vmatpush1.xpose.msra.mxu0 0.0
    %5598 = vmatprep.subr.mxu0 0.0
    %5599 = vmatpush1.xpose.msra.mxu0 0.0
    %5600 = vmatprep.subr.mxu0 0.0
    %5601 = vmatpush1.xpose.msra.mxu0 0.0
    %5602 = vmatprep.subr.mxu0 0.0
    %5603 = vmatpush1.xpose.msra.mxu0 0.0
    %5604 = vmatprep.subr.mxu0 0.0
    %5605 = vmatpush1.xpose.msra.mxu0 0.0
    %5606 = vmatprep.subr.mxu0 0.0
    %5607 = vmatpush1.xpose.msra.mxu0 0.0
    %5608 = vmatprep.mubr.f32.mxu0 0.0
    %5609 = vmatmul.mubr.f32.gmra.mrb[0].mxu0 %v5535
    %v5610 = vpop.f32.mrb[0].mxu0
    %v5611 = vadd.f32 %v386, %v5610
    %v5612 = vpop.f32.mrb[0].mxu0
    %5613 = vmatprep.mubr.f32.mxu0 0.0
    %5614 = vmatmul.mubr.f32.gmra.mrb[0].mxu0 %v5538
    %v5615 = vpop.f32.mrb[0].mxu0
    %v5616 = vadd.f32 %v387, %v5615
    %v5617 = vpop.f32.mrb[0].mxu0
    %5618 = vdwg.mxu0
    %v5619 = vsel %vm590, %v5611, -inf
    %5620 = vmax.xlane.f32.xlu0 %v5619
    %v5621 = vpop.xlane.xlu0 %5620
    %v5622 = vsel %vm590, %v5616, -inf
    %5623 = vmax.xlane.f32.xlu0 %v5622
    %v5624 = vpop.xlane.xlu0 %5623
    %v5625 = vsub.f32 %v5611, %v5621
    %v5626 = vsub.f32 %v5616, %v5624
    %v5627 = vmul.f32 %v5625, 1.442695
    %v5628 = vpow.pop %v5627
    %v5629 = vmul.f32 %v5626, 1.442695
    %v5630 = vpow.pop %v5629
    %v5631 = vsel %vm590, %v5628, 0.0
    %5632 = vadd.xlane.f32.xlu0 %v5631
    %v5633 = vpop.xlane.xlu0 %5632
    %v5634 = vsel %vm590, %v5630, 0.0
    %5635 = vadd.xlane.f32.xlu0 %v5634
    %v5636 = vpop.xlane.xlu0 %5635
    %v5637 = vrcp.pop %v5633
    %v5638 = vrcp.pop %v5636
    %v5639 = vmul.f32 %v5628, %v5637
    %v5640 = vmul.f32 %v5630, %v5638
    %v5641 = vmul.f32 %v5518, %v614
    %v5642 = vmul.f32 %v5523, %v614
    %v5643 = vmul.f32 %v5518, %v624
    %v5644 = vmul.f32 %v5523, %v624
    %v5646 = vsel %vm408, %v5643, 0
    %v5649 = vsel %vm408, %v5644, 0
    %5651 = vmatprep.subr.mxu0 0.0
    %5652 = vmatpush1.xpose.msra.mxu0 %v5540
    %5653 = vmatprep.subr.mxu0 0.0
    %5654 = vmatpush1.xpose.msra.mxu0 %v5542
    %5655 = vmatprep.subr.mxu0 0.0
    %5656 = vmatpush1.xpose.msra.mxu0 0.0
    %5657 = vmatprep.subr.mxu0 0.0
    %5658 = vmatpush1.xpose.msra.mxu0 0.0
    %5659 = vmatprep.subr.mxu0 0.0
    %5660 = vmatpush1.xpose.msra.mxu0 0.0
    %5661 = vmatprep.subr.mxu0 0.0
    %5662 = vmatpush1.xpose.msra.mxu0 0.0
    %5663 = vmatprep.subr.mxu0 0.0
    %5664 = vmatpush1.xpose.msra.mxu0 0.0
    %5665 = vmatprep.subr.mxu0 0.0
    %5666 = vmatpush1.xpose.msra.mxu0 0.0
    %5667 = vmatprep.subr.mxu0 0.0
    %5668 = vmatpush1.xpose.msra.mxu0 0.0
    %5669 = vmatprep.subr.mxu0 0.0
    %5670 = vmatpush1.xpose.msra.mxu0 0.0
    %5671 = vmatprep.subr.mxu0 0.0
    %5672 = vmatpush1.xpose.msra.mxu0 0.0
    %5673 = vmatprep.subr.mxu0 0.0
    %5674 = vmatpush1.xpose.msra.mxu0 0.0
    %5675 = vmatprep.subr.mxu0 0.0
    %5676 = vmatpush1.xpose.msra.mxu0 0.0
    %5677 = vmatprep.subr.mxu0 0.0
    %5678 = vmatpush1.xpose.msra.mxu0 0.0
    %5679 = vmatprep.subr.mxu0 0.0
    %5680 = vmatpush1.xpose.msra.mxu0 0.0
    %5681 = vmatprep.subr.mxu0 0.0
    %5682 = vmatpush1.xpose.msra.mxu0 0.0
    %5683 = vmatprep.subr.mxu0 0.0
    %5684 = vmatpush1.xpose.msra.mxu0 0.0
    %5685 = vmatprep.subr.mxu0 0.0
    %5686 = vmatpush1.xpose.msra.mxu0 0.0
    %5687 = vmatprep.subr.mxu0 0.0
    %5688 = vmatpush1.xpose.msra.mxu0 0.0
    %5689 = vmatprep.subr.mxu0 0.0
    %5690 = vmatpush1.xpose.msra.mxu0 0.0
    %5691 = vmatprep.subr.mxu0 0.0
    %5692 = vmatpush1.xpose.msra.mxu0 0.0
    %5693 = vmatprep.subr.mxu0 0.0
    %5694 = vmatpush1.xpose.msra.mxu0 0.0
    %5695 = vmatprep.subr.mxu0 0.0
    %5696 = vmatpush1.xpose.msra.mxu0 0.0
    %5697 = vmatprep.subr.mxu0 0.0
    %5698 = vmatpush1.xpose.msra.mxu0 0.0
    %5699 = vmatprep.subr.mxu0 0.0
    %5700 = vmatpush1.xpose.msra.mxu0 0.0
    %5701 = vmatprep.subr.mxu0 0.0
    %5702 = vmatpush1.xpose.msra.mxu0 0.0
    %5703 = vmatprep.subr.mxu0 0.0
    %5704 = vmatpush1.xpose.msra.mxu0 0.0
    %5705 = vmatprep.subr.mxu0 0.0
    %5706 = vmatpush1.xpose.msra.mxu0 0.0
    %5707 = vmatprep.subr.mxu0 0.0
    %5708 = vmatpush1.xpose.msra.mxu0 0.0
    %5709 = vmatprep.subr.mxu0 0.0
    %5710 = vmatpush1.xpose.msra.mxu0 0.0
    %5711 = vmatprep.subr.mxu0 0.0
    %5712 = vmatpush1.xpose.msra.mxu0 0.0
    %5713 = vmatprep.subr.mxu0 0.0
    %5714 = vmatpush1.xpose.msra.mxu0 0.0
    %5715 = vmatprep.mubr.f32.mxu0 0.0
    %5716 = vmatmul.mubr.f32.gmra.mrb[0].mxu0 %v5646
    %v5717 = vpop.f32.mrb[0].mxu0
    %v5718 = vadd.f32 %v386, %v5717
    %v5719 = vpop.f32.mrb[0].mxu0
    %5720 = vmatprep.mubr.f32.mxu0 0.0
    %5721 = vmatmul.mubr.f32.gmra.mrb[0].mxu0 %v5649
    %v5722 = vpop.f32.mrb[0].mxu0
    %v5723 = vadd.f32 %v387, %v5722
    %v5724 = vpop.f32.mrb[0].mxu0
    %5725 = vdwg.mxu0
    %v5726 = vsel %vm590, %v5718, -inf
    %5727 = vmax.xlane.f32.xlu0 %v5726
    %v5728 = vpop.xlane.xlu0 %5727
    %v5729 = vsel %vm590, %v5723, -inf
    %5730 = vmax.xlane.f32.xlu0 %v5729
    %v5731 = vpop.xlane.xlu0 %5730
    %v5732 = vsub.f32 %v5718, %v5728
    %v5733 = vsub.f32 %v5723, %v5731
    %v5734 = vmul.f32 %v5732, 1.442695
    %v5735 = vpow.pop %v5734
    %v5736 = vmul.f32 %v5733, 1.442695
    %v5737 = vpow.pop %v5736
    %v5738 = vsel %vm590, %v5735, 0.0
    %5739 = vadd.xlane.f32.xlu0 %v5738
    %v5740 = vpop.xlane.xlu0 %5739
    %v5741 = vsel %vm590, %v5737, 0.0
    %5742 = vadd.xlane.f32.xlu0 %v5741
    %v5743 = vpop.xlane.xlu0 %5742
    %v5744 = vrcp.pop %v5740
    %v5745 = vrcp.pop %v5743
    %v5746 = vmul.f32 %v5735, %v5744
    %v5747 = vmul.f32 %v5737, %v5745
    %v5748 = vmul.f32 %v5518, %v732
    %v5749 = vmul.f32 %v5523, %v732
    %5752 = vrot.lane.b32.xlu0 %v5748, 64
    %v5753 = vpop.permute.xlu0 %5752
    %5754 = vrot.lane.b32.xlu0 %v5749, 64
    %v5755 = vpop.permute.xlu0 %5754
    %v5759 = vsel %vm590, %v5746, 0
    %v5762 = vsel %vm590, %v5747, 0
    %5764 = vmatprep.subr.mxu0 0.0
    %5765 = vmatpush1.msra.mxu0 %v5753
    %5766 = vmatprep.subr.mxu0 0.0
    %5767 = vmatpush1.msra.mxu0 %v5755
    %5768 = vmatprep.subr.mxu0 0.0
    %5769 = vmatpush1.msra.mxu0 0.0
    %5770 = vmatprep.subr.mxu0 0.0
    %5771 = vmatpush1.msra.mxu0 0.0
    %5772 = vmatprep.subr.mxu0 0.0
    %5773 = vmatpush1.msra.mxu0 0.0
    %5774 = vmatprep.subr.mxu0 0.0
    %5775 = vmatpush1.msra.mxu0 0.0
    %5776 = vmatprep.subr.mxu0 0.0
    %5777 = vmatpush1.msra.mxu0 0.0
    %5778 = vmatprep.subr.mxu0 0.0
    %5779 = vmatpush1.msra.mxu0 0.0
    %5780 = vmatprep.subr.mxu0 0.0
    %5781 = vmatpush1.msra.mxu0 0.0
    %5782 = vmatprep.subr.mxu0 0.0
    %5783 = vmatpush1.msra.mxu0 0.0
    %5784 = vmatprep.subr.mxu0 0.0
    %5785 = vmatpush1.msra.mxu0 0.0
    %5786 = vmatprep.subr.mxu0 0.0
    %5787 = vmatpush1.msra.mxu0 0.0
    %5788 = vmatprep.subr.mxu0 0.0
    %5789 = vmatpush1.msra.mxu0 0.0
    %5790 = vmatprep.subr.mxu0 0.0
    %5791 = vmatpush1.msra.mxu0 0.0
    %5792 = vmatprep.subr.mxu0 0.0
    %5793 = vmatpush1.msra.mxu0 0.0
    %5794 = vmatprep.subr.mxu0 0.0
    %5795 = vmatpush1.msra.mxu0 0.0
    %5796 = vmatprep.subr.mxu0 0.0
    %5797 = vmatpush1.msra.mxu0 0.0
    %5798 = vmatprep.subr.mxu0 0.0
    %5799 = vmatpush1.msra.mxu0 0.0
    %5800 = vmatprep.subr.mxu0 0.0
    %5801 = vmatpush1.msra.mxu0 0.0
    %5802 = vmatprep.subr.mxu0 0.0
    %5803 = vmatpush1.msra.mxu0 0.0
    %5804 = vmatprep.subr.mxu0 0.0
    %5805 = vmatpush1.msra.mxu0 0.0
    %5806 = vmatprep.subr.mxu0 0.0
    %5807 = vmatpush1.msra.mxu0 0.0
    %5808 = vmatprep.subr.mxu0 0.0
    %5809 = vmatpush1.msra.mxu0 0.0
    %5810 = vmatprep.subr.mxu0 0.0
    %5811 = vmatpush1.msra.mxu0 0.0
    %5812 = vmatprep.subr.mxu0 0.0
    %5813 = vmatpush1.msra.mxu0 0.0
    %5814 = vmatprep.subr.mxu0 0.0
    %5815 = vmatpush1.msra.mxu0 0.0
    %5816 = vmatprep.subr.mxu0 0.0
    %5817 = vmatpush1.msra.mxu0 0.0
    %5818 = vmatprep.subr.mxu0 0.0
    %5819 = vmatpush1.msra.mxu0 0.0
    %5820 = vmatprep.subr.mxu0 0.0
    %5821 = vmatpush1.msra.mxu0 0.0
    %5822 = vmatprep.subr.mxu0 0.0
    %5823 = vmatpush1.msra.mxu0 0.0
    %5824 = vmatprep.subr.mxu0 0.0
    %5825 = vmatpush1.msra.mxu0 0.0
    %5826 = vmatprep.subr.mxu0 0.0
    %5827 = vmatpush1.msra.mxu0 0.0
    %5828 = vmatprep.mubr.f32.mxu0 0.0
    %5829 = vmatmul.mubr.f32.gmra.mrb[0].mxu0 %v5759
    %v5830 = vpop.f32.mrb[0].mxu0
    %v5831 = vadd.f32 0.0, %v5830
    %v5832 = vpop.f32.mrb[0].mxu0
    %5833 = vmatprep.mubr.f32.mxu0 0.0
    %5834 = vmatmul.mubr.f32.gmra.mrb[0].mxu0 %v5762
    %v5835 = vpop.f32.mrb[0].mxu0
    %v5836 = vadd.f32 0.0, %v5835
    %v5837 = vpop.f32.mrb[0].mxu0
    %5838 = vdwg.mxu0
    %5841 = vrot.lane.b32.xlu0 %v5641, 64
    %v5842 = vpop.permute.xlu0 %5841
    %5843 = vrot.lane.b32.xlu0 %v5642, 64
    %v5844 = vpop.permute.xlu0 %5843
    %v5848 = vsel %vm590, %v5639, 0
    %v5851 = vsel %vm590, %v5640, 0
    %5853 = vmatprep.subr.mxu0 0.0
    %5854 = vmatpush1.msra.mxu0 %v5842
    %5855 = vmatprep.subr.mxu0 0.0
    %5856 = vmatpush1.msra.mxu0 %v5844
    %5857 = vmatprep.subr.mxu0 0.0
    %5858 = vmatpush1.msra.mxu0 0.0
    %5859 = vmatprep.subr.mxu0 0.0
    %5860 = vmatpush1.msra.mxu0 0.0
    %5861 = vmatprep.subr.mxu0 0.0
    %5862 = vmatpush1.msra.mxu0 0.0
    %5863 = vmatprep.subr.mxu0 0.0
    %5864 = vmatpush1.msra.mxu0 0.0
    %5865 = vmatprep.subr.mxu0 0.0
    %5866 = vmatpush1.msra.mxu0 0.0
    %5867 = vmatprep.subr.mxu0 0.0
    %5868 = vmatpush1.msra.mxu0 0.0
    %5869 = vmatprep.subr.mxu0 0.0
    %5870 = vmatpush1.msra.mxu0 0.0
    %5871 = vmatprep.subr.mxu0 0.0
    %5872 = vmatpush1.msra.mxu0 0.0
    %5873 = vmatprep.subr.mxu0 0.0
    %5874 = vmatpush1.msra.mxu0 0.0
    %5875 = vmatprep.subr.mxu0 0.0
    %5876 = vmatpush1.msra.mxu0 0.0
    %5877 = vmatprep.subr.mxu0 0.0
    %5878 = vmatpush1.msra.mxu0 0.0
    %5879 = vmatprep.subr.mxu0 0.0
    %5880 = vmatpush1.msra.mxu0 0.0
    %5881 = vmatprep.subr.mxu0 0.0
    %5882 = vmatpush1.msra.mxu0 0.0
    %5883 = vmatprep.subr.mxu0 0.0
    %5884 = vmatpush1.msra.mxu0 0.0
    %5885 = vmatprep.subr.mxu0 0.0
    %5886 = vmatpush1.msra.mxu0 0.0
    %5887 = vmatprep.subr.mxu0 0.0
    %5888 = vmatpush1.msra.mxu0 0.0
    %5889 = vmatprep.subr.mxu0 0.0
    %5890 = vmatpush1.msra.mxu0 0.0
    %5891 = vmatprep.subr.mxu0 0.0
    %5892 = vmatpush1.msra.mxu0 0.0
    %5893 = vmatprep.subr.mxu0 0.0
    %5894 = vmatpush1.msra.mxu0 0.0
    %5895 = vmatprep.subr.mxu0 0.0
    %5896 = vmatpush1.msra.mxu0 0.0
    %5897 = vmatprep.subr.mxu0 0.0
    %5898 = vmatpush1.msra.mxu0 0.0
    %5899 = vmatprep.subr.mxu0 0.0
    %5900 = vmatpush1.msra.mxu0 0.0
    %5901 = vmatprep.subr.mxu0 0.0
    %5902 = vmatpush1.msra.mxu0 0.0
    %5903 = vmatprep.subr.mxu0 0.0
    %5904 = vmatpush1.msra.mxu0 0.0
    %5905 = vmatprep.subr.mxu0 0.0
    %5906 = vmatpush1.msra.mxu0 0.0
    %5907 = vmatprep.subr.mxu0 0.0
    %5908 = vmatpush1.msra.mxu0 0.0
    %5909 = vmatprep.subr.mxu0 0.0
    %5910 = vmatpush1.msra.mxu0 0.0
    %5911 = vmatprep.subr.mxu0 0.0
    %5912 = vmatpush1.msra.mxu0 0.0
    %5913 = vmatprep.subr.mxu0 0.0
    %5914 = vmatpush1.msra.mxu0 0.0
    %5915 = vmatprep.subr.mxu0 0.0
    %5916 = vmatpush1.msra.mxu0 0.0
    %5917 = vmatprep.mubr.f32.mxu0 0.0
    %5918 = vmatmul.mubr.f32.gmra.mrb[0].mxu0 %v5848
    %v5919 = vpop.f32.mrb[0].mxu0
    %v5920 = vadd.f32 %v5831, %v5919
    %v5921 = vpop.f32.mrb[0].mxu0
    %5922 = vmatprep.mubr.f32.mxu0 0.0
    %5923 = vmatmul.mubr.f32.gmra.mrb[0].mxu0 %v5851
    %v5924 = vpop.f32.mrb[0].mxu0
    %v5925 = vadd.f32 %v5836, %v5924
    %v5926 = vpop.f32.mrb[0].mxu0
    %5927 = vdwg.mxu0
    %v5928 = vmul.f32 %v5518, %v920
    %v5929 = vmul.f32 %v5523, %v920
    %v5931 = vsel %vm408, %v5928, 0
    %v5934 = vsel %vm408, %v5929, 0
    %5936 = vmatprep.subr.mxu0 0.0
    %5937 = vmatpush1.xpose.msra.mxu0 %v5540
    %5938 = vmatprep.subr.mxu0 0.0
    %5939 = vmatpush1.xpose.msra.mxu0 %v5542
    %5940 = vmatprep.subr.mxu0 0.0
    %5941 = vmatpush1.xpose.msra.mxu0 0.0
    %5942 = vmatprep.subr.mxu0 0.0
    %5943 = vmatpush1.xpose.msra.mxu0 0.0
    %5944 = vmatprep.subr.mxu0 0.0
    %5945 = vmatpush1.xpose.msra.mxu0 0.0
    %5946 = vmatprep.subr.mxu0 0.0
    %5947 = vmatpush1.xpose.msra.mxu0 0.0
    %5948 = vmatprep.subr.mxu0 0.0
    %5949 = vmatpush1.xpose.msra.mxu0 0.0
    %5950 = vmatprep.subr.mxu0 0.0
    %5951 = vmatpush1.xpose.msra.mxu0 0.0
    %5952 = vmatprep.subr.mxu0 0.0
    %5953 = vmatpush1.xpose.msra.mxu0 0.0
    %5954 = vmatprep.subr.mxu0 0.0
    %5955 = vmatpush1.xpose.msra.mxu0 0.0
    %5956 = vmatprep.subr.mxu0 0.0
    %5957 = vmatpush1.xpose.msra.mxu0 0.0
    %5958 = vmatprep.subr.mxu0 0.0
    %5959 = vmatpush1.xpose.msra.mxu0 0.0
    %5960 = vmatprep.subr.mxu0 0.0
    %5961 = vmatpush1.xpose.msra.mxu0 0.0
    %5962 = vmatprep.subr.mxu0 0.0
    %5963 = vmatpush1.xpose.msra.mxu0 0.0
    %5964 = vmatprep.subr.mxu0 0.0
    %5965 = vmatpush1.xpose.msra.mxu0 0.0
    %5966 = vmatprep.subr.mxu0 0.0
    %5967 = vmatpush1.xpose.msra.mxu0 0.0
    %5968 = vmatprep.subr.mxu0 0.0
    %5969 = vmatpush1.xpose.msra.mxu0 0.0
    %5970 = vmatprep.subr.mxu0 0.0
    %5971 = vmatpush1.xpose.msra.mxu0 0.0
    %5972 = vmatprep.subr.mxu0 0.0
    %5973 = vmatpush1.xpose.msra.mxu0 0.0
    %5974 = vmatprep.subr.mxu0 0.0
    %5975 = vmatpush1.xpose.msra.mxu0 0.0
    %5976 = vmatprep.subr.mxu0 0.0
    %5977 = vmatpush1.xpose.msra.mxu0 0.0
    %5978 = vmatprep.subr.mxu0 0.0
    %5979 = vmatpush1.xpose.msra.mxu0 0.0
    %5980 = vmatprep.subr.mxu0 0.0
    %5981 = vmatpush1.xpose.msra.mxu0 0.0
    %5982 = vmatprep.subr.mxu0 0.0
    %5983 = vmatpush1.xpose.msra.mxu0 0.0
    %5984 = vmatprep.subr.mxu0 0.0
    %5985 = vmatpush1.xpose.msra.mxu0 0.0
    %5986 = vmatprep.subr.mxu0 0.0
    %5987 = vmatpush1.xpose.msra.mxu0 0.0
    %5988 = vmatprep.subr.mxu0 0.0
    %5989 = vmatpush1.xpose.msra.mxu0 0.0
    %5990 = vmatprep.subr.mxu0 0.0
    %5991 = vmatpush1.xpose.msra.mxu0 0.0
    %5992 = vmatprep.subr.mxu0 0.0
    %5993 = vmatpush1.xpose.msra.mxu0 0.0
    %5994 = vmatprep.subr.mxu0 0.0
    %5995 = vmatpush1.xpose.msra.mxu0 0.0
    %5996 = vmatprep.subr.mxu0 0.0
    %5997 = vmatpush1.xpose.msra.mxu0 0.0
    %5998 = vmatprep.subr.mxu0 0.0
    %5999 = vmatpush1.xpose.msra.mxu0 0.0
    %6000 = vmatprep.mubr.f32.mxu0 0.0
    %6001 = vmatmul.mubr.f32.gmra.mrb[0].mxu0 %v5931
    %v6002 = vpop.f32.mrb[0].mxu0
    %v6003 = vadd.f32 %v386, %v6002
    %v6004 = vpop.f32.mrb[0].mxu0
    %6005 = vmatprep.mubr.f32.mxu0 0.0
    %6006 = vmatmul.mubr.f32.gmra.mrb[0].mxu0 %v5934
    %v6007 = vpop.f32.mrb[0].mxu0
    %v6008 = vadd.f32 %v387, %v6007
    %v6009 = vpop.f32.mrb[0].mxu0
    %6010 = vdwg.mxu0
    %v6011 = vsel %vm590, %v6003, -inf
    %6012 = vmax.xlane.f32.xlu0 %v6011
    %v6013 = vpop.xlane.xlu0 %6012
    %v6014 = vsel %vm590, %v6008, -inf
    %6015 = vmax.xlane.f32.xlu0 %v6014
    %v6016 = vpop.xlane.xlu0 %6015
    %v6017 = vsub.f32 %v6003, %v6013
    %v6018 = vsub.f32 %v6008, %v6016
    %v6019 = vmul.f32 %v6017, 1.442695
    %v6020 = vpow.pop %v6019
    %v6021 = vmul.f32 %v6018, 1.442695
    %v6022 = vpow.pop %v6021
    %v6023 = vsel %vm590, %v6020, 0.0
    %6024 = vadd.xlane.f32.xlu0 %v6023
    %v6025 = vpop.xlane.xlu0 %6024
    %v6026 = vsel %vm590, %v6022, 0.0
    %6027 = vadd.xlane.f32.xlu0 %v6026
    %v6028 = vpop.xlane.xlu0 %6027
    %v6029 = vrcp.pop %v6025
    %v6030 = vrcp.pop %v6028
    %v6031 = vmul.f32 %v6020, %v6029
    %v6032 = vmul.f32 %v6022, %v6030
    %v6033 = vmul.f32 %v5518, %v1028
    %v6034 = vmul.f32 %v5523, %v1028
    %6037 = vrot.lane.b32.xlu0 %v6033, 64
    %v6038 = vpop.permute.xlu0 %6037
    %6039 = vrot.lane.b32.xlu0 %v6034, 64
    %v6040 = vpop.permute.xlu0 %6039
    %v6044 = vsel %vm590, %v6031, 0
    %v6047 = vsel %vm590, %v6032, 0
    %6049 = vmatprep.subr.mxu0 0.0
    %6050 = vmatpush1.msra.mxu0 %v6038
    %6051 = vmatprep.subr.mxu0 0.0
    %6052 = vmatpush1.msra.mxu0 %v6040
    %6053 = vmatprep.subr.mxu0 0.0
    %6054 = vmatpush1.msra.mxu0 0.0
    %6055 = vmatprep.subr.mxu0 0.0
    %6056 = vmatpush1.msra.mxu0 0.0
    %6057 = vmatprep.subr.mxu0 0.0
    %6058 = vmatpush1.msra.mxu0 0.0
    %6059 = vmatprep.subr.mxu0 0.0
    %6060 = vmatpush1.msra.mxu0 0.0
    %6061 = vmatprep.subr.mxu0 0.0
    %6062 = vmatpush1.msra.mxu0 0.0
    %6063 = vmatprep.subr.mxu0 0.0
    %6064 = vmatpush1.msra.mxu0 0.0
    %6065 = vmatprep.subr.mxu0 0.0
    %6066 = vmatpush1.msra.mxu0 0.0
    %6067 = vmatprep.subr.mxu0 0.0
    %6068 = vmatpush1.msra.mxu0 0.0
    %6069 = vmatprep.subr.mxu0 0.0
    %6070 = vmatpush1.msra.mxu0 0.0
    %6071 = vmatprep.subr.mxu0 0.0
    %6072 = vmatpush1.msra.mxu0 0.0
    %6073 = vmatprep.subr.mxu0 0.0
    %6074 = vmatpush1.msra.mxu0 0.0
    %6075 = vmatprep.subr.mxu0 0.0
    %6076 = vmatpush1.msra.mxu0 0.0
    %6077 = vmatprep.subr.mxu0 0.0
    %6078 = vmatpush1.msra.mxu0 0.0
    %6079 = vmatprep.subr.mxu0 0.0
    %6080 = vmatpush1.msra.mxu0 0.0
    %6081 = vmatprep.subr.mxu0 0.0
    %6082 = vmatpush1.msra.mxu0 0.0
    %6083 = vmatprep.subr.mxu0 0.0
    %6084 = vmatpush1.msra.mxu0 0.0
    %6085 = vmatprep.subr.mxu0 0.0
    %6086 = vmatpush1.msra.mxu0 0.0
    %6087 = vmatprep.subr.mxu0 0.0
    %6088 = vmatpush1.msra.mxu0 0.0
    %6089 = vmatprep.subr.mxu0 0.0
    %6090 = vmatpush1.msra.mxu0 0.0
    %6091 = vmatprep.subr.mxu0 0.0
    %6092 = vmatpush1.msra.mxu0 0.0
    %6093 = vmatprep.subr.mxu0 0.0
    %6094 = vmatpush1.msra.mxu0 0.0
    %6095 = vmatprep.subr.mxu0 0.0
    %6096 = vmatpush1.msra.mxu0 0.0
    %6097 = vmatprep.subr.mxu0 0.0
    %6098 = vmatpush1.msra.mxu0 0.0
    %6099 = vmatprep.subr.mxu0 0.0
    %6100 = vmatpush1.msra.mxu0 0.0
    %6101 = vmatprep.subr.mxu0 0.0
    %6102 = vmatpush1.msra.mxu0 0.0
    %6103 = vmatprep.subr.mxu0 0.0
    %6104 = vmatpush1.msra.mxu0 0.0
    %6105 = vmatprep.subr.mxu0 0.0
    %6106 = vmatpush1.msra.mxu0 0.0
    %6107 = vmatprep.subr.mxu0 0.0
    %6108 = vmatpush1.msra.mxu0 0.0
    %6109 = vmatprep.subr.mxu0 0.0
    %6110 = vmatpush1.msra.mxu0 0.0
    %6111 = vmatprep.subr.mxu0 0.0
    %6112 = vmatpush1.msra.mxu0 0.0
    %6113 = vmatprep.mubr.f32.mxu0 0.0
    %6114 = vmatmul.mubr.f32.gmra.mrb[0].mxu0 %v6044
    %v6115 = vpop.f32.mrb[0].mxu0
    %v6116 = vadd.f32 0.0, %v6115
    %v6117 = vpop.f32.mrb[0].mxu0
    %6118 = vmatprep.mubr.f32.mxu0 0.0
    %6119 = vmatmul.mubr.f32.gmra.mrb[0].mxu0 %v6047
    %v6120 = vpop.f32.mrb[0].mxu0
    %v6121 = vadd.f32 0.0, %v6120
    %v6122 = vpop.f32.mrb[0].mxu0
    %6123 = vdwg.mxu0
    %v6124 = vadd.f32 %v5920, %v6116
    %v6125 = vadd.f32 %v5925, %v6121
    %v6126 = vmul.f32 %v5518, %v1129
    %v6127 = vmul.f32 %v5523, %v1129
    %v6129 = vsel %vm408, %v6126, 0
    %v6132 = vsel %vm408, %v6127, 0
    %6134 = vmatprep.subr.mxu0 0.0
    %6135 = vmatpush1.xpose.msra.mxu0 %v5540
    %6136 = vmatprep.subr.mxu0 0.0
    %6137 = vmatpush1.xpose.msra.mxu0 %v5542
    %6138 = vmatprep.subr.mxu0 0.0
    %6139 = vmatpush1.xpose.msra.mxu0 0.0
    %6140 = vmatprep.subr.mxu0 0.0
    %6141 = vmatpush1.xpose.msra.mxu0 0.0
    %6142 = vmatprep.subr.mxu0 0.0
    %6143 = vmatpush1.xpose.msra.mxu0 0.0
    %6144 = vmatprep.subr.mxu0 0.0
    %6145 = vmatpush1.xpose.msra.mxu0 0.0
    %6146 = vmatprep.subr.mxu0 0.0
    %6147 = vmatpush1.xpose.msra.mxu0 0.0
    %6148 = vmatprep.subr.mxu0 0.0
    %6149 = vmatpush1.xpose.msra.mxu0 0.0
    %6150 = vmatprep.subr.mxu0 0.0
    %6151 = vmatpush1.xpose.msra.mxu0 0.0
    %6152 = vmatprep.subr.mxu0 0.0
    %6153 = vmatpush1.xpose.msra.mxu0 0.0
    %6154 = vmatprep.subr.mxu0 0.0
    %6155 = vmatpush1.xpose.msra.mxu0 0.0
    %6156 = vmatprep.subr.mxu0 0.0
    %6157 = vmatpush1.xpose.msra.mxu0 0.0
    %6158 = vmatprep.subr.mxu0 0.0
    %6159 = vmatpush1.xpose.msra.mxu0 0.0
    %6160 = vmatprep.subr.mxu0 0.0
    %6161 = vmatpush1.xpose.msra.mxu0 0.0
    %6162 = vmatprep.subr.mxu0 0.0
    %6163 = vmatpush1.xpose.msra.mxu0 0.0
    %6164 = vmatprep.subr.mxu0 0.0
    %6165 = vmatpush1.xpose.msra.mxu0 0.0
    %6166 = vmatprep.subr.mxu0 0.0
    %6167 = vmatpush1.xpose.msra.mxu0 0.0
    %6168 = vmatprep.subr.mxu0 0.0
    %6169 = vmatpush1.xpose.msra.mxu0 0.0
    %6170 = vmatprep.subr.mxu0 0.0
    %6171 = vmatpush1.xpose.msra.mxu0 0.0
    %6172 = vmatprep.subr.mxu0 0.0
    %6173 = vmatpush1.xpose.msra.mxu0 0.0
    %6174 = vmatprep.subr.mxu0 0.0
    %6175 = vmatpush1.xpose.msra.mxu0 0.0
    %6176 = vmatprep.subr.mxu0 0.0
    %6177 = vmatpush1.xpose.msra.mxu0 0.0
    %6178 = vmatprep.subr.mxu0 0.0
    %6179 = vmatpush1.xpose.msra.mxu0 0.0
    %6180 = vmatprep.subr.mxu0 0.0
    %6181 = vmatpush1.xpose.msra.mxu0 0.0
    %6182 = vmatprep.subr.mxu0 0.0
    %6183 = vmatpush1.xpose.msra.mxu0 0.0
    %6184 = vmatprep.subr.mxu0 0.0
    %6185 = vmatpush1.xpose.msra.mxu0 0.0
    %6186 = vmatprep.subr.mxu0 0.0
    %6187 = vmatpush1.xpose.msra.mxu0 0.0
    %6188 = vmatprep.subr.mxu0 0.0
    %6189 = vmatpush1.xpose.msra.mxu0 0.0
    %6190 = vmatprep.subr.mxu0 0.0
    %6191 = vmatpush1.xpose.msra.mxu0 0.0
    %6192 = vmatprep.subr.mxu0 0.0
    %6193 = vmatpush1.xpose.msra.mxu0 0.0
    %6194 = vmatprep.subr.mxu0 0.0
    %6195 = vmatpush1.xpose.msra.mxu0 0.0
    %6196 = vmatprep.subr.mxu0 0.0
    %6197 = vmatpush1.xpose.msra.mxu0 0.0
    %6198 = vmatprep.mubr.f32.mxu0 0.0
    %6199 = vmatmul.mubr.f32.gmra.mrb[0].mxu0 %v6129
    %v6200 = vpop.f32.mrb[0].mxu0
    %v6201 = vadd.f32 %v386, %v6200
    %v6202 = vpop.f32.mrb[0].mxu0
    %6203 = vmatprep.mubr.f32.mxu0 0.0
    %6204 = vmatmul.mubr.f32.gmra.mrb[0].mxu0 %v6132
    %v6205 = vpop.f32.mrb[0].mxu0
    %v6206 = vadd.f32 %v387, %v6205
    %v6207 = vpop.f32.mrb[0].mxu0
    %6208 = vdwg.mxu0
    %v6209 = vsel %vm590, %v6201, -inf
    %6210 = vmax.xlane.f32.xlu0 %v6209
    %v6211 = vpop.xlane.xlu0 %6210
    %v6212 = vsel %vm590, %v6206, -inf
    %6213 = vmax.xlane.f32.xlu0 %v6212
    %v6214 = vpop.xlane.xlu0 %6213
    %v6215 = vsub.f32 %v6201, %v6211
    %v6216 = vsub.f32 %v6206, %v6214
    %v6217 = vmul.f32 %v6215, 1.442695
    %v6218 = vpow.pop %v6217
    %v6219 = vmul.f32 %v6216, 1.442695
    %v6220 = vpow.pop %v6219
    %v6221 = vsel %vm590, %v6218, 0.0
    %6222 = vadd.xlane.f32.xlu0 %v6221
    %v6223 = vpop.xlane.xlu0 %6222
    %v6224 = vsel %vm590, %v6220, 0.0
    %6225 = vadd.xlane.f32.xlu0 %v6224
    %v6226 = vpop.xlane.xlu0 %6225
    %v6227 = vrcp.pop %v6223
    %v6228 = vrcp.pop %v6226
    %v6229 = vmul.f32 %v6218, %v6227
    %v6230 = vmul.f32 %v6220, %v6228
    %v6231 = vmul.f32 %v5518, %v1237
    %v6232 = vmul.f32 %v5523, %v1237
    %6235 = vrot.lane.b32.xlu0 %v6231, 64
    %v6236 = vpop.permute.xlu0 %6235
    %6237 = vrot.lane.b32.xlu0 %v6232, 64
    %v6238 = vpop.permute.xlu0 %6237
    %v6242 = vsel %vm590, %v6229, 0
    %v6245 = vsel %vm590, %v6230, 0
    %6247 = vmatprep.subr.mxu0 0.0
    %6248 = vmatpush1.msra.mxu0 %v6236
    %6249 = vmatprep.subr.mxu0 0.0
    %6250 = vmatpush1.msra.mxu0 %v6238
    %6251 = vmatprep.subr.mxu0 0.0
    %6252 = vmatpush1.msra.mxu0 0.0
    %6253 = vmatprep.subr.mxu0 0.0
    %6254 = vmatpush1.msra.mxu0 0.0
    %6255 = vmatprep.subr.mxu0 0.0
    %6256 = vmatpush1.msra.mxu0 0.0
    %6257 = vmatprep.subr.mxu0 0.0
    %6258 = vmatpush1.msra.mxu0 0.0
    %6259 = vmatprep.subr.mxu0 0.0
    %6260 = vmatpush1.msra.mxu0 0.0
    %6261 = vmatprep.subr.mxu0 0.0
    %6262 = vmatpush1.msra.mxu0 0.0
    %6263 = vmatprep.subr.mxu0 0.0
    %6264 = vmatpush1.msra.mxu0 0.0
    %6265 = vmatprep.subr.mxu0 0.0
    %6266 = vmatpush1.msra.mxu0 0.0
    %6267 = vmatprep.subr.mxu0 0.0
    %6268 = vmatpush1.msra.mxu0 0.0
    %6269 = vmatprep.subr.mxu0 0.0
    %6270 = vmatpush1.msra.mxu0 0.0
    %6271 = vmatprep.subr.mxu0 0.0
    %6272 = vmatpush1.msra.mxu0 0.0
    %6273 = vmatprep.subr.mxu0 0.0
    %6274 = vmatpush1.msra.mxu0 0.0
    %6275 = vmatprep.subr.mxu0 0.0
    %6276 = vmatpush1.msra.mxu0 0.0
    %6277 = vmatprep.subr.mxu0 0.0
    %6278 = vmatpush1.msra.mxu0 0.0
    %6279 = vmatprep.subr.mxu0 0.0
    %6280 = vmatpush1.msra.mxu0 0.0
    %6281 = vmatprep.subr.mxu0 0.0
    %6282 = vmatpush1.msra.mxu0 0.0
    %6283 = vmatprep.subr.mxu0 0.0
    %6284 = vmatpush1.msra.mxu0 0.0
    %6285 = vmatprep.subr.mxu0 0.0
    %6286 = vmatpush1.msra.mxu0 0.0
    %6287 = vmatprep.subr.mxu0 0.0
    %6288 = vmatpush1.msra.mxu0 0.0
    %6289 = vmatprep.subr.mxu0 0.0
    %6290 = vmatpush1.msra.mxu0 0.0
    %6291 = vmatprep.subr.mxu0 0.0
    %6292 = vmatpush1.msra.mxu0 0.0
    %6293 = vmatprep.subr.mxu0 0.0
    %6294 = vmatpush1.msra.mxu0 0.0
    %6295 = vmatprep.subr.mxu0 0.0
    %6296 = vmatpush1.msra.mxu0 0.0
    %6297 = vmatprep.subr.mxu0 0.0
    %6298 = vmatpush1.msra.mxu0 0.0
    %6299 = vmatprep.subr.mxu0 0.0
    %6300 = vmatpush1.msra.mxu0 0.0
    %6301 = vmatprep.subr.mxu0 0.0
    %6302 = vmatpush1.msra.mxu0 0.0
    %6303 = vmatprep.subr.mxu0 0.0
    %6304 = vmatpush1.msra.mxu0 0.0
    %6305 = vmatprep.subr.mxu0 0.0
    %6306 = vmatpush1.msra.mxu0 0.0
    %6307 = vmatprep.subr.mxu0 0.0
    %6308 = vmatpush1.msra.mxu0 0.0
    %6309 = vmatprep.subr.mxu0 0.0
    %6310 = vmatpush1.msra.mxu0 0.0
    %6311 = vmatprep.mubr.f32.mxu0 0.0
    %6312 = vmatmul.mubr.f32.gmra.mrb[0].mxu0 %v6242
    %v6313 = vpop.f32.mrb[0].mxu0
    %v6314 = vadd.f32 0.0, %v6313
    %v6315 = vpop.f32.mrb[0].mxu0
    %6316 = vmatprep.mubr.f32.mxu0 0.0
    %6317 = vmatmul.mubr.f32.gmra.mrb[0].mxu0 %v6245
    %v6318 = vpop.f32.mrb[0].mxu0
    %v6319 = vadd.f32 0.0, %v6318
    %v6320 = vpop.f32.mrb[0].mxu0
    %6321 = vdwg.mxu0
    %v6322 = vadd.f32 %v6124, %v6314
    %v6323 = vadd.f32 %v6125, %v6319
    %v6325 = vlaneseq
    %v6326 = vshrl.u32 %v6325, 7
    %v6327 = vsub.s32 0, %v6326
    %v6328 = vrot.slane %v5438, %v6327
    %v6331 = vsel %vm408, %v6322, 0
    %v6334 = vsel %vm408, %v6323, 0
    %6336 = vmatprep.subr.mxu0 0.0
    %6337 = vmatpush1.msra.mxu0 %v5433
    %6338 = vmatprep.subr.mxu0 0.0
    %6339 = vmatpush1.msra.mxu0 %v5434
    %6340 = vmatprep.subr.mxu0 0.0
    %6341 = vmatpush1.msra.mxu0 %v5435
    %6342 = vmatprep.subr.mxu0 0.0
    %6343 = vmatpush1.msra.mxu0 %v5436
    %6344 = vmatprep.subr.mxu0 0.0
    %6345 = vmatpush1.msra.mxu0 0.0
    %6346 = vmatprep.subr.mxu0 0.0
    %6347 = vmatpush1.msra.mxu0 0.0
    %6348 = vmatprep.subr.mxu0 0.0
    %6349 = vmatpush1.msra.mxu0 0.0
    %6350 = vmatprep.subr.mxu0 0.0
    %6351 = vmatpush1.msra.mxu0 0.0
    %6352 = vmatprep.subr.mxu0 0.0
    %6353 = vmatpush1.msra.mxu0 0.0
    %6354 = vmatprep.subr.mxu0 0.0
    %6355 = vmatpush1.msra.mxu0 0.0
    %6356 = vmatprep.subr.mxu0 0.0
    %6357 = vmatpush1.msra.mxu0 0.0
    %6358 = vmatprep.subr.mxu0 0.0
    %6359 = vmatpush1.msra.mxu0 0.0
    %6360 = vmatprep.subr.mxu0 0.0
    %6361 = vmatpush1.msra.mxu0 0.0
    %6362 = vmatprep.subr.mxu0 0.0
    %6363 = vmatpush1.msra.mxu0 0.0
    %6364 = vmatprep.subr.mxu0 0.0
    %6365 = vmatpush1.msra.mxu0 0.0
    %6366 = vmatprep.subr.mxu0 0.0
    %6367 = vmatpush1.msra.mxu0 0.0
    %6368 = vmatprep.subr.mxu0 0.0
    %6369 = vmatpush1.msra.mxu0 0.0
    %6370 = vmatprep.subr.mxu0 0.0
    %6371 = vmatpush1.msra.mxu0 0.0
    %6372 = vmatprep.subr.mxu0 0.0
    %6373 = vmatpush1.msra.mxu0 0.0
    %6374 = vmatprep.subr.mxu0 0.0
    %6375 = vmatpush1.msra.mxu0 0.0
    %6376 = vmatprep.subr.mxu0 0.0
    %6377 = vmatpush1.msra.mxu0 0.0
    %6378 = vmatprep.subr.mxu0 0.0
    %6379 = vmatpush1.msra.mxu0 0.0
    %6380 = vmatprep.subr.mxu0 0.0
    %6381 = vmatpush1.msra.mxu0 0.0
    %6382 = vmatprep.subr.mxu0 0.0
    %6383 = vmatpush1.msra.mxu0 0.0
    %6384 = vmatprep.subr.mxu0 0.0
    %6385 = vmatpush1.msra.mxu0 0.0
    %6386 = vmatprep.subr.mxu0 0.0
    %6387 = vmatpush1.msra.mxu0 0.0
    %6388 = vmatprep.subr.mxu0 0.0
    %6389 = vmatpush1.msra.mxu0 0.0
    %6390 = vmatprep.subr.mxu0 0.0
    %6391 = vmatpush1.msra.mxu0 0.0
    %6392 = vmatprep.subr.mxu0 0.0
    %6393 = vmatpush1.msra.mxu0 0.0
    %6394 = vmatprep.subr.mxu0 0.0
    %6395 = vmatpush1.msra.mxu0 0.0
    %6396 = vmatprep.subr.mxu0 0.0
    %6397 = vmatpush1.msra.mxu0 0.0
    %6398 = vmatprep.subr.mxu0 0.0
    %6399 = vmatpush1.msra.mxu0 0.0
    %6400 = vmatprep.mubr.f32.mxu0 0.0
    %6401 = vmatmul.mubr.f32.gmra.mrb[0].mxu0 %v6331
    %v6402 = vpop.f32.mrb[0].mxu0
    %v6403 = vadd.f32 %v6328, %v6402
    %v6404 = vpop.f32.mrb[0].mxu0
    %6405 = vmatprep.mubr.f32.mxu0 0.0
    %6406 = vmatmul.mubr.f32.gmra.mrb[0].mxu0 %v6334
    %v6407 = vpop.f32.mrb[0].mxu0
    %v6408 = vadd.f32 %v6328, %v6407
    %v6409 = vpop.f32.mrb[0].mxu0
    %6410 = vdwg.mxu0
    %v6411 = vadd.f32 %v5423, %v6403
    %v6412 = vadd.f32 %v5424, %v6408
    %s6413 = scalar_lea.vmem %s61, 1
    %v6414 = vld [vmem:[%s6413] sm:$0x1]
    %s6415 = scalar_lea.vmem %s63, 1
    %v6416 = vld [vmem:[%s6415] sm:$0x1]
    %v6417 = vsel %vm408, %v6411, 0.0
    %6418 = vadd.xlane.f32.xlu0 %v6417
    %v6419 = vpop.xlane.xlu0 %6418
    %v6420 = vsel %vm408, %v6412, 0.0
    %6421 = vadd.xlane.f32.xlu0 %v6420
    %v6422 = vpop.xlane.xlu0 %6421
    %v6423 = vmul.f32 %v6419, %v1429
    %v6424 = vmul.f32 %v6422, %v1429
    %v6425 = vsub.f32 %v6411, %v6423
    %v6426 = vsub.f32 %v6412, %v6424
    %v6427 = vmul.f32 %v6425, %v6425
    %v6428 = vmul.f32 %v6426, %v6426
    %v6429 = vsel %vm408, %v6427, 0.0
    %6430 = vadd.xlane.f32.xlu0 %v6429
    %v6431 = vpop.xlane.xlu0 %6430
    %v6432 = vsel %vm408, %v6428, 0.0
    %6433 = vadd.xlane.f32.xlu0 %v6432
    %v6434 = vpop.xlane.xlu0 %6433
    %v6435 = vmul.f32 %v6431, %v1429
    %v6436 = vmul.f32 %v6434, %v1429
    %v6437 = vadd.f32 %v6435, 1e-05
    %v6438 = vadd.f32 %v6436, 1e-05
    %v6439 = vrsqrt.pop %v6437
    %v6440 = vrsqrt.pop %v6438
    %v6441 = vmul.f32 %v6425, %v6439
    %v6442 = vmul.f32 %v6426, %v6440
    %v6444 = vlaneseq
    %v6445 = vshrl.u32 %v6444, 7
    %v6446 = vsub.s32 0, %v6445
    %v6447 = vrot.slane %v6414, %v6446
    %v6449 = vmul.f32 %v6441, %v6447
    %v6450 = vmul.f32 %v6442, %v6447
    %v6452 = vlaneseq
    %v6453 = vshrl.u32 %v6452, 7
    %v6454 = vsub.s32 0, %v6453
    %v6455 = vrot.slane %v6416, %v6454
    %v6457 = vadd.f32 %v6449, %v6455
    %v6458 = vadd.f32 %v6450, %v6455
    %s6459 = scalar_lea.vmem %s45, 32
    %v6460 = vld [vmem:[%s6459] sm:$0xff]
    %v6461 = vld [vmem:[%s6459 + $0x8] sm:$0xff]
    %v6462 = vld [vmem:[%s6459 + $0x10] sm:$0xff]
    %v6463 = vld [vmem:[%s6459 + $0x18] sm:$0xff]
    %s6464 = scalar_lea.vmem [#allocation22], 1
    %v6465 = vld [vmem:[%s6464] sm:$0x1]
    %s6466 = scalar_lea.vmem %s49, 32
    %v6467 = vld [vmem:[%s6466] sm:$0xff]
    %v6468 = vld [vmem:[%s6466 + $0x8] sm:$0xff]
    %v6469 = vld [vmem:[%s6466 + $0x10] sm:$0xff]
    %v6470 = vld [vmem:[%s6466 + $0x18] sm:$0xff]
    %s6471 = scalar_lea.vmem [#allocation23], 1
    %v6472 = vld [vmem:[%s6471] sm:$0x1]
    %v6474 = vlaneseq
    %v6475 = vshrl.u32 %v6474, 7
    %v6476 = vsub.s32 0, %v6475
    %v6477 = vrot.slane %v6465, %v6476
    %v6480 = vsel %vm408, %v6457, 0
    %v6483 = vsel %vm408, %v6458, 0
    %6485 = vmatprep.subr.mxu0 0.0
    %6486 = vmatpush1.msra.mxu0 %v6460
    %6487 = vmatprep.subr.mxu0 0.0
    %6488 = vmatpush1.msra.mxu0 %v6461
    %6489 = vmatprep.subr.mxu0 0.0
    %6490 = vmatpush1.msra.mxu0 %v6462
    %6491 = vmatprep.subr.mxu0 0.0
    %6492 = vmatpush1.msra.mxu0 %v6463
    %6493 = vmatprep.subr.mxu0 0.0
    %6494 = vmatpush1.msra.mxu0 0.0
    %6495 = vmatprep.subr.mxu0 0.0
    %6496 = vmatpush1.msra.mxu0 0.0
    %6497 = vmatprep.subr.mxu0 0.0
    %6498 = vmatpush1.msra.mxu0 0.0
    %6499 = vmatprep.subr.mxu0 0.0
    %6500 = vmatpush1.msra.mxu0 0.0
    %6501 = vmatprep.subr.mxu0 0.0
    %6502 = vmatpush1.msra.mxu0 0.0
    %6503 = vmatprep.subr.mxu0 0.0
    %6504 = vmatpush1.msra.mxu0 0.0
    %6505 = vmatprep.subr.mxu0 0.0
    %6506 = vmatpush1.msra.mxu0 0.0
    %6507 = vmatprep.subr.mxu0 0.0
    %6508 = vmatpush1.msra.mxu0 0.0
    %6509 = vmatprep.subr.mxu0 0.0
    %6510 = vmatpush1.msra.mxu0 0.0
    %6511 = vmatprep.subr.mxu0 0.0
    %6512 = vmatpush1.msra.mxu0 0.0
    %6513 = vmatprep.subr.mxu0 0.0
    %6514 = vmatpush1.msra.mxu0 0.0
    %6515 = vmatprep.subr.mxu0 0.0
    %6516 = vmatpush1.msra.mxu0 0.0
    %6517 = vmatprep.subr.mxu0 0.0
    %6518 = vmatpush1.msra.mxu0 0.0
    %6519 = vmatprep.subr.mxu0 0.0
    %6520 = vmatpush1.msra.mxu0 0.0
    %6521 = vmatprep.subr.mxu0 0.0
    %6522 = vmatpush1.msra.mxu0 0.0
    %6523 = vmatprep.subr.mxu0 0.0
    %6524 = vmatpush1.msra.mxu0 0.0
    %6525 = vmatprep.subr.mxu0 0.0
    %6526 = vmatpush1.msra.mxu0 0.0
    %6527 = vmatprep.subr.mxu0 0.0
    %6528 = vmatpush1.msra.mxu0 0.0
    %6529 = vmatprep.subr.mxu0 0.0
    %6530 = vmatpush1.msra.mxu0 0.0
    %6531 = vmatprep.subr.mxu0 0.0
    %6532 = vmatpush1.msra.mxu0 0.0
    %6533 = vmatprep.subr.mxu0 0.0
    %6534 = vmatpush1.msra.mxu0 0.0
    %6535 = vmatprep.subr.mxu0 0.0
    %6536 = vmatpush1.msra.mxu0 0.0
    %6537 = vmatprep.subr.mxu0 0.0
    %6538 = vmatpush1.msra.mxu0 0.0
    %6539 = vmatprep.subr.mxu0 0.0
    %6540 = vmatpush1.msra.mxu0 0.0
    %6541 = vmatprep.subr.mxu0 0.0
    %6542 = vmatpush1.msra.mxu0 0.0
    %6543 = vmatprep.subr.mxu0 0.0
    %6544 = vmatpush1.msra.mxu0 0.0
    %6545 = vmatprep.subr.mxu0 0.0
    %6546 = vmatpush1.msra.mxu0 0.0
    %6547 = vmatprep.subr.mxu0 0.0
    %6548 = vmatpush1.msra.mxu0 0.0
    %6549 = vmatprep.mubr.f32.mxu0 0.0
    %6550 = vmatmul.mubr.f32.gmra.mrb[0].mxu0 %v6480
    %v6551 = vpop.f32.mrb[0].mxu0
    %v6552 = vadd.f32 %v6477, %v6551
    %v6553 = vpop.f32.mrb[0].mxu0
    %6554 = vmatprep.mubr.f32.mxu0 0.0
    %6555 = vmatmul.mubr.f32.gmra.mrb[0].mxu0 %v6483
    %v6556 = vpop.f32.mrb[0].mxu0
    %v6557 = vadd.f32 %v6477, %v6556
    %v6558 = vpop.f32.mrb[0].mxu0
    %6559 = vdwg.mxu0
    %6564 = vrot.lane.b32.xlu0 %v6460, 96
    %v6565 = vpop.permute.xlu0 %6564
    %6566 = vrot.lane.b32.xlu0 %v6461, 96
    %v6567 = vpop.permute.xlu0 %6566
    %6568 = vrot.lane.b32.xlu0 %v6462, 96
    %v6569 = vpop.permute.xlu0 %6568
    %6570 = vrot.lane.b32.xlu0 %v6463, 96
    %v6571 = vpop.permute.xlu0 %6570
    %6576 = vrot.lane.b32.xlu0 %v6477, 96
    %v6577 = vpop.permute.xlu0 %6576
    %6579 = vmatprep.subr.mxu0 0.0
    %6580 = vmatpush1.msra.mxu0 %v6565
    %6581 = vmatprep.subr.mxu0 0.0
    %6582 = vmatpush1.msra.mxu0 %v6567
    %6583 = vmatprep.subr.mxu0 0.0
    %6584 = vmatpush1.msra.mxu0 %v6569
    %6585 = vmatprep.subr.mxu0 0.0
    %6586 = vmatpush1.msra.mxu0 %v6571
    %6587 = vmatprep.subr.mxu0 0.0
    %6588 = vmatpush1.msra.mxu0 0.0
    %6589 = vmatprep.subr.mxu0 0.0
    %6590 = vmatpush1.msra.mxu0 0.0
    %6591 = vmatprep.subr.mxu0 0.0
    %6592 = vmatpush1.msra.mxu0 0.0
    %6593 = vmatprep.subr.mxu0 0.0
    %6594 = vmatpush1.msra.mxu0 0.0
    %6595 = vmatprep.subr.mxu0 0.0
    %6596 = vmatpush1.msra.mxu0 0.0
    %6597 = vmatprep.subr.mxu0 0.0
    %6598 = vmatpush1.msra.mxu0 0.0
    %6599 = vmatprep.subr.mxu0 0.0
    %6600 = vmatpush1.msra.mxu0 0.0
    %6601 = vmatprep.subr.mxu0 0.0
    %6602 = vmatpush1.msra.mxu0 0.0
    %6603 = vmatprep.subr.mxu0 0.0
    %6604 = vmatpush1.msra.mxu0 0.0
    %6605 = vmatprep.subr.mxu0 0.0
    %6606 = vmatpush1.msra.mxu0 0.0
    %6607 = vmatprep.subr.mxu0 0.0
    %6608 = vmatpush1.msra.mxu0 0.0
    %6609 = vmatprep.subr.mxu0 0.0
    %6610 = vmatpush1.msra.mxu0 0.0
    %6611 = vmatprep.subr.mxu0 0.0
    %6612 = vmatpush1.msra.mxu0 0.0
    %6613 = vmatprep.subr.mxu0 0.0
    %6614 = vmatpush1.msra.mxu0 0.0
    %6615 = vmatprep.subr.mxu0 0.0
    %6616 = vmatpush1.msra.mxu0 0.0
    %6617 = vmatprep.subr.mxu0 0.0
    %6618 = vmatpush1.msra.mxu0 0.0
    %6619 = vmatprep.subr.mxu0 0.0
    %6620 = vmatpush1.msra.mxu0 0.0
    %6621 = vmatprep.subr.mxu0 0.0
    %6622 = vmatpush1.msra.mxu0 0.0
    %6623 = vmatprep.subr.mxu0 0.0
    %6624 = vmatpush1.msra.mxu0 0.0
    %6625 = vmatprep.subr.mxu0 0.0
    %6626 = vmatpush1.msra.mxu0 0.0
    %6627 = vmatprep.subr.mxu0 0.0
    %6628 = vmatpush1.msra.mxu0 0.0
    %6629 = vmatprep.subr.mxu0 0.0
    %6630 = vmatpush1.msra.mxu0 0.0
    %6631 = vmatprep.subr.mxu0 0.0
    %6632 = vmatpush1.msra.mxu0 0.0
    %6633 = vmatprep.subr.mxu0 0.0
    %6634 = vmatpush1.msra.mxu0 0.0
    %6635 = vmatprep.subr.mxu0 0.0
    %6636 = vmatpush1.msra.mxu0 0.0
    %6637 = vmatprep.subr.mxu0 0.0
    %6638 = vmatpush1.msra.mxu0 0.0
    %6639 = vmatprep.subr.mxu0 0.0
    %6640 = vmatpush1.msra.mxu0 0.0
    %6641 = vmatprep.subr.mxu0 0.0
    %6642 = vmatpush1.msra.mxu0 0.0
    %6643 = vmatprep.mubr.f32.mxu0 0.0
    %6644 = vmatmul.mubr.f32.gmra.mrb[0].mxu0 %v4170
    %v6645 = vpop.f32.mrb[0].mxu0
    %v6646 = vadd.f32 %v6577, %v6645
    %v6647 = vpop.f32.mrb[0].mxu0
    %6648 = vmatprep.mubr.f32.mxu0 0.0
    %6649 = vmatmul.mubr.f32.gmra.mrb[0].mxu0 %v4173
    %v6650 = vpop.f32.mrb[0].mxu0
    %v6651 = vadd.f32 %v6577, %v6650
    %v6652 = vpop.f32.mrb[0].mxu0
    %6653 = vdwg.mxu0
    %v6654 = vmul.f32 %v6552, %v495
    %v6655 = vmul.f32 %v6557, %v495
    %v6657 = vsel %vm408, %v6654, 0
    %v6660 = vsel %vm408, %v6655, 0
    %v6663 = vsel %vm408, %v6646, 0
    %v6666 = vsel %vm408, %v6651, 0
    %6668 = vmatprep.subr.mxu0 0.0
    %6669 = vmatpush1.xpose.msra.mxu0 %v6663
    %6670 = vmatprep.subr.mxu0 0.0
    %6671 = vmatpush1.xpose.msra.mxu0 %v6666
    %6672 = vmatprep.subr.mxu0 0.0
    %6673 = vmatpush1.xpose.msra.mxu0 0.0
    %6674 = vmatprep.subr.mxu0 0.0
    %6675 = vmatpush1.xpose.msra.mxu0 0.0
    %6676 = vmatprep.subr.mxu0 0.0
    %6677 = vmatpush1.xpose.msra.mxu0 0.0
    %6678 = vmatprep.subr.mxu0 0.0
    %6679 = vmatpush1.xpose.msra.mxu0 0.0
    %6680 = vmatprep.subr.mxu0 0.0
    %6681 = vmatpush1.xpose.msra.mxu0 0.0
    %6682 = vmatprep.subr.mxu0 0.0
    %6683 = vmatpush1.xpose.msra.mxu0 0.0
    %6684 = vmatprep.subr.mxu0 0.0
    %6685 = vmatpush1.xpose.msra.mxu0 0.0
    %6686 = vmatprep.subr.mxu0 0.0
    %6687 = vmatpush1.xpose.msra.mxu0 0.0
    %6688 = vmatprep.subr.mxu0 0.0
    %6689 = vmatpush1.xpose.msra.mxu0 0.0
    %6690 = vmatprep.subr.mxu0 0.0
    %6691 = vmatpush1.xpose.msra.mxu0 0.0
    %6692 = vmatprep.subr.mxu0 0.0
    %6693 = vmatpush1.xpose.msra.mxu0 0.0
    %6694 = vmatprep.subr.mxu0 0.0
    %6695 = vmatpush1.xpose.msra.mxu0 0.0
    %6696 = vmatprep.subr.mxu0 0.0
    %6697 = vmatpush1.xpose.msra.mxu0 0.0
    %6698 = vmatprep.subr.mxu0 0.0
    %6699 = vmatpush1.xpose.msra.mxu0 0.0
    %6700 = vmatprep.subr.mxu0 0.0
    %6701 = vmatpush1.xpose.msra.mxu0 0.0
    %6702 = vmatprep.subr.mxu0 0.0
    %6703 = vmatpush1.xpose.msra.mxu0 0.0
    %6704 = vmatprep.subr.mxu0 0.0
    %6705 = vmatpush1.xpose.msra.mxu0 0.0
    %6706 = vmatprep.subr.mxu0 0.0
    %6707 = vmatpush1.xpose.msra.mxu0 0.0
    %6708 = vmatprep.subr.mxu0 0.0
    %6709 = vmatpush1.xpose.msra.mxu0 0.0
    %6710 = vmatprep.subr.mxu0 0.0
    %6711 = vmatpush1.xpose.msra.mxu0 0.0
    %6712 = vmatprep.subr.mxu0 0.0
    %6713 = vmatpush1.xpose.msra.mxu0 0.0
    %6714 = vmatprep.subr.mxu0 0.0
    %6715 = vmatpush1.xpose.msra.mxu0 0.0
    %6716 = vmatprep.subr.mxu0 0.0
    %6717 = vmatpush1.xpose.msra.mxu0 0.0
    %6718 = vmatprep.subr.mxu0 0.0
    %6719 = vmatpush1.xpose.msra.mxu0 0.0
    %6720 = vmatprep.subr.mxu0 0.0
    %6721 = vmatpush1.xpose.msra.mxu0 0.0
    %6722 = vmatprep.subr.mxu0 0.0
    %6723 = vmatpush1.xpose.msra.mxu0 0.0
    %6724 = vmatprep.subr.mxu0 0.0
    %6725 = vmatpush1.xpose.msra.mxu0 0.0
    %6726 = vmatprep.subr.mxu0 0.0
    %6727 = vmatpush1.xpose.msra.mxu0 0.0
    %6728 = vmatprep.subr.mxu0 0.0
    %6729 = vmatpush1.xpose.msra.mxu0 0.0
    %6730 = vmatprep.subr.mxu0 0.0
    %6731 = vmatpush1.xpose.msra.mxu0 0.0
    %6732 = vmatprep.mubr.f32.mxu0 0.0
    %6733 = vmatmul.mubr.f32.gmra.mrb[0].mxu0 %v6657
    %v6734 = vpop.f32.mrb[0].mxu0
    %v6735 = vadd.f32 %v388, %v6734
    %v6736 = vpop.f32.mrb[0].mxu0
    %6737 = vmatprep.mubr.f32.mxu0 0.0
    %6738 = vmatmul.mubr.f32.gmra.mrb[0].mxu0 %v6660
    %v6739 = vpop.f32.mrb[0].mxu0
    %v6740 = vadd.f32 %v389, %v6739
    %v6741 = vpop.f32.mrb[0].mxu0
    %6742 = vdwg.mxu0
    %v6743 = vsel %vm590, %v6735, -inf
    %6744 = vmax.xlane.f32.xlu0 %v6743
    %v6745 = vpop.xlane.xlu0 %6744
    %v6746 = vsel %vm590, %v6740, -inf
    %6747 = vmax.xlane.f32.xlu0 %v6746
    %v6748 = vpop.xlane.xlu0 %6747
    %v6749 = vsub.f32 %v6735, %v6745
    %v6750 = vsub.f32 %v6740, %v6748
    %v6751 = vmul.f32 %v6749, 1.442695
    %v6752 = vpow.pop %v6751
    %v6753 = vmul.f32 %v6750, 1.442695
    %v6754 = vpow.pop %v6753
    %v6755 = vsel %vm590, %v6752, 0.0
    %6756 = vadd.xlane.f32.xlu0 %v6755
    %v6757 = vpop.xlane.xlu0 %6756
    %v6758 = vsel %vm590, %v6754, 0.0
    %6759 = vadd.xlane.f32.xlu0 %v6758
    %v6760 = vpop.xlane.xlu0 %6759
    %v6761 = vrcp.pop %v6757
    %v6762 = vrcp.pop %v6760
    %v6763 = vmul.f32 %v6752, %v6761
    %v6764 = vmul.f32 %v6754, %v6762
    %v6765 = vmul.f32 %v6646, %v4362
    %v6766 = vmul.f32 %v6651, %v4362
    %v6767 = vmul.f32 %v6552, %v624
    %v6768 = vmul.f32 %v6557, %v624
    %v6770 = vsel %vm408, %v6767, 0
    %v6773 = vsel %vm408, %v6768, 0
    %6775 = vmatprep.subr.mxu0 0.0
    %6776 = vmatpush1.xpose.msra.mxu0 %v6663
    %6777 = vmatprep.subr.mxu0 0.0
    %6778 = vmatpush1.xpose.msra.mxu0 %v6666
    %6779 = vmatprep.subr.mxu0 0.0
    %6780 = vmatpush1.xpose.msra.mxu0 0.0
    %6781 = vmatprep.subr.mxu0 0.0
    %6782 = vmatpush1.xpose.msra.mxu0 0.0
    %6783 = vmatprep.subr.mxu0 0.0
    %6784 = vmatpush1.xpose.msra.mxu0 0.0
    %6785 = vmatprep.subr.mxu0 0.0
    %6786 = vmatpush1.xpose.msra.mxu0 0.0
    %6787 = vmatprep.subr.mxu0 0.0
    %6788 = vmatpush1.xpose.msra.mxu0 0.0
    %6789 = vmatprep.subr.mxu0 0.0
    %6790 = vmatpush1.xpose.msra.mxu0 0.0
    %6791 = vmatprep.subr.mxu0 0.0
    %6792 = vmatpush1.xpose.msra.mxu0 0.0
    %6793 = vmatprep.subr.mxu0 0.0
    %6794 = vmatpush1.xpose.msra.mxu0 0.0
    %6795 = vmatprep.subr.mxu0 0.0
    %6796 = vmatpush1.xpose.msra.mxu0 0.0
    %6797 = vmatprep.subr.mxu0 0.0
    %6798 = vmatpush1.xpose.msra.mxu0 0.0
    %6799 = vmatprep.subr.mxu0 0.0
    %6800 = vmatpush1.xpose.msra.mxu0 0.0
    %6801 = vmatprep.subr.mxu0 0.0
    %6802 = vmatpush1.xpose.msra.mxu0 0.0
    %6803 = vmatprep.subr.mxu0 0.0
    %6804 = vmatpush1.xpose.msra.mxu0 0.0
    %6805 = vmatprep.subr.mxu0 0.0
    %6806 = vmatpush1.xpose.msra.mxu0 0.0
    %6807 = vmatprep.subr.mxu0 0.0
    %6808 = vmatpush1.xpose.msra.mxu0 0.0
    %6809 = vmatprep.subr.mxu0 0.0
    %6810 = vmatpush1.xpose.msra.mxu0 0.0
    %6811 = vmatprep.subr.mxu0 0.0
    %6812 = vmatpush1.xpose.msra.mxu0 0.0
    %6813 = vmatprep.subr.mxu0 0.0
    %6814 = vmatpush1.xpose.msra.mxu0 0.0
    %6815 = vmatprep.subr.mxu0 0.0
    %6816 = vmatpush1.xpose.msra.mxu0 0.0
    %6817 = vmatprep.subr.mxu0 0.0
    %6818 = vmatpush1.xpose.msra.mxu0 0.0
    %6819 = vmatprep.subr.mxu0 0.0
    %6820 = vmatpush1.xpose.msra.mxu0 0.0
    %6821 = vmatprep.subr.mxu0 0.0
    %6822 = vmatpush1.xpose.msra.mxu0 0.0
    %6823 = vmatprep.subr.mxu0 0.0
    %6824 = vmatpush1.xpose.msra.mxu0 0.0
    %6825 = vmatprep.subr.mxu0 0.0
    %6826 = vmatpush1.xpose.msra.mxu0 0.0
    %6827 = vmatprep.subr.mxu0 0.0
    %6828 = vmatpush1.xpose.msra.mxu0 0.0
    %6829 = vmatprep.subr.mxu0 0.0
    %6830 = vmatpush1.xpose.msra.mxu0 0.0
    %6831 = vmatprep.subr.mxu0 0.0
    %6832 = vmatpush1.xpose.msra.mxu0 0.0
    %6833 = vmatprep.subr.mxu0 0.0
    %6834 = vmatpush1.xpose.msra.mxu0 0.0
    %6835 = vmatprep.subr.mxu0 0.0
    %6836 = vmatpush1.xpose.msra.mxu0 0.0
    %6837 = vmatprep.subr.mxu0 0.0
    %6838 = vmatpush1.xpose.msra.mxu0 0.0
    %6839 = vmatprep.mubr.f32.mxu0 0.0
    %6840 = vmatmul.mubr.f32.gmra.mrb[0].mxu0 %v6770
    %v6841 = vpop.f32.mrb[0].mxu0
    %v6842 = vadd.f32 %v388, %v6841
    %v6843 = vpop.f32.mrb[0].mxu0
    %6844 = vmatprep.mubr.f32.mxu0 0.0
    %6845 = vmatmul.mubr.f32.gmra.mrb[0].mxu0 %v6773
    %v6846 = vpop.f32.mrb[0].mxu0
    %v6847 = vadd.f32 %v389, %v6846
    %v6848 = vpop.f32.mrb[0].mxu0
    %6849 = vdwg.mxu0
    %v6850 = vsel %vm590, %v6842, -inf
    %6851 = vmax.xlane.f32.xlu0 %v6850
    %v6852 = vpop.xlane.xlu0 %6851
    %v6853 = vsel %vm590, %v6847, -inf
    %6854 = vmax.xlane.f32.xlu0 %v6853
    %v6855 = vpop.xlane.xlu0 %6854
    %v6856 = vsub.f32 %v6842, %v6852
    %v6857 = vsub.f32 %v6847, %v6855
    %v6858 = vmul.f32 %v6856, 1.442695
    %v6859 = vpow.pop %v6858
    %v6860 = vmul.f32 %v6857, 1.442695
    %v6861 = vpow.pop %v6860
    %v6862 = vsel %vm590, %v6859, 0.0
    %6863 = vadd.xlane.f32.xlu0 %v6862
    %v6864 = vpop.xlane.xlu0 %6863
    %v6865 = vsel %vm590, %v6861, 0.0
    %6866 = vadd.xlane.f32.xlu0 %v6865
    %v6867 = vpop.xlane.xlu0 %6866
    %v6868 = vrcp.pop %v6864
    %v6869 = vrcp.pop %v6867
    %v6870 = vmul.f32 %v6859, %v6868
    %v6871 = vmul.f32 %v6861, %v6869
    %v6872 = vmul.f32 %v6646, %v4472
    %v6873 = vmul.f32 %v6651, %v4472
    %6876 = vrot.lane.b32.xlu0 %v6872, 96
    %v6877 = vpop.permute.xlu0 %6876
    %6878 = vrot.lane.b32.xlu0 %v6873, 96
    %v6879 = vpop.permute.xlu0 %6878
    %v6883 = vsel %vm590, %v6870, 0
    %v6886 = vsel %vm590, %v6871, 0
    %6888 = vmatprep.subr.mxu0 0.0
    %6889 = vmatpush1.msra.mxu0 %v6877
    %6890 = vmatprep.subr.mxu0 0.0
    %6891 = vmatpush1.msra.mxu0 %v6879
    %6892 = vmatprep.subr.mxu0 0.0
    %6893 = vmatpush1.msra.mxu0 0.0
    %6894 = vmatprep.subr.mxu0 0.0
    %6895 = vmatpush1.msra.mxu0 0.0
    %6896 = vmatprep.subr.mxu0 0.0
    %6897 = vmatpush1.msra.mxu0 0.0
    %6898 = vmatprep.subr.mxu0 0.0
    %6899 = vmatpush1.msra.mxu0 0.0
    %6900 = vmatprep.subr.mxu0 0.0
    %6901 = vmatpush1.msra.mxu0 0.0
    %6902 = vmatprep.subr.mxu0 0.0
    %6903 = vmatpush1.msra.mxu0 0.0
    %6904 = vmatprep.subr.mxu0 0.0
    %6905 = vmatpush1.msra.mxu0 0.0
    %6906 = vmatprep.subr.mxu0 0.0
    %6907 = vmatpush1.msra.mxu0 0.0
    %6908 = vmatprep.subr.mxu0 0.0
    %6909 = vmatpush1.msra.mxu0 0.0
    %6910 = vmatprep.subr.mxu0 0.0
    %6911 = vmatpush1.msra.mxu0 0.0
    %6912 = vmatprep.subr.mxu0 0.0
    %6913 = vmatpush1.msra.mxu0 0.0
    %6914 = vmatprep.subr.mxu0 0.0
    %6915 = vmatpush1.msra.mxu0 0.0
    %6916 = vmatprep.subr.mxu0 0.0
    %6917 = vmatpush1.msra.mxu0 0.0
    %6918 = vmatprep.subr.mxu0 0.0
    %6919 = vmatpush1.msra.mxu0 0.0
    %6920 = vmatprep.subr.mxu0 0.0
    %6921 = vmatpush1.msra.mxu0 0.0
    %6922 = vmatprep.subr.mxu0 0.0
    %6923 = vmatpush1.msra.mxu0 0.0
    %6924 = vmatprep.subr.mxu0 0.0
    %6925 = vmatpush1.msra.mxu0 0.0
    %6926 = vmatprep.subr.mxu0 0.0
    %6927 = vmatpush1.msra.mxu0 0.0
    %6928 = vmatprep.subr.mxu0 0.0
    %6929 = vmatpush1.msra.mxu0 0.0
    %6930 = vmatprep.subr.mxu0 0.0
    %6931 = vmatpush1.msra.mxu0 0.0
    %6932 = vmatprep.subr.mxu0 0.0
    %6933 = vmatpush1.msra.mxu0 0.0
    %6934 = vmatprep.subr.mxu0 0.0
    %6935 = vmatpush1.msra.mxu0 0.0
    %6936 = vmatprep.subr.mxu0 0.0
    %6937 = vmatpush1.msra.mxu0 0.0
    %6938 = vmatprep.subr.mxu0 0.0
    %6939 = vmatpush1.msra.mxu0 0.0
    %6940 = vmatprep.subr.mxu0 0.0
    %6941 = vmatpush1.msra.mxu0 0.0
    %6942 = vmatprep.subr.mxu0 0.0
    %6943 = vmatpush1.msra.mxu0 0.0
    %6944 = vmatprep.subr.mxu0 0.0
    %6945 = vmatpush1.msra.mxu0 0.0
    %6946 = vmatprep.subr.mxu0 0.0
    %6947 = vmatpush1.msra.mxu0 0.0
    %6948 = vmatprep.subr.mxu0 0.0
    %6949 = vmatpush1.msra.mxu0 0.0
    %6950 = vmatprep.subr.mxu0 0.0
    %6951 = vmatpush1.msra.mxu0 0.0
    %6952 = vmatprep.mubr.f32.mxu0 0.0
    %6953 = vmatmul.mubr.f32.gmra.mrb[0].mxu0 %v6883
    %v6954 = vpop.f32.mrb[0].mxu0
    %v6955 = vadd.f32 0.0, %v6954
    %v6956 = vpop.f32.mrb[0].mxu0
    %6957 = vmatprep.mubr.f32.mxu0 0.0
    %6958 = vmatmul.mubr.f32.gmra.mrb[0].mxu0 %v6886
    %v6959 = vpop.f32.mrb[0].mxu0
    %v6960 = vadd.f32 0.0, %v6959
    %v6961 = vpop.f32.mrb[0].mxu0
    %6962 = vdwg.mxu0
    %6965 = vrot.lane.b32.xlu0 %v6765, 96
    %v6966 = vpop.permute.xlu0 %6965
    %6967 = vrot.lane.b32.xlu0 %v6766, 96
    %v6968 = vpop.permute.xlu0 %6967
    %v6972 = vsel %vm590, %v6763, 0
    %v6975 = vsel %vm590, %v6764, 0
    %6977 = vmatprep.subr.mxu0 0.0
    %6978 = vmatpush1.msra.mxu0 %v6966
    %6979 = vmatprep.subr.mxu0 0.0
    %6980 = vmatpush1.msra.mxu0 %v6968
    %6981 = vmatprep.subr.mxu0 0.0
    %6982 = vmatpush1.msra.mxu0 0.0
    %6983 = vmatprep.subr.mxu0 0.0
    %6984 = vmatpush1.msra.mxu0 0.0
    %6985 = vmatprep.subr.mxu0 0.0
    %6986 = vmatpush1.msra.mxu0 0.0
    %6987 = vmatprep.subr.mxu0 0.0
    %6988 = vmatpush1.msra.mxu0 0.0
    %6989 = vmatprep.subr.mxu0 0.0
    %6990 = vmatpush1.msra.mxu0 0.0
    %6991 = vmatprep.subr.mxu0 0.0
    %6992 = vmatpush1.msra.mxu0 0.0
    %6993 = vmatprep.subr.mxu0 0.0
    %6994 = vmatpush1.msra.mxu0 0.0
    %6995 = vmatprep.subr.mxu0 0.0
    %6996 = vmatpush1.msra.mxu0 0.0
    %6997 = vmatprep.subr.mxu0 0.0
    %6998 = vmatpush1.msra.mxu0 0.0
    %6999 = vmatprep.subr.mxu0 0.0
    %7000 = vmatpush1.msra.mxu0 0.0
    %7001 = vmatprep.subr.mxu0 0.0
    %7002 = vmatpush1.msra.mxu0 0.0
    %7003 = vmatprep.subr.mxu0 0.0
    %7004 = vmatpush1.msra.mxu0 0.0
    %7005 = vmatprep.subr.mxu0 0.0
    %7006 = vmatpush1.msra.mxu0 0.0
    %7007 = vmatprep.subr.mxu0 0.0
    %7008 = vmatpush1.msra.mxu0 0.0
    %7009 = vmatprep.subr.mxu0 0.0
    %7010 = vmatpush1.msra.mxu0 0.0
    %7011 = vmatprep.subr.mxu0 0.0
    %7012 = vmatpush1.msra.mxu0 0.0
    %7013 = vmatprep.subr.mxu0 0.0
    %7014 = vmatpush1.msra.mxu0 0.0
    %7015 = vmatprep.subr.mxu0 0.0
    %7016 = vmatpush1.msra.mxu0 0.0
    %7017 = vmatprep.subr.mxu0 0.0
    %7018 = vmatpush1.msra.mxu0 0.0
    %7019 = vmatprep.subr.mxu0 0.0
    %7020 = vmatpush1.msra.mxu0 0.0
    %7021 = vmatprep.subr.mxu0 0.0
    %7022 = vmatpush1.msra.mxu0 0.0
    %7023 = vmatprep.subr.mxu0 0.0
    %7024 = vmatpush1.msra.mxu0 0.0
    %7025 = vmatprep.subr.mxu0 0.0
    %7026 = vmatpush1.msra.mxu0 0.0
    %7027 = vmatprep.subr.mxu0 0.0
    %7028 = vmatpush1.msra.mxu0 0.0
    %7029 = vmatprep.subr.mxu0 0.0
    %7030 = vmatpush1.msra.mxu0 0.0
    %7031 = vmatprep.subr.mxu0 0.0
    %7032 = vmatpush1.msra.mxu0 0.0
    %7033 = vmatprep.subr.mxu0 0.0
    %7034 = vmatpush1.msra.mxu0 0.0
    %7035 = vmatprep.subr.mxu0 0.0
    %7036 = vmatpush1.msra.mxu0 0.0
    %7037 = vmatprep.subr.mxu0 0.0
    %7038 = vmatpush1.msra.mxu0 0.0
    %7039 = vmatprep.subr.mxu0 0.0
    %7040 = vmatpush1.msra.mxu0 0.0
    %7041 = vmatprep.mubr.f32.mxu0 0.0
    %7042 = vmatmul.mubr.f32.gmra.mrb[0].mxu0 %v6972
    %v7043 = vpop.f32.mrb[0].mxu0
    %v7044 = vadd.f32 %v6955, %v7043
    %v7045 = vpop.f32.mrb[0].mxu0
    %7046 = vmatprep.mubr.f32.mxu0 0.0
    %7047 = vmatmul.mubr.f32.gmra.mrb[0].mxu0 %v6975
    %v7048 = vpop.f32.mrb[0].mxu0
    %v7049 = vadd.f32 %v6960, %v7048
    %v7050 = vpop.f32.mrb[0].mxu0
    %7051 = vdwg.mxu0
    %v7052 = vmul.f32 %v6552, %v920
    %v7053 = vmul.f32 %v6557, %v920
    %v7055 = vsel %vm408, %v7052, 0
    %v7058 = vsel %vm408, %v7053, 0
    %7060 = vmatprep.subr.mxu0 0.0
    %7061 = vmatpush1.xpose.msra.mxu0 %v6663
    %7062 = vmatprep.subr.mxu0 0.0
    %7063 = vmatpush1.xpose.msra.mxu0 %v6666
    %7064 = vmatprep.subr.mxu0 0.0
    %7065 = vmatpush1.xpose.msra.mxu0 0.0
    %7066 = vmatprep.subr.mxu0 0.0
    %7067 = vmatpush1.xpose.msra.mxu0 0.0
    %7068 = vmatprep.subr.mxu0 0.0
    %7069 = vmatpush1.xpose.msra.mxu0 0.0
    %7070 = vmatprep.subr.mxu0 0.0
    %7071 = vmatpush1.xpose.msra.mxu0 0.0
    %7072 = vmatprep.subr.mxu0 0.0
    %7073 = vmatpush1.xpose.msra.mxu0 0.0
    %7074 = vmatprep.subr.mxu0 0.0
    %7075 = vmatpush1.xpose.msra.mxu0 0.0
    %7076 = vmatprep.subr.mxu0 0.0
    %7077 = vmatpush1.xpose.msra.mxu0 0.0
    %7078 = vmatprep.subr.mxu0 0.0
    %7079 = vmatpush1.xpose.msra.mxu0 0.0
    %7080 = vmatprep.subr.mxu0 0.0
    %7081 = vmatpush1.xpose.msra.mxu0 0.0
    %7082 = vmatprep.subr.mxu0 0.0
    %7083 = vmatpush1.xpose.msra.mxu0 0.0
    %7084 = vmatprep.subr.mxu0 0.0
    %7085 = vmatpush1.xpose.msra.mxu0 0.0
    %7086 = vmatprep.subr.mxu0 0.0
    %7087 = vmatpush1.xpose.msra.mxu0 0.0
    %7088 = vmatprep.subr.mxu0 0.0
    %7089 = vmatpush1.xpose.msra.mxu0 0.0
    %7090 = vmatprep.subr.mxu0 0.0
    %7091 = vmatpush1.xpose.msra.mxu0 0.0
    %7092 = vmatprep.subr.mxu0 0.0
    %7093 = vmatpush1.xpose.msra.mxu0 0.0
    %7094 = vmatprep.subr.mxu0 0.0
    %7095 = vmatpush1.xpose.msra.mxu0 0.0
    %7096 = vmatprep.subr.mxu0 0.0
    %7097 = vmatpush1.xpose.msra.mxu0 0.0
    %7098 = vmatprep.subr.mxu0 0.0
    %7099 = vmatpush1.xpose.msra.mxu0 0.0
    %7100 = vmatprep.subr.mxu0 0.0
    %7101 = vmatpush1.xpose.msra.mxu0 0.0
    %7102 = vmatprep.subr.mxu0 0.0
    %7103 = vmatpush1.xpose.msra.mxu0 0.0
    %7104 = vmatprep.subr.mxu0 0.0
    %7105 = vmatpush1.xpose.msra.mxu0 0.0
    %7106 = vmatprep.subr.mxu0 0.0
    %7107 = vmatpush1.xpose.msra.mxu0 0.0
    %7108 = vmatprep.subr.mxu0 0.0
    %7109 = vmatpush1.xpose.msra.mxu0 0.0
    %7110 = vmatprep.subr.mxu0 0.0
    %7111 = vmatpush1.xpose.msra.mxu0 0.0
    %7112 = vmatprep.subr.mxu0 0.0
    %7113 = vmatpush1.xpose.msra.mxu0 0.0
    %7114 = vmatprep.subr.mxu0 0.0
    %7115 = vmatpush1.xpose.msra.mxu0 0.0
    %7116 = vmatprep.subr.mxu0 0.0
    %7117 = vmatpush1.xpose.msra.mxu0 0.0
    %7118 = vmatprep.subr.mxu0 0.0
    %7119 = vmatpush1.xpose.msra.mxu0 0.0
    %7120 = vmatprep.subr.mxu0 0.0
    %7121 = vmatpush1.xpose.msra.mxu0 0.0
    %7122 = vmatprep.subr.mxu0 0.0
    %7123 = vmatpush1.xpose.msra.mxu0 0.0
    %7124 = vmatprep.mubr.f32.mxu0 0.0
    %7125 = vmatmul.mubr.f32.gmra.mrb[0].mxu0 %v7055
    %v7126 = vpop.f32.mrb[0].mxu0
    %v7127 = vadd.f32 %v388, %v7126
    %v7128 = vpop.f32.mrb[0].mxu0
    %7129 = vmatprep.mubr.f32.mxu0 0.0
    %7130 = vmatmul.mubr.f32.gmra.mrb[0].mxu0 %v7058
    %v7131 = vpop.f32.mrb[0].mxu0
    %v7132 = vadd.f32 %v389, %v7131
    %v7133 = vpop.f32.mrb[0].mxu0
    %7134 = vdwg.mxu0
    %v7135 = vsel %vm590, %v7127, -inf
    %7136 = vmax.xlane.f32.xlu0 %v7135
    %v7137 = vpop.xlane.xlu0 %7136
    %v7138 = vsel %vm590, %v7132, -inf
    %7139 = vmax.xlane.f32.xlu0 %v7138
    %v7140 = vpop.xlane.xlu0 %7139
    %v7141 = vsub.f32 %v7127, %v7137
    %v7142 = vsub.f32 %v7132, %v7140
    %v7143 = vmul.f32 %v7141, 1.442695
    %v7144 = vpow.pop %v7143
    %v7145 = vmul.f32 %v7142, 1.442695
    %v7146 = vpow.pop %v7145
    %v7147 = vsel %vm590, %v7144, 0.0
    %7148 = vadd.xlane.f32.xlu0 %v7147
    %v7149 = vpop.xlane.xlu0 %7148
    %v7150 = vsel %vm590, %v7146, 0.0
    %7151 = vadd.xlane.f32.xlu0 %v7150
    %v7152 = vpop.xlane.xlu0 %7151
    %v7153 = vrcp.pop %v7149
    %v7154 = vrcp.pop %v7152
    %v7155 = vmul.f32 %v7144, %v7153
    %v7156 = vmul.f32 %v7146, %v7154
    %v7157 = vmul.f32 %v6646, %v4760
    %v7158 = vmul.f32 %v6651, %v4760
    %7161 = vrot.lane.b32.xlu0 %v7157, 96
    %v7162 = vpop.permute.xlu0 %7161
    %7163 = vrot.lane.b32.xlu0 %v7158, 96
    %v7164 = vpop.permute.xlu0 %7163
    %v7168 = vsel %vm590, %v7155, 0
    %v7171 = vsel %vm590, %v7156, 0
    %7173 = vmatprep.subr.mxu0 0.0
    %7174 = vmatpush1.msra.mxu0 %v7162
    %7175 = vmatprep.subr.mxu0 0.0
    %7176 = vmatpush1.msra.mxu0 %v7164
    %7177 = vmatprep.subr.mxu0 0.0
    %7178 = vmatpush1.msra.mxu0 0.0
    %7179 = vmatprep.subr.mxu0 0.0
    %7180 = vmatpush1.msra.mxu0 0.0
    %7181 = vmatprep.subr.mxu0 0.0
    %7182 = vmatpush1.msra.mxu0 0.0
    %7183 = vmatprep.subr.mxu0 0.0
    %7184 = vmatpush1.msra.mxu0 0.0
    %7185 = vmatprep.subr.mxu0 0.0
    %7186 = vmatpush1.msra.mxu0 0.0
    %7187 = vmatprep.subr.mxu0 0.0
    %7188 = vmatpush1.msra.mxu0 0.0
    %7189 = vmatprep.subr.mxu0 0.0
    %7190 = vmatpush1.msra.mxu0 0.0
    %7191 = vmatprep.subr.mxu0 0.0
    %7192 = vmatpush1.msra.mxu0 0.0
    %7193 = vmatprep.subr.mxu0 0.0
    %7194 = vmatpush1.msra.mxu0 0.0
    %7195 = vmatprep.subr.mxu0 0.0
    %7196 = vmatpush1.msra.mxu0 0.0
    %7197 = vmatprep.subr.mxu0 0.0
    %7198 = vmatpush1.msra.mxu0 0.0
    %7199 = vmatprep.subr.mxu0 0.0
    %7200 = vmatpush1.msra.mxu0 0.0
    %7201 = vmatprep.subr.mxu0 0.0
    %7202 = vmatpush1.msra.mxu0 0.0
    %7203 = vmatprep.subr.mxu0 0.0
    %7204 = vmatpush1.msra.mxu0 0.0
    %7205 = vmatprep.subr.mxu0 0.0
    %7206 = vmatpush1.msra.mxu0 0.0
    %7207 = vmatprep.subr.mxu0 0.0
    %7208 = vmatpush1.msra.mxu0 0.0
    %7209 = vmatprep.subr.mxu0 0.0
    %7210 = vmatpush1.msra.mxu0 0.0
    %7211 = vmatprep.subr.mxu0 0.0
    %7212 = vmatpush1.msra.mxu0 0.0
    %7213 = vmatprep.subr.mxu0 0.0
    %7214 = vmatpush1.msra.mxu0 0.0
    %7215 = vmatprep.subr.mxu0 0.0
    %7216 = vmatpush1.msra.mxu0 0.0
    %7217 = vmatprep.subr.mxu0 0.0
    %7218 = vmatpush1.msra.mxu0 0.0
    %7219 = vmatprep.subr.mxu0 0.0
    %7220 = vmatpush1.msra.mxu0 0.0
    %7221 = vmatprep.subr.mxu0 0.0
    %7222 = vmatpush1.msra.mxu0 0.0
    %7223 = vmatprep.subr.mxu0 0.0
    %7224 = vmatpush1.msra.mxu0 0.0
    %7225 = vmatprep.subr.mxu0 0.0
    %7226 = vmatpush1.msra.mxu0 0.0
    %7227 = vmatprep.subr.mxu0 0.0
    %7228 = vmatpush1.msra.mxu0 0.0
    %7229 = vmatprep.subr.mxu0 0.0
    %7230 = vmatpush1.msra.mxu0 0.0
    %7231 = vmatprep.subr.mxu0 0.0
    %7232 = vmatpush1.msra.mxu0 0.0
    %7233 = vmatprep.subr.mxu0 0.0
    %7234 = vmatpush1.msra.mxu0 0.0
    %7235 = vmatprep.subr.mxu0 0.0
    %7236 = vmatpush1.msra.mxu0 0.0
    %7237 = vmatprep.mubr.f32.mxu0 0.0
    %7238 = vmatmul.mubr.f32.gmra.mrb[0].mxu0 %v7168
    %v7239 = vpop.f32.mrb[0].mxu0
    %v7240 = vadd.f32 0.0, %v7239
    %v7241 = vpop.f32.mrb[0].mxu0
    %7242 = vmatprep.mubr.f32.mxu0 0.0
    %7243 = vmatmul.mubr.f32.gmra.mrb[0].mxu0 %v7171
    %v7244 = vpop.f32.mrb[0].mxu0
    %v7245 = vadd.f32 0.0, %v7244
    %v7246 = vpop.f32.mrb[0].mxu0
    %7247 = vdwg.mxu0
    %v7248 = vadd.f32 %v7044, %v7240
    %v7249 = vadd.f32 %v7049, %v7245
    %v7250 = vmul.f32 %v6552, %v1129
    %v7251 = vmul.f32 %v6557, %v1129
    %v7253 = vsel %vm408, %v7250, 0
    %v7256 = vsel %vm408, %v7251, 0
    %7258 = vmatprep.subr.mxu0 0.0
    %7259 = vmatpush1.xpose.msra.mxu0 %v6663
    %7260 = vmatprep.subr.mxu0 0.0
    %7261 = vmatpush1.xpose.msra.mxu0 %v6666
    %7262 = vmatprep.subr.mxu0 0.0
    %7263 = vmatpush1.xpose.msra.mxu0 0.0
    %7264 = vmatprep.subr.mxu0 0.0
    %7265 = vmatpush1.xpose.msra.mxu0 0.0
    %7266 = vmatprep.subr.mxu0 0.0
    %7267 = vmatpush1.xpose.msra.mxu0 0.0
    %7268 = vmatprep.subr.mxu0 0.0
    %7269 = vmatpush1.xpose.msra.mxu0 0.0
    %7270 = vmatprep.subr.mxu0 0.0
    %7271 = vmatpush1.xpose.msra.mxu0 0.0
    %7272 = vmatprep.subr.mxu0 0.0
    %7273 = vmatpush1.xpose.msra.mxu0 0.0
    %7274 = vmatprep.subr.mxu0 0.0
    %7275 = vmatpush1.xpose.msra.mxu0 0.0
    %7276 = vmatprep.subr.mxu0 0.0
    %7277 = vmatpush1.xpose.msra.mxu0 0.0
    %7278 = vmatprep.subr.mxu0 0.0
    %7279 = vmatpush1.xpose.msra.mxu0 0.0
    %7280 = vmatprep.subr.mxu0 0.0
    %7281 = vmatpush1.xpose.msra.mxu0 0.0
    %7282 = vmatprep.subr.mxu0 0.0
    %7283 = vmatpush1.xpose.msra.mxu0 0.0
    %7284 = vmatprep.subr.mxu0 0.0
    %7285 = vmatpush1.xpose.msra.mxu0 0.0
    %7286 = vmatprep.subr.mxu0 0.0
    %7287 = vmatpush1.xpose.msra.mxu0 0.0
    %7288 = vmatprep.subr.mxu0 0.0
    %7289 = vmatpush1.xpose.msra.mxu0 0.0
    %7290 = vmatprep.subr.mxu0 0.0
    %7291 = vmatpush1.xpose.msra.mxu0 0.0
    %7292 = vmatprep.subr.mxu0 0.0
    %7293 = vmatpush1.xpose.msra.mxu0 0.0
    %7294 = vmatprep.subr.mxu0 0.0
    %7295 = vmatpush1.xpose.msra.mxu0 0.0
    %7296 = vmatprep.subr.mxu0 0.0
    %7297 = vmatpush1.xpose.msra.mxu0 0.0
    %7298 = vmatprep.subr.mxu0 0.0
    %7299 = vmatpush1.xpose.msra.mxu0 0.0
    %7300 = vmatprep.subr.mxu0 0.0
    %7301 = vmatpush1.xpose.msra.mxu0 0.0
    %7302 = vmatprep.subr.mxu0 0.0
    %7303 = vmatpush1.xpose.msra.mxu0 0.0
    %7304 = vmatprep.subr.mxu0 0.0
    %7305 = vmatpush1.xpose.msra.mxu0 0.0
    %7306 = vmatprep.subr.mxu0 0.0
    %7307 = vmatpush1.xpose.msra.mxu0 0.0
    %7308 = vmatprep.subr.mxu0 0.0
    %7309 = vmatpush1.xpose.msra.mxu0 0.0
    %7310 = vmatprep.subr.mxu0 0.0
    %7311 = vmatpush1.xpose.msra.mxu0 0.0
    %7312 = vmatprep.subr.mxu0 0.0
    %7313 = vmatpush1.xpose.msra.mxu0 0.0
    %7314 = vmatprep.subr.mxu0 0.0
    %7315 = vmatpush1.xpose.msra.mxu0 0.0
    %7316 = vmatprep.subr.mxu0 0.0
    %7317 = vmatpush1.xpose.msra.mxu0 0.0
    %7318 = vmatprep.subr.mxu0 0.0
    %7319 = vmatpush1.xpose.msra.mxu0 0.0
    %7320 = vmatprep.subr.mxu0 0.0
    %7321 = vmatpush1.xpose.msra.mxu0 0.0
    %7322 = vmatprep.mubr.f32.mxu0 0.0
    %7323 = vmatmul.mubr.f32.gmra.mrb[0].mxu0 %v7253
    %v7324 = vpop.f32.mrb[0].mxu0
    %v7325 = vadd.f32 %v388, %v7324
    %v7326 = vpop.f32.mrb[0].mxu0
    %7327 = vmatprep.mubr.f32.mxu0 0.0
    %7328 = vmatmul.mubr.f32.gmra.mrb[0].mxu0 %v7256
    %v7329 = vpop.f32.mrb[0].mxu0
    %v7330 = vadd.f32 %v389, %v7329
    %v7331 = vpop.f32.mrb[0].mxu0
    %7332 = vdwg.mxu0
    %v7333 = vsel %vm590, %v7325, -inf
    %7334 = vmax.xlane.f32.xlu0 %v7333
    %v7335 = vpop.xlane.xlu0 %7334
    %v7336 = vsel %vm590, %v7330, -inf
    %7337 = vmax.xlane.f32.xlu0 %v7336
    %v7338 = vpop.xlane.xlu0 %7337
    %v7339 = vsub.f32 %v7325, %v7335
    %v7340 = vsub.f32 %v7330, %v7338
    %v7341 = vmul.f32 %v7339, 1.442695
    %v7342 = vpow.pop %v7341
    %v7343 = vmul.f32 %v7340, 1.442695
    %v7344 = vpow.pop %v7343
    %v7345 = vsel %vm590, %v7342, 0.0
    %7346 = vadd.xlane.f32.xlu0 %v7345
    %v7347 = vpop.xlane.xlu0 %7346
    %v7348 = vsel %vm590, %v7344, 0.0
    %7349 = vadd.xlane.f32.xlu0 %v7348
    %v7350 = vpop.xlane.xlu0 %7349
    %v7351 = vrcp.pop %v7347
    %v7352 = vrcp.pop %v7350
    %v7353 = vmul.f32 %v7342, %v7351
    %v7354 = vmul.f32 %v7344, %v7352
    %v7355 = vmul.f32 %v6646, %v4961
    %v7356 = vmul.f32 %v6651, %v4961
    %7359 = vrot.lane.b32.xlu0 %v7355, 96
    %v7360 = vpop.permute.xlu0 %7359
    %7361 = vrot.lane.b32.xlu0 %v7356, 96
    %v7362 = vpop.permute.xlu0 %7361
    %v7366 = vsel %vm590, %v7353, 0
    %v7369 = vsel %vm590, %v7354, 0
    %7371 = vmatprep.subr.mxu0 0.0
    %7372 = vmatpush1.msra.mxu0 %v7360
    %7373 = vmatprep.subr.mxu0 0.0
    %7374 = vmatpush1.msra.mxu0 %v7362
    %7375 = vmatprep.subr.mxu0 0.0
    %7376 = vmatpush1.msra.mxu0 0.0
    %7377 = vmatprep.subr.mxu0 0.0
    %7378 = vmatpush1.msra.mxu0 0.0
    %7379 = vmatprep.subr.mxu0 0.0
    %7380 = vmatpush1.msra.mxu0 0.0
    %7381 = vmatprep.subr.mxu0 0.0
    %7382 = vmatpush1.msra.mxu0 0.0
    %7383 = vmatprep.subr.mxu0 0.0
    %7384 = vmatpush1.msra.mxu0 0.0
    %7385 = vmatprep.subr.mxu0 0.0
    %7386 = vmatpush1.msra.mxu0 0.0
    %7387 = vmatprep.subr.mxu0 0.0
    %7388 = vmatpush1.msra.mxu0 0.0
    %7389 = vmatprep.subr.mxu0 0.0
    %7390 = vmatpush1.msra.mxu0 0.0
    %7391 = vmatprep.subr.mxu0 0.0
    %7392 = vmatpush1.msra.mxu0 0.0
    %7393 = vmatprep.subr.mxu0 0.0
    %7394 = vmatpush1.msra.mxu0 0.0
    %7395 = vmatprep.subr.mxu0 0.0
    %7396 = vmatpush1.msra.mxu0 0.0
    %7397 = vmatprep.subr.mxu0 0.0
    %7398 = vmatpush1.msra.mxu0 0.0
    %7399 = vmatprep.subr.mxu0 0.0
    %7400 = vmatpush1.msra.mxu0 0.0
    %7401 = vmatprep.subr.mxu0 0.0
    %7402 = vmatpush1.msra.mxu0 0.0
    %7403 = vmatprep.subr.mxu0 0.0
    %7404 = vmatpush1.msra.mxu0 0.0
    %7405 = vmatprep.subr.mxu0 0.0
    %7406 = vmatpush1.msra.mxu0 0.0
    %7407 = vmatprep.subr.mxu0 0.0
    %7408 = vmatpush1.msra.mxu0 0.0
    %7409 = vmatprep.subr.mxu0 0.0
    %7410 = vmatpush1.msra.mxu0 0.0
    %7411 = vmatprep.subr.mxu0 0.0
    %7412 = vmatpush1.msra.mxu0 0.0
    %7413 = vmatprep.subr.mxu0 0.0
    %7414 = vmatpush1.msra.mxu0 0.0
    %7415 = vmatprep.subr.mxu0 0.0
    %7416 = vmatpush1.msra.mxu0 0.0
    %7417 = vmatprep.subr.mxu0 0.0
    %7418 = vmatpush1.msra.mxu0 0.0
    %7419 = vmatprep.subr.mxu0 0.0
    %7420 = vmatpush1.msra.mxu0 0.0
    %7421 = vmatprep.subr.mxu0 0.0
    %7422 = vmatpush1.msra.mxu0 0.0
    %7423 = vmatprep.subr.mxu0 0.0
    %7424 = vmatpush1.msra.mxu0 0.0
    %7425 = vmatprep.subr.mxu0 0.0
    %7426 = vmatpush1.msra.mxu0 0.0
    %7427 = vmatprep.subr.mxu0 0.0
    %7428 = vmatpush1.msra.mxu0 0.0
    %7429 = vmatprep.subr.mxu0 0.0
    %7430 = vmatpush1.msra.mxu0 0.0
    %7431 = vmatprep.subr.mxu0 0.0
    %7432 = vmatpush1.msra.mxu0 0.0
    %7433 = vmatprep.subr.mxu0 0.0
    %7434 = vmatpush1.msra.mxu0 0.0
    %7435 = vmatprep.mubr.f32.mxu0 0.0
    %7436 = vmatmul.mubr.f32.gmra.mrb[0].mxu0 %v7366
    %v7437 = vpop.f32.mrb[0].mxu0
    %v7438 = vadd.f32 0.0, %v7437
    %v7439 = vpop.f32.mrb[0].mxu0
    %7440 = vmatprep.mubr.f32.mxu0 0.0
    %7441 = vmatmul.mubr.f32.gmra.mrb[0].mxu0 %v7369
    %v7442 = vpop.f32.mrb[0].mxu0
    %v7443 = vadd.f32 0.0, %v7442
    %v7444 = vpop.f32.mrb[0].mxu0
    %7445 = vdwg.mxu0
    %v7446 = vadd.f32 %v7248, %v7438
    %v7447 = vadd.f32 %v7249, %v7443
    %v7449 = vlaneseq
    %v7450 = vshrl.u32 %v7449, 7
    %v7451 = vsub.s32 0, %v7450
    %v7452 = vrot.slane %v6472, %v7451
    %v7455 = vsel %vm408, %v7446, 0
    %v7458 = vsel %vm408, %v7447, 0
    %7460 = vmatprep.subr.mxu0 0.0
    %7461 = vmatpush1.msra.mxu0 %v6467
    %7462 = vmatprep.subr.mxu0 0.0
    %7463 = vmatpush1.msra.mxu0 %v6468
    %7464 = vmatprep.subr.mxu0 0.0
    %7465 = vmatpush1.msra.mxu0 %v6469
    %7466 = vmatprep.subr.mxu0 0.0
    %7467 = vmatpush1.msra.mxu0 %v6470
    %7468 = vmatprep.subr.mxu0 0.0
    %7469 = vmatpush1.msra.mxu0 0.0
    %7470 = vmatprep.subr.mxu0 0.0
    %7471 = vmatpush1.msra.mxu0 0.0
    %7472 = vmatprep.subr.mxu0 0.0
    %7473 = vmatpush1.msra.mxu0 0.0
    %7474 = vmatprep.subr.mxu0 0.0
    %7475 = vmatpush1.msra.mxu0 0.0
    %7476 = vmatprep.subr.mxu0 0.0
    %7477 = vmatpush1.msra.mxu0 0.0
    %7478 = vmatprep.subr.mxu0 0.0
    %7479 = vmatpush1.msra.mxu0 0.0
    %7480 = vmatprep.subr.mxu0 0.0
    %7481 = vmatpush1.msra.mxu0 0.0
    %7482 = vmatprep.subr.mxu0 0.0
    %7483 = vmatpush1.msra.mxu0 0.0
    %7484 = vmatprep.subr.mxu0 0.0
    %7485 = vmatpush1.msra.mxu0 0.0
    %7486 = vmatprep.subr.mxu0 0.0
    %7487 = vmatpush1.msra.mxu0 0.0
    %7488 = vmatprep.subr.mxu0 0.0
    %7489 = vmatpush1.msra.mxu0 0.0
    %7490 = vmatprep.subr.mxu0 0.0
    %7491 = vmatpush1.msra.mxu0 0.0
    %7492 = vmatprep.subr.mxu0 0.0
    %7493 = vmatpush1.msra.mxu0 0.0
    %7494 = vmatprep.subr.mxu0 0.0
    %7495 = vmatpush1.msra.mxu0 0.0
    %7496 = vmatprep.subr.mxu0 0.0
    %7497 = vmatpush1.msra.mxu0 0.0
    %7498 = vmatprep.subr.mxu0 0.0
    %7499 = vmatpush1.msra.mxu0 0.0
    %7500 = vmatprep.subr.mxu0 0.0
    %7501 = vmatpush1.msra.mxu0 0.0
    %7502 = vmatprep.subr.mxu0 0.0
    %7503 = vmatpush1.msra.mxu0 0.0
    %7504 = vmatprep.subr.mxu0 0.0
    %7505 = vmatpush1.msra.mxu0 0.0
    %7506 = vmatprep.subr.mxu0 0.0
    %7507 = vmatpush1.msra.mxu0 0.0
    %7508 = vmatprep.subr.mxu0 0.0
    %7509 = vmatpush1.msra.mxu0 0.0
    %7510 = vmatprep.subr.mxu0 0.0
    %7511 = vmatpush1.msra.mxu0 0.0
    %7512 = vmatprep.subr.mxu0 0.0
    %7513 = vmatpush1.msra.mxu0 0.0
    %7514 = vmatprep.subr.mxu0 0.0
    %7515 = vmatpush1.msra.mxu0 0.0
    %7516 = vmatprep.subr.mxu0 0.0
    %7517 = vmatpush1.msra.mxu0 0.0
    %7518 = vmatprep.subr.mxu0 0.0
    %7519 = vmatpush1.msra.mxu0 0.0
    %7520 = vmatprep.subr.mxu0 0.0
    %7521 = vmatpush1.msra.mxu0 0.0
    %7522 = vmatprep.subr.mxu0 0.0
    %7523 = vmatpush1.msra.mxu0 0.0
    %7524 = vmatprep.mubr.f32.mxu0 0.0
    %7525 = vmatmul.mubr.f32.gmra.mrb[0].mxu0 %v7455
    %v7526 = vpop.f32.mrb[0].mxu0
    %v7527 = vadd.f32 %v7452, %v7526
    %v7528 = vpop.f32.mrb[0].mxu0
    %7529 = vmatprep.mubr.f32.mxu0 0.0
    %7530 = vmatmul.mubr.f32.gmra.mrb[0].mxu0 %v7458
    %v7531 = vpop.f32.mrb[0].mxu0
    %v7532 = vadd.f32 %v7452, %v7531
    %v7533 = vpop.f32.mrb[0].mxu0
    %7534 = vdwg.mxu0
    %v7535 = vadd.f32 %v6457, %v7527
    %v7536 = vadd.f32 %v6458, %v7532
    %s7537 = scalar_lea.vmem %s65, 1
    %v7538 = vld [vmem:[%s7537] sm:$0x1]
    %s7539 = scalar_lea.vmem %s67, 1
    %v7540 = vld [vmem:[%s7539] sm:$0x1]
    %v7541 = vsel %vm408, %v7535, 0.0
    %7542 = vadd.xlane.f32.xlu0 %v7541
    %v7543 = vpop.xlane.xlu0 %7542
    %v7544 = vsel %vm408, %v7536, 0.0
    %7545 = vadd.xlane.f32.xlu0 %v7544
    %v7546 = vpop.xlane.xlu0 %7545
    %v7547 = vmul.f32 %v7543, %v1429
    %v7548 = vmul.f32 %v7546, %v1429
    %v7549 = vsub.f32 %v7535, %v7547
    %v7550 = vsub.f32 %v7536, %v7548
    %v7551 = vmul.f32 %v7549, %v7549
    %v7552 = vmul.f32 %v7550, %v7550
    %v7553 = vsel %vm408, %v7551, 0.0
    %7554 = vadd.xlane.f32.xlu0 %v7553
    %v7555 = vpop.xlane.xlu0 %7554
    %v7556 = vsel %vm408, %v7552, 0.0
    %7557 = vadd.xlane.f32.xlu0 %v7556
    %v7558 = vpop.xlane.xlu0 %7557
    %v7559 = vmul.f32 %v7555, %v1429
    %v7560 = vmul.f32 %v7558, %v1429
    %v7561 = vadd.f32 %v7559, 1e-05
    %v7562 = vadd.f32 %v7560, 1e-05
    %v7563 = vrsqrt.pop %v7561
    %v7564 = vrsqrt.pop %v7562
    %v7565 = vmul.f32 %v7549, %v7563
    %v7566 = vmul.f32 %v7550, %v7564
    %v7568 = vlaneseq
    %v7569 = vshrl.u32 %v7568, 7
    %v7570 = vsub.s32 0, %v7569
    %v7571 = vrot.slane %v7538, %v7570
    %v7573 = vmul.f32 %v7565, %v7571
    %v7574 = vmul.f32 %v7566, %v7571
    %v7576 = vlaneseq
    %v7577 = vshrl.u32 %v7576, 7
    %v7578 = vsub.s32 0, %v7577
    %v7579 = vrot.slane %v7540, %v7578
    %v7581 = vadd.f32 %v7573, %v7579
    %v7582 = vadd.f32 %v7574, %v7579
    %s7583 = scalar_lea.vmem [#allocation25], 32
    %v7584 = vld [vmem:[%s7583] sm:$0xff]
    %v7585 = vld [vmem:[%s7583 + $0x8] sm:$0xff]
    %v7586 = vld [vmem:[%s7583 + $0x10] sm:$0xff]
    %v7587 = vld [vmem:[%s7583 + $0x18] sm:$0xff]
    %s7588 = scalar_lea.vmem [#allocation26], 1
    %v7589 = vld [vmem:[%s7588] sm:$0x1]
    %v7591 = vlaneseq
    %v7592 = vshrl.u32 %v7591, 7
    %v7593 = vsub.s32 0, %v7592
    %v7594 = vrot.slane %v7589, %v7593
    %v7597 = vsel %vm408, %v7581, 0
    %v7600 = vsel %vm408, %v7582, 0
    %7602 = vmatprep.subr.mxu0 0.0
    %7603 = vmatpush1.msra.mxu0 %v7584
    %7604 = vmatprep.subr.mxu0 0.0
    %7605 = vmatpush1.msra.mxu0 %v7585
    %7606 = vmatprep.subr.mxu0 0.0
    %7607 = vmatpush1.msra.mxu0 %v7586
    %7608 = vmatprep.subr.mxu0 0.0
    %7609 = vmatpush1.msra.mxu0 %v7587
    %7610 = vmatprep.subr.mxu0 0.0
    %7611 = vmatpush1.msra.mxu0 0.0
    %7612 = vmatprep.subr.mxu0 0.0
    %7613 = vmatpush1.msra.mxu0 0.0
    %7614 = vmatprep.subr.mxu0 0.0
    %7615 = vmatpush1.msra.mxu0 0.0
    %7616 = vmatprep.subr.mxu0 0.0
    %7617 = vmatpush1.msra.mxu0 0.0
    %7618 = vmatprep.subr.mxu0 0.0
    %7619 = vmatpush1.msra.mxu0 0.0
    %7620 = vmatprep.subr.mxu0 0.0
    %7621 = vmatpush1.msra.mxu0 0.0
    %7622 = vmatprep.subr.mxu0 0.0
    %7623 = vmatpush1.msra.mxu0 0.0
    %7624 = vmatprep.subr.mxu0 0.0
    %7625 = vmatpush1.msra.mxu0 0.0
    %7626 = vmatprep.subr.mxu0 0.0
    %7627 = vmatpush1.msra.mxu0 0.0
    %7628 = vmatprep.subr.mxu0 0.0
    %7629 = vmatpush1.msra.mxu0 0.0
    %7630 = vmatprep.subr.mxu0 0.0
    %7631 = vmatpush1.msra.mxu0 0.0
    %7632 = vmatprep.subr.mxu0 0.0
    %7633 = vmatpush1.msra.mxu0 0.0
    %7634 = vmatprep.subr.mxu0 0.0
    %7635 = vmatpush1.msra.mxu0 0.0
    %7636 = vmatprep.subr.mxu0 0.0
    %7637 = vmatpush1.msra.mxu0 0.0
    %7638 = vmatprep.subr.mxu0 0.0
    %7639 = vmatpush1.msra.mxu0 0.0
    %7640 = vmatprep.subr.mxu0 0.0
    %7641 = vmatpush1.msra.mxu0 0.0
    %7642 = vmatprep.subr.mxu0 0.0
    %7643 = vmatpush1.msra.mxu0 0.0
    %7644 = vmatprep.subr.mxu0 0.0
    %7645 = vmatpush1.msra.mxu0 0.0
    %7646 = vmatprep.subr.mxu0 0.0
    %7647 = vmatpush1.msra.mxu0 0.0
    %7648 = vmatprep.subr.mxu0 0.0
    %7649 = vmatpush1.msra.mxu0 0.0
    %7650 = vmatprep.subr.mxu0 0.0
    %7651 = vmatpush1.msra.mxu0 0.0
    %7652 = vmatprep.subr.mxu0 0.0
    %7653 = vmatpush1.msra.mxu0 0.0
    %7654 = vmatprep.subr.mxu0 0.0
    %7655 = vmatpush1.msra.mxu0 0.0
    %7656 = vmatprep.subr.mxu0 0.0
    %7657 = vmatpush1.msra.mxu0 0.0
    %7658 = vmatprep.subr.mxu0 0.0
    %7659 = vmatpush1.msra.mxu0 0.0
    %7660 = vmatprep.subr.mxu0 0.0
    %7661 = vmatpush1.msra.mxu0 0.0
    %7662 = vmatprep.subr.mxu0 0.0
    %7663 = vmatpush1.msra.mxu0 0.0
    %7664 = vmatprep.subr.mxu0 0.0
    %7665 = vmatpush1.msra.mxu0 0.0
    %7666 = vmatprep.mubr.f32.mxu0 0.0
    %7667 = vmatmul.mubr.f32.gmra.mrb[0].mxu0 %v7597
    %v7668 = vpop.f32.mrb[0].mxu0
    %v7669 = vadd.f32 %v7594, %v7668
    %v7670 = vpop.f32.mrb[0].mxu0
    %7671 = vmatprep.mubr.f32.mxu0 0.0
    %7672 = vmatmul.mubr.f32.gmra.mrb[0].mxu0 %v7600
    %v7673 = vpop.f32.mrb[0].mxu0
    %v7674 = vadd.f32 %v7594, %v7673
    %v7675 = vpop.f32.mrb[0].mxu0
    %7676 = vdwg.mxu0
    %v7677 = vmax.f32 %v7669, 0.0
    %v7678 = vmax.f32 %v7674, 0.0
    %s7679 = scalar_lea.vmem %s57, 64
    %v7680 = vld [vmem:[%s7679] sm:$0xff]
    %v7681 = vld [vmem:[%s7679 + $0x8] sm:$0xff]
    %v7682 = vld [vmem:[%s7679 + $0x10] sm:$0xff]
    %v7683 = vld [vmem:[%s7679 + $0x18] sm:$0xff]
    %v7684 = vld [vmem:[%s7679 + $0x20] sm:$0xff]
    %v7685 = vld [vmem:[%s7679 + $0x28] sm:$0xff]
    %v7686 = vld [vmem:[%s7679 + $0x30] sm:$0xff]
    %v7687 = vld [vmem:[%s7679 + $0x38] sm:$0xff]
    %s7688 = scalar_lea.vmem %s59, 1
    %v7689 = vld [vmem:[%s7688] sm:$0x1]
    %v7691 = vlaneseq
    %v7692 = vshrl.u32 %v7691, 7
    %v7693 = vsub.s32 0, %v7692
    %v7694 = vrot.slane %v7689, %v7693
    %v7697 = vsel %vm1575, %v7677, 0
    %v7700 = vsel %vm1575, %v7678, 0
    %7702 = vmatprep.subr.mxu0 0.0
    %7703 = vmatpush1.msra.mxu0 %v7680
    %7704 = vmatprep.subr.mxu0 0.0
    %7705 = vmatpush1.msra.mxu0 %v7681
    %7706 = vmatprep.subr.mxu0 0.0
    %7707 = vmatpush1.msra.mxu0 %v7682
    %7708 = vmatprep.subr.mxu0 0.0
    %7709 = vmatpush1.msra.mxu0 %v7683
    %7710 = vmatprep.subr.mxu0 0.0
    %7711 = vmatpush1.msra.mxu0 %v7684
    %7712 = vmatprep.subr.mxu0 0.0
    %7713 = vmatpush1.msra.mxu0 %v7685
    %7714 = vmatprep.subr.mxu0 0.0
    %7715 = vmatpush1.msra.mxu0 %v7686
    %7716 = vmatprep.subr.mxu0 0.0
    %7717 = vmatpush1.msra.mxu0 %v7687
    %7718 = vmatprep.subr.mxu0 0.0
    %7719 = vmatpush1.msra.mxu0 0.0
    %7720 = vmatprep.subr.mxu0 0.0
    %7721 = vmatpush1.msra.mxu0 0.0
    %7722 = vmatprep.subr.mxu0 0.0
    %7723 = vmatpush1.msra.mxu0 0.0
    %7724 = vmatprep.subr.mxu0 0.0
    %7725 = vmatpush1.msra.mxu0 0.0
    %7726 = vmatprep.subr.mxu0 0.0
    %7727 = vmatpush1.msra.mxu0 0.0
    %7728 = vmatprep.subr.mxu0 0.0
    %7729 = vmatpush1.msra.mxu0 0.0
    %7730 = vmatprep.subr.mxu0 0.0
    %7731 = vmatpush1.msra.mxu0 0.0
    %7732 = vmatprep.subr.mxu0 0.0
    %7733 = vmatpush1.msra.mxu0 0.0
    %7734 = vmatprep.subr.mxu0 0.0
    %7735 = vmatpush1.msra.mxu0 0.0
    %7736 = vmatprep.subr.mxu0 0.0
    %7737 = vmatpush1.msra.mxu0 0.0
    %7738 = vmatprep.subr.mxu0 0.0
    %7739 = vmatpush1.msra.mxu0 0.0
    %7740 = vmatprep.subr.mxu0 0.0
    %7741 = vmatpush1.msra.mxu0 0.0
    %7742 = vmatprep.subr.mxu0 0.0
    %7743 = vmatpush1.msra.mxu0 0.0
    %7744 = vmatprep.subr.mxu0 0.0
    %7745 = vmatpush1.msra.mxu0 0.0
    %7746 = vmatprep.subr.mxu0 0.0
    %7747 = vmatpush1.msra.mxu0 0.0
    %7748 = vmatprep.subr.mxu0 0.0
    %7749 = vmatpush1.msra.mxu0 0.0
    %7750 = vmatprep.subr.mxu0 0.0
    %7751 = vmatpush1.msra.mxu0 0.0
    %7752 = vmatprep.subr.mxu0 0.0
    %7753 = vmatpush1.msra.mxu0 0.0
    %7754 = vmatprep.subr.mxu0 0.0
    %7755 = vmatpush1.msra.mxu0 0.0
    %7756 = vmatprep.subr.mxu0 0.0
    %7757 = vmatpush1.msra.mxu0 0.0
    %7758 = vmatprep.subr.mxu0 0.0
    %7759 = vmatpush1.msra.mxu0 0.0
    %7760 = vmatprep.subr.mxu0 0.0
    %7761 = vmatpush1.msra.mxu0 0.0
    %7762 = vmatprep.subr.mxu0 0.0
    %7763 = vmatpush1.msra.mxu0 0.0
    %7764 = vmatprep.subr.mxu0 0.0
    %7765 = vmatpush1.msra.mxu0 0.0
    %7766 = vmatprep.mubr.f32.mxu0 0.0
    %7767 = vmatmul.mubr.f32.gmra.mrb[0].mxu0 %v7697
    %v7768 = vpop.f32.mrb[0].mxu0
    %v7769 = vadd.f32 %v7694, %v7768
    %v7770 = vpop.f32.mrb[0].mxu0
    %7771 = vmatprep.mubr.f32.mxu0 0.0
    %7772 = vmatmul.mubr.f32.gmra.mrb[0].mxu0 %v7700
    %v7773 = vpop.f32.mrb[0].mxu0
    %v7774 = vadd.f32 %v7694, %v7773
    %v7775 = vpop.f32.mrb[0].mxu0
    %7776 = vdwg.mxu0
    %v7777 = vadd.f32 %v7581, %v7769
    %v7778 = vadd.f32 %v7582, %v7774
    %s7779 = scalar_lea.vmem %s69, 1
    %v7780 = vld [vmem:[%s7779] sm:$0x1]
    %s7781 = scalar_lea.vmem %s71, 1
    %v7782 = vld [vmem:[%s7781] sm:$0x1]
    %v7783 = vsel %vm408, %v7777, 0.0
    %7784 = vadd.xlane.f32.xlu0 %v7783
    %v7785 = vpop.xlane.xlu0 %7784
    %v7786 = vsel %vm408, %v7778, 0.0
    %7787 = vadd.xlane.f32.xlu0 %v7786
    %v7788 = vpop.xlane.xlu0 %7787
    %v7789 = vmul.f32 %v7785, %v1429
    %v7790 = vmul.f32 %v7788, %v1429
    %v7791 = vsub.f32 %v7777, %v7789
    %v7792 = vsub.f32 %v7778, %v7790
    %v7793 = vmul.f32 %v7791, %v7791
    %v7794 = vmul.f32 %v7792, %v7792
    %v7795 = vsel %vm408, %v7793, 0.0
    %7796 = vadd.xlane.f32.xlu0 %v7795
    %v7797 = vpop.xlane.xlu0 %7796
    %v7798 = vsel %vm408, %v7794, 0.0
    %7799 = vadd.xlane.f32.xlu0 %v7798
    %v7800 = vpop.xlane.xlu0 %7799
    %v7801 = vmul.f32 %v7797, %v1429
    %v7802 = vmul.f32 %v7800, %v1429
    %v7803 = vadd.f32 %v7801, 1e-05
    %v7804 = vadd.f32 %v7802, 1e-05
    %v7805 = vrsqrt.pop %v7803
    %v7806 = vrsqrt.pop %v7804
    %v7807 = vmul.f32 %v7791, %v7805
    %v7808 = vmul.f32 %v7792, %v7806
    %v7810 = vlaneseq
    %v7811 = vshrl.u32 %v7810, 7
    %v7812 = vsub.s32 0, %v7811
    %v7813 = vrot.slane %v7780, %v7812
    %v7815 = vmul.f32 %v7807, %v7813
    %v7816 = vmul.f32 %v7808, %v7813
    %v7818 = vlaneseq
    %v7819 = vshrl.u32 %v7818, 7
    %v7820 = vsub.s32 0, %v7819
    %v7821 = vrot.slane %v7782, %v7820
    %v7823 = vadd.f32 %v7815, %v7821
    %v7824 = vadd.f32 %v7816, %v7821
    %v7825 = vld [vmem:[%s77] sm:$0x1]
    %v7826 = vld [vmem:[%s79] sm:$0x1]
    %v7827 = vsel %vm408, %v7823, 0.0
    %7828 = vadd.xlane.f32.xlu0 %v7827
    %v7829 = vpop.xlane.xlu0 %7828
    %v7830 = vsel %vm408, %v7824, 0.0
    %7831 = vadd.xlane.f32.xlu0 %v7830
    %v7832 = vpop.xlane.xlu0 %7831
    %v7833 = vmul.f32 %v7829, %v1429
    %v7834 = vmul.f32 %v7832, %v1429
    %v7835 = vsub.f32 %v7823, %v7833
    %v7836 = vsub.f32 %v7824, %v7834
    %v7837 = vmul.f32 %v7835, %v7835
    %v7838 = vmul.f32 %v7836, %v7836
    %v7839 = vsel %vm408, %v7837, 0.0
    %7840 = vadd.xlane.f32.xlu0 %v7839
    %v7841 = vpop.xlane.xlu0 %7840
    %v7842 = vsel %vm408, %v7838, 0.0
    %7843 = vadd.xlane.f32.xlu0 %v7842
    %v7844 = vpop.xlane.xlu0 %7843
    %v7845 = vmul.f32 %v7841, %v1429
    %v7846 = vmul.f32 %v7844, %v1429
    %v7847 = vadd.f32 %v7845, 1e-05
    %v7848 = vadd.f32 %v7846, 1e-05
    %v7849 = vrsqrt.pop %v7847
    %v7850 = vrsqrt.pop %v7848
    %v7851 = vmul.f32 %v7835, %v7849
    %v7852 = vmul.f32 %v7836, %v7850
    %v7854 = vlaneseq
    %v7855 = vshrl.u32 %v7854, 7
    %v7856 = vsub.s32 0, %v7855
    %v7857 = vrot.slane %v7825, %v7856
    %v7859 = vmul.f32 %v7851, %v7857
    %v7860 = vmul.f32 %v7852, %v7857
    %v7862 = vlaneseq
    %v7863 = vshrl.u32 %v7862, 7
    %v7864 = vsub.s32 0, %v7863
    %v7865 = vrot.slane %v7826, %v7864
    %v7867 = vadd.f32 %v7859, %v7865
    %v7868 = vadd.f32 %v7860, %v7865
    %7869 = vst.msk [vmem:[#allocation28] sm:$0xff] %vm408, %v7867
    %7870 = vst.msk [vmem:[#allocation28 + $0x8] sm:$0xff] %vm408, %v7868
    // Predicated region
    $region226: #{transformer_forward.1} parent=1 // pred_check
      _
    $region227: #{transformer_forward.1} parent=1 // pred_check_branch
      %7872 = sbr.rel (0) target = $region229
    $region228: #{transformer_forward.1} parent=1 // pred_region
      %s7874 = ssub.s32 256, 256
      %7875 = vsyncadd [#allocation4], %s7874
      %s7876 = sshll.u32 [#allocation28], 4
      %s7877 = int_to_ptr.vmem [resolvable:$true] %s7876
      %7882 = dma.vmem_to_hbm [thread:$0]  %s7877, 256, %s81, [#allocation4], 128, 128, 8
    $region229: #{transformer_forward.1} parent=1 // pred_fallthru
      _
    // Predicated region
    $region230: #{transformer_forward.1} parent=1 // pred_check
      _
    $region231: #{transformer_forward.1} parent=1 // pred_check_branch
      %7884 = sbr.rel (0) target = $region233
    $region232: #{transformer_forward.1} parent=1 // pred_region
      %7885 = dma.done [#allocation4], 256
    $region233: #{transformer_forward.1} parent=1 // pred_fallthru
      _
    %7886 = vsyncpa [#allocation3], 1
    %7887 = vsyncpa [#allocation6], 1
    %7888 = vsyncpa [#allocation9], 1
    %7889 = vsyncpa [#allocation12], 1
    %7890 = vsyncpa [#allocation15], 1
    %7891 = vsyncpa [#allocation18], 1
    %7892 = vsyncpa [#allocation21], 1
    %7893 = vsyncpa [#allocation24], 1
    %7894 = vsyncpa [#allocation27], 1
    %7895 = vsyncpa [#allocation4], 1

</llo_original>
